<compile_context>
chip_gen: v5e
topology: v5e:2x2
jax: 0.10.0
libtpu: 0.0.40
codegen_flags: <defaults>
</compile_context>

<pallas_src>
import functools

import jax
import jax.numpy as jnp
from jax.experimental import pallas as pl
from jax.experimental.pallas import tpu as pltpu


# ------------------------------------------------------------------
# Haar DWT combine (writes the subband tensor already halo-padded for body0)
# ------------------------------------------------------------------
def _make_dwt_kernel(h, w, c):
    def kernel(x1_ref, x2_ref, x3_ref, x4_ref, o_ref):
        a = x1_ref[...].astype(jnp.float32) * 0.5
        b = x2_ref[...].astype(jnp.float32) * 0.5
        cc = x3_ref[...].astype(jnp.float32) * 0.5
        d = x4_ref[...].astype(jnp.float32) * 0.5
        dt = o_ref.dtype
        o_ref[...] = jnp.zeros(o_ref.shape, dt)
        o_ref[:, 1:1 + h, 1:1 + w, 0 * c:1 * c] = (a + b + cc + d).astype(dt)   # LL
        o_ref[:, 1:1 + h, 1:1 + w, 1 * c:2 * c] = (-a - b + cc + d).astype(dt)  # HL
        o_ref[:, 1:1 + h, 1:1 + w, 2 * c:3 * c] = (-a + b - cc + d).astype(dt)  # LH
        o_ref[:, 1:1 + h, 1:1 + w, 3 * c:4 * c] = (a - b - cc + d).astype(dt)   # HH
    return kernel


def dwt_pad_nhwc(x_half, cdt):
    """Haar DWT of an NHWC tensor -> (B, h+2, w+2, 4C) with zero 1-px border."""
    B, H, W, C = x_half.shape
    h, w = H // 2, W // 2
    x1 = x_half[:, 0::2, 0::2, :]
    x2 = x_half[:, 1::2, 0::2, :]
    x3 = x_half[:, 0::2, 1::2, :]
    x4 = x_half[:, 1::2, 1::2, :]
    return pl.pallas_call(
        _make_dwt_kernel(h, w, C),
        out_shape=jax.ShapeDtypeStruct((B, h + 2, w + 2, 4 * C), cdt),
    )(x1, x2, x3, x4)


# ------------------------------------------------------------------
# Generic NHWC conv kernel with fused in-kernel im2col
#   optional PReLU (slope from SMEM), optional halo output, optional fused
#   global-average-pool side output (used for the CA squeeze-excite).
# ------------------------------------------------------------------
def _make_conv_kernel(kh, kw, H, W, out_pad, act, with_pool, cdt):
    def kernel(*refs):
        it = iter(refs)
        x_ref = next(it)
        w_ref = next(it)
        slope_ref = next(it) if act == "prelu" else None
        o_ref = next(it)
        pool_ref = next(it) if with_pool else None

        x = x_ref[0].astype(cdt)                      # (H+kh-1, W+kw-1, Cin)
        cin = x.shape[-1]
        cout = o_ref.shape[-1]
        acc = jnp.zeros((H * W, cout), jnp.float32)
        for di in range(kh):
            for dj in range(kw):
                patch = x[di:di + H, dj:dj + W, :].reshape(H * W, cin)
                acc = acc + jnp.dot(patch, w_ref[di * kw + dj],
                                    preferred_element_type=jnp.float32)
        if act == "prelu":
            s = slope_ref[0]
            acc = jnp.where(acc >= 0.0, acc, s * acc)
        if with_pool:
            pool_ref[0] = jnp.mean(acc, axis=0, keepdims=True)
        y = acc.astype(o_ref.dtype).reshape(H, W, cout)
        if out_pad == 0:
            o_ref[0] = y
        else:
            o_ref[...] = jnp.zeros(o_ref.shape, o_ref.dtype)
            o_ref[0, out_pad:out_pad + H, out_pad:out_pad + W, :] = y
    return kernel


def conv_nhwc(x_pad, w_oihw, *, act=None, slope=None, out_pad=0,
              with_pool=False, cdt=jnp.float32):
    """stride-1 Conv2d (bias=False) on a spatially pre-padded NHWC tensor."""
    B, Hp, Wp, Cin = x_pad.shape
    O, Ci, kh, kw = w_oihw.shape
    assert Ci == Cin
    H, W = Hp - (kh - 1), Wp - (kw - 1)
    wk = jnp.transpose(w_oihw, (2, 3, 1, 0)).reshape(kh * kw, Cin, O).astype(cdt)
    Ho, Wo = H + 2 * out_pad, W + 2 * out_pad

    in_specs = [
        pl.BlockSpec((1, Hp, Wp, Cin), lambda b: (b, 0, 0, 0)),
        pl.BlockSpec((kh * kw, Cin, O), lambda b: (0, 0, 0)),
    ]
    args = [x_pad, wk]
    if act == "prelu":
        in_specs.append(pl.BlockSpec(memory_space=pltpu.MemorySpace.SMEM))
        args.append(jnp.asarray(slope, jnp.float32).reshape(1))

    out_shape = [jax.ShapeDtypeStruct((B, Ho, Wo, O), cdt)]
    out_specs = [pl.BlockSpec((1, Ho, Wo, O), lambda b: (b, 0, 0, 0))]
    if with_pool:
        out_shape.append(jax.ShapeDtypeStruct((B, 1, O), jnp.float32))
        out_specs.append(pl.BlockSpec((1, 1, O), lambda b: (b, 0, 0)))

    return pl.pallas_call(
        _make_conv_kernel(kh, kw, H, W, out_pad, act, with_pool, cdt),
        out_shape=tuple(out_shape) if with_pool else out_shape[0],
        grid=(B,),
        in_specs=in_specs,
        out_specs=tuple(out_specs) if with_pool else out_specs[0],
        compiler_params=pltpu.CompilerParams(dimension_semantics=("parallel",)),
    )(*args)


# ------------------------------------------------------------------
# CA squeeze-excite (batched over B in one kernel)
# ------------------------------------------------------------------
def _ca_kernel(p_ref, w1_ref, w2_ref, o_ref):
    p = p_ref[...]                                       # (B, C) f32
    t = jnp.dot(p, w1_ref[...], preferred_element_type=jnp.float32)
    t = jnp.maximum(t, 0.0)
    s = jnp.dot(t, w2_ref[...], preferred_element_type=jnp.float32)
    o_ref[...] = jax.nn.sigmoid(s)


def ca_scale(pooled_bc, w1_oihw, w2_oihw):
    B, C = pooled_bc.shape
    Cr = w1_oihw.shape[0]
    w1 = jnp.transpose(w1_oihw.reshape(Cr, C))           # (C, Cr)
    w2 = jnp.transpose(w2_oihw.reshape(C, Cr))           # (Cr, C)
    return pl.pallas_call(
        _ca_kernel,
        out_shape=jax.ShapeDtypeStruct((B, C), jnp.float32),
    )(pooled_bc, w1, w2)


# ------------------------------------------------------------------
# Fused: SALayer + CA scale apply + conv1x1(cat) + x_dwt residual + IWT combine
# ------------------------------------------------------------------
def _make_attn_iwt_kernel(h, w, C2, nc, cdt):
    def kernel(res_ref, sca_ref, xd_ref, wsa_ref, w1_ref, w2_ref,
               ee_ref, oe_ref, eo_ref, oo_ref, pool_ref):
        x = res_ref[0].astype(jnp.float32)               # (h, w, C2)

        # SALayer: channel max/mean pool written into a zero-padded VMEM scratch
        pool_ref[...] = jnp.zeros(pool_ref.shape, pool_ref.dtype)
        pool_ref[0, 2:2 + h, 2:2 + w, :] = jnp.max(x, axis=-1, keepdims=True)
        pool_ref[1, 2:2 + h, 2:2 + w, :] = jnp.mean(x, axis=-1, keepdims=True)
        pool = pool_ref[...]                             # (2, h+4, w+4, 1)

        # 5x5 (2->1) conv as 50 shifted multiply-adds on the VPU (weights in SMEM)
        acc5 = jnp.zeros((h, w, 1), jnp.float32)
        for c in range(2):
            for di in range(5):
                for dj in range(5):
                    acc5 = acc5 + (wsa_ref[c * 25 + di * 5 + dj]
                                   * pool[c, di:di + h, dj:dj + w, :])
        y_sa = jax.nn.sigmoid(acc5)                      # (h, w, 1)

        # branches + conv1x1 of the (never materialized) concat + residual
        b_sa = (x * y_sa).astype(cdt).reshape(h * w, C2)
        s_ca = sca_ref[0].astype(jnp.float32)            # (1, C2)
        b_ca = (x * s_ca).astype(cdt).reshape(h * w, C2)
        r2 = jnp.dot(b_sa, w1_ref[...], preferred_element_type=jnp.float32)
        r2 = r2 + jnp.dot(b_ca, w2_ref[...], preferred_element_type=jnp.float32)
        r2 = r2 + xd_ref[0, 1:1 + h, 1:1 + w, :].astype(jnp.float32).reshape(h * w, C2)

        # IWT combine fused into the epilogue (includes iwt_init's /2)
        r2 = (r2 * 0.5).reshape(h, w, C2)
        g1 = r2[:, :, 0 * nc:1 * nc]
        g2 = r2[:, :, 1 * nc:2 * nc]
        g3 = r2[:, :, 2 * nc:3 * nc]
        g4 = r2[:, :, 3 * nc:4 * nc]
        ee_ref[0] = (g1 - g2 - g3 + g4).astype(ee_ref.dtype)   # out[0::2, 0::2]
        oe_ref[0] = (g1 - g2 + g3 - g4).astype(oe_ref.dtype)   # out[1::2, 0::2]
        eo_ref[0] = (g1 + g2 - g3 - g4).astype(eo_ref.dtype)   # out[0::2, 1::2]
        oo_ref[0] = (g1 + g2 + g3 + g4).astype(oo_ref.dtype)   # out[1::2, 1::2]
    return kernel


def attn_conv1x1_iwt(res, s_ca, x_dwt_pad, wsa_oihw, w1x1_oihw, cdt):
    B, h, w, C2 = res.shape
    nc = C2 // 4
    wsa_flat = wsa_oihw.reshape(-1).astype(jnp.float32)          # (50,) [max, mean]
    wcat = jnp.transpose(w1x1_oihw.reshape(C2, 2 * C2))          # (2*C2, C2)
    w1 = wcat[:C2].astype(cdt)                                   # SA half
    w2 = wcat[C2:].astype(cdt)                                   # CA half
    s_ca3 = s_ca.reshape(B, 1, C2)

    sub = jax.ShapeDtypeStruct((B, h, w, nc), cdt)
    sub_spec = pl.BlockSpec((1, h, w, nc), lambda b: (b, 0, 0, 0))
    return pl.pallas_call(
        _make_attn_iwt_kernel(h, w, C2, nc, cdt),
        out_shape=(sub, sub, sub, sub),
        grid=(B,),
        in_specs=[
            pl.BlockSpec((1, h, w, C2), lambda b: (b, 0, 0, 0)),
            pl.BlockSpec((1, 1, C2), lambda b: (b, 0, 0)),
            pl.BlockSpec((1, h + 2, w + 2, C2), lambda b: (b, 0, 0, 0)),
            pl.BlockSpec(memory_space=pltpu.MemorySpace.SMEM),
            pl.BlockSpec((C2, C2), lambda b: (0, 0)),
            pl.BlockSpec((C2, C2), lambda b: (0, 0)),
        ],
        out_specs=(sub_spec, sub_spec, sub_spec, sub_spec),
        scratch_shapes=[pltpu.VMEM((2, h + 4, w + 4, 1), jnp.float32)],
        compiler_params=pltpu.CompilerParams(dimension_semantics=("parallel",)),
    )(res, s_ca3, x_dwt_pad, wsa_flat, w1, w2)


# ------------------------------------------------------------------
# Fused tail: PReLU(conv3x3(concat([wave, identity]))) + conv1x1_final(residual)
#   The padded concat tile is assembled in a VMEM scratch (no pad/concat glue).
# ------------------------------------------------------------------
def _make_final_kernel(H, W, n, nc, O, cdt):
    def kernel(wave_ref, x_ref, w3_ref, wf_ref, slope_ref, o_ref, asm_ref):
        xf = x_ref[0]                                    # (H, W, n) f32
        asm_ref[...] = jnp.zeros(asm_ref.shape, asm_ref.dtype)
        asm_ref[1:1 + H, 1:1 + W, 0:nc] = wave_ref[0].astype(asm_ref.dtype)
        asm_ref[1:1 + H, 1:1 + W, nc:n] = xf[:, :, nc:].astype(asm_ref.dtype)
        a = asm_ref[...]                                 # (H+2, W+2, n)

        acc = jnp.zeros((H * W, O), jnp.float32)
        for di in range(3):
            for dj in range(3):
                patch = a[di:di + H, dj:dj + W, :].reshape(H * W, n)
                acc = acc + jnp.dot(patch, w3_ref[di * 3 + dj],
                                    preferred_element_type=jnp.float32)
        s = slope_ref[0]
        acc = jnp.where(acc >= 0.0, acc, s * acc)        # PReLU(conv3x3(cat))
        acc = acc + jnp.dot(xf.reshape(H * W, n).astype(cdt), wf_ref[...],
                            preferred_element_type=jnp.float32)
        o_ref[0] = acc.reshape(H, W, O).astype(o_ref.dtype)
    return kernel


def final_convs(wave, x_nhwc, w3_oihw, wf_oihw, slope, cdt):
    B, H, W, nc = wave.shape
    n = x_nhwc.shape[-1]
    O = w3_oihw.shape[0]
    w3 = jnp.transpose(w3_oihw, (2, 3, 1, 0)).reshape(9, n, O).astype(cdt)
    wf = jnp.transpose(wf_oihw.reshape(O, n)).astype(cdt)          # (n, O)
    return pl.pallas_call(
        _make_final_kernel(H, W, n, nc, O, cdt),
        out_shape=jax.ShapeDtypeStruct((B, H, W, O), jnp.float32),
        grid=(B,),
        in_specs=[
            pl.BlockSpec((1, H, W, nc), lambda b: (b, 0, 0, 0)),
            pl.BlockSpec((1, H, W, n), lambda b: (b, 0, 0, 0)),
            pl.BlockSpec((9, n, O), lambda b: (0, 0, 0)),
            pl.BlockSpec((n, O), lambda b: (0, 0)),
            pl.BlockSpec(memory_space=pltpu.MemorySpace.SMEM),
        ],
        out_specs=pl.BlockSpec((1, H, W, O), lambda b: (b, 0, 0, 0)),
        scratch_shapes=[pltpu.VMEM((H + 2, W + 2, n), cdt)],
        compiler_params=pltpu.CompilerParams(dimension_semantics=("parallel",)),
    )(wave, x_nhwc, w3, wf, jnp.asarray(slope, jnp.float32).reshape(1))


# ------------------------------------------------------------------
# HWAB forward (Pallas)
# ------------------------------------------------------------------
def hwab_pallas(x_nchw, p, compute_dtype=jnp.bfloat16):
    """HWAB forward. x_nchw (B, n_feat, H, W) f32 -> (B, o_feat, H, W) f32."""
    cdt = compute_dtype
    B, n, H, W = x_nchw.shape
    nc = n // 2
    slope = p["prelu"]

    x_nhwc = jnp.transpose(x_nchw, (0, 2, 3, 1))               # boundary transpose

    # Haar DWT of the wavelet half (output halo-padded for the 3x3 body conv)
    x_dwt_pad = dwt_pad_nhwc(x_nhwc[..., :nc], cdt)            # (B, h+2, w+2, 2n)

    # body: conv3x3(2n->n)+PReLU (emits halo), conv3x3(n->2n) (+ fused CA pool)
    r_pad = conv_nhwc(x_dwt_pad, p["body0"], act="prelu", slope=slope,
                      out_pad=1, cdt=cdt)                      # (B, h+2, w+2, n)
    res, pooled = conv_nhwc(r_pad, p["body2"], out_pad=0,
                            with_pool=True, cdt=cdt)           # (B,h,w,2n), (B,1,2n)

    # channel-attention squeeze-excite, batched over B
    s_ca = ca_scale(pooled.reshape(B, -1), p["wca1"], p["wca2"])   # (B, 2n) f32

    # fused SA + CA apply + conv1x1(cat) + x_dwt residual + IWT combine
    ee, oe, eo, oo = attn_conv1x1_iwt(res, s_ca, x_dwt_pad,
                                      p["wsa"], p["conv1x1"], cdt)

    # spatial re-interleave of the IWT sub-bands (tiny XLA glue)
    h = H // 2
    row_even = jnp.stack([ee, eo], axis=3).reshape(B, h, W, nc)
    row_odd = jnp.stack([oe, oo], axis=3).reshape(B, h, W, nc)
    wave = jnp.stack([row_even, row_odd], axis=2).reshape(B, H, W, nc)

    # PReLU(conv3x3(concat([wave, identity]))) + conv1x1_final(residual)
    out_nhwc = final_convs(wave, x_nhwc, p["conv3x3"], p["conv1x1_final"],
                           slope, cdt)
    return jnp.transpose(out_nhwc, (0, 3, 1, 2))


# ------------------------------------------------------------------
# Pure-JAX reference (mirrors the PyTorch module) for verification
# ------------------------------------------------------------------
def _conv_ref(x, w, pad):
    return jax.lax.conv_general_dilated(
        x, w, window_strides=(1, 1), padding=((pad, pad), (pad, pad)),
        dimension_numbers=("NCHW", "OIHW", "NCHW"),
        precision=jax.lax.Precision.HIGHEST)


def _prelu_ref(x, a):
    return jnp.where(x >= 0, x, a * x)


def _dwt_ref(x):
    x01 = x[:, :, 0::2, :] / 2
    x02 = x[:, :, 1::2, :] / 2
    x1, x2 = x01[:, :, :, 0::2], x02[:, :, :, 0::2]
    x3, x4 = x01[:, :, :, 1::2], x02[:, :, :, 1::2]
    return jnp.concatenate([x1 + x2 + x3 + x4, -x1 - x2 + x3 + x4,
                            -x1 + x2 - x3 + x4, x1 - x2 - x3 + x4], axis=1)


def _iwt_ref(x):
    B, C, h, w = x.shape
    oc = C // 4
    x1 = x[:, 0 * oc:1 * oc] / 2
    x2 = x[:, 1 * oc:2 * oc] / 2
    x3 = x[:, 2 * oc:3 * oc] / 2
    x4 = x[:, 3 * oc:4 * oc] / 2
    out = jnp.zeros((B, oc, 2 * h, 2 * w), x.dtype)
    out = out.at[:, :, 0::2, 0::2].set(x1 - x2 - x3 + x4)
    out = out.at[:, :, 1::2, 0::2].set(x1 - x2 + x3 - x4)
    out = out.at[:, :, 0::2, 1::2].set(x1 + x2 - x3 - x4)
    out = out.at[:, :, 1::2, 1::2].set(x1 + x2 + x3 + x4)
    return out


def _sa_ref(x, w):
    mx = jnp.max(x, axis=1, keepdims=True)
    mn = jnp.mean(x, axis=1, keepdims=True)
    y = jax.nn.sigmoid(_conv_ref(jnp.concatenate([mx, mn], axis=1), w, 2))
    return x * y


def _ca_ref(x, w1, w2):
    p = jnp.mean(x, axis=(2, 3), keepdims=True)
    y = jax.nn.relu(_conv_ref(p, w1, 0))
    y = jax.nn.sigmoid(_conv_ref(y, w2, 0))
    return x * y


def hwab_ref(x, p):
    slope = p["prelu"]
    residual = x
    c = x.shape[1] // 2
    wave_in, identity = x[:, :c], x[:, c:]
    x_dwt = _dwt_ref(wave_in)
    r = _prelu_ref(_conv_ref(x_dwt, p["body0"], 1), slope)
    r = _conv_ref(r, p["body2"], 1)
    res = jnp.concatenate([_sa_ref(r, p["wsa"]),
                           _ca_ref(r, p["wca1"], p["wca2"])], axis=1)
    res = _conv_ref(res, p["conv1x1"], 0) + x_dwt
    wave = _iwt_ref(res)
    out = jnp.concatenate([wave, identity], axis=1)
    out = _prelu_ref(_conv_ref(out, p["conv3x3"], 1), slope)
    return out + _conv_ref(residual, p["conv1x1_final"], 0)


# ------------------------------------------------------------------
# Deterministic parameter init (bias=False everywhere, matching the module)
# ------------------------------------------------------------------
def init_params(key, n_feat, o_feat, reduction=16):
    n2 = n_feat * 2
    cr = n2 // reduction
    keys = jax.random.split(key, 8)

    def w(k, shape):
        fan_in = shape[1] * shape[2] * shape[3]
        return jax.random.normal(k, shape, jnp.float32) / jnp.sqrt(float(fan_in))

    return {
        "body0": w(keys[0], (n_feat, n2, 3, 3)),
        "body2": w(keys[1], (n2, n_feat, 3, 3)),
        "wsa": w(keys[2], (1, 2, 5, 5)),
        "wca1": w(keys[3], (cr, n2, 1, 1)),
        "wca2": w(keys[4], (n2, cr, 1, 1)),
        "conv1x1": w(keys[5], (n2, n2 * 2, 1, 1)),
        "conv3x3": w(keys[6], (o_feat, n_feat, 3, 3)),
        "conv1x1_final": w(keys[7], (o_feat, n_feat, 1, 1)),
        "prelu": jnp.full((1,), 0.25, jnp.float32),   # nn.PReLU() default init
    }


if __name__ == "__main__":
    B, n_feat, o_feat, H, W = 2, 16, 16, 16, 16
    key = jax.random.PRNGKey(0)
    kp, kx = jax.random.split(key)
    params = init_params(kp, n_feat, o_feat)
    x = jax.random.normal(kx, (B, n_feat, H, W), jnp.float32)

    ref = hwab_ref(x, params)

    # f32 compute path: tight check against the pure-JAX reference.
    out_f32 = jax.block_until_ready(
        jax.jit(functools.partial(hwab_pallas, p=params,
                                  compute_dtype=jnp.float32))(x))
    assert out_f32.shape == (B, o_feat, H, W), out_f32.shape
    err_f32 = float(jnp.max(jnp.abs(out_f32 - ref)))
    assert err_f32 < 3e-3, f"f32 max abs err {err_f32}"

    # bf16 MXU operands (production path on v6e/v7x), f32 accumulation.
    out_bf16 = jax.block_until_ready(
        jax.jit(functools.partial(hwab_pallas, p=params,
                                  compute_dtype=jnp.bfloat16))(x))
    err_bf16 = float(jnp.max(jnp.abs(out_bf16 - ref)))
    assert err_bf16 < 2.5e-1, f"bf16 max abs err {err_bf16}"

    print("KERNEL_OK")
</pallas_src>

<mosaic_0001>
module attributes {stable_mosaic.version = 11 : i64} {
  func.func @kernel(%arg0: memref<2x8x8x8xf32, #tpu.memory_space<vmem>>, %arg1: memref<2x8x8x8xf32, #tpu.memory_space<vmem>>, %arg2: memref<2x8x8x8xf32, #tpu.memory_space<vmem>>, %arg3: memref<2x8x8x8xf32, #tpu.memory_space<vmem>>, %arg4: memref<2x10x10x32xf32, #tpu.memory_space<vmem>>) attributes {dimension_semantics = [], scalar_prefetch = 0 : i64, scratch_operands = 0 : i64, tpu.core_type = #tpu.core_type<tc>} {
    %c0 = arith.constant 0 : index
    %c0_0 = arith.constant 0 : index
    %c0_1 = arith.constant 0 : index
    %c0_2 = arith.constant 0 : index
    %0 = vector.load %arg0[%c0, %c0_0, %c0_1, %c0_2] : memref<2x8x8x8xf32, #tpu.memory_space<vmem>>, vector<2x8x8x8xf32>
    %cst = arith.constant 5.000000e-01 : f32
    %1 = vector.broadcast %cst : f32 to vector<2x8x8x8xf32>
    %2 = arith.mulf %0, %1 : vector<2x8x8x8xf32>
    %c0_3 = arith.constant 0 : index
    %c0_4 = arith.constant 0 : index
    %c0_5 = arith.constant 0 : index
    %c0_6 = arith.constant 0 : index
    %3 = vector.load %arg1[%c0_3, %c0_4, %c0_5, %c0_6] : memref<2x8x8x8xf32, #tpu.memory_space<vmem>>, vector<2x8x8x8xf32>
    %cst_7 = arith.constant 5.000000e-01 : f32
    %4 = vector.broadcast %cst_7 : f32 to vector<2x8x8x8xf32>
    %5 = arith.mulf %3, %4 : vector<2x8x8x8xf32>
    %c0_8 = arith.constant 0 : index
    %c0_9 = arith.constant 0 : index
    %c0_10 = arith.constant 0 : index
    %c0_11 = arith.constant 0 : index
    %6 = vector.load %arg2[%c0_8, %c0_9, %c0_10, %c0_11] : memref<2x8x8x8xf32, #tpu.memory_space<vmem>>, vector<2x8x8x8xf32>
    %cst_12 = arith.constant 5.000000e-01 : f32
    %7 = vector.broadcast %cst_12 : f32 to vector<2x8x8x8xf32>
    %8 = arith.mulf %6, %7 : vector<2x8x8x8xf32>
    %c0_13 = arith.constant 0 : index
    %c0_14 = arith.constant 0 : index
    %c0_15 = arith.constant 0 : index
    %c0_16 = arith.constant 0 : index
    %9 = vector.load %arg3[%c0_13, %c0_14, %c0_15, %c0_16] : memref<2x8x8x8xf32, #tpu.memory_space<vmem>>, vector<2x8x8x8xf32>
    %cst_17 = arith.constant 5.000000e-01 : f32
    %10 = vector.broadcast %cst_17 : f32 to vector<2x8x8x8xf32>
    %11 = arith.mulf %9, %10 : vector<2x8x8x8xf32>
    %cst_18 = arith.constant 0.000000e+00 : f32
    %12 = vector.broadcast %cst_18 : f32 to vector<2x10x10x32xf32>
    %c0_19 = arith.constant 0 : index
    %c0_20 = arith.constant 0 : index
    %c0_21 = arith.constant 0 : index
    %c0_22 = arith.constant 0 : index
    %13 = vector.load %arg4[%c0_19, %c0_20, %c0_21, %c0_22] : memref<2x10x10x32xf32, #tpu.memory_space<vmem>>, vector<2x10x10x32xf32>
    tpu.vector_store %arg4[%c0_19, %c0_20, %c0_21, %c0_22], %12 {strides = array<i32>} : memref<2x10x10x32xf32, #tpu.memory_space<vmem>>, vector<2x10x10x32xf32>,
    %14 = arith.addf %2, %5 : vector<2x8x8x8xf32>
    %15 = arith.addf %14, %8 : vector<2x8x8x8xf32>
    %16 = arith.addf %15, %11 : vector<2x8x8x8xf32>
    %c0_23 = arith.constant 0 : index
    %c1 = arith.constant 1 : index
    %c1_24 = arith.constant 1 : index
    %c0_25 = arith.constant 0 : index
    %17 = vector.load %arg4[%c0_23, %c1, %c1_24, %c0_25] : memref<2x10x10x32xf32, #tpu.memory_space<vmem>>, vector<2x8x8x8xf32>
    tpu.vector_store %arg4[%c0_23, %c1, %c1_24, %c0_25], %16 {strides = array<i32>} : memref<2x10x10x32xf32, #tpu.memory_space<vmem>>, vector<2x8x8x8xf32>,
    %cst_26 = arith.constant 0.000000e+00 : f32
    %18 = vector.broadcast %cst_26 : f32 to vector<2x8x8x8xf32>
    %19 = arith.subf %18, %2 : vector<2x8x8x8xf32>
    %20 = arith.subf %19, %5 : vector<2x8x8x8xf32>
    %21 = arith.addf %20, %8 : vector<2x8x8x8xf32>
    %22 = arith.addf %21, %11 : vector<2x8x8x8xf32>
    %c0_27 = arith.constant 0 : index
    %c1_28 = arith.constant 1 : index
    %c1_29 = arith.constant 1 : index
    %c8 = arith.constant 8 : index
    %23 = vector.load %arg4[%c0_27, %c1_28, %c1_29, %c8] : memref<2x10x10x32xf32, #tpu.memory_space<vmem>>, vector<2x8x8x8xf32>
    tpu.vector_store %arg4[%c0_27, %c1_28, %c1_29, %c8], %22 {strides = array<i32>} : memref<2x10x10x32xf32, #tpu.memory_space<vmem>>, vector<2x8x8x8xf32>,
    %cst_30 = arith.constant 0.000000e+00 : f32
    %24 = vector.broadcast %cst_30 : f32 to vector<2x8x8x8xf32>
    %25 = arith.subf %24, %2 : vector<2x8x8x8xf32>
    %26 = arith.addf %25, %5 : vector<2x8x8x8xf32>
    %27 = arith.subf %26, %8 : vector<2x8x8x8xf32>
    %28 = arith.addf %27, %11 : vector<2x8x8x8xf32>
    %c0_31 = arith.constant 0 : index
    %c1_32 = arith.constant 1 : index
    %c1_33 = arith.constant 1 : index
    %c16 = arith.constant 16 : index
    %29 = vector.load %arg4[%c0_31, %c1_32, %c1_33, %c16] : memref<2x10x10x32xf32, #tpu.memory_space<vmem>>, vector<2x8x8x8xf32>
    tpu.vector_store %arg4[%c0_31, %c1_32, %c1_33, %c16], %28 {strides = array<i32>} : memref<2x10x10x32xf32, #tpu.memory_space<vmem>>, vector<2x8x8x8xf32>,
    %30 = arith.subf %2, %5 : vector<2x8x8x8xf32>
    %31 = arith.subf %30, %8 : vector<2x8x8x8xf32>
    %32 = arith.addf %31, %11 : vector<2x8x8x8xf32>
    %c0_34 = arith.constant 0 : index
    %c1_35 = arith.constant 1 : index
    %c1_36 = arith.constant 1 : index
    %c24 = arith.constant 24 : index
    %33 = vector.load %arg4[%c0_34, %c1_35, %c1_36, %c24] : memref<2x10x10x32xf32, #tpu.memory_space<vmem>>, vector<2x8x8x8xf32>
    tpu.vector_store %arg4[%c0_34, %c1_35, %c1_36, %c24], %32 {strides = array<i32>} : memref<2x10x10x32xf32, #tpu.memory_space<vmem>>, vector<2x8x8x8xf32>,
    return
  }
}

module attributes {stable_mosaic.version = 11 : i64} {
  func.func @kernel(%arg0: i32, %arg1: memref<1x10x10x32xf32, #tpu.memory_space<vmem>>, %arg2: memref<9x32x16xf32, #tpu.memory_space<vmem>>, %arg3: memref<1xf32, #tpu.memory_space<smem>>, %arg4: memref<1x10x10x16xf32, #tpu.memory_space<vmem>>) attributes {dimension_semantics = [#tpu.dimension_semantics<parallel>], iteration_bounds = array<i64: 2>, scalar_prefetch = 0 : i64, scratch_operands = 0 : i64, tpu.core_type = #tpu.core_type<tc>, window_params = [{transform_indices = @transform_0, window_bounds = array<i64: 1, 10, 10, 32>}, {pipeline_mode = #tpu.pipeline_mode<synchronous>, transform_indices = @transform_1, window_bounds = array<i64: 9, 32, 16>}, {transform_indices = @transform_2, window_bounds = array<i64: 1>}, {transform_indices = @transform_3, window_bounds = array<i64: 1, 10, 10, 16>}]} {
    %c0 = arith.constant 0 : index
    %c0_0 = arith.constant 0 : index
    %c0_1 = arith.constant 0 : index
    %c0_2 = arith.constant 0 : index
    %0 = vector.load %arg1[%c0, %c0_0, %c0_1, %c0_2] : memref<1x10x10x32xf32, #tpu.memory_space<vmem>>, vector<1x10x10x32xf32>
    %1 = vector.shape_cast %0 : vector<1x10x10x32xf32> to vector<10x10x32xf32>
    %cst = arith.constant 0.000000e+00 : f32
    %2 = vector.broadcast %cst : f32 to vector<64x16xf32>
    %3 = vector.extract_strided_slice %1 {offsets = [0, 0, 0], sizes = [8, 8, 32], strides = [1, 1, 1]} : vector<10x10x32xf32> to vector<8x8x32xf32>
    %4 = vector.shape_cast %3 : vector<8x8x32xf32> to vector<64x32xf32>
    %c0_3 = arith.constant 0 : index
    %c0_4 = arith.constant 0 : index
    %c0_5 = arith.constant 0 : index
    %5 = vector.load %arg2[%c0_3, %c0_4, %c0_5] : memref<9x32x16xf32, #tpu.memory_space<vmem>>, vector<1x32x16xf32>
    %6 = vector.shape_cast %5 : vector<1x32x16xf32> to vector<32x16xf32>
    %cst_6 = arith.constant dense<0.000000e+00> : vector<64x16xf32>
    %7 = tpu.matmul %4, %6, %cst_6 {dimension_numbers = #tpu.dot_dimension_numbers<[1], [0], [0], [1], [0, 0, 1, 1], [], []>} : vector<64x32xf32>, vector<32x16xf32>, vector<64x16xf32> -> vector<64x16xf32>
    %8 = arith.addf %2, %7 : vector<64x16xf32>
    %9 = vector.extract_strided_slice %1 {offsets = [0, 1, 0], sizes = [8, 8, 32], strides = [1, 1, 1]} : vector<10x10x32xf32> to vector<8x8x32xf32>
    %10 = vector.shape_cast %9 : vector<8x8x32xf32> to vector<64x32xf32>
    %c1 = arith.constant 1 : index
    %c0_7 = arith.constant 0 : index
    %c0_8 = arith.constant 0 : index
    %11 = vector.load %arg2[%c1, %c0_7, %c0_8] : memref<9x32x16xf32, #tpu.memory_space<vmem>>, vector<1x32x16xf32>
    %12 = vector.shape_cast %11 : vector<1x32x16xf32> to vector<32x16xf32>
    %cst_9 = arith.constant dense<0.000000e+00> : vector<64x16xf32>
    %13 = tpu.matmul %10, %12, %cst_9 {dimension_numbers = #tpu.dot_dimension_numbers<[1], [0], [0], [1], [0, 0, 1, 1], [], []>} : vector<64x32xf32>, vector<32x16xf32>, vector<64x16xf32> -> vector<64x16xf32>
    %14 = arith.addf %8, %13 : vector<64x16xf32>
    %15 = vector.extract_strided_slice %1 {offsets = [0, 2, 0], sizes = [8, 8, 32], strides = [1, 1, 1]} : vector<10x10x32xf32> to vector<8x8x32xf32>
    %16 = vector.shape_cast %15 : vector<8x8x32xf32> to vector<64x32xf32>
    %c2 = arith.constant 2 : index
    %c0_10 = arith.constant 0 : index
    %c0_11 = arith.constant 0 : index
    %17 = vector.load %arg2[%c2, %c0_10, %c0_11] : memref<9x32x16xf32, #tpu.memory_space<vmem>>, vector<1x32x16xf32>
    %18 = vector.shape_cast %17 : vector<1x32x16xf32> to vector<32x16xf32>
    %cst_12 = arith.constant dense<0.000000e+00> : vector<64x16xf32>
    %19 = tpu.matmul %16, %18, %cst_12 {dimension_numbers = #tpu.dot_dimension_numbers<[1], [0], [0], [1], [0, 0, 1, 1], [], []>} : vector<64x32xf32>, vector<32x16xf32>, vector<64x16xf32> -> vector<64x16xf32>
    %20 = arith.addf %14, %19 : vector<64x16xf32>
    %21 = vector.extract_strided_slice %1 {offsets = [1, 0, 0], sizes = [8, 8, 32], strides = [1, 1, 1]} : vector<10x10x32xf32> to vector<8x8x32xf32>
    %22 = vector.shape_cast %21 : vector<8x8x32xf32> to vector<64x32xf32>
    %c3 = arith.constant 3 : index
    %c0_13 = arith.constant 0 : index
    %c0_14 = arith.constant 0 : index
    %23 = vector.load %arg2[%c3, %c0_13, %c0_14] : memref<9x32x16xf32, #tpu.memory_space<vmem>>, vector<1x32x16xf32>
    %24 = vector.shape_cast %23 : vector<1x32x16xf32> to vector<32x16xf32>
    %cst_15 = arith.constant dense<0.000000e+00> : vector<64x16xf32>
    %25 = tpu.matmul %22, %24, %cst_15 {dimension_numbers = #tpu.dot_dimension_numbers<[1], [0], [0], [1], [0, 0, 1, 1], [], []>} : vector<64x32xf32>, vector<32x16xf32>, vector<64x16xf32> -> vector<64x16xf32>
    %26 = arith.addf %20, %25 : vector<64x16xf32>
    %27 = vector.extract_strided_slice %1 {offsets = [1, 1, 0], sizes = [8, 8, 32], strides = [1, 1, 1]} : vector<10x10x32xf32> to vector<8x8x32xf32>
    %28 = vector.shape_cast %27 : vector<8x8x32xf32> to vector<64x32xf32>
    %c4 = arith.constant 4 : index
    %c0_16 = arith.constant 0 : index
    %c0_17 = arith.constant 0 : index
    %29 = vector.load %arg2[%c4, %c0_16, %c0_17] : memref<9x32x16xf32, #tpu.memory_space<vmem>>, vector<1x32x16xf32>
    %30 = vector.shape_cast %29 : vector<1x32x16xf32> to vector<32x16xf32>
    %cst_18 = arith.constant dense<0.000000e+00> : vector<64x16xf32>
    %31 = tpu.matmul %28, %30, %cst_18 {dimension_numbers = #tpu.dot_dimension_numbers<[1], [0], [0], [1], [0, 0, 1, 1], [], []>} : vector<64x32xf32>, vector<32x16xf32>, vector<64x16xf32> -> vector<64x16xf32>
    %32 = arith.addf %26, %31 : vector<64x16xf32>
    %33 = vector.extract_strided_slice %1 {offsets = [1, 2, 0], sizes = [8, 8, 32], strides = [1, 1, 1]} : vector<10x10x32xf32> to vector<8x8x32xf32>
    %34 = vector.shape_cast %33 : vector<8x8x32xf32> to vector<64x32xf32>
    %c5 = arith.constant 5 : index
    %c0_19 = arith.constant 0 : index
    %c0_20 = arith.constant 0 : index
    %35 = vector.load %arg2[%c5, %c0_19, %c0_20] : memref<9x32x16xf32, #tpu.memory_space<vmem>>, vector<1x32x16xf32>
    %36 = vector.shape_cast %35 : vector<1x32x16xf32> to vector<32x16xf32>
    %cst_21 = arith.constant dense<0.000000e+00> : vector<64x16xf32>
    %37 = tpu.matmul %34, %36, %cst_21 {dimension_numbers = #tpu.dot_dimension_numbers<[1], [0], [0], [1], [0, 0, 1, 1], [], []>} : vector<64x32xf32>, vector<32x16xf32>, vector<64x16xf32> -> vector<64x16xf32>
    %38 = arith.addf %32, %37 : vector<64x16xf32>
    %39 = vector.extract_strided_slice %1 {offsets = [2, 0, 0], sizes = [8, 8, 32], strides = [1, 1, 1]} : vector<10x10x32xf32> to vector<8x8x32xf32>
    %40 = vector.shape_cast %39 : vector<8x8x32xf32> to vector<64x32xf32>
    %c6 = arith.constant 6 : index
    %c0_22 = arith.constant 0 : index
    %c0_23 = arith.constant 0 : index
    %41 = vector.load %arg2[%c6, %c0_22, %c0_23] : memref<9x32x16xf32, #tpu.memory_space<vmem>>, vector<1x32x16xf32>
    %42 = vector.shape_cast %41 : vector<1x32x16xf32> to vector<32x16xf32>
    %cst_24 = arith.constant dense<0.000000e+00> : vector<64x16xf32>
    %43 = tpu.matmul %40, %42, %cst_24 {dimension_numbers = #tpu.dot_dimension_numbers<[1], [0], [0], [1], [0, 0, 1, 1], [], []>} : vector<64x32xf32>, vector<32x16xf32>, vector<64x16xf32> -> vector<64x16xf32>
    %44 = arith.addf %38, %43 : vector<64x16xf32>
    %45 = vector.extract_strided_slice %1 {offsets = [2, 1, 0], sizes = [8, 8, 32], strides = [1, 1, 1]} : vector<10x10x32xf32> to vector<8x8x32xf32>
    %46 = vector.shape_cast %45 : vector<8x8x32xf32> to vector<64x32xf32>
    %c7 = arith.constant 7 : index
    %c0_25 = arith.constant 0 : index
    %c0_26 = arith.constant 0 : index
    %47 = vector.load %arg2[%c7, %c0_25, %c0_26] : memref<9x32x16xf32, #tpu.memory_space<vmem>>, vector<1x32x16xf32>
    %48 = vector.shape_cast %47 : vector<1x32x16xf32> to vector<32x16xf32>
    %cst_27 = arith.constant dense<0.000000e+00> : vector<64x16xf32>
    %49 = tpu.matmul %46, %48, %cst_27 {dimension_numbers = #tpu.dot_dimension_numbers<[1], [0], [0], [1], [0, 0, 1, 1], [], []>} : vector<64x32xf32>, vector<32x16xf32>, vector<64x16xf32> -> vector<64x16xf32>
    %50 = arith.addf %44, %49 : vector<64x16xf32>
    %51 = vector.extract_strided_slice %1 {offsets = [2, 2, 0], sizes = [8, 8, 32], strides = [1, 1, 1]} : vector<10x10x32xf32> to vector<8x8x32xf32>
    %52 = vector.shape_cast %51 : vector<8x8x32xf32> to vector<64x32xf32>
    %c8 = arith.constant 8 : index
    %c0_28 = arith.constant 0 : index
    %c0_29 = arith.constant 0 : index
    %53 = vector.load %arg2[%c8, %c0_28, %c0_29] : memref<9x32x16xf32, #tpu.memory_space<vmem>>, vector<1x32x16xf32>
    %54 = vector.shape_cast %53 : vector<1x32x16xf32> to vector<32x16xf32>
    %cst_30 = arith.constant dense<0.000000e+00> : vector<64x16xf32>
    %55 = tpu.matmul %52, %54, %cst_30 {dimension_numbers = #tpu.dot_dimension_numbers<[1], [0], [0], [1], [0, 0, 1, 1], [], []>} : vector<64x32xf32>, vector<32x16xf32>, vector<64x16xf32> -> vector<64x16xf32>
    %56 = arith.addf %50, %55 : vector<64x16xf32>
    %c0_31 = arith.constant 0 : index
    %57 = memref.load %arg3[%c0_31] : memref<1xf32, #tpu.memory_space<smem>>
    %cst_32 = arith.constant 0.000000e+00 : f32
    %58 = vector.broadcast %cst_32 : f32 to vector<64x16xf32>
    %59 = arith.cmpf oge, %56, %58 : vector<64x16xf32>
    %60 = vector.broadcast %57 : f32 to vector<64x16xf32>
    %61 = arith.mulf %60, %56 : vector<64x16xf32>
    %62 = arith.select %59, %56, %61 : vector<64x16xi1>, vector<64x16xf32>
    %63 = vector.shape_cast %62 : vector<64x16xf32> to vector<8x8x16xf32>
    %cst_33 = arith.constant 0.000000e+00 : f32
    %64 = vector.broadcast %cst_33 : f32 to vector<1x10x10x16xf32>
    %c0_34 = arith.constant 0 : index
    %c0_35 = arith.constant 0 : index
    %c0_36 = arith.constant 0 : index
    %c0_37 = arith.constant 0 : index
    %65 = vector.load %arg4[%c0_34, %c0_35, %c0_36, %c0_37] : memref<1x10x10x16xf32, #tpu.memory_space<vmem>>, vector<1x10x10x16xf32>
    tpu.vector_store %arg4[%c0_34, %c0_35, %c0_36, %c0_37], %64 {strides = array<i32>} : memref<1x10x10x16xf32, #tpu.memory_space<vmem>>, vector<1x10x10x16xf32>,
    %c0_38 = arith.constant 0 : index
    %c1_39 = arith.constant 1 : index
    %c1_40 = arith.constant 1 : index
    %c0_41 = arith.constant 0 : index
    %66 = vector.load %arg4[%c0_38, %c1_39, %c1_40, %c0_41] : memref<1x10x10x16xf32, #tpu.memory_space<vmem>>, vector<1x8x8x16xf32>
    %67 = vector.shape_cast %66 : vector<1x8x8x16xf32> to vector<8x8x16xf32>
    %68 = vector.shape_cast %63 : vector<8x8x16xf32> to vector<1x8x8x16xf32>
    tpu.vector_store %arg4[%c0_38, %c1_39, %c1_40, %c0_41], %68 {strides = array<i32>} : memref<1x10x10x16xf32, #tpu.memory_space<vmem>>, vector<1x8x8x16xf32>,
    return
  }
  func.func @transform_0(%arg0: i32) -> (i32, i32, i32, i32) {
    %c0_i32 = arith.constant 0 : i32
    %c0_i32_0 = arith.constant 0 : i32
    %c0_i32_1 = arith.constant 0 : i32
    %c0_i32_2 = arith.constant 0 : i32
    return %arg0, %c0_i32, %c0_i32_0, %c0_i32_1 : i32, i32, i32, i32
  }
  func.func @transform_1(%arg0: i32) -> (i32, i32, i32) {
    %c0_i32 = arith.constant 0 : i32
    %c0_i32_0 = arith.constant 0 : i32
    %c0_i32_1 = arith.constant 0 : i32
    %c0_i32_2 = arith.constant 0 : i32
    return %c0_i32, %c0_i32_0, %c0_i32_1 : i32, i32, i32
  }
  func.func @transform_2(%arg0: i32) -> i32 {
    %c0_i32 = arith.constant 0 : i32
    %c0_i32_0 = arith.constant 0 : i32
    return %c0_i32 : i32
  }
  func.func @transform_3(%arg0: i32) -> (i32, i32, i32, i32) {
    %c0_i32 = arith.constant 0 : i32
    %c0_i32_0 = arith.constant 0 : i32
    %c0_i32_1 = arith.constant 0 : i32
    %c0_i32_2 = arith.constant 0 : i32
    return %arg0, %c0_i32, %c0_i32_0, %c0_i32_1 : i32, i32, i32, i32
  }
}

module attributes {stable_mosaic.version = 11 : i64} {
  func.func @kernel(%arg0: i32, %arg1: memref<1x10x10x16xf32, #tpu.memory_space<vmem>>, %arg2: memref<9x16x32xf32, #tpu.memory_space<vmem>>, %arg3: memref<1x8x8x32xf32, #tpu.memory_space<vmem>>, %arg4: memref<1x1x32xf32, #tpu.memory_space<vmem>>) attributes {dimension_semantics = [#tpu.dimension_semantics<parallel>], iteration_bounds = array<i64: 2>, scalar_prefetch = 0 : i64, scratch_operands = 0 : i64, tpu.core_type = #tpu.core_type<tc>, window_params = [{transform_indices = @transform_0, window_bounds = array<i64: 1, 10, 10, 16>}, {pipeline_mode = #tpu.pipeline_mode<synchronous>, transform_indices = @transform_1, window_bounds = array<i64: 9, 16, 32>}, {transform_indices = @transform_2, window_bounds = array<i64: 1, 8, 8, 32>}, {transform_indices = @transform_3, window_bounds = array<i64: 1, 1, 32>}]} {
    %c0 = arith.constant 0 : index
    %c0_0 = arith.constant 0 : index
    %c0_1 = arith.constant 0 : index
    %c0_2 = arith.constant 0 : index
    %0 = vector.load %arg1[%c0, %c0_0, %c0_1, %c0_2] : memref<1x10x10x16xf32, #tpu.memory_space<vmem>>, vector<1x10x10x16xf32>
    %1 = vector.shape_cast %0 : vector<1x10x10x16xf32> to vector<10x10x16xf32>
    %cst = arith.constant 0.000000e+00 : f32
    %2 = vector.broadcast %cst : f32 to vector<64x32xf32>
    %3 = vector.extract_strided_slice %1 {offsets = [0, 0, 0], sizes = [8, 8, 16], strides = [1, 1, 1]} : vector<10x10x16xf32> to vector<8x8x16xf32>
    %4 = vector.shape_cast %3 : vector<8x8x16xf32> to vector<64x16xf32>
    %c0_3 = arith.constant 0 : index
    %c0_4 = arith.constant 0 : index
    %c0_5 = arith.constant 0 : index
    %5 = vector.load %arg2[%c0_3, %c0_4, %c0_5] : memref<9x16x32xf32, #tpu.memory_space<vmem>>, vector<1x16x32xf32>
    %6 = vector.shape_cast %5 : vector<1x16x32xf32> to vector<16x32xf32>
    %cst_6 = arith.constant dense<0.000000e+00> : vector<64x32xf32>
    %7 = tpu.matmul %4, %6, %cst_6 {dimension_numbers = #tpu.dot_dimension_numbers<[1], [0], [0], [1], [0, 0, 1, 1], [], []>} : vector<64x16xf32>, vector<16x32xf32>, vector<64x32xf32> -> vector<64x32xf32>
    %8 = arith.addf %2, %7 : vector<64x32xf32>
    %9 = vector.extract_strided_slice %1 {offsets = [0, 1, 0], sizes = [8, 8, 16], strides = [1, 1, 1]} : vector<10x10x16xf32> to vector<8x8x16xf32>
    %10 = vector.shape_cast %9 : vector<8x8x16xf32> to vector<64x16xf32>
    %c1 = arith.constant 1 : index
    %c0_7 = arith.constant 0 : index
    %c0_8 = arith.constant 0 : index
    %11 = vector.load %arg2[%c1, %c0_7, %c0_8] : memref<9x16x32xf32, #tpu.memory_space<vmem>>, vector<1x16x32xf32>
    %12 = vector.shape_cast %11 : vector<1x16x32xf32> to vector<16x32xf32>
    %cst_9 = arith.constant dense<0.000000e+00> : vector<64x32xf32>
    %13 = tpu.matmul %10, %12, %cst_9 {dimension_numbers = #tpu.dot_dimension_numbers<[1], [0], [0], [1], [0, 0, 1, 1], [], []>} : vector<64x16xf32>, vector<16x32xf32>, vector<64x32xf32> -> vector<64x32xf32>
    %14 = arith.addf %8, %13 : vector<64x32xf32>
    %15 = vector.extract_strided_slice %1 {offsets = [0, 2, 0], sizes = [8, 8, 16], strides = [1, 1, 1]} : vector<10x10x16xf32> to vector<8x8x16xf32>
    %16 = vector.shape_cast %15 : vector<8x8x16xf32> to vector<64x16xf32>
    %c2 = arith.constant 2 : index
    %c0_10 = arith.constant 0 : index
    %c0_11 = arith.constant 0 : index
    %17 = vector.load %arg2[%c2, %c0_10, %c0_11] : memref<9x16x32xf32, #tpu.memory_space<vmem>>, vector<1x16x32xf32>
    %18 = vector.shape_cast %17 : vector<1x16x32xf32> to vector<16x32xf32>
    %cst_12 = arith.constant dense<0.000000e+00> : vector<64x32xf32>
    %19 = tpu.matmul %16, %18, %cst_12 {dimension_numbers = #tpu.dot_dimension_numbers<[1], [0], [0], [1], [0, 0, 1, 1], [], []>} : vector<64x16xf32>, vector<16x32xf32>, vector<64x32xf32> -> vector<64x32xf32>
    %20 = arith.addf %14, %19 : vector<64x32xf32>
    %21 = vector.extract_strided_slice %1 {offsets = [1, 0, 0], sizes = [8, 8, 16], strides = [1, 1, 1]} : vector<10x10x16xf32> to vector<8x8x16xf32>
    %22 = vector.shape_cast %21 : vector<8x8x16xf32> to vector<64x16xf32>
    %c3 = arith.constant 3 : index
    %c0_13 = arith.constant 0 : index
    %c0_14 = arith.constant 0 : index
    %23 = vector.load %arg2[%c3, %c0_13, %c0_14] : memref<9x16x32xf32, #tpu.memory_space<vmem>>, vector<1x16x32xf32>
    %24 = vector.shape_cast %23 : vector<1x16x32xf32> to vector<16x32xf32>
    %cst_15 = arith.constant dense<0.000000e+00> : vector<64x32xf32>
    %25 = tpu.matmul %22, %24, %cst_15 {dimension_numbers = #tpu.dot_dimension_numbers<[1], [0], [0], [1], [0, 0, 1, 1], [], []>} : vector<64x16xf32>, vector<16x32xf32>, vector<64x32xf32> -> vector<64x32xf32>
    %26 = arith.addf %20, %25 : vector<64x32xf32>
    %27 = vector.extract_strided_slice %1 {offsets = [1, 1, 0], sizes = [8, 8, 16], strides = [1, 1, 1]} : vector<10x10x16xf32> to vector<8x8x16xf32>
    %28 = vector.shape_cast %27 : vector<8x8x16xf32> to vector<64x16xf32>
    %c4 = arith.constant 4 : index
    %c0_16 = arith.constant 0 : index
    %c0_17 = arith.constant 0 : index
    %29 = vector.load %arg2[%c4, %c0_16, %c0_17] : memref<9x16x32xf32, #tpu.memory_space<vmem>>, vector<1x16x32xf32>
    %30 = vector.shape_cast %29 : vector<1x16x32xf32> to vector<16x32xf32>
    %cst_18 = arith.constant dense<0.000000e+00> : vector<64x32xf32>
    %31 = tpu.matmul %28, %30, %cst_18 {dimension_numbers = #tpu.dot_dimension_numbers<[1], [0], [0], [1], [0, 0, 1, 1], [], []>} : vector<64x16xf32>, vector<16x32xf32>, vector<64x32xf32> -> vector<64x32xf32>
    %32 = arith.addf %26, %31 : vector<64x32xf32>
    %33 = vector.extract_strided_slice %1 {offsets = [1, 2, 0], sizes = [8, 8, 16], strides = [1, 1, 1]} : vector<10x10x16xf32> to vector<8x8x16xf32>
    %34 = vector.shape_cast %33 : vector<8x8x16xf32> to vector<64x16xf32>
    %c5 = arith.constant 5 : index
    %c0_19 = arith.constant 0 : index
    %c0_20 = arith.constant 0 : index
    %35 = vector.load %arg2[%c5, %c0_19, %c0_20] : memref<9x16x32xf32, #tpu.memory_space<vmem>>, vector<1x16x32xf32>
    %36 = vector.shape_cast %35 : vector<1x16x32xf32> to vector<16x32xf32>
    %cst_21 = arith.constant dense<0.000000e+00> : vector<64x32xf32>
    %37 = tpu.matmul %34, %36, %cst_21 {dimension_numbers = #tpu.dot_dimension_numbers<[1], [0], [0], [1], [0, 0, 1, 1], [], []>} : vector<64x16xf32>, vector<16x32xf32>, vector<64x32xf32> -> vector<64x32xf32>
    %38 = arith.addf %32, %37 : vector<64x32xf32>
    %39 = vector.extract_strided_slice %1 {offsets = [2, 0, 0], sizes = [8, 8, 16], strides = [1, 1, 1]} : vector<10x10x16xf32> to vector<8x8x16xf32>
    %40 = vector.shape_cast %39 : vector<8x8x16xf32> to vector<64x16xf32>
    %c6 = arith.constant 6 : index
    %c0_22 = arith.constant 0 : index
    %c0_23 = arith.constant 0 : index
    %41 = vector.load %arg2[%c6, %c0_22, %c0_23] : memref<9x16x32xf32, #tpu.memory_space<vmem>>, vector<1x16x32xf32>
    %42 = vector.shape_cast %41 : vector<1x16x32xf32> to vector<16x32xf32>
    %cst_24 = arith.constant dense<0.000000e+00> : vector<64x32xf32>
    %43 = tpu.matmul %40, %42, %cst_24 {dimension_numbers = #tpu.dot_dimension_numbers<[1], [0], [0], [1], [0, 0, 1, 1], [], []>} : vector<64x16xf32>, vector<16x32xf32>, vector<64x32xf32> -> vector<64x32xf32>
    %44 = arith.addf %38, %43 : vector<64x32xf32>
    %45 = vector.extract_strided_slice %1 {offsets = [2, 1, 0], sizes = [8, 8, 16], strides = [1, 1, 1]} : vector<10x10x16xf32> to vector<8x8x16xf32>
    %46 = vector.shape_cast %45 : vector<8x8x16xf32> to vector<64x16xf32>
    %c7 = arith.constant 7 : index
    %c0_25 = arith.constant 0 : index
    %c0_26 = arith.constant 0 : index
    %47 = vector.load %arg2[%c7, %c0_25, %c0_26] : memref<9x16x32xf32, #tpu.memory_space<vmem>>, vector<1x16x32xf32>
    %48 = vector.shape_cast %47 : vector<1x16x32xf32> to vector<16x32xf32>
    %cst_27 = arith.constant dense<0.000000e+00> : vector<64x32xf32>
    %49 = tpu.matmul %46, %48, %cst_27 {dimension_numbers = #tpu.dot_dimension_numbers<[1], [0], [0], [1], [0, 0, 1, 1], [], []>} : vector<64x16xf32>, vector<16x32xf32>, vector<64x32xf32> -> vector<64x32xf32>
    %50 = arith.addf %44, %49 : vector<64x32xf32>
    %51 = vector.extract_strided_slice %1 {offsets = [2, 2, 0], sizes = [8, 8, 16], strides = [1, 1, 1]} : vector<10x10x16xf32> to vector<8x8x16xf32>
    %52 = vector.shape_cast %51 : vector<8x8x16xf32> to vector<64x16xf32>
    %c8 = arith.constant 8 : index
    %c0_28 = arith.constant 0 : index
    %c0_29 = arith.constant 0 : index
    %53 = vector.load %arg2[%c8, %c0_28, %c0_29] : memref<9x16x32xf32, #tpu.memory_space<vmem>>, vector<1x16x32xf32>
    %54 = vector.shape_cast %53 : vector<1x16x32xf32> to vector<16x32xf32>
    %cst_30 = arith.constant dense<0.000000e+00> : vector<64x32xf32>
    %55 = tpu.matmul %52, %54, %cst_30 {dimension_numbers = #tpu.dot_dimension_numbers<[1], [0], [0], [1], [0, 0, 1, 1], [], []>} : vector<64x16xf32>, vector<16x32xf32>, vector<64x32xf32> -> vector<64x32xf32>
    %56 = arith.addf %50, %55 : vector<64x32xf32>
    %cst_31 = arith.constant dense<0.000000e+00> : vector<32xf32>
    %57 = vector.multi_reduction <add>, %56, %cst_31 [0] : vector<64x32xf32> to vector<32xf32>
    %58 = vector.shape_cast %57 : vector<32xf32> to vector<1x32xf32>
    %cst_32 = arith.constant 6.400000e+01 : f32
    %59 = vector.broadcast %cst_32 : f32 to vector<1x32xf32>
    %60 = arith.divf %58, %59 : vector<1x32xf32>
    %c0_33 = arith.constant 0 : index
    %c0_34 = arith.constant 0 : index
    %c0_35 = arith.constant 0 : index
    %61 = vector.load %arg4[%c0_33, %c0_34, %c0_35] : memref<1x1x32xf32, #tpu.memory_space<vmem>>, vector<1x1x32xf32>
    %62 = vector.shape_cast %61 : vector<1x1x32xf32> to vector<1x32xf32>
    %63 = vector.shape_cast %60 : vector<1x32xf32> to vector<1x1x32xf32>
    tpu.vector_store %arg4[%c0_33, %c0_34, %c0_35], %63 {strides = array<i32>} : memref<1x1x32xf32, #tpu.memory_space<vmem>>, vector<1x1x32xf32>,
    %64 = vector.shape_cast %56 : vector<64x32xf32> to vector<8x8x32xf32>
    %c0_36 = arith.constant 0 : index
    %c0_37 = arith.constant 0 : index
    %c0_38 = arith.constant 0 : index
    %c0_39 = arith.constant 0 : index
    %65 = vector.load %arg3[%c0_36, %c0_37, %c0_38, %c0_39] : memref<1x8x8x32xf32, #tpu.memory_space<vmem>>, vector<1x8x8x32xf32>
    %66 = vector.shape_cast %65 : vector<1x8x8x32xf32> to vector<8x8x32xf32>
    %67 = vector.shape_cast %64 : vector<8x8x32xf32> to vector<1x8x8x32xf32>
    tpu.vector_store %arg3[%c0_36, %c0_37, %c0_38, %c0_39], %67 {strides = array<i32>} : memref<1x8x8x32xf32, #tpu.memory_space<vmem>>, vector<1x8x8x32xf32>,
    return
  }
  func.func @transform_0(%arg0: i32) -> (i32, i32, i32, i32) {
    %c0_i32 = arith.constant 0 : i32
    %c0_i32_0 = arith.constant 0 : i32
    %c0_i32_1 = arith.constant 0 : i32
    %c0_i32_2 = arith.constant 0 : i32
    return %arg0, %c0_i32, %c0_i32_0, %c0_i32_1 : i32, i32, i32, i32
  }
  func.func @transform_1(%arg0: i32) -> (i32, i32, i32) {
    %c0_i32 = arith.constant 0 : i32
    %c0_i32_0 = arith.constant 0 : i32
    %c0_i32_1 = arith.constant 0 : i32
    %c0_i32_2 = arith.constant 0 : i32
    return %c0_i32, %c0_i32_0, %c0_i32_1 : i32, i32, i32
  }
  func.func @transform_2(%arg0: i32) -> (i32, i32, i32, i32) {
    %c0_i32 = arith.constant 0 : i32
    %c0_i32_0 = arith.constant 0 : i32
    %c0_i32_1 = arith.constant 0 : i32
    %c0_i32_2 = arith.constant 0 : i32
    return %arg0, %c0_i32, %c0_i32_0, %c0_i32_1 : i32, i32, i32, i32
  }
  func.func @transform_3(%arg0: i32) -> (i32, i32, i32) {
    %c0_i32 = arith.constant 0 : i32
    %c0_i32_0 = arith.constant 0 : i32
    %c0_i32_1 = arith.constant 0 : i32
    return %arg0, %c0_i32, %c0_i32_0 : i32, i32, i32
  }
}

module attributes {stable_mosaic.version = 11 : i64} {
  func.func @_ca_kernel(%arg0: memref<2x32xf32, #tpu.memory_space<vmem>>, %arg1: memref<32x2xf32, #tpu.memory_space<vmem>>, %arg2: memref<2x32xf32, #tpu.memory_space<vmem>>, %arg3: memref<2x32xf32, #tpu.memory_space<vmem>>) attributes {dimension_semantics = [], scalar_prefetch = 0 : i64, scratch_operands = 0 : i64, tpu.core_type = #tpu.core_type<tc>} {
    %c0 = arith.constant 0 : index
    %c0_0 = arith.constant 0 : index
    %0 = vector.load %arg0[%c0, %c0_0] : memref<2x32xf32, #tpu.memory_space<vmem>>, vector<2x32xf32>
    %c0_1 = arith.constant 0 : index
    %c0_2 = arith.constant 0 : index
    %1 = vector.load %arg1[%c0_1, %c0_2] : memref<32x2xf32, #tpu.memory_space<vmem>>, vector<32x2xf32>
    %cst = arith.constant dense<0.000000e+00> : vector<2x2xf32>
    %2 = tpu.matmul %0, %1, %cst {dimension_numbers = #tpu.dot_dimension_numbers<[1], [0], [0], [1], [0, 0, 1, 1], [], []>} : vector<2x32xf32>, vector<32x2xf32>, vector<2x2xf32> -> vector<2x2xf32>
    %cst_3 = arith.constant 0.000000e+00 : f32
    %3 = vector.broadcast %cst_3 : f32 to vector<2x2xf32>
    %4 = arith.maximumf %2, %3 : vector<2x2xf32>
    %c0_4 = arith.constant 0 : index
    %c0_5 = arith.constant 0 : index
    %5 = vector.load %arg2[%c0_4, %c0_5] : memref<2x32xf32, #tpu.memory_space<vmem>>, vector<2x32xf32>
    %cst_6 = arith.constant dense<0.000000e+00> : vector<2x32xf32>
    %6 = tpu.matmul %4, %5, %cst_6 {dimension_numbers = #tpu.dot_dimension_numbers<[1], [0], [0], [1], [0, 0, 1, 1], [], []>} : vector<2x2xf32>, vector<2x32xf32>, vector<2x32xf32> -> vector<2x32xf32>
    %7 = arith.negf %6 : vector<2x32xf32>
    %8 = math.exp %7 : vector<2x32xf32>
    %cst_7 = arith.constant 1.000000e+00 : f32
    %9 = vector.broadcast %cst_7 : f32 to vector<2x32xf32>
    %10 = arith.addf %9, %8 : vector<2x32xf32>
    %11 = arith.divf %9, %10 : vector<2x32xf32>
    %c0_8 = arith.constant 0 : index
    %c0_9 = arith.constant 0 : index
    %12 = vector.load %arg3[%c0_8, %c0_9] : memref<2x32xf32, #tpu.memory_space<vmem>>, vector<2x32xf32>
    tpu.vector_store %arg3[%c0_8, %c0_9], %11 {strides = array<i32>} : memref<2x32xf32, #tpu.memory_space<vmem>>, vector<2x32xf32>,
    return
  }
}

module attributes {stable_mosaic.version = 11 : i64} {
  func.func @kernel(%arg0: i32, %arg1: memref<1x8x8x32xf32, #tpu.memory_space<vmem>>, %arg2: memref<1x1x32xf32, #tpu.memory_space<vmem>>, %arg3: memref<1x10x10x32xf32, #tpu.memory_space<vmem>>, %arg4: memref<50xf32, #tpu.memory_space<smem>>, %arg5: memref<32x32xf32, #tpu.memory_space<vmem>>, %arg6: memref<32x32xf32, #tpu.memory_space<vmem>>, %arg7: memref<1x8x8x8xf32, #tpu.memory_space<vmem>>, %arg8: memref<1x8x8x8xf32, #tpu.memory_space<vmem>>, %arg9: memref<1x8x8x8xf32, #tpu.memory_space<vmem>>, %arg10: memref<1x8x8x8xf32, #tpu.memory_space<vmem>>, %arg11: memref<2x12x12x1xf32, #tpu.memory_space<vmem>>) attributes {dimension_semantics = [#tpu.dimension_semantics<parallel>], iteration_bounds = array<i64: 2>, scalar_prefetch = 0 : i64, scratch_operands = 1 : i64, tpu.core_type = #tpu.core_type<tc>, window_params = [{transform_indices = @transform_0, window_bounds = array<i64: 1, 8, 8, 32>}, {transform_indices = @transform_1, window_bounds = array<i64: 1, 1, 32>}, {transform_indices = @transform_2, window_bounds = array<i64: 1, 10, 10, 32>}, {transform_indices = @transform_3, window_bounds = array<i64: 50>}, {pipeline_mode = #tpu.pipeline_mode<synchronous>, transform_indices = @transform_4, window_bounds = array<i64: 32, 32>}, {pipeline_mode = #tpu.pipeline_mode<synchronous>, transform_indices = @transform_5, window_bounds = array<i64: 32, 32>}, {transform_indices = @transform_6, window_bounds = array<i64: 1, 8, 8, 8>}, {transform_indices = @transform_7, window_bounds = array<i64: 1, 8, 8, 8>}, {transform_indices = @transform_8, window_bounds = array<i64: 1, 8, 8, 8>}, {transform_indices = @transform_9, window_bounds = array<i64: 1, 8, 8, 8>}]} {
    %c0 = arith.constant 0 : index
    %c0_0 = arith.constant 0 : index
    %c0_1 = arith.constant 0 : index
    %c0_2 = arith.constant 0 : index
    %0 = vector.load %arg1[%c0, %c0_0, %c0_1, %c0_2] : memref<1x8x8x32xf32, #tpu.memory_space<vmem>>, vector<1x8x8x32xf32>
    %1 = vector.shape_cast %0 : vector<1x8x8x32xf32> to vector<8x8x32xf32>
    %cst = arith.constant 0.000000e+00 : f32
    %2 = vector.broadcast %cst : f32 to vector<2x12x12x1xf32>
    %c0_3 = arith.constant 0 : index
    %c0_4 = arith.constant 0 : index
    %c0_5 = arith.constant 0 : index
    %c0_6 = arith.constant 0 : index
    %3 = vector.load %arg11[%c0_3, %c0_4, %c0_5, %c0_6] : memref<2x12x12x1xf32, #tpu.memory_space<vmem>>, vector<2x12x12x1xf32>
    tpu.vector_store %arg11[%c0_3, %c0_4, %c0_5, %c0_6], %2 {strides = array<i32>} : memref<2x12x12x1xf32, #tpu.memory_space<vmem>>, vector<2x12x12x1xf32>,
    %cst_7 = arith.constant dense<0xFF800000> : vector<8x8xf32>
    %4 = vector.multi_reduction <maximumf>, %1, %cst_7 [2] : vector<8x8x32xf32> to vector<8x8xf32>
    %5 = vector.shape_cast %4 : vector<8x8xf32> to vector<8x8x1xf32>
    %c0_8 = arith.constant 0 : index
    %c2 = arith.constant 2 : index
    %c2_9 = arith.constant 2 : index
    %c0_10 = arith.constant 0 : index
    %6 = vector.load %arg11[%c0_8, %c2, %c2_9, %c0_10] : memref<2x12x12x1xf32, #tpu.memory_space<vmem>>, vector<1x8x8x1xf32>
    %7 = vector.shape_cast %6 : vector<1x8x8x1xf32> to vector<8x8x1xf32>
    %8 = vector.shape_cast %5 : vector<8x8x1xf32> to vector<1x8x8x1xf32>
    tpu.vector_store %arg11[%c0_8, %c2, %c2_9, %c0_10], %8 {strides = array<i32>} : memref<2x12x12x1xf32, #tpu.memory_space<vmem>>, vector<1x8x8x1xf32>,
    %cst_11 = arith.constant dense<0.000000e+00> : vector<8x8xf32>
    %9 = vector.multi_reduction <add>, %1, %cst_11 [2] : vector<8x8x32xf32> to vector<8x8xf32>
    %10 = vector.shape_cast %9 : vector<8x8xf32> to vector<8x8x1xf32>
    %cst_12 = arith.constant 3.200000e+01 : f32
    %11 = vector.broadcast %cst_12 : f32 to vector<8x8x1xf32>
    %12 = arith.divf %10, %11 : vector<8x8x1xf32>
    %c1 = arith.constant 1 : index
    %c2_13 = arith.constant 2 : index
    %c2_14 = arith.constant 2 : index
    %c0_15 = arith.constant 0 : index
    %13 = vector.load %arg11[%c1, %c2_13, %c2_14, %c0_15] : memref<2x12x12x1xf32, #tpu.memory_space<vmem>>, vector<1x8x8x1xf32>
    %14 = vector.shape_cast %13 : vector<1x8x8x1xf32> to vector<8x8x1xf32>
    %15 = vector.shape_cast %12 : vector<8x8x1xf32> to vector<1x8x8x1xf32>
    tpu.vector_store %arg11[%c1, %c2_13, %c2_14, %c0_15], %15 {strides = array<i32>} : memref<2x12x12x1xf32, #tpu.memory_space<vmem>>, vector<1x8x8x1xf32>,
    %c0_16 = arith.constant 0 : index
    %c0_17 = arith.constant 0 : index
    %c0_18 = arith.constant 0 : index
    %c0_19 = arith.constant 0 : index
    %16 = vector.load %arg11[%c0_16, %c0_17, %c0_18, %c0_19] : memref<2x12x12x1xf32, #tpu.memory_space<vmem>>, vector<2x12x12x1xf32>
    %cst_20 = arith.constant 0.000000e+00 : f32
    %17 = vector.broadcast %cst_20 : f32 to vector<8x8x1xf32>
    %c0_21 = arith.constant 0 : index
    %18 = memref.load %arg4[%c0_21] : memref<50xf32, #tpu.memory_space<smem>>
    %19 = vector.extract_strided_slice %16 {offsets = [0, 0, 0, 0], sizes = [1, 8, 8, 1], strides = [1, 1, 1, 1]} : vector<2x12x12x1xf32> to vector<1x8x8x1xf32>
    %20 = vector.shape_cast %19 : vector<1x8x8x1xf32> to vector<8x8x1xf32>
    %21 = vector.broadcast %18 : f32 to vector<8x8x1xf32>
    %22 = arith.mulf %21, %20 : vector<8x8x1xf32>
    %23 = arith.addf %17, %22 : vector<8x8x1xf32>
    %c1_22 = arith.constant 1 : index
    %24 = memref.load %arg4[%c1_22] : memref<50xf32, #tpu.memory_space<smem>>
    %25 = vector.extract_strided_slice %16 {offsets = [0, 0, 1, 0], sizes = [1, 8, 8, 1], strides = [1, 1, 1, 1]} : vector<2x12x12x1xf32> to vector<1x8x8x1xf32>
    %26 = vector.shape_cast %25 : vector<1x8x8x1xf32> to vector<8x8x1xf32>
    %27 = vector.broadcast %24 : f32 to vector<8x8x1xf32>
    %28 = arith.mulf %27, %26 : vector<8x8x1xf32>
    %29 = arith.addf %23, %28 : vector<8x8x1xf32>
    %c2_23 = arith.constant 2 : index
    %30 = memref.load %arg4[%c2_23] : memref<50xf32, #tpu.memory_space<smem>>
    %31 = vector.extract_strided_slice %16 {offsets = [0, 0, 2, 0], sizes = [1, 8, 8, 1], strides = [1, 1, 1, 1]} : vector<2x12x12x1xf32> to vector<1x8x8x1xf32>
    %32 = vector.shape_cast %31 : vector<1x8x8x1xf32> to vector<8x8x1xf32>
    %33 = vector.broadcast %30 : f32 to vector<8x8x1xf32>
    %34 = arith.mulf %33, %32 : vector<8x8x1xf32>
    %35 = arith.addf %29, %34 : vector<8x8x1xf32>
    %c3 = arith.constant 3 : index
    %36 = memref.load %arg4[%c3] : memref<50xf32, #tpu.memory_space<smem>>
    %37 = vector.extract_strided_slice %16 {offsets = [0, 0, 3, 0], sizes = [1, 8, 8, 1], strides = [1, 1, 1, 1]} : vector<2x12x12x1xf32> to vector<1x8x8x1xf32>
    %38 = vector.shape_cast %37 : vector<1x8x8x1xf32> to vector<8x8x1xf32>
    %39 = vector.broadcast %36 : f32 to vector<8x8x1xf32>
    %40 = arith.mulf %39, %38 : vector<8x8x1xf32>
    %41 = arith.addf %35, %40 : vector<8x8x1xf32>
    %c4 = arith.constant 4 : index
    %42 = memref.load %arg4[%c4] : memref<50xf32, #tpu.memory_space<smem>>
    %43 = vector.extract_strided_slice %16 {offsets = [0, 0, 4, 0], sizes = [1, 8, 8, 1], strides = [1, 1, 1, 1]} : vector<2x12x12x1xf32> to vector<1x8x8x1xf32>
    %44 = vector.shape_cast %43 : vector<1x8x8x1xf32> to vector<8x8x1xf32>
    %45 = vector.broadcast %42 : f32 to vector<8x8x1xf32>
    %46 = arith.mulf %45, %44 : vector<8x8x1xf32>
    %47 = arith.addf %41, %46 : vector<8x8x1xf32>
    %c5 = arith.constant 5 : index
    %48 = memref.load %arg4[%c5] : memref<50xf32, #tpu.memory_space<smem>>
    %49 = vector.extract_strided_slice %16 {offsets = [0, 1, 0, 0], sizes = [1, 8, 8, 1], strides = [1, 1, 1, 1]} : vector<2x12x12x1xf32> to vector<1x8x8x1xf32>
    %50 = vector.shape_cast %49 : vector<1x8x8x1xf32> to vector<8x8x1xf32>
    %51 = vector.broadcast %48 : f32 to vector<8x8x1xf32>
    %52 = arith.mulf %51, %50 : vector<8x8x1xf32>
    %53 = arith.addf %47, %52 : vector<8x8x1xf32>
    %c6 = arith.constant 6 : index
    %54 = memref.load %arg4[%c6] : memref<50xf32, #tpu.memory_space<smem>>
    %55 = vector.extract_strided_slice %16 {offsets = [0, 1, 1, 0], sizes = [1, 8, 8, 1], strides = [1, 1, 1, 1]} : vector<2x12x12x1xf32> to vector<1x8x8x1xf32>
    %56 = vector.shape_cast %55 : vector<1x8x8x1xf32> to vector<8x8x1xf32>
    %57 = vector.broadcast %54 : f32 to vector<8x8x1xf32>
    %58 = arith.mulf %57, %56 : vector<8x8x1xf32>
    %59 = arith.addf %53, %58 : vector<8x8x1xf32>
    %c7 = arith.constant 7 : index
    %60 = memref.load %arg4[%c7] : memref<50xf32, #tpu.memory_space<smem>>
    %61 = vector.extract_strided_slice %16 {offsets = [0, 1, 2, 0], sizes = [1, 8, 8, 1], strides = [1, 1, 1, 1]} : vector<2x12x12x1xf32> to vector<1x8x8x1xf32>
    %62 = vector.shape_cast %61 : vector<1x8x8x1xf32> to vector<8x8x1xf32>
    %63 = vector.broadcast %60 : f32 to vector<8x8x1xf32>
    %64 = arith.mulf %63, %62 : vector<8x8x1xf32>
    %65 = arith.addf %59, %64 : vector<8x8x1xf32>
    %c8 = arith.constant 8 : index
    %66 = memref.load %arg4[%c8] : memref<50xf32, #tpu.memory_space<smem>>
    %67 = vector.extract_strided_slice %16 {offsets = [0, 1, 3, 0], sizes = [1, 8, 8, 1], strides = [1, 1, 1, 1]} : vector<2x12x12x1xf32> to vector<1x8x8x1xf32>
    %68 = vector.shape_cast %67 : vector<1x8x8x1xf32> to vector<8x8x1xf32>
    %69 = vector.broadcast %66 : f32 to vector<8x8x1xf32>
    %70 = arith.mulf %69, %68 : vector<8x8x1xf32>
    %71 = arith.addf %65, %70 : vector<8x8x1xf32>
    %c9 = arith.constant 9 : index
    %72 = memref.load %arg4[%c9] : memref<50xf32, #tpu.memory_space<smem>>
    %73 = vector.extract_strided_slice %16 {offsets = [0, 1, 4, 0], sizes = [1, 8, 8, 1], strides = [1, 1, 1, 1]} : vector<2x12x12x1xf32> to vector<1x8x8x1xf32>
    %74 = vector.shape_cast %73 : vector<1x8x8x1xf32> to vector<8x8x1xf32>
    %75 = vector.broadcast %72 : f32 to vector<8x8x1xf32>
    %76 = arith.mulf %75, %74 : vector<8x8x1xf32>
    %77 = arith.addf %71, %76 : vector<8x8x1xf32>
    %c10 = arith.constant 10 : index
    %78 = memref.load %arg4[%c10] : memref<50xf32, #tpu.memory_space<smem>>
    %79 = vector.extract_strided_slice %16 {offsets = [0, 2, 0, 0], sizes = [1, 8, 8, 1], strides = [1, 1, 1, 1]} : vector<2x12x12x1xf32> to vector<1x8x8x1xf32>
    %80 = vector.shape_cast %79 : vector<1x8x8x1xf32> to vector<8x8x1xf32>
    %81 = vector.broadcast %78 : f32 to vector<8x8x1xf32>
    %82 = arith.mulf %81, %80 : vector<8x8x1xf32>
    %83 = arith.addf %77, %82 : vector<8x8x1xf32>
    %c11 = arith.constant 11 : index
    %84 = memref.load %arg4[%c11] : memref<50xf32, #tpu.memory_space<smem>>
    %85 = vector.extract_strided_slice %16 {offsets = [0, 2, 1, 0], sizes = [1, 8, 8, 1], strides = [1, 1, 1, 1]} : vector<2x12x12x1xf32> to vector<1x8x8x1xf32>
    %86 = vector.shape_cast %85 : vector<1x8x8x1xf32> to vector<8x8x1xf32>
    %87 = vector.broadcast %84 : f32 to vector<8x8x1xf32>
    %88 = arith.mulf %87, %86 : vector<8x8x1xf32>
    %89 = arith.addf %83, %88 : vector<8x8x1xf32>
    %c12 = arith.constant 12 : index
    %90 = memref.load %arg4[%c12] : memref<50xf32, #tpu.memory_space<smem>>
    %91 = vector.extract_strided_slice %16 {offsets = [0, 2, 2, 0], sizes = [1, 8, 8, 1], strides = [1, 1, 1, 1]} : vector<2x12x12x1xf32> to vector<1x8x8x1xf32>
    %92 = vector.shape_cast %91 : vector<1x8x8x1xf32> to vector<8x8x1xf32>
    %93 = vector.broadcast %90 : f32 to vector<8x8x1xf32>
    %94 = arith.mulf %93, %92 : vector<8x8x1xf32>
    %95 = arith.addf %89, %94 : vector<8x8x1xf32>
    %c13 = arith.constant 13 : index
    %96 = memref.load %arg4[%c13] : memref<50xf32, #tpu.memory_space<smem>>
    %97 = vector.extract_strided_slice %16 {offsets = [0, 2, 3, 0], sizes = [1, 8, 8, 1], strides = [1, 1, 1, 1]} : vector<2x12x12x1xf32> to vector<1x8x8x1xf32>
    %98 = vector.shape_cast %97 : vector<1x8x8x1xf32> to vector<8x8x1xf32>
    %99 = vector.broadcast %96 : f32 to vector<8x8x1xf32>
    %100 = arith.mulf %99, %98 : vector<8x8x1xf32>
    %101 = arith.addf %95, %100 : vector<8x8x1xf32>
    %c14 = arith.constant 14 : index
    %102 = memref.load %arg4[%c14] : memref<50xf32, #tpu.memory_space<smem>>
    %103 = vector.extract_strided_slice %16 {offsets = [0, 2, 4, 0], sizes = [1, 8, 8, 1], strides = [1, 1, 1, 1]} : vector<2x12x12x1xf32> to vector<1x8x8x1xf32>
    %104 = vector.shape_cast %103 : vector<1x8x8x1xf32> to vector<8x8x1xf32>
    %105 = vector.broadcast %102 : f32 to vector<8x8x1xf32>
    %106 = arith.mulf %105, %104 : vector<8x8x1xf32>
    %107 = arith.addf %101, %106 : vector<8x8x1xf32>
    %c15 = arith.constant 15 : index
    %108 = memref.load %arg4[%c15] : memref<50xf32, #tpu.memory_space<smem>>
    %109 = vector.extract_strided_slice %16 {offsets = [0, 3, 0, 0], sizes = [1, 8, 8, 1], strides = [1, 1, 1, 1]} : vector<2x12x12x1xf32> to vector<1x8x8x1xf32>
    %110 = vector.shape_cast %109 : vector<1x8x8x1xf32> to vector<8x8x1xf32>
    %111 = vector.broadcast %108 : f32 to vector<8x8x1xf32>
    %112 = arith.mulf %111, %110 : vector<8x8x1xf32>
    %113 = arith.addf %107, %112 : vector<8x8x1xf32>
    %c16 = arith.constant 16 : index
    %114 = memref.load %arg4[%c16] : memref<50xf32, #tpu.memory_space<smem>>
    %115 = vector.extract_strided_slice %16 {offsets = [0, 3, 1, 0], sizes = [1, 8, 8, 1], strides = [1, 1, 1, 1]} : vector<2x12x12x1xf32> to vector<1x8x8x1xf32>
    %116 = vector.shape_cast %115 : vector<1x8x8x1xf32> to vector<8x8x1xf32>
    %117 = vector.broadcast %114 : f32 to vector<8x8x1xf32>
    %118 = arith.mulf %117, %116 : vector<8x8x1xf32>
    %119 = arith.addf %113, %118 : vector<8x8x1xf32>
    %c17 = arith.constant 17 : index
    %120 = memref.load %arg4[%c17] : memref<50xf32, #tpu.memory_space<smem>>
    %121 = vector.extract_strided_slice %16 {offsets = [0, 3, 2, 0], sizes = [1, 8, 8, 1], strides = [1, 1, 1, 1]} : vector<2x12x12x1xf32> to vector<1x8x8x1xf32>
    %122 = vector.shape_cast %121 : vector<1x8x8x1xf32> to vector<8x8x1xf32>
    %123 = vector.broadcast %120 : f32 to vector<8x8x1xf32>
    %124 = arith.mulf %123, %122 : vector<8x8x1xf32>
    %125 = arith.addf %119, %124 : vector<8x8x1xf32>
    %c18 = arith.constant 18 : index
    %126 = memref.load %arg4[%c18] : memref<50xf32, #tpu.memory_space<smem>>
    %127 = vector.extract_strided_slice %16 {offsets = [0, 3, 3, 0], sizes = [1, 8, 8, 1], strides = [1, 1, 1, 1]} : vector<2x12x12x1xf32> to vector<1x8x8x1xf32>
    %128 = vector.shape_cast %127 : vector<1x8x8x1xf32> to vector<8x8x1xf32>
    %129 = vector.broadcast %126 : f32 to vector<8x8x1xf32>
    %130 = arith.mulf %129, %128 : vector<8x8x1xf32>
    %131 = arith.addf %125, %130 : vector<8x8x1xf32>
    %c19 = arith.constant 19 : index
    %132 = memref.load %arg4[%c19] : memref<50xf32, #tpu.memory_space<smem>>
    %133 = vector.extract_strided_slice %16 {offsets = [0, 3, 4, 0], sizes = [1, 8, 8, 1], strides = [1, 1, 1, 1]} : vector<2x12x12x1xf32> to vector<1x8x8x1xf32>
    %134 = vector.shape_cast %133 : vector<1x8x8x1xf32> to vector<8x8x1xf32>
    %135 = vector.broadcast %132 : f32 to vector<8x8x1xf32>
    %136 = arith.mulf %135, %134 : vector<8x8x1xf32>
    %137 = arith.addf %131, %136 : vector<8x8x1xf32>
    %c20 = arith.constant 20 : index
    %138 = memref.load %arg4[%c20] : memref<50xf32, #tpu.memory_space<smem>>
    %139 = vector.extract_strided_slice %16 {offsets = [0, 4, 0, 0], sizes = [1, 8, 8, 1], strides = [1, 1, 1, 1]} : vector<2x12x12x1xf32> to vector<1x8x8x1xf32>
    %140 = vector.shape_cast %139 : vector<1x8x8x1xf32> to vector<8x8x1xf32>
    %141 = vector.broadcast %138 : f32 to vector<8x8x1xf32>
    %142 = arith.mulf %141, %140 : vector<8x8x1xf32>
    %143 = arith.addf %137, %142 : vector<8x8x1xf32>
    %c21 = arith.constant 21 : index
    %144 = memref.load %arg4[%c21] : memref<50xf32, #tpu.memory_space<smem>>
    %145 = vector.extract_strided_slice %16 {offsets = [0, 4, 1, 0], sizes = [1, 8, 8, 1], strides = [1, 1, 1, 1]} : vector<2x12x12x1xf32> to vector<1x8x8x1xf32>
    %146 = vector.shape_cast %145 : vector<1x8x8x1xf32> to vector<8x8x1xf32>
    %147 = vector.broadcast %144 : f32 to vector<8x8x1xf32>
    %148 = arith.mulf %147, %146 : vector<8x8x1xf32>
    %149 = arith.addf %143, %148 : vector<8x8x1xf32>
    %c22 = arith.constant 22 : index
    %150 = memref.load %arg4[%c22] : memref<50xf32, #tpu.memory_space<smem>>
    %151 = vector.extract_strided_slice %16 {offsets = [0, 4, 2, 0], sizes = [1, 8, 8, 1], strides = [1, 1, 1, 1]} : vector<2x12x12x1xf32> to vector<1x8x8x1xf32>
    %152 = vector.shape_cast %151 : vector<1x8x8x1xf32> to vector<8x8x1xf32>
    %153 = vector.broadcast %150 : f32 to vector<8x8x1xf32>
    %154 = arith.mulf %153, %152 : vector<8x8x1xf32>
    %155 = arith.addf %149, %154 : vector<8x8x1xf32>
    %c23 = arith.constant 23 : index
    %156 = memref.load %arg4[%c23] : memref<50xf32, #tpu.memory_space<smem>>
    %157 = vector.extract_strided_slice %16 {offsets = [0, 4, 3, 0], sizes = [1, 8, 8, 1], strides = [1, 1, 1, 1]} : vector<2x12x12x1xf32> to vector<1x8x8x1xf32>
    %158 = vector.shape_cast %157 : vector<1x8x8x1xf32> to vector<8x8x1xf32>
    %159 = vector.broadcast %156 : f32 to vector<8x8x1xf32>
    %160 = arith.mulf %159, %158 : vector<8x8x1xf32>
    %161 = arith.addf %155, %160 : vector<8x8x1xf32>
    %c24 = arith.constant 24 : index
    %162 = memref.load %arg4[%c24] : memref<50xf32, #tpu.memory_space<smem>>
    %163 = vector.extract_strided_slice %16 {offsets = [0, 4, 4, 0], sizes = [1, 8, 8, 1], strides = [1, 1, 1, 1]} : vector<2x12x12x1xf32> to vector<1x8x8x1xf32>
    %164 = vector.shape_cast %163 : vector<1x8x8x1xf32> to vector<8x8x1xf32>
    %165 = vector.broadcast %162 : f32 to vector<8x8x1xf32>
    %166 = arith.mulf %165, %164 : vector<8x8x1xf32>
    %167 = arith.addf %161, %166 : vector<8x8x1xf32>
    %c25 = arith.constant 25 : index
    %168 = memref.load %arg4[%c25] : memref<50xf32, #tpu.memory_space<smem>>
    %169 = vector.extract_strided_slice %16 {offsets = [1, 0, 0, 0], sizes = [1, 8, 8, 1], strides = [1, 1, 1, 1]} : vector<2x12x12x1xf32> to vector<1x8x8x1xf32>
    %170 = vector.shape_cast %169 : vector<1x8x8x1xf32> to vector<8x8x1xf32>
    %171 = vector.broadcast %168 : f32 to vector<8x8x1xf32>
    %172 = arith.mulf %171, %170 : vector<8x8x1xf32>
    %173 = arith.addf %167, %172 : vector<8x8x1xf32>
    %c26 = arith.constant 26 : index
    %174 = memref.load %arg4[%c26] : memref<50xf32, #tpu.memory_space<smem>>
    %175 = vector.extract_strided_slice %16 {offsets = [1, 0, 1, 0], sizes = [1, 8, 8, 1], strides = [1, 1, 1, 1]} : vector<2x12x12x1xf32> to vector<1x8x8x1xf32>
    %176 = vector.shape_cast %175 : vector<1x8x8x1xf32> to vector<8x8x1xf32>
    %177 = vector.broadcast %174 : f32 to vector<8x8x1xf32>
    %178 = arith.mulf %177, %176 : vector<8x8x1xf32>
    %179 = arith.addf %173, %178 : vector<8x8x1xf32>
    %c27 = arith.constant 27 : index
    %180 = memref.load %arg4[%c27] : memref<50xf32, #tpu.memory_space<smem>>
    %181 = vector.extract_strided_slice %16 {offsets = [1, 0, 2, 0], sizes = [1, 8, 8, 1], strides = [1, 1, 1, 1]} : vector<2x12x12x1xf32> to vector<1x8x8x1xf32>
    %182 = vector.shape_cast %181 : vector<1x8x8x1xf32> to vector<8x8x1xf32>
    %183 = vector.broadcast %180 : f32 to vector<8x8x1xf32>
    %184 = arith.mulf %183, %182 : vector<8x8x1xf32>
    %185 = arith.addf %179, %184 : vector<8x8x1xf32>
    %c28 = arith.constant 28 : index
    %186 = memref.load %arg4[%c28] : memref<50xf32, #tpu.memory_space<smem>>
    %187 = vector.extract_strided_slice %16 {offsets = [1, 0, 3, 0], sizes = [1, 8, 8, 1], strides = [1, 1, 1, 1]} : vector<2x12x12x1xf32> to vector<1x8x8x1xf32>
    %188 = vector.shape_cast %187 : vector<1x8x8x1xf32> to vector<8x8x1xf32>
    %189 = vector.broadcast %186 : f32 to vector<8x8x1xf32>
    %190 = arith.mulf %189, %188 : vector<8x8x1xf32>
    %191 = arith.addf %185, %190 : vector<8x8x1xf32>
    %c29 = arith.constant 29 : index
    %192 = memref.load %arg4[%c29] : memref<50xf32, #tpu.memory_space<smem>>
    %193 = vector.extract_strided_slice %16 {offsets = [1, 0, 4, 0], sizes = [1, 8, 8, 1], strides = [1, 1, 1, 1]} : vector<2x12x12x1xf32> to vector<1x8x8x1xf32>
    %194 = vector.shape_cast %193 : vector<1x8x8x1xf32> to vector<8x8x1xf32>
    %195 = vector.broadcast %192 : f32 to vector<8x8x1xf32>
    %196 = arith.mulf %195, %194 : vector<8x8x1xf32>
    %197 = arith.addf %191, %196 : vector<8x8x1xf32>
    %c30 = arith.constant 30 : index
    %198 = memref.load %arg4[%c30] : memref<50xf32, #tpu.memory_space<smem>>
    %199 = vector.extract_strided_slice %16 {offsets = [1, 1, 0, 0], sizes = [1, 8, 8, 1], strides = [1, 1, 1, 1]} : vector<2x12x12x1xf32> to vector<1x8x8x1xf32>
    %200 = vector.shape_cast %199 : vector<1x8x8x1xf32> to vector<8x8x1xf32>
    %201 = vector.broadcast %198 : f32 to vector<8x8x1xf32>
    %202 = arith.mulf %201, %200 : vector<8x8x1xf32>
    %203 = arith.addf %197, %202 : vector<8x8x1xf32>
    %c31 = arith.constant 31 : index
    %204 = memref.load %arg4[%c31] : memref<50xf32, #tpu.memory_space<smem>>
    %205 = vector.extract_strided_slice %16 {offsets = [1, 1, 1, 0], sizes = [1, 8, 8, 1], strides = [1, 1, 1, 1]} : vector<2x12x12x1xf32> to vector<1x8x8x1xf32>
    %206 = vector.shape_cast %205 : vector<1x8x8x1xf32> to vector<8x8x1xf32>
    %207 = vector.broadcast %204 : f32 to vector<8x8x1xf32>
    %208 = arith.mulf %207, %206 : vector<8x8x1xf32>
    %209 = arith.addf %203, %208 : vector<8x8x1xf32>
    %c32 = arith.constant 32 : index
    %210 = memref.load %arg4[%c32] : memref<50xf32, #tpu.memory_space<smem>>
    %211 = vector.extract_strided_slice %16 {offsets = [1, 1, 2, 0], sizes = [1, 8, 8, 1], strides = [1, 1, 1, 1]} : vector<2x12x12x1xf32> to vector<1x8x8x1xf32>
    %212 = vector.shape_cast %211 : vector<1x8x8x1xf32> to vector<8x8x1xf32>
    %213 = vector.broadcast %210 : f32 to vector<8x8x1xf32>
    %214 = arith.mulf %213, %212 : vector<8x8x1xf32>
    %215 = arith.addf %209, %214 : vector<8x8x1xf32>
    %c33 = arith.constant 33 : index
    %216 = memref.load %arg4[%c33] : memref<50xf32, #tpu.memory_space<smem>>
    %217 = vector.extract_strided_slice %16 {offsets = [1, 1, 3, 0], sizes = [1, 8, 8, 1], strides = [1, 1, 1, 1]} : vector<2x12x12x1xf32> to vector<1x8x8x1xf32>
    %218 = vector.shape_cast %217 : vector<1x8x8x1xf32> to vector<8x8x1xf32>
    %219 = vector.broadcast %216 : f32 to vector<8x8x1xf32>
    %220 = arith.mulf %219, %218 : vector<8x8x1xf32>
    %221 = arith.addf %215, %220 : vector<8x8x1xf32>
    %c34 = arith.constant 34 : index
    %222 = memref.load %arg4[%c34] : memref<50xf32, #tpu.memory_space<smem>>
    %223 = vector.extract_strided_slice %16 {offsets = [1, 1, 4, 0], sizes = [1, 8, 8, 1], strides = [1, 1, 1, 1]} : vector<2x12x12x1xf32> to vector<1x8x8x1xf32>
    %224 = vector.shape_cast %223 : vector<1x8x8x1xf32> to vector<8x8x1xf32>
    %225 = vector.broadcast %222 : f32 to vector<8x8x1xf32>
    %226 = arith.mulf %225, %224 : vector<8x8x1xf32>
    %227 = arith.addf %221, %226 : vector<8x8x1xf32>
    %c35 = arith.constant 35 : index
    %228 = memref.load %arg4[%c35] : memref<50xf32, #tpu.memory_space<smem>>
    %229 = vector.extract_strided_slice %16 {offsets = [1, 2, 0, 0], sizes = [1, 8, 8, 1], strides = [1, 1, 1, 1]} : vector<2x12x12x1xf32> to vector<1x8x8x1xf32>
    %230 = vector.shape_cast %229 : vector<1x8x8x1xf32> to vector<8x8x1xf32>
    %231 = vector.broadcast %228 : f32 to vector<8x8x1xf32>
    %232 = arith.mulf %231, %230 : vector<8x8x1xf32>
    %233 = arith.addf %227, %232 : vector<8x8x1xf32>
    %c36 = arith.constant 36 : index
    %234 = memref.load %arg4[%c36] : memref<50xf32, #tpu.memory_space<smem>>
    %235 = vector.extract_strided_slice %16 {offsets = [1, 2, 1, 0], sizes = [1, 8, 8, 1], strides = [1, 1, 1, 1]} : vector<2x12x12x1xf32> to vector<1x8x8x1xf32>
    %236 = vector.shape_cast %235 : vector<1x8x8x1xf32> to vector<8x8x1xf32>
    %237 = vector.broadcast %234 : f32 to vector<8x8x1xf32>
    %238 = arith.mulf %237, %236 : vector<8x8x1xf32>
    %239 = arith.addf %233, %238 : vector<8x8x1xf32>
    %c37 = arith.constant 37 : index
    %240 = memref.load %arg4[%c37] : memref<50xf32, #tpu.memory_space<smem>>
    %241 = vector.extract_strided_slice %16 {offsets = [1, 2, 2, 0], sizes = [1, 8, 8, 1], strides = [1, 1, 1, 1]} : vector<2x12x12x1xf32> to vector<1x8x8x1xf32>
    %242 = vector.shape_cast %241 : vector<1x8x8x1xf32> to vector<8x8x1xf32>
    %243 = vector.broadcast %240 : f32 to vector<8x8x1xf32>
    %244 = arith.mulf %243, %242 : vector<8x8x1xf32>
    %245 = arith.addf %239, %244 : vector<8x8x1xf32>
    %c38 = arith.constant 38 : index
    %246 = memref.load %arg4[%c38] : memref<50xf32, #tpu.memory_space<smem>>
    %247 = vector.extract_strided_slice %16 {offsets = [1, 2, 3, 0], sizes = [1, 8, 8, 1], strides = [1, 1, 1, 1]} : vector<2x12x12x1xf32> to vector<1x8x8x1xf32>
    %248 = vector.shape_cast %247 : vector<1x8x8x1xf32> to vector<8x8x1xf32>
    %249 = vector.broadcast %246 : f32 to vector<8x8x1xf32>
    %250 = arith.mulf %249, %248 : vector<8x8x1xf32>
    %251 = arith.addf %245, %250 : vector<8x8x1xf32>
    %c39 = arith.constant 39 : index
    %252 = memref.load %arg4[%c39] : memref<50xf32, #tpu.memory_space<smem>>
    %253 = vector.extract_strided_slice %16 {offsets = [1, 2, 4, 0], sizes = [1, 8, 8, 1], strides = [1, 1, 1, 1]} : vector<2x12x12x1xf32> to vector<1x8x8x1xf32>
    %254 = vector.shape_cast %253 : vector<1x8x8x1xf32> to vector<8x8x1xf32>
    %255 = vector.broadcast %252 : f32 to vector<8x8x1xf32>
    %256 = arith.mulf %255, %254 : vector<8x8x1xf32>
    %257 = arith.addf %251, %256 : vector<8x8x1xf32>
    %c40 = arith.constant 40 : index
    %258 = memref.load %arg4[%c40] : memref<50xf32, #tpu.memory_space<smem>>
    %259 = vector.extract_strided_slice %16 {offsets = [1, 3, 0, 0], sizes = [1, 8, 8, 1], strides = [1, 1, 1, 1]} : vector<2x12x12x1xf32> to vector<1x8x8x1xf32>
    %260 = vector.shape_cast %259 : vector<1x8x8x1xf32> to vector<8x8x1xf32>
    %261 = vector.broadcast %258 : f32 to vector<8x8x1xf32>
    %262 = arith.mulf %261, %260 : vector<8x8x1xf32>
    %263 = arith.addf %257, %262 : vector<8x8x1xf32>
    %c41 = arith.constant 41 : index
    %264 = memref.load %arg4[%c41] : memref<50xf32, #tpu.memory_space<smem>>
    %265 = vector.extract_strided_slice %16 {offsets = [1, 3, 1, 0], sizes = [1, 8, 8, 1], strides = [1, 1, 1, 1]} : vector<2x12x12x1xf32> to vector<1x8x8x1xf32>
    %266 = vector.shape_cast %265 : vector<1x8x8x1xf32> to vector<8x8x1xf32>
    %267 = vector.broadcast %264 : f32 to vector<8x8x1xf32>
    %268 = arith.mulf %267, %266 : vector<8x8x1xf32>
    %269 = arith.addf %263, %268 : vector<8x8x1xf32>
    %c42 = arith.constant 42 : index
    %270 = memref.load %arg4[%c42] : memref<50xf32, #tpu.memory_space<smem>>
    %271 = vector.extract_strided_slice %16 {offsets = [1, 3, 2, 0], sizes = [1, 8, 8, 1], strides = [1, 1, 1, 1]} : vector<2x12x12x1xf32> to vector<1x8x8x1xf32>
    %272 = vector.shape_cast %271 : vector<1x8x8x1xf32> to vector<8x8x1xf32>
    %273 = vector.broadcast %270 : f32 to vector<8x8x1xf32>
    %274 = arith.mulf %273, %272 : vector<8x8x1xf32>
    %275 = arith.addf %269, %274 : vector<8x8x1xf32>
    %c43 = arith.constant 43 : index
    %276 = memref.load %arg4[%c43] : memref<50xf32, #tpu.memory_space<smem>>
    %277 = vector.extract_strided_slice %16 {offsets = [1, 3, 3, 0], sizes = [1, 8, 8, 1], strides = [1, 1, 1, 1]} : vector<2x12x12x1xf32> to vector<1x8x8x1xf32>
    %278 = vector.shape_cast %277 : vector<1x8x8x1xf32> to vector<8x8x1xf32>
    %279 = vector.broadcast %276 : f32 to vector<8x8x1xf32>
    %280 = arith.mulf %279, %278 : vector<8x8x1xf32>
    %281 = arith.addf %275, %280 : vector<8x8x1xf32>
    %c44 = arith.constant 44 : index
    %282 = memref.load %arg4[%c44] : memref<50xf32, #tpu.memory_space<smem>>
    %283 = vector.extract_strided_slice %16 {offsets = [1, 3, 4, 0], sizes = [1, 8, 8, 1], strides = [1, 1, 1, 1]} : vector<2x12x12x1xf32> to vector<1x8x8x1xf32>
    %284 = vector.shape_cast %283 : vector<1x8x8x1xf32> to vector<8x8x1xf32>
    %285 = vector.broadcast %282 : f32 to vector<8x8x1xf32>
    %286 = arith.mulf %285, %284 : vector<8x8x1xf32>
    %287 = arith.addf %281, %286 : vector<8x8x1xf32>
    %c45 = arith.constant 45 : index
    %288 = memref.load %arg4[%c45] : memref<50xf32, #tpu.memory_space<smem>>
    %289 = vector.extract_strided_slice %16 {offsets = [1, 4, 0, 0], sizes = [1, 8, 8, 1], strides = [1, 1, 1, 1]} : vector<2x12x12x1xf32> to vector<1x8x8x1xf32>
    %290 = vector.shape_cast %289 : vector<1x8x8x1xf32> to vector<8x8x1xf32>
    %291 = vector.broadcast %288 : f32 to vector<8x8x1xf32>
    %292 = arith.mulf %291, %290 : vector<8x8x1xf32>
    %293 = arith.addf %287, %292 : vector<8x8x1xf32>
    %c46 = arith.constant 46 : index
    %294 = memref.load %arg4[%c46] : memref<50xf32, #tpu.memory_space<smem>>
    %295 = vector.extract_strided_slice %16 {offsets = [1, 4, 1, 0], sizes = [1, 8, 8, 1], strides = [1, 1, 1, 1]} : vector<2x12x12x1xf32> to vector<1x8x8x1xf32>
    %296 = vector.shape_cast %295 : vector<1x8x8x1xf32> to vector<8x8x1xf32>
    %297 = vector.broadcast %294 : f32 to vector<8x8x1xf32>
    %298 = arith.mulf %297, %296 : vector<8x8x1xf32>
    %299 = arith.addf %293, %298 : vector<8x8x1xf32>
    %c47 = arith.constant 47 : index
    %300 = memref.load %arg4[%c47] : memref<50xf32, #tpu.memory_space<smem>>
    %301 = vector.extract_strided_slice %16 {offsets = [1, 4, 2, 0], sizes = [1, 8, 8, 1], strides = [1, 1, 1, 1]} : vector<2x12x12x1xf32> to vector<1x8x8x1xf32>
    %302 = vector.shape_cast %301 : vector<1x8x8x1xf32> to vector<8x8x1xf32>
    %303 = vector.broadcast %300 : f32 to vector<8x8x1xf32>
    %304 = arith.mulf %303, %302 : vector<8x8x1xf32>
    %305 = arith.addf %299, %304 : vector<8x8x1xf32>
    %c48 = arith.constant 48 : index
    %306 = memref.load %arg4[%c48] : memref<50xf32, #tpu.memory_space<smem>>
    %307 = vector.extract_strided_slice %16 {offsets = [1, 4, 3, 0], sizes = [1, 8, 8, 1], strides = [1, 1, 1, 1]} : vector<2x12x12x1xf32> to vector<1x8x8x1xf32>
    %308 = vector.shape_cast %307 : vector<1x8x8x1xf32> to vector<8x8x1xf32>
    %309 = vector.broadcast %306 : f32 to vector<8x8x1xf32>
    %310 = arith.mulf %309, %308 : vector<8x8x1xf32>
    %311 = arith.addf %305, %310 : vector<8x8x1xf32>
    %c49 = arith.constant 49 : index
    %312 = memref.load %arg4[%c49] : memref<50xf32, #tpu.memory_space<smem>>
    %313 = vector.extract_strided_slice %16 {offsets = [1, 4, 4, 0], sizes = [1, 8, 8, 1], strides = [1, 1, 1, 1]} : vector<2x12x12x1xf32> to vector<1x8x8x1xf32>
    %314 = vector.shape_cast %313 : vector<1x8x8x1xf32> to vector<8x8x1xf32>
    %315 = vector.broadcast %312 : f32 to vector<8x8x1xf32>
    %316 = arith.mulf %315, %314 : vector<8x8x1xf32>
    %317 = arith.addf %311, %316 : vector<8x8x1xf32>
    %318 = arith.negf %317 : vector<8x8x1xf32>
    %319 = math.exp %318 : vector<8x8x1xf32>
    %cst_24 = arith.constant 1.000000e+00 : f32
    %320 = vector.broadcast %cst_24 : f32 to vector<8x8x1xf32>
    %321 = arith.addf %320, %319 : vector<8x8x1xf32>
    %322 = arith.divf %320, %321 : vector<8x8x1xf32>
    %323 = vector.broadcast %322 : vector<8x8x1xf32> to vector<8x8x32xf32>
    %324 = arith.mulf %1, %323 : vector<8x8x32xf32>
    %325 = vector.shape_cast %324 : vector<8x8x32xf32> to vector<64x32xf32>
    %c0_25 = arith.constant 0 : index
    %c0_26 = arith.constant 0 : index
    %c0_27 = arith.constant 0 : index
    %326 = vector.load %arg2[%c0_25, %c0_26, %c0_27] : memref<1x1x32xf32, #tpu.memory_space<vmem>>, vector<1x1x32xf32>
    %327 = vector.shape_cast %326 : vector<1x1x32xf32> to vector<1x32xf32>
    %328 = vector.shape_cast %327 : vector<1x32xf32> to vector<1x1x32xf32>
    %329 = vector.broadcast %328 : vector<1x1x32xf32> to vector<8x8x32xf32>
    %330 = arith.mulf %1, %329 : vector<8x8x32xf32>
    %331 = vector.shape_cast %330 : vector<8x8x32xf32> to vector<64x32xf32>
    %c0_28 = arith.constant 0 : index
    %c0_29 = arith.constant 0 : index
    %332 = vector.load %arg5[%c0_28, %c0_29] : memref<32x32xf32, #tpu.memory_space<vmem>>, vector<32x32xf32>
    %cst_30 = arith.constant dense<0.000000e+00> : vector<64x32xf32>
    %333 = tpu.matmul %325, %332, %cst_30 {dimension_numbers = #tpu.dot_dimension_numbers<[1], [0], [0], [1], [0, 0, 1, 1], [], []>} : vector<64x32xf32>, vector<32x32xf32>, vector<64x32xf32> -> vector<64x32xf32>
    %c0_31 = arith.constant 0 : index
    %c0_32 = arith.constant 0 : index
    %334 = vector.load %arg6[%c0_31, %c0_32] : memref<32x32xf32, #tpu.memory_space<vmem>>, vector<32x32xf32>
    %cst_33 = arith.constant dense<0.000000e+00> : vector<64x32xf32>
    %335 = tpu.matmul %331, %334, %cst_33 {dimension_numbers = #tpu.dot_dimension_numbers<[1], [0], [0], [1], [0, 0, 1, 1], [], []>} : vector<64x32xf32>, vector<32x32xf32>, vector<64x32xf32> -> vector<64x32xf32>
    %336 = arith.addf %333, %335 : vector<64x32xf32>
    %c0_34 = arith.constant 0 : index
    %c1_35 = arith.constant 1 : index
    %c1_36 = arith.constant 1 : index
    %c0_37 = arith.constant 0 : index
    %337 = vector.load %arg3[%c0_34, %c1_35, %c1_36, %c0_37] : memref<1x10x10x32xf32, #tpu.memory_space<vmem>>, vector<1x8x8x32xf32>
    %338 = vector.shape_cast %337 : vector<1x8x8x32xf32> to vector<8x8x32xf32>
    %339 = vector.shape_cast %338 : vector<8x8x32xf32> to vector<64x32xf32>
    %340 = arith.addf %336, %339 : vector<64x32xf32>
    %cst_38 = arith.constant 5.000000e-01 : f32
    %341 = vector.broadcast %cst_38 : f32 to vector<64x32xf32>
    %342 = arith.mulf %340, %341 : vector<64x32xf32>
    %343 = vector.shape_cast %342 : vector<64x32xf32> to vector<8x8x32xf32>
    %344 = vector.extract_strided_slice %343 {offsets = [0, 0, 0], sizes = [8, 8, 8], strides = [1, 1, 1]} : vector<8x8x32xf32> to vector<8x8x8xf32>
    %345 = vector.extract_strided_slice %343 {offsets = [0, 0, 8], sizes = [8, 8, 8], strides = [1, 1, 1]} : vector<8x8x32xf32> to vector<8x8x8xf32>
    %346 = vector.extract_strided_slice %343 {offsets = [0, 0, 16], sizes = [8, 8, 8], strides = [1, 1, 1]} : vector<8x8x32xf32> to vector<8x8x8xf32>
    %347 = vector.extract_strided_slice %343 {offsets = [0, 0, 24], sizes = [8, 8, 8], strides = [1, 1, 1]} : vector<8x8x32xf32> to vector<8x8x8xf32>
    %348 = arith.subf %344, %345 : vector<8x8x8xf32>
    %349 = arith.subf %348, %346 : vector<8x8x8xf32>
    %350 = arith.addf %349, %347 : vector<8x8x8xf32>
    %c0_39 = arith.constant 0 : index
    %c0_40 = arith.constant 0 : index
    %c0_41 = arith.constant 0 : index
    %c0_42 = arith.constant 0 : index
    %351 = vector.load %arg7[%c0_39, %c0_40, %c0_41, %c0_42] : memref<1x8x8x8xf32, #tpu.memory_space<vmem>>, vector<1x8x8x8xf32>
    %352 = vector.shape_cast %351 : vector<1x8x8x8xf32> to vector<8x8x8xf32>
    %353 = vector.shape_cast %350 : vector<8x8x8xf32> to vector<1x8x8x8xf32>
    tpu.vector_store %arg7[%c0_39, %c0_40, %c0_41, %c0_42], %353 {strides = array<i32>} : memref<1x8x8x8xf32, #tpu.memory_space<vmem>>, vector<1x8x8x8xf32>,
    %354 = arith.subf %344, %345 : vector<8x8x8xf32>
    %355 = arith.addf %354, %346 : vector<8x8x8xf32>
    %356 = arith.subf %355, %347 : vector<8x8x8xf32>
    %c0_43 = arith.constant 0 : index
    %c0_44 = arith.constant 0 : index
    %c0_45 = arith.constant 0 : index
    %c0_46 = arith.constant 0 : index
    %357 = vector.load %arg8[%c0_43, %c0_44, %c0_45, %c0_46] : memref<1x8x8x8xf32, #tpu.memory_space<vmem>>, vector<1x8x8x8xf32>
    %358 = vector.shape_cast %357 : vector<1x8x8x8xf32> to vector<8x8x8xf32>
    %359 = vector.shape_cast %356 : vector<8x8x8xf32> to vector<1x8x8x8xf32>
    tpu.vector_store %arg8[%c0_43, %c0_44, %c0_45, %c0_46], %359 {strides = array<i32>} : memref<1x8x8x8xf32, #tpu.memory_space<vmem>>, vector<1x8x8x8xf32>,
    %360 = arith.addf %344, %345 : vector<8x8x8xf32>
    %361 = arith.subf %360, %346 : vector<8x8x8xf32>
    %362 = arith.subf %361, %347 : vector<8x8x8xf32>
    %c0_47 = arith.constant 0 : index
    %c0_48 = arith.constant 0 : index
    %c0_49 = arith.constant 0 : index
    %c0_50 = arith.constant 0 : index
    %363 = vector.load %arg9[%c0_47, %c0_48, %c0_49, %c0_50] : memref<1x8x8x8xf32, #tpu.memory_space<vmem>>, vector<1x8x8x8xf32>
    %364 = vector.shape_cast %363 : vector<1x8x8x8xf32> to vector<8x8x8xf32>
    %365 = vector.shape_cast %362 : vector<8x8x8xf32> to vector<1x8x8x8xf32>
    tpu.vector_store %arg9[%c0_47, %c0_48, %c0_49, %c0_50], %365 {strides = array<i32>} : memref<1x8x8x8xf32, #tpu.memory_space<vmem>>, vector<1x8x8x8xf32>,
    %366 = arith.addf %344, %345 : vector<8x8x8xf32>
    %367 = arith.addf %366, %346 : vector<8x8x8xf32>
    %368 = arith.addf %367, %347 : vector<8x8x8xf32>
    %c0_51 = arith.constant 0 : index
    %c0_52 = arith.constant 0 : index
    %c0_53 = arith.constant 0 : index
    %c0_54 = arith.constant 0 : index
    %369 = vector.load %arg10[%c0_51, %c0_52, %c0_53, %c0_54] : memref<1x8x8x8xf32, #tpu.memory_space<vmem>>, vector<1x8x8x8xf32>
    %370 = vector.shape_cast %369 : vector<1x8x8x8xf32> to vector<8x8x8xf32>
    %371 = vector.shape_cast %368 : vector<8x8x8xf32> to vector<1x8x8x8xf32>
    tpu.vector_store %arg10[%c0_51, %c0_52, %c0_53, %c0_54], %371 {strides = array<i32>} : memref<1x8x8x8xf32, #tpu.memory_space<vmem>>, vector<1x8x8x8xf32>,
    return
  }
  func.func @transform_0(%arg0: i32) -> (i32, i32, i32, i32) {
    %c0_i32 = arith.constant 0 : i32
    %c0_i32_0 = arith.constant 0 : i32
    %c0_i32_1 = arith.constant 0 : i32
    %c0_i32_2 = arith.constant 0 : i32
    return %arg0, %c0_i32, %c0_i32_0, %c0_i32_1 : i32, i32, i32, i32
  }
  func.func @transform_1(%arg0: i32) -> (i32, i32, i32) {
    %c0_i32 = arith.constant 0 : i32
    %c0_i32_0 = arith.constant 0 : i32
    %c0_i32_1 = arith.constant 0 : i32
    return %arg0, %c0_i32, %c0_i32_0 : i32, i32, i32
  }
  func.func @transform_2(%arg0: i32) -> (i32, i32, i32, i32) {
    %c0_i32 = arith.constant 0 : i32
    %c0_i32_0 = arith.constant 0 : i32
    %c0_i32_1 = arith.constant 0 : i32
    %c0_i32_2 = arith.constant 0 : i32
    return %arg0, %c0_i32, %c0_i32_0, %c0_i32_1 : i32, i32, i32, i32
  }
  func.func @transform_3(%arg0: i32) -> i32 {
    %c0_i32 = arith.constant 0 : i32
    %c0_i32_0 = arith.constant 0 : i32
    return %c0_i32 : i32
  }
  func.func @transform_4(%arg0: i32) -> (i32, i32) {
    %c0_i32 = arith.constant 0 : i32
    %c0_i32_0 = arith.constant 0 : i32
    %c0_i32_1 = arith.constant 0 : i32
    return %c0_i32, %c0_i32_0 : i32, i32
  }
  func.func @transform_5(%arg0: i32) -> (i32, i32) {
    %c0_i32 = arith.constant 0 : i32
    %c0_i32_0 = arith.constant 0 : i32
    %c0_i32_1 = arith.constant 0 : i32
    return %c0_i32, %c0_i32_0 : i32, i32
  }
  func.func @transform_6(%arg0: i32) -> (i32, i32, i32, i32) {
    %c0_i32 = arith.constant 0 : i32
    %c0_i32_0 = arith.constant 0 : i32
    %c0_i32_1 = arith.constant 0 : i32
    %c0_i32_2 = arith.constant 0 : i32
    return %arg0, %c0_i32, %c0_i32_0, %c0_i32_1 : i32, i32, i32, i32
  }
  func.func @transform_7(%arg0: i32) -> (i32, i32, i32, i32) {
    %c0_i32 = arith.constant 0 : i32
    %c0_i32_0 = arith.constant 0 : i32
    %c0_i32_1 = arith.constant 0 : i32
    %c0_i32_2 = arith.constant 0 : i32
    return %arg0, %c0_i32, %c0_i32_0, %c0_i32_1 : i32, i32, i32, i32
  }
  func.func @transform_8(%arg0: i32) -> (i32, i32, i32, i32) {
    %c0_i32 = arith.constant 0 : i32
    %c0_i32_0 = arith.constant 0 : i32
    %c0_i32_1 = arith.constant 0 : i32
    %c0_i32_2 = arith.constant 0 : i32
    return %arg0, %c0_i32, %c0_i32_0, %c0_i32_1 : i32, i32, i32, i32
  }
  func.func @transform_9(%arg0: i32) -> (i32, i32, i32, i32) {
    %c0_i32 = arith.constant 0 : i32
    %c0_i32_0 = arith.constant 0 : i32
    %c0_i32_1 = arith.constant 0 : i32
    %c0_i32_2 = arith.constant 0 : i32
    return %arg0, %c0_i32, %c0_i32_0, %c0_i32_1 : i32, i32, i32, i32
  }
}

module attributes {stable_mosaic.version = 11 : i64} {
  func.func @kernel(%arg0: i32, %arg1: memref<1x16x16x8xf32, #tpu.memory_space<vmem>>, %arg2: memref<1x16x16x16xf32, #tpu.memory_space<vmem>>, %arg3: memref<9x16x16xf32, #tpu.memory_space<vmem>>, %arg4: memref<16x16xf32, #tpu.memory_space<vmem>>, %arg5: memref<1xf32, #tpu.memory_space<smem>>, %arg6: memref<1x16x16x16xf32, #tpu.memory_space<vmem>>, %arg7: memref<18x18x16xf32, #tpu.memory_space<vmem>>) attributes {dimension_semantics = [#tpu.dimension_semantics<parallel>], iteration_bounds = array<i64: 2>, scalar_prefetch = 0 : i64, scratch_operands = 1 : i64, tpu.core_type = #tpu.core_type<tc>, window_params = [{transform_indices = @transform_0, window_bounds = array<i64: 1, 16, 16, 8>}, {transform_indices = @transform_1, window_bounds = array<i64: 1, 16, 16, 16>}, {pipeline_mode = #tpu.pipeline_mode<synchronous>, transform_indices = @transform_2, window_bounds = array<i64: 9, 16, 16>}, {pipeline_mode = #tpu.pipeline_mode<synchronous>, transform_indices = @transform_3, window_bounds = array<i64: 16, 16>}, {transform_indices = @transform_4, window_bounds = array<i64: 1>}, {transform_indices = @transform_5, window_bounds = array<i64: 1, 16, 16, 16>}]} {
    %c0 = arith.constant 0 : index
    %c0_0 = arith.constant 0 : index
    %c0_1 = arith.constant 0 : index
    %c0_2 = arith.constant 0 : index
    %0 = vector.load %arg2[%c0, %c0_0, %c0_1, %c0_2] : memref<1x16x16x16xf32, #tpu.memory_space<vmem>>, vector<1x16x16x16xf32>
    %1 = vector.shape_cast %0 : vector<1x16x16x16xf32> to vector<16x16x16xf32>
    %cst = arith.constant 0.000000e+00 : f32
    %2 = vector.broadcast %cst : f32 to vector<18x18x16xf32>
    %c0_3 = arith.constant 0 : index
    %c0_4 = arith.constant 0 : index
    %c0_5 = arith.constant 0 : index
    %3 = vector.load %arg7[%c0_3, %c0_4, %c0_5] : memref<18x18x16xf32, #tpu.memory_space<vmem>>, vector<18x18x16xf32>
    tpu.vector_store %arg7[%c0_3, %c0_4, %c0_5], %2 {strides = array<i32>} : memref<18x18x16xf32, #tpu.memory_space<vmem>>, vector<18x18x16xf32>,
    %c0_6 = arith.constant 0 : index
    %c0_7 = arith.constant 0 : index
    %c0_8 = arith.constant 0 : index
    %c0_9 = arith.constant 0 : index
    %4 = vector.load %arg1[%c0_6, %c0_7, %c0_8, %c0_9] : memref<1x16x16x8xf32, #tpu.memory_space<vmem>>, vector<1x16x16x8xf32>
    %5 = vector.shape_cast %4 : vector<1x16x16x8xf32> to vector<16x16x8xf32>
    %c1 = arith.constant 1 : index
    %c1_10 = arith.constant 1 : index
    %c0_11 = arith.constant 0 : index
    %6 = vector.load %arg7[%c1, %c1_10, %c0_11] : memref<18x18x16xf32, #tpu.memory_space<vmem>>, vector<16x16x8xf32>
    tpu.vector_store %arg7[%c1, %c1_10, %c0_11], %5 {strides = array<i32>} : memref<18x18x16xf32, #tpu.memory_space<vmem>>, vector<16x16x8xf32>,
    %7 = vector.extract_strided_slice %1 {offsets = [0, 0, 8], sizes = [16, 16, 8], strides = [1, 1, 1]} : vector<16x16x16xf32> to vector<16x16x8xf32>
    %c1_12 = arith.constant 1 : index
    %c1_13 = arith.constant 1 : index
    %c8 = arith.constant 8 : index
    %8 = vector.load %arg7[%c1_12, %c1_13, %c8] : memref<18x18x16xf32, #tpu.memory_space<vmem>>, vector<16x16x8xf32>
    tpu.vector_store %arg7[%c1_12, %c1_13, %c8], %7 {strides = array<i32>} : memref<18x18x16xf32, #tpu.memory_space<vmem>>, vector<16x16x8xf32>,
    %c0_14 = arith.constant 0 : index
    %c0_15 = arith.constant 0 : index
    %c0_16 = arith.constant 0 : index
    %9 = vector.load %arg7[%c0_14, %c0_15, %c0_16] : memref<18x18x16xf32, #tpu.memory_space<vmem>>, vector<18x18x16xf32>
    %cst_17 = arith.constant 0.000000e+00 : f32
    %10 = vector.broadcast %cst_17 : f32 to vector<256x16xf32>
    %11 = vector.extract_strided_slice %9 {offsets = [0, 0, 0], sizes = [16, 16, 16], strides = [1, 1, 1]} : vector<18x18x16xf32> to vector<16x16x16xf32>
    %12 = vector.shape_cast %11 : vector<16x16x16xf32> to vector<256x16xf32>
    %c0_18 = arith.constant 0 : index
    %c0_19 = arith.constant 0 : index
    %c0_20 = arith.constant 0 : index
    %13 = vector.load %arg3[%c0_18, %c0_19, %c0_20] : memref<9x16x16xf32, #tpu.memory_space<vmem>>, vector<1x16x16xf32>
    %14 = vector.shape_cast %13 : vector<1x16x16xf32> to vector<16x16xf32>
    %cst_21 = arith.constant dense<0.000000e+00> : vector<256x16xf32>
    %15 = tpu.matmul %12, %14, %cst_21 {dimension_numbers = #tpu.dot_dimension_numbers<[1], [0], [0], [1], [0, 0, 1, 1], [], []>} : vector<256x16xf32>, vector<16x16xf32>, vector<256x16xf32> -> vector<256x16xf32>
    %16 = arith.addf %10, %15 : vector<256x16xf32>
    %17 = vector.extract_strided_slice %9 {offsets = [0, 1, 0], sizes = [16, 16, 16], strides = [1, 1, 1]} : vector<18x18x16xf32> to vector<16x16x16xf32>
    %18 = vector.shape_cast %17 : vector<16x16x16xf32> to vector<256x16xf32>
    %c1_22 = arith.constant 1 : index
    %c0_23 = arith.constant 0 : index
    %c0_24 = arith.constant 0 : index
    %19 = vector.load %arg3[%c1_22, %c0_23, %c0_24] : memref<9x16x16xf32, #tpu.memory_space<vmem>>, vector<1x16x16xf32>
    %20 = vector.shape_cast %19 : vector<1x16x16xf32> to vector<16x16xf32>
    %cst_25 = arith.constant dense<0.000000e+00> : vector<256x16xf32>
    %21 = tpu.matmul %18, %20, %cst_25 {dimension_numbers = #tpu.dot_dimension_numbers<[1], [0], [0], [1], [0, 0, 1, 1], [], []>} : vector<256x16xf32>, vector<16x16xf32>, vector<256x16xf32> -> vector<256x16xf32>
    %22 = arith.addf %16, %21 : vector<256x16xf32>
    %23 = vector.extract_strided_slice %9 {offsets = [0, 2, 0], sizes = [16, 16, 16], strides = [1, 1, 1]} : vector<18x18x16xf32> to vector<16x16x16xf32>
    %24 = vector.shape_cast %23 : vector<16x16x16xf32> to vector<256x16xf32>
    %c2 = arith.constant 2 : index
    %c0_26 = arith.constant 0 : index
    %c0_27 = arith.constant 0 : index
    %25 = vector.load %arg3[%c2, %c0_26, %c0_27] : memref<9x16x16xf32, #tpu.memory_space<vmem>>, vector<1x16x16xf32>
    %26 = vector.shape_cast %25 : vector<1x16x16xf32> to vector<16x16xf32>
    %cst_28 = arith.constant dense<0.000000e+00> : vector<256x16xf32>
    %27 = tpu.matmul %24, %26, %cst_28 {dimension_numbers = #tpu.dot_dimension_numbers<[1], [0], [0], [1], [0, 0, 1, 1], [], []>} : vector<256x16xf32>, vector<16x16xf32>, vector<256x16xf32> -> vector<256x16xf32>
    %28 = arith.addf %22, %27 : vector<256x16xf32>
    %29 = vector.extract_strided_slice %9 {offsets = [1, 0, 0], sizes = [16, 16, 16], strides = [1, 1, 1]} : vector<18x18x16xf32> to vector<16x16x16xf32>
    %30 = vector.shape_cast %29 : vector<16x16x16xf32> to vector<256x16xf32>
    %c3 = arith.constant 3 : index
    %c0_29 = arith.constant 0 : index
    %c0_30 = arith.constant 0 : index
    %31 = vector.load %arg3[%c3, %c0_29, %c0_30] : memref<9x16x16xf32, #tpu.memory_space<vmem>>, vector<1x16x16xf32>
    %32 = vector.shape_cast %31 : vector<1x16x16xf32> to vector<16x16xf32>
    %cst_31 = arith.constant dense<0.000000e+00> : vector<256x16xf32>
    %33 = tpu.matmul %30, %32, %cst_31 {dimension_numbers = #tpu.dot_dimension_numbers<[1], [0], [0], [1], [0, 0, 1, 1], [], []>} : vector<256x16xf32>, vector<16x16xf32>, vector<256x16xf32> -> vector<256x16xf32>
    %34 = arith.addf %28, %33 : vector<256x16xf32>
    %35 = vector.extract_strided_slice %9 {offsets = [1, 1, 0], sizes = [16, 16, 16], strides = [1, 1, 1]} : vector<18x18x16xf32> to vector<16x16x16xf32>
    %36 = vector.shape_cast %35 : vector<16x16x16xf32> to vector<256x16xf32>
    %c4 = arith.constant 4 : index
    %c0_32 = arith.constant 0 : index
    %c0_33 = arith.constant 0 : index
    %37 = vector.load %arg3[%c4, %c0_32, %c0_33] : memref<9x16x16xf32, #tpu.memory_space<vmem>>, vector<1x16x16xf32>
    %38 = vector.shape_cast %37 : vector<1x16x16xf32> to vector<16x16xf32>
    %cst_34 = arith.constant dense<0.000000e+00> : vector<256x16xf32>
    %39 = tpu.matmul %36, %38, %cst_34 {dimension_numbers = #tpu.dot_dimension_numbers<[1], [0], [0], [1], [0, 0, 1, 1], [], []>} : vector<256x16xf32>, vector<16x16xf32>, vector<256x16xf32> -> vector<256x16xf32>
    %40 = arith.addf %34, %39 : vector<256x16xf32>
    %41 = vector.extract_strided_slice %9 {offsets = [1, 2, 0], sizes = [16, 16, 16], strides = [1, 1, 1]} : vector<18x18x16xf32> to vector<16x16x16xf32>
    %42 = vector.shape_cast %41 : vector<16x16x16xf32> to vector<256x16xf32>
    %c5 = arith.constant 5 : index
    %c0_35 = arith.constant 0 : index
    %c0_36 = arith.constant 0 : index
    %43 = vector.load %arg3[%c5, %c0_35, %c0_36] : memref<9x16x16xf32, #tpu.memory_space<vmem>>, vector<1x16x16xf32>
    %44 = vector.shape_cast %43 : vector<1x16x16xf32> to vector<16x16xf32>
    %cst_37 = arith.constant dense<0.000000e+00> : vector<256x16xf32>
    %45 = tpu.matmul %42, %44, %cst_37 {dimension_numbers = #tpu.dot_dimension_numbers<[1], [0], [0], [1], [0, 0, 1, 1], [], []>} : vector<256x16xf32>, vector<16x16xf32>, vector<256x16xf32> -> vector<256x16xf32>
    %46 = arith.addf %40, %45 : vector<256x16xf32>
    %47 = vector.extract_strided_slice %9 {offsets = [2, 0, 0], sizes = [16, 16, 16], strides = [1, 1, 1]} : vector<18x18x16xf32> to vector<16x16x16xf32>
    %48 = vector.shape_cast %47 : vector<16x16x16xf32> to vector<256x16xf32>
    %c6 = arith.constant 6 : index
    %c0_38 = arith.constant 0 : index
    %c0_39 = arith.constant 0 : index
    %49 = vector.load %arg3[%c6, %c0_38, %c0_39] : memref<9x16x16xf32, #tpu.memory_space<vmem>>, vector<1x16x16xf32>
    %50 = vector.shape_cast %49 : vector<1x16x16xf32> to vector<16x16xf32>
    %cst_40 = arith.constant dense<0.000000e+00> : vector<256x16xf32>
    %51 = tpu.matmul %48, %50, %cst_40 {dimension_numbers = #tpu.dot_dimension_numbers<[1], [0], [0], [1], [0, 0, 1, 1], [], []>} : vector<256x16xf32>, vector<16x16xf32>, vector<256x16xf32> -> vector<256x16xf32>
    %52 = arith.addf %46, %51 : vector<256x16xf32>
    %53 = vector.extract_strided_slice %9 {offsets = [2, 1, 0], sizes = [16, 16, 16], strides = [1, 1, 1]} : vector<18x18x16xf32> to vector<16x16x16xf32>
    %54 = vector.shape_cast %53 : vector<16x16x16xf32> to vector<256x16xf32>
    %c7 = arith.constant 7 : index
    %c0_41 = arith.constant 0 : index
    %c0_42 = arith.constant 0 : index
    %55 = vector.load %arg3[%c7, %c0_41, %c0_42] : memref<9x16x16xf32, #tpu.memory_space<vmem>>, vector<1x16x16xf32>
    %56 = vector.shape_cast %55 : vector<1x16x16xf32> to vector<16x16xf32>
    %cst_43 = arith.constant dense<0.000000e+00> : vector<256x16xf32>
    %57 = tpu.matmul %54, %56, %cst_43 {dimension_numbers = #tpu.dot_dimension_numbers<[1], [0], [0], [1], [0, 0, 1, 1], [], []>} : vector<256x16xf32>, vector<16x16xf32>, vector<256x16xf32> -> vector<256x16xf32>
    %58 = arith.addf %52, %57 : vector<256x16xf32>
    %59 = vector.extract_strided_slice %9 {offsets = [2, 2, 0], sizes = [16, 16, 16], strides = [1, 1, 1]} : vector<18x18x16xf32> to vector<16x16x16xf32>
    %60 = vector.shape_cast %59 : vector<16x16x16xf32> to vector<256x16xf32>
    %c8_44 = arith.constant 8 : index
    %c0_45 = arith.constant 0 : index
    %c0_46 = arith.constant 0 : index
    %61 = vector.load %arg3[%c8_44, %c0_45, %c0_46] : memref<9x16x16xf32, #tpu.memory_space<vmem>>, vector<1x16x16xf32>
    %62 = vector.shape_cast %61 : vector<1x16x16xf32> to vector<16x16xf32>
    %cst_47 = arith.constant dense<0.000000e+00> : vector<256x16xf32>
    %63 = tpu.matmul %60, %62, %cst_47 {dimension_numbers = #tpu.dot_dimension_numbers<[1], [0], [0], [1], [0, 0, 1, 1], [], []>} : vector<256x16xf32>, vector<16x16xf32>, vector<256x16xf32> -> vector<256x16xf32>
    %64 = arith.addf %58, %63 : vector<256x16xf32>
    %c0_48 = arith.constant 0 : index
    %65 = memref.load %arg5[%c0_48] : memref<1xf32, #tpu.memory_space<smem>>
    %cst_49 = arith.constant 0.000000e+00 : f32
    %66 = vector.broadcast %cst_49 : f32 to vector<256x16xf32>
    %67 = arith.cmpf oge, %64, %66 : vector<256x16xf32>
    %68 = vector.broadcast %65 : f32 to vector<256x16xf32>
    %69 = arith.mulf %68, %64 : vector<256x16xf32>
    %70 = arith.select %67, %64, %69 : vector<256x16xi1>, vector<256x16xf32>
    %71 = vector.shape_cast %1 : vector<16x16x16xf32> to vector<256x16xf32>
    %c0_50 = arith.constant 0 : index
    %c0_51 = arith.constant 0 : index
    %72 = vector.load %arg4[%c0_50, %c0_51] : memref<16x16xf32, #tpu.memory_space<vmem>>, vector<16x16xf32>
    %cst_52 = arith.constant dense<0.000000e+00> : vector<256x16xf32>
    %73 = tpu.matmul %71, %72, %cst_52 {dimension_numbers = #tpu.dot_dimension_numbers<[1], [0], [0], [1], [0, 0, 1, 1], [], []>} : vector<256x16xf32>, vector<16x16xf32>, vector<256x16xf32> -> vector<256x16xf32>
    %74 = arith.addf %70, %73 : vector<256x16xf32>
    %75 = vector.shape_cast %74 : vector<256x16xf32> to vector<16x16x16xf32>
    %c0_53 = arith.constant 0 : index
    %c0_54 = arith.constant 0 : index
    %c0_55 = arith.constant 0 : index
    %c0_56 = arith.constant 0 : index
    %76 = vector.load %arg6[%c0_53, %c0_54, %c0_55, %c0_56] : memref<1x16x16x16xf32, #tpu.memory_space<vmem>>, vector<1x16x16x16xf32>
    %77 = vector.shape_cast %76 : vector<1x16x16x16xf32> to vector<16x16x16xf32>
    %78 = vector.shape_cast %75 : vector<16x16x16xf32> to vector<1x16x16x16xf32>
    tpu.vector_store %arg6[%c0_53, %c0_54, %c0_55, %c0_56], %78 {strides = array<i32>} : memref<1x16x16x16xf32, #tpu.memory_space<vmem>>, vector<1x16x16x16xf32>,
    return
  }
  func.func @transform_0(%arg0: i32) -> (i32, i32, i32, i32) {
    %c0_i32 = arith.constant 0 : i32
    %c0_i32_0 = arith.constant 0 : i32
    %c0_i32_1 = arith.constant 0 : i32
    %c0_i32_2 = arith.constant 0 : i32
    return %arg0, %c0_i32, %c0_i32_0, %c0_i32_1 : i32, i32, i32, i32
  }
  func.func @transform_1(%arg0: i32) -> (i32, i32, i32, i32) {
    %c0_i32 = arith.constant 0 : i32
    %c0_i32_0 = arith.constant 0 : i32
    %c0_i32_1 = arith.constant 0 : i32
    %c0_i32_2 = arith.constant 0 : i32
    return %arg0, %c0_i32, %c0_i32_0, %c0_i32_1 : i32, i32, i32, i32
  }
  func.func @transform_2(%arg0: i32) -> (i32, i32, i32) {
    %c0_i32 = arith.constant 0 : i32
    %c0_i32_0 = arith.constant 0 : i32
    %c0_i32_1 = arith.constant 0 : i32
    %c0_i32_2 = arith.constant 0 : i32
    return %c0_i32, %c0_i32_0, %c0_i32_1 : i32, i32, i32
  }
  func.func @transform_3(%arg0: i32) -> (i32, i32) {
    %c0_i32 = arith.constant 0 : i32
    %c0_i32_0 = arith.constant 0 : i32
    %c0_i32_1 = arith.constant 0 : i32
    return %c0_i32, %c0_i32_0 : i32, i32
  }
  func.func @transform_4(%arg0: i32) -> i32 {
    %c0_i32 = arith.constant 0 : i32
    %c0_i32_0 = arith.constant 0 : i32
    return %c0_i32 : i32
  }
  func.func @transform_5(%arg0: i32) -> (i32, i32, i32, i32) {
    %c0_i32 = arith.constant 0 : i32
    %c0_i32_0 = arith.constant 0 : i32
    %c0_i32_1 = arith.constant 0 : i32
    %c0_i32_2 = arith.constant 0 : i32
    return %arg0, %c0_i32, %c0_i32_0, %c0_i32_1 : i32, i32, i32, i32
  }
}

</mosaic_0001>

<llo_original>
// kernel: hwab_pallas.9
$region0: #{hwab_pallas.9}
  #allocation0 [shape = 'u32[]', space=smem, size = 0x4, offset = 0x4, fixed_abs, tag = 'smem constant byte address 0x4 - core index']
  #allocation1 [shape = 'u32[72,128]{1,0:T(1,128)}', space=vmem, size = 0x9000, scoped, tag = 'internal scratch']
  %s0 = inlined_call_operand.vmem [shape: f32[2,32], index: 0, kind: input, shape index: {}]
  %s1 = inlined_call_operand.vmem [shape: f32[32,2], index: 1, kind: input, shape index: {}]
  %s2 = inlined_call_operand.vmem [shape: f32[2,32], index: 2, kind: input, shape index: {}]
  %s3 = inlined_call_operand.vmem [shape: f32[2,32], index: 3, kind: output, shape index: {}]
  %s4 = sld [smem:[#allocation0]]
  $region22: #{hwab_pallas.9} parent=0
    _
  %s6 = ssub.s32 1, %s4
  %s7 = scalar_select 0, %s6, %s4
  // Predicated region
  $region2: #{hwab_pallas.9} parent=0 // pred_check
    _
  $region3: #{hwab_pallas.9} parent=0 // pred_check_branch
    %9 = sbr.rel (0) target = $region5
  $region4: #{hwab_pallas.9} parent=0 // pred_region
    _
  $region5: #{hwab_pallas.9} parent=0 // pred_fallthru
    _
  // Predicated region
  $region6: #{hwab_pallas.9} parent=0 // pred_check
    _
  $region7: #{hwab_pallas.9} parent=0 // pred_check_branch
    %11 = sbr.rel (0) target = $region9
  $region8: #{hwab_pallas.9} parent=0 // pred_region
    _
  $region9: #{hwab_pallas.9} parent=0 // pred_fallthru
    _
  // Predicated region
  $region10: #{hwab_pallas.9} parent=0 // pred_check
    _
  $region11: #{hwab_pallas.9} parent=0 // pred_check_branch
    %13 = sbr.rel (0) target = $region13
  $region12: #{hwab_pallas.9} parent=0 // pred_region
    _
  $region13: #{hwab_pallas.9} parent=0 // pred_fallthru
    _
  %v14 = vld [vmem:[%s0] sm:$0x3]
  %v15 = vld [vmem:[%s1] sm:$0xff]
  %v16 = vld [vmem:[%s1 + $0x8] sm:$0xff]
  %v17 = vld [vmem:[%s1 + $0x10] sm:$0xff]
  %v18 = vld [vmem:[%s1 + $0x18] sm:$0xff]
  %vm19 = vcmask 261120
  %v21 = vsel %vm19, %v14, 0
  %23 = vmatpush.msra.mxu0 0.0
  %24 = vmatpush.msra.mxu0 0.0
  %25 = vmatpush.msra.mxu0 0.0
  %26 = vmatpush.msra.mxu0 0.0
  %27 = vmatpush.msra.mxu0 0.0
  %28 = vmatpush.msra.mxu0 0.0
  %29 = vmatpush.msra.mxu0 0.0
  %30 = vmatpush.msra.mxu0 0.0
  %31 = vmatpush.msra.mxu0 0.0
  %32 = vmatpush.msra.mxu0 0.0
  %33 = vmatpush.msra.mxu0 0.0
  %34 = vmatpush.msra.mxu0 0.0
  %35 = vmatpush.msra.mxu0 %v18
  %36 = vmatpush.msra.mxu0 %v17
  %37 = vmatpush.msra.mxu0 %v16
  %38 = vmatpush.msra.mxu0 %v15
  %39 = vmatmul.f32.gmra.mxu0 %v21
  %v40 = vpop.f32.mrf.mxu0
  %v41 = vadd.f32 0.0, %v40
  %42 = vdwg.mxu0
  %v43 = vmax.f32 %v41, 0.0
  %v44 = vld [vmem:[%s2] sm:$0x3]
  %vm45 = vcmask 15360
  %v47 = vsel %vm45, %v43, 0
  %vm49 = vcmask 1041408
  %v51 = vsel %vm49, %v44, 0
  %53 = vmatpush.msra.mxu0 0.0
  %54 = vmatpush.msra.mxu0 0.0
  %55 = vmatpush.msra.mxu0 0.0
  %56 = vmatpush.msra.mxu0 0.0
  %57 = vmatpush.msra.mxu0 0.0
  %58 = vmatpush.msra.mxu0 0.0
  %59 = vmatpush.msra.mxu0 0.0
  %60 = vmatpush.msra.mxu0 0.0
  %61 = vmatpush.msra.mxu0 0.0
  %62 = vmatpush.msra.mxu0 0.0
  %63 = vmatpush.msra.mxu0 0.0
  %64 = vmatpush.msra.mxu0 0.0
  %65 = vmatpush.msra.mxu0 0.0
  %66 = vmatpush.msra.mxu0 0.0
  %67 = vmatpush.msra.mxu0 0.0
  %68 = vmatpush.msra.mxu0 %v51
  %69 = vmatmul.f32.gmra.mxu0 %v47
  %v70 = vpop.f32.mrf.mxu0
  %v71 = vadd.f32 0.0, %v70
  %72 = vdwg.mxu0
  %v73 = vxor.u32 %v71, 2147483648
  %v74 = vmul.f32 %v73, 1.442695
  %v75 = vpow.pop %v74
  %v76 = vadd.f32 %v75, 1.0
  %v77 = vrcp.pop %v76
  %v78 = vmul.f32 %v76, %v77
  %v79 = vsub.f32 1.0, %v78
  %v80 = vmul.f32 %v77, %v79
  %v81 = vadd.f32 %v77, %v80
  %vm82 = vweird.f32 %v76
  %vm83 = vweird.f32 %v77
  %vm84 = vmor %vm82, %vm83
  %v85 = vsel %vm84, %v77, %v81
  %v86 = vand.u32 2147483647, %v76
  %vm87 = vcmp.eq.f32.partialorder %v86, 8.507059e+37
  %v88 = vand.u32 %v76, 2147483648
  %v89 = vor.u32 1.1754944e-38, %v88
  %v90 = vsel %vm87, %v89, %v85
  %v91 = vmul.f32 1.0, %v90
  %vm92 = vcmask 254976
  %93 = vst.msk [vmem:[%s3] sm:$0x3] %vm92, %v91
  // Predicated region
  $region14: #{hwab_pallas.9} parent=0 // pred_check
    _
  $region15: #{hwab_pallas.9} parent=0 // pred_check_branch
    %95 = sbr.rel (0) target = $region17
  $region16: #{hwab_pallas.9} parent=0 // pred_region
    _
  $region17: #{hwab_pallas.9} parent=0 // pred_fallthru
    _
  // Predicated region
  $region18: #{hwab_pallas.9} parent=0 // pred_check
    _
  $region19: #{hwab_pallas.9} parent=0 // pred_check_branch
    %97 = sbr.rel (0) target = $region21
  $region20: #{hwab_pallas.9} parent=0 // pred_region
    _
  $region21: #{hwab_pallas.9} parent=0 // pred_fallthru
    _

// kernel: hwab_pallas.8
$region0: #{hwab_pallas.8}
  #allocation0 [shape = 'u32[]', space=smem, size = 0x4, offset = 0x4, fixed_abs, tag = 'smem constant byte address 0x4 - core index']
  #allocation1 [shape = 'u32[72,128]{1,0:T(1,128)}', space=vmem, size = 0x9000, scoped, tag = 'internal scratch']
  %s0 = inlined_call_operand.vmem [shape: f32[2,10,10,16], index: 0, kind: input, shape index: {}]
  %s1 = inlined_call_operand.vmem [shape: f32[9,16,32], index: 1, kind: input, shape index: {}]
  %s2 = inlined_call_operand.vmem [shape: f32[2,8,8,32], index: 2, kind: output, shape index: {0}]
  %s3 = inlined_call_operand.vmem [shape: f32[2,1,32], index: 3, kind: output, shape index: {1}]
  %4 = xla_tuple %s2, %s3
  %s5 = sld [smem:[#allocation0]]
  $region49: #{hwab_pallas.8} parent=0
    _
  %s7 = ssub.s32 1, %s5
  %s8 = scalar_select 0, %s7, %s5
  loop: start=0, step=1, limit=4
  $region2: #{hwab_pallas.8} parent=0 // loop_pre_header
    _
  $region3: #{hwab_pallas.8} parent=0 // loop_header
    %s10 = sphi 0, %s14
    %p11 = scmp.ge.s32.totalorder %s10, 4
    %s20 = sphi 0, %s22
    %s23 = sphi 0, %s20
    %s24 = sphi 0, %s23
    %s40 = sphi 0, %s24
    %s44 = sphi 0, %s44
    %s46 = sphi 0, %s44
    %s47 = sphi 0, %s46
    %s61 = sphi 0, %s47
    %s67 = sphi 0, %s69
    %s70 = sphi 0, %s67
    %s71 = sphi 0, %s70
    %s87 = sphi 0, %s71
    %s93 = sphi 0, %s95
    %s96 = sphi 0, %s93
    %s97 = sphi 0, %s96
    %s113 = sphi 0, %s97
  $region4: #{hwab_pallas.8} parent=0 // loop_header_branch
    %13 = sbr.rel (%p11) target = $region8
  $region5: #{hwab_pallas.8} parent=0 // loop_body
    %s15 = ssub.s32 %s10, 1
    %s16 = ssub.s32 %s10, 2
    %s17 = sadd.s32 %s10, 1
    %s18 = ssub.s32 %s10, %s17
    %p19 = scmp.eq.s32.totalorder %s18, 0
    %s21 = sadd.s32 %s20, 1
    %s22 = scalar_select %p19, %s20, %s21
    %p25 = pneg %p19
    %p26 = scmp.eq.s32.totalorder %s10, 1
    %p27 = por %p25, %p26
    %p28 = scmp.ne.s32.totalorder %s20, %s23
    %p29 = scmp.eq.s32.totalorder %s10, 0
    %p30 = por %p28, %p29
    %p31 = scmp.ne.s32.totalorder %s20, %s23
    %p32 = scmp.eq.s32.totalorder %s15, 1
    %p33 = por %p31, %p32
    %p34 = scmp.ne.s32.totalorder %s23, %s24
    %p35 = scmp.eq.s32.totalorder %s15, 0
    %p36 = por %p34, %p35
    %p37 = scmp.ne.s32.totalorder %s23, %s24
    %p38 = scmp.eq.s32.totalorder %s16, 1
    %p39 = por %p37, %p38
    %p41 = scmp.ne.s32.totalorder %s24, %s40
    %p42 = scmp.eq.s32.totalorder %s16, 0
    %p43 = por %p41, %p42
    %s45 = sadd.s32 %s44, 1
    %p48 = scmp.eq.s32.totalorder %s10, 1
    %p49 = scmp.ne.s32.totalorder %s44, %s46
    %p50 = scmp.eq.s32.totalorder %s10, 0
    %p51 = por %p49, %p50
    %p52 = scmp.ne.s32.totalorder %s44, %s46
    %p53 = scmp.eq.s32.totalorder %s15, 1
    %p54 = por %p52, %p53
    %p55 = scmp.ne.s32.totalorder %s46, %s47
    %p56 = scmp.eq.s32.totalorder %s15, 0
    %p57 = por %p55, %p56
    %p58 = scmp.ne.s32.totalorder %s46, %s47
    %p59 = scmp.eq.s32.totalorder %s16, 1
    %p60 = por %p58, %p59
    %p62 = scmp.ne.s32.totalorder %s47, %s61
    %p63 = scmp.eq.s32.totalorder %s16, 0
    %p64 = por %p62, %p63
    %s65 = ssub.s32 %s10, %s17
    %p66 = scmp.eq.s32.totalorder %s65, 0
    %s68 = sadd.s32 %s67, 1
    %s69 = scalar_select %p66, %s67, %s68
    %p72 = pneg %p66
    %p73 = scmp.eq.s32.totalorder %s10, 1
    %p74 = por %p72, %p73
    %p75 = scmp.ne.s32.totalorder %s67, %s70
    %p76 = scmp.eq.s32.totalorder %s10, 0
    %p77 = por %p75, %p76
    %p78 = scmp.ne.s32.totalorder %s67, %s70
    %p79 = scmp.eq.s32.totalorder %s15, 1
    %p80 = por %p78, %p79
    %p81 = scmp.ne.s32.totalorder %s70, %s71
    %p82 = scmp.eq.s32.totalorder %s15, 0
    %p83 = por %p81, %p82
    %p84 = scmp.ne.s32.totalorder %s70, %s71
    %p85 = scmp.eq.s32.totalorder %s16, 1
    %p86 = por %p84, %p85
    %p88 = scmp.ne.s32.totalorder %s71, %s87
    %p89 = scmp.eq.s32.totalorder %s16, 0
    %p90 = por %p88, %p89
    %s91 = ssub.s32 %s10, %s17
    %p92 = scmp.eq.s32.totalorder %s91, 0
    %s94 = sadd.s32 %s93, 1
    %s95 = scalar_select %p92, %s93, %s94
    %p98 = pneg %p92
    %p99 = scmp.eq.s32.totalorder %s10, 1
    %p100 = por %p98, %p99
    %p101 = scmp.ne.s32.totalorder %s93, %s96
    %p102 = scmp.eq.s32.totalorder %s10, 0
    %p103 = por %p101, %p102
    %p104 = scmp.ne.s32.totalorder %s93, %s96
    %p105 = scmp.eq.s32.totalorder %s15, 1
    %p106 = por %p104, %p105
    %p107 = scmp.ne.s32.totalorder %s96, %s97
    %p108 = scmp.eq.s32.totalorder %s15, 0
    %p109 = por %p107, %p108
    %p110 = scmp.ne.s32.totalorder %s96, %s97
    %p111 = scmp.eq.s32.totalorder %s16, 1
    %p112 = por %p110, %p111
    %p114 = scmp.ne.s32.totalorder %s97, %s113
    %p115 = scmp.eq.s32.totalorder %s16, 0
    %p116 = por %p114, %p115
    %p117 = scmp.le.s32.totalorder 1, %s10
    %p118 = scmp.lt.s32.totalorder %s10, 3
    %p119 = pnand %p117, %p118
    %p120 = pneg %p119
    // Predicated region
    $region9: #{hwab_pallas.8} parent=5 // pred_check
      _
    $region10: #{hwab_pallas.8} parent=5 // pred_check_branch
      %122 = sbr.rel (%p119) target = $region12
    $region11: #{hwab_pallas.8} parent=5 // pred_region
      %s123 = ssub.s32 %s10, 1
      // Predicated region
      $region13: #{hwab_pallas.8} parent=11 // pred_check
        %p124 = pneg %p57
      $region14: #{hwab_pallas.8} parent=11 // pred_check_branch
        %126 = sbr.rel (%p124) target = $region16
      $region15: #{hwab_pallas.8} parent=11 // pred_region
        _
      $region16: #{hwab_pallas.8} parent=11 // pred_fallthru
        _
    $region12: #{hwab_pallas.8} parent=5 // pred_fallthru
      _
    %p127 = scmp.lt.s32.totalorder %s10, 2
    // Predicated region
    $region17: #{hwab_pallas.8} parent=5 // pred_check
      %p128 = pneg %p127
    $region18: #{hwab_pallas.8} parent=5 // pred_check_branch
      %130 = sbr.rel (%p128) target = $region20
    $region19: #{hwab_pallas.8} parent=5 // pred_region
      // Predicated region
      $region21: #{hwab_pallas.8} parent=19 // pred_check
        %p131 = pneg %p30
      $region22: #{hwab_pallas.8} parent=19 // pred_check_branch
        %133 = sbr.rel (%p131) target = $region24
      $region23: #{hwab_pallas.8} parent=19 // pred_region
        %p134 = scmp.lt.s32.totalorder %s10, 1
        %s135 = scalar_select %p134, %s10, 1
        %s136 = smul.addr %s135, 20
        %s137 = smul.addr %s136, 8
        %s138 = scalar_lea.vmem %s0, %s137
      $region24: #{hwab_pallas.8} parent=19 // pred_fallthru
        _
    $region20: #{hwab_pallas.8} parent=5 // pred_fallthru
      _
    %p139 = scmp.le.s32.totalorder 1, %s10
    %p140 = scmp.lt.s32.totalorder %s10, 3
    %p141 = pnand %p139, %p140
    %p142 = pneg %p141
    // Predicated region
    $region25: #{hwab_pallas.8} parent=5 // pred_check
      _
    $region26: #{hwab_pallas.8} parent=5 // pred_check_branch
      %144 = sbr.rel (%p141) target = $region28
    $region27: #{hwab_pallas.8} parent=5 // pred_region
      %s145 = ssub.s32 %s10, 1
      %p146 = scmp.lt.s32.totalorder %s15, 1
      %s147 = scalar_select %p146, %s15, 1
      %s148 = smul.addr %s147, 20
      %s149 = smul.addr %s148, 8
      %s150 = scalar_lea.vmem %s0, %s149
      %p151 = pneg %p36
      %p152 = pneg %p33
      %p153 = pneg %p57
      %p154 = pneg %p54
      %p155 = pneg %p83
      %p156 = pneg %p80
      %p157 = scmp.lt.s32.totalorder %s15, 1
      %s158 = scalar_select %p157, %s15, 1
      %s159 = smul.addr %s158, 8
      %s160 = smul.addr %s159, 8
      %s161 = scalar_lea.vmem %s2, %s160
      %p162 = pneg %p109
      %p163 = pneg %p106
      %p164 = scmp.lt.s32.totalorder %s15, 1
      %s165 = scalar_select %p164, %s15, 1
      %s166 = scalar_lea.vmem %s3, %s165
      %p167 = scmp.lt.s32.totalorder %s15, 1
      %s168 = scalar_select %p167, %s15, 1
      %s169 = smul.addr %s168, 20
      %s170 = smul.addr %s169, 8
      %s171 = scalar_lea.vmem %s0, %s170
      %p172 = scmp.lt.s32.totalorder %s15, 1
      %s173 = scalar_select %p172, %s15, 1
      %s174 = smul.addr %s173, 8
      %s175 = smul.addr %s174, 8
      %s176 = scalar_lea.vmem %s2, %s175
      %p177 = scmp.lt.s32.totalorder %s15, 1
      %s178 = scalar_select %p177, %s15, 1
      %s179 = scalar_lea.vmem %s3, %s178
      %v180 = vld [vmem:[%s171] sm:$0xff]
      %v181 = vld [vmem:[%s171 + $0x8] sm:$0x3]
      %v182 = vld [vmem:[%s171 + $0x10] sm:$0xff]
      %v183 = vld [vmem:[%s171 + $0x18] sm:$0x3]
      %v184 = vld [vmem:[%s171 + $0x20] sm:$0xff]
      %v185 = vld [vmem:[%s171 + $0x28] sm:$0x3]
      %v186 = vld [vmem:[%s171 + $0x30] sm:$0xff]
      %v187 = vld [vmem:[%s171 + $0x38] sm:$0x3]
      %v188 = vld [vmem:[%s171 + $0x40] sm:$0xff]
      %v189 = vld [vmem:[%s171 + $0x48] sm:$0x3]
      %v190 = vld [vmem:[%s171 + $0x50] sm:$0xff]
      %v191 = vld [vmem:[%s171 + $0x58] sm:$0x3]
      %v192 = vld [vmem:[%s171 + $0x60] sm:$0xff]
      %v193 = vld [vmem:[%s171 + $0x68] sm:$0x3]
      %v194 = vld [vmem:[%s171 + $0x70] sm:$0xff]
      %v195 = vld [vmem:[%s171 + $0x78] sm:$0x3]
      %v196 = vld [vmem:[%s171 + $0x80] sm:$0xff]
      %v197 = vld [vmem:[%s171 + $0x88] sm:$0x3]
      %v198 = vld [vmem:[%s171 + $0x90] sm:$0xff]
      %v199 = vld [vmem:[%s171 + $0x98] sm:$0x3]
      %v200 = vld [vmem:[%s1] sm:$0xff]
      %v201 = vld [vmem:[%s1 + $0x8] sm:$0xff]
      %vm218 = vcmask 1046528
      %v219 = vrot.slane %v180, 1
      %v220 = vrot.slane %v181, 1
      %v221 = vsel %vm218, %v219, %v220
      %v222 = vrot.slane %v182, 1
      %v223 = vrot.slane %v183, 1
      %v224 = vsel %vm218, %v222, %v223
      %v225 = vrot.slane %v184, 1
      %v226 = vrot.slane %v185, 1
      %v227 = vsel %vm218, %v225, %v226
      %v228 = vrot.slane %v186, 1
      %v229 = vrot.slane %v187, 1
      %v230 = vsel %vm218, %v228, %v229
      %v231 = vrot.slane %v188, 1
      %v232 = vrot.slane %v189, 1
      %v233 = vsel %vm218, %v231, %v232
      %v234 = vrot.slane %v190, 1
      %v235 = vrot.slane %v191, 1
      %v236 = vsel %vm218, %v234, %v235
      %v237 = vrot.slane %v192, 1
      %v238 = vrot.slane %v193, 1
      %v239 = vsel %vm218, %v237, %v238
      %v240 = vrot.slane %v194, 1
      %v241 = vrot.slane %v195, 1
      %v242 = vsel %vm218, %v240, %v241
      %s243 = scalar_lea.vmem %s1, 16
      %v244 = vld [vmem:[%s243] sm:$0xff]
      %v245 = vld [vmem:[%s243 + $0x8] sm:$0xff]
      %vm246 = vcmask 130048
      %v247 = vsel %vm246, %v221, 0
      %v249 = vsel %vm246, %v224, 0
      %v251 = vsel %vm246, %v227, 0
      %v253 = vsel %vm246, %v230, 0
      %v255 = vsel %vm246, %v233, 0
      %v257 = vsel %vm246, %v236, 0
      %v259 = vsel %vm246, %v239, 0
      %v261 = vsel %vm246, %v242, 0
      %263 = vmatpush.msra.mxu0 0.0
      %264 = vmatpush.msra.mxu0 0.0
      %265 = vmatpush.msra.mxu0 0.0
      %266 = vmatpush.msra.mxu0 0.0
      %267 = vmatpush.msra.mxu0 0.0
      %268 = vmatpush.msra.mxu0 0.0
      %269 = vmatpush.msra.mxu0 0.0
      %270 = vmatpush.msra.mxu0 0.0
      %271 = vmatpush.msra.mxu0 0.0
      %272 = vmatpush.msra.mxu0 0.0
      %273 = vmatpush.msra.mxu0 0.0
      %274 = vmatpush.msra.mxu0 0.0
      %275 = vmatpush.msra.mxu0 0.0
      %276 = vmatpush.msra.mxu0 0.0
      %277 = vmatpush.msra.mxu0 %v245
      %278 = vmatpush.msra.mxu0 %v244
      %279 = vmatmul.f32.gmra.mxu0 %v247
      %v280 = vpop.f32.mrf.mxu0
      %v281 = vadd.f32 0.0, %v280
      %282 = vmatmul.f32.gmra.mxu0 %v249
      %v283 = vpop.f32.mrf.mxu0
      %v284 = vadd.f32 0.0, %v283
      %285 = vmatmul.f32.gmra.mxu0 %v251
      %v286 = vpop.f32.mrf.mxu0
      %v287 = vadd.f32 0.0, %v286
      %288 = vmatmul.f32.gmra.mxu0 %v253
      %v289 = vpop.f32.mrf.mxu0
      %v290 = vadd.f32 0.0, %v289
      %291 = vmatmul.f32.gmra.mxu0 %v255
      %v292 = vpop.f32.mrf.mxu0
      %v293 = vadd.f32 0.0, %v292
      %294 = vmatmul.f32.gmra.mxu0 %v257
      %v295 = vpop.f32.mrf.mxu0
      %v296 = vadd.f32 0.0, %v295
      %297 = vmatmul.f32.gmra.mxu0 %v259
      %v298 = vpop.f32.mrf.mxu0
      %v299 = vadd.f32 0.0, %v298
      %300 = vmatmul.f32.gmra.mxu0 %v261
      %v301 = vpop.f32.mrf.mxu0
      %v302 = vadd.f32 0.0, %v301
      %303 = vdwg.mxu0
      %v304 = vsel %vm246, %v180, 0
      %v306 = vsel %vm246, %v182, 0
      %v308 = vsel %vm246, %v184, 0
      %v310 = vsel %vm246, %v186, 0
      %v312 = vsel %vm246, %v188, 0
      %v314 = vsel %vm246, %v190, 0
      %v316 = vsel %vm246, %v192, 0
      %v318 = vsel %vm246, %v194, 0
      %320 = vmatpush.msra.mxu0 0.0
      %321 = vmatpush.msra.mxu0 0.0
      %322 = vmatpush.msra.mxu0 0.0
      %323 = vmatpush.msra.mxu0 0.0
      %324 = vmatpush.msra.mxu0 0.0
      %325 = vmatpush.msra.mxu0 0.0
      %326 = vmatpush.msra.mxu0 0.0
      %327 = vmatpush.msra.mxu0 0.0
      %328 = vmatpush.msra.mxu0 0.0
      %329 = vmatpush.msra.mxu0 0.0
      %330 = vmatpush.msra.mxu0 0.0
      %331 = vmatpush.msra.mxu0 0.0
      %332 = vmatpush.msra.mxu0 0.0
      %333 = vmatpush.msra.mxu0 0.0
      %334 = vmatpush.msra.mxu0 %v201
      %335 = vmatpush.msra.mxu0 %v200
      %336 = vmatmul.f32.gmra.mxu0 %v304
      %v337 = vpop.f32.mrf.mxu0
      %v338 = vadd.f32 %v281, %v337
      %339 = vmatmul.f32.gmra.mxu0 %v306
      %v340 = vpop.f32.mrf.mxu0
      %v341 = vadd.f32 %v284, %v340
      %342 = vmatmul.f32.gmra.mxu0 %v308
      %v343 = vpop.f32.mrf.mxu0
      %v344 = vadd.f32 %v287, %v343
      %345 = vmatmul.f32.gmra.mxu0 %v310
      %v346 = vpop.f32.mrf.mxu0
      %v347 = vadd.f32 %v290, %v346
      %348 = vmatmul.f32.gmra.mxu0 %v312
      %v349 = vpop.f32.mrf.mxu0
      %v350 = vadd.f32 %v293, %v349
      %351 = vmatmul.f32.gmra.mxu0 %v314
      %v352 = vpop.f32.mrf.mxu0
      %v353 = vadd.f32 %v296, %v352
      %354 = vmatmul.f32.gmra.mxu0 %v316
      %v355 = vpop.f32.mrf.mxu0
      %v356 = vadd.f32 %v299, %v355
      %357 = vmatmul.f32.gmra.mxu0 %v318
      %v358 = vpop.f32.mrf.mxu0
      %v359 = vadd.f32 %v302, %v358
      %360 = vdwg.mxu0
      %vm361 = vcmask 1045504
      %v362 = vrot.slane %v180, 2
      %v363 = vrot.slane %v181, 2
      %v364 = vsel %vm361, %v362, %v363
      %v365 = vrot.slane %v182, 2
      %v366 = vrot.slane %v183, 2
      %v367 = vsel %vm361, %v365, %v366
      %v368 = vrot.slane %v184, 2
      %v369 = vrot.slane %v185, 2
      %v370 = vsel %vm361, %v368, %v369
      %v371 = vrot.slane %v186, 2
      %v372 = vrot.slane %v187, 2
      %v373 = vsel %vm361, %v371, %v372
      %v374 = vrot.slane %v188, 2
      %v375 = vrot.slane %v189, 2
      %v376 = vsel %vm361, %v374, %v375
      %v377 = vrot.slane %v190, 2
      %v378 = vrot.slane %v191, 2
      %v379 = vsel %vm361, %v377, %v378
      %v380 = vrot.slane %v192, 2
      %v381 = vrot.slane %v193, 2
      %v382 = vsel %vm361, %v380, %v381
      %v383 = vrot.slane %v194, 2
      %v384 = vrot.slane %v195, 2
      %v385 = vsel %vm361, %v383, %v384
      %s386 = scalar_lea.vmem %s1, 32
      %v387 = vld [vmem:[%s386] sm:$0xff]
      %v388 = vld [vmem:[%s386 + $0x8] sm:$0xff]
      %v389 = vsel %vm246, %v364, 0
      %v391 = vsel %vm246, %v367, 0
      %v393 = vsel %vm246, %v370, 0
      %v395 = vsel %vm246, %v373, 0
      %v397 = vsel %vm246, %v376, 0
      %v399 = vsel %vm246, %v379, 0
      %v401 = vsel %vm246, %v382, 0
      %v403 = vsel %vm246, %v385, 0
      %405 = vmatpush.msra.mxu0 0.0
      %406 = vmatpush.msra.mxu0 0.0
      %407 = vmatpush.msra.mxu0 0.0
      %408 = vmatpush.msra.mxu0 0.0
      %409 = vmatpush.msra.mxu0 0.0
      %410 = vmatpush.msra.mxu0 0.0
      %411 = vmatpush.msra.mxu0 0.0
      %412 = vmatpush.msra.mxu0 0.0
      %413 = vmatpush.msra.mxu0 0.0
      %414 = vmatpush.msra.mxu0 0.0
      %415 = vmatpush.msra.mxu0 0.0
      %416 = vmatpush.msra.mxu0 0.0
      %417 = vmatpush.msra.mxu0 0.0
      %418 = vmatpush.msra.mxu0 0.0
      %419 = vmatpush.msra.mxu0 %v388
      %420 = vmatpush.msra.mxu0 %v387
      %421 = vmatmul.f32.gmra.mxu0 %v389
      %v422 = vpop.f32.mrf.mxu0
      %v423 = vadd.f32 0.0, %v422
      %424 = vmatmul.f32.gmra.mxu0 %v391
      %v425 = vpop.f32.mrf.mxu0
      %v426 = vadd.f32 0.0, %v425
      %427 = vmatmul.f32.gmra.mxu0 %v393
      %v428 = vpop.f32.mrf.mxu0
      %v429 = vadd.f32 0.0, %v428
      %430 = vmatmul.f32.gmra.mxu0 %v395
      %v431 = vpop.f32.mrf.mxu0
      %v432 = vadd.f32 0.0, %v431
      %433 = vmatmul.f32.gmra.mxu0 %v397
      %v434 = vpop.f32.mrf.mxu0
      %v435 = vadd.f32 0.0, %v434
      %436 = vmatmul.f32.gmra.mxu0 %v399
      %v437 = vpop.f32.mrf.mxu0
      %v438 = vadd.f32 0.0, %v437
      %439 = vmatmul.f32.gmra.mxu0 %v401
      %v440 = vpop.f32.mrf.mxu0
      %v441 = vadd.f32 0.0, %v440
      %442 = vmatmul.f32.gmra.mxu0 %v403
      %v443 = vpop.f32.mrf.mxu0
      %v444 = vadd.f32 0.0, %v443
      %445 = vdwg.mxu0
      %v446 = vadd.f32 %v338, %v423
      %v447 = vadd.f32 %v341, %v426
      %v448 = vadd.f32 %v344, %v429
      %v449 = vadd.f32 %v347, %v432
      %v450 = vadd.f32 %v350, %v435
      %v451 = vadd.f32 %v353, %v438
      %v452 = vadd.f32 %v356, %v441
      %v453 = vadd.f32 %v359, %v444
      %s454 = scalar_lea.vmem %s1, 48
      %v455 = vld [vmem:[%s454] sm:$0xff]
      %v456 = vld [vmem:[%s454 + $0x8] sm:$0xff]
      %v458 = vsel %vm246, %v196, 0
      %460 = vmatpush.msra.mxu0 0.0
      %461 = vmatpush.msra.mxu0 0.0
      %462 = vmatpush.msra.mxu0 0.0
      %463 = vmatpush.msra.mxu0 0.0
      %464 = vmatpush.msra.mxu0 0.0
      %465 = vmatpush.msra.mxu0 0.0
      %466 = vmatpush.msra.mxu0 0.0
      %467 = vmatpush.msra.mxu0 0.0
      %468 = vmatpush.msra.mxu0 0.0
      %469 = vmatpush.msra.mxu0 0.0
      %470 = vmatpush.msra.mxu0 0.0
      %471 = vmatpush.msra.mxu0 0.0
      %472 = vmatpush.msra.mxu0 0.0
      %473 = vmatpush.msra.mxu0 0.0
      %474 = vmatpush.msra.mxu0 %v456
      %475 = vmatpush.msra.mxu0 %v455
      %476 = vmatmul.f32.gmra.mxu0 %v306
      %v477 = vpop.f32.mrf.mxu0
      %v478 = vadd.f32 0.0, %v477
      %479 = vmatmul.f32.gmra.mxu0 %v308
      %v480 = vpop.f32.mrf.mxu0
      %v481 = vadd.f32 0.0, %v480
      %482 = vmatmul.f32.gmra.mxu0 %v310
      %v483 = vpop.f32.mrf.mxu0
      %v484 = vadd.f32 0.0, %v483
      %485 = vmatmul.f32.gmra.mxu0 %v312
      %v486 = vpop.f32.mrf.mxu0
      %v487 = vadd.f32 0.0, %v486
      %488 = vmatmul.f32.gmra.mxu0 %v314
      %v489 = vpop.f32.mrf.mxu0
      %v490 = vadd.f32 0.0, %v489
      %491 = vmatmul.f32.gmra.mxu0 %v316
      %v492 = vpop.f32.mrf.mxu0
      %v493 = vadd.f32 0.0, %v492
      %494 = vmatmul.f32.gmra.mxu0 %v318
      %v495 = vpop.f32.mrf.mxu0
      %v496 = vadd.f32 0.0, %v495
      %497 = vmatmul.f32.gmra.mxu0 %v458
      %v498 = vpop.f32.mrf.mxu0
      %v499 = vadd.f32 0.0, %v498
      %500 = vdwg.mxu0
      %v501 = vadd.f32 %v446, %v478
      %v502 = vadd.f32 %v447, %v481
      %v503 = vadd.f32 %v448, %v484
      %v504 = vadd.f32 %v449, %v487
      %v505 = vadd.f32 %v450, %v490
      %v506 = vadd.f32 %v451, %v493
      %v507 = vadd.f32 %v452, %v496
      %v508 = vadd.f32 %v453, %v499
      %v510 = vrot.slane %v196, 1
      %v511 = vrot.slane %v197, 1
      %v512 = vsel %vm218, %v510, %v511
      %s513 = scalar_lea.vmem %s1, 64
      %v514 = vld [vmem:[%s513] sm:$0xff]
      %v515 = vld [vmem:[%s513 + $0x8] sm:$0xff]
      %v516 = vsel %vm246, %v512, 0
      %518 = vmatpush.msra.mxu0 0.0
      %519 = vmatpush.msra.mxu0 0.0
      %520 = vmatpush.msra.mxu0 0.0
      %521 = vmatpush.msra.mxu0 0.0
      %522 = vmatpush.msra.mxu0 0.0
      %523 = vmatpush.msra.mxu0 0.0
      %524 = vmatpush.msra.mxu0 0.0
      %525 = vmatpush.msra.mxu0 0.0
      %526 = vmatpush.msra.mxu0 0.0
      %527 = vmatpush.msra.mxu0 0.0
      %528 = vmatpush.msra.mxu0 0.0
      %529 = vmatpush.msra.mxu0 0.0
      %530 = vmatpush.msra.mxu0 0.0
      %531 = vmatpush.msra.mxu0 0.0
      %532 = vmatpush.msra.mxu0 %v515
      %533 = vmatpush.msra.mxu0 %v514
      %534 = vmatmul.f32.gmra.mxu0 %v249
      %v535 = vpop.f32.mrf.mxu0
      %v536 = vadd.f32 0.0, %v535
      %537 = vmatmul.f32.gmra.mxu0 %v251
      %v538 = vpop.f32.mrf.mxu0
      %v539 = vadd.f32 0.0, %v538
      %540 = vmatmul.f32.gmra.mxu0 %v253
      %v541 = vpop.f32.mrf.mxu0
      %v542 = vadd.f32 0.0, %v541
      %543 = vmatmul.f32.gmra.mxu0 %v255
      %v544 = vpop.f32.mrf.mxu0
      %v545 = vadd.f32 0.0, %v544
      %546 = vmatmul.f32.gmra.mxu0 %v257
      %v547 = vpop.f32.mrf.mxu0
      %v548 = vadd.f32 0.0, %v547
      %549 = vmatmul.f32.gmra.mxu0 %v259
      %v550 = vpop.f32.mrf.mxu0
      %v551 = vadd.f32 0.0, %v550
      %552 = vmatmul.f32.gmra.mxu0 %v261
      %v553 = vpop.f32.mrf.mxu0
      %v554 = vadd.f32 0.0, %v553
      %555 = vmatmul.f32.gmra.mxu0 %v516
      %v556 = vpop.f32.mrf.mxu0
      %v557 = vadd.f32 0.0, %v556
      %558 = vdwg.mxu0
      %v559 = vadd.f32 %v501, %v536
      %v560 = vadd.f32 %v502, %v539
      %v561 = vadd.f32 %v503, %v542
      %v562 = vadd.f32 %v504, %v545
      %v563 = vadd.f32 %v505, %v548
      %v564 = vadd.f32 %v506, %v551
      %v565 = vadd.f32 %v507, %v554
      %v566 = vadd.f32 %v508, %v557
      %v567 = vrot.slane %v196, 2
      %v568 = vrot.slane %v197, 2
      %v569 = vsel %vm361, %v567, %v568
      %s570 = scalar_lea.vmem %s1, 80
      %v571 = vld [vmem:[%s570] sm:$0xff]
      %v572 = vld [vmem:[%s570 + $0x8] sm:$0xff]
      %v573 = vsel %vm246, %v569, 0
      %575 = vmatpush.msra.mxu0 0.0
      %576 = vmatpush.msra.mxu0 0.0
      %577 = vmatpush.msra.mxu0 0.0
      %578 = vmatpush.msra.mxu0 0.0
      %579 = vmatpush.msra.mxu0 0.0
      %580 = vmatpush.msra.mxu0 0.0
      %581 = vmatpush.msra.mxu0 0.0
      %582 = vmatpush.msra.mxu0 0.0
      %583 = vmatpush.msra.mxu0 0.0
      %584 = vmatpush.msra.mxu0 0.0
      %585 = vmatpush.msra.mxu0 0.0
      %586 = vmatpush.msra.mxu0 0.0
      %587 = vmatpush.msra.mxu0 0.0
      %588 = vmatpush.msra.mxu0 0.0
      %589 = vmatpush.msra.mxu0 %v572
      %590 = vmatpush.msra.mxu0 %v571
      %591 = vmatmul.f32.gmra.mxu0 %v391
      %v592 = vpop.f32.mrf.mxu0
      %v593 = vadd.f32 0.0, %v592
      %594 = vmatmul.f32.gmra.mxu0 %v393
      %v595 = vpop.f32.mrf.mxu0
      %v596 = vadd.f32 0.0, %v595
      %597 = vmatmul.f32.gmra.mxu0 %v395
      %v598 = vpop.f32.mrf.mxu0
      %v599 = vadd.f32 0.0, %v598
      %600 = vmatmul.f32.gmra.mxu0 %v397
      %v601 = vpop.f32.mrf.mxu0
      %v602 = vadd.f32 0.0, %v601
      %603 = vmatmul.f32.gmra.mxu0 %v399
      %v604 = vpop.f32.mrf.mxu0
      %v605 = vadd.f32 0.0, %v604
      %606 = vmatmul.f32.gmra.mxu0 %v401
      %v607 = vpop.f32.mrf.mxu0
      %v608 = vadd.f32 0.0, %v607
      %609 = vmatmul.f32.gmra.mxu0 %v403
      %v610 = vpop.f32.mrf.mxu0
      %v611 = vadd.f32 0.0, %v610
      %612 = vmatmul.f32.gmra.mxu0 %v573
      %v613 = vpop.f32.mrf.mxu0
      %v614 = vadd.f32 0.0, %v613
      %615 = vdwg.mxu0
      %v616 = vadd.f32 %v559, %v593
      %v617 = vadd.f32 %v560, %v596
      %v618 = vadd.f32 %v561, %v599
      %v619 = vadd.f32 %v562, %v602
      %v620 = vadd.f32 %v563, %v605
      %v621 = vadd.f32 %v564, %v608
      %v622 = vadd.f32 %v565, %v611
      %v623 = vadd.f32 %v566, %v614
      %s624 = scalar_lea.vmem %s1, 96
      %v625 = vld [vmem:[%s624] sm:$0xff]
      %v626 = vld [vmem:[%s624 + $0x8] sm:$0xff]
      %v628 = vsel %vm246, %v198, 0
      %630 = vmatpush.msra.mxu0 0.0
      %631 = vmatpush.msra.mxu0 0.0
      %632 = vmatpush.msra.mxu0 0.0
      %633 = vmatpush.msra.mxu0 0.0
      %634 = vmatpush.msra.mxu0 0.0
      %635 = vmatpush.msra.mxu0 0.0
      %636 = vmatpush.msra.mxu0 0.0
      %637 = vmatpush.msra.mxu0 0.0
      %638 = vmatpush.msra.mxu0 0.0
      %639 = vmatpush.msra.mxu0 0.0
      %640 = vmatpush.msra.mxu0 0.0
      %641 = vmatpush.msra.mxu0 0.0
      %642 = vmatpush.msra.mxu0 0.0
      %643 = vmatpush.msra.mxu0 0.0
      %644 = vmatpush.msra.mxu0 %v626
      %645 = vmatpush.msra.mxu0 %v625
      %646 = vmatmul.f32.gmra.mxu0 %v308
      %v647 = vpop.f32.mrf.mxu0
      %v648 = vadd.f32 0.0, %v647
      %649 = vmatmul.f32.gmra.mxu0 %v310
      %v650 = vpop.f32.mrf.mxu0
      %v651 = vadd.f32 0.0, %v650
      %652 = vmatmul.f32.gmra.mxu0 %v312
      %v653 = vpop.f32.mrf.mxu0
      %v654 = vadd.f32 0.0, %v653
      %655 = vmatmul.f32.gmra.mxu0 %v314
      %v656 = vpop.f32.mrf.mxu0
      %v657 = vadd.f32 0.0, %v656
      %658 = vmatmul.f32.gmra.mxu0 %v316
      %v659 = vpop.f32.mrf.mxu0
      %v660 = vadd.f32 0.0, %v659
      %661 = vmatmul.f32.gmra.mxu0 %v318
      %v662 = vpop.f32.mrf.mxu0
      %v663 = vadd.f32 0.0, %v662
      %664 = vmatmul.f32.gmra.mxu0 %v458
      %v665 = vpop.f32.mrf.mxu0
      %v666 = vadd.f32 0.0, %v665
      %667 = vmatmul.f32.gmra.mxu0 %v628
      %v668 = vpop.f32.mrf.mxu0
      %v669 = vadd.f32 0.0, %v668
      %670 = vdwg.mxu0
      %v671 = vadd.f32 %v616, %v648
      %v672 = vadd.f32 %v617, %v651
      %v673 = vadd.f32 %v618, %v654
      %v674 = vadd.f32 %v619, %v657
      %v675 = vadd.f32 %v620, %v660
      %v676 = vadd.f32 %v621, %v663
      %v677 = vadd.f32 %v622, %v666
      %v678 = vadd.f32 %v623, %v669
      %v680 = vrot.slane %v198, 1
      %v681 = vrot.slane %v199, 1
      %v682 = vsel %vm218, %v680, %v681
      %s683 = scalar_lea.vmem %s1, 112
      %v684 = vld [vmem:[%s683] sm:$0xff]
      %v685 = vld [vmem:[%s683 + $0x8] sm:$0xff]
      %v686 = vsel %vm246, %v682, 0
      %688 = vmatpush.msra.mxu0 0.0
      %689 = vmatpush.msra.mxu0 0.0
      %690 = vmatpush.msra.mxu0 0.0
      %691 = vmatpush.msra.mxu0 0.0
      %692 = vmatpush.msra.mxu0 0.0
      %693 = vmatpush.msra.mxu0 0.0
      %694 = vmatpush.msra.mxu0 0.0
      %695 = vmatpush.msra.mxu0 0.0
      %696 = vmatpush.msra.mxu0 0.0
      %697 = vmatpush.msra.mxu0 0.0
      %698 = vmatpush.msra.mxu0 0.0
      %699 = vmatpush.msra.mxu0 0.0
      %700 = vmatpush.msra.mxu0 0.0
      %701 = vmatpush.msra.mxu0 0.0
      %702 = vmatpush.msra.mxu0 %v685
      %703 = vmatpush.msra.mxu0 %v684
      %704 = vmatmul.f32.gmra.mxu0 %v251
      %v705 = vpop.f32.mrf.mxu0
      %v706 = vadd.f32 0.0, %v705
      %707 = vmatmul.f32.gmra.mxu0 %v253
      %v708 = vpop.f32.mrf.mxu0
      %v709 = vadd.f32 0.0, %v708
      %710 = vmatmul.f32.gmra.mxu0 %v255
      %v711 = vpop.f32.mrf.mxu0
      %v712 = vadd.f32 0.0, %v711
      %713 = vmatmul.f32.gmra.mxu0 %v257
      %v714 = vpop.f32.mrf.mxu0
      %v715 = vadd.f32 0.0, %v714
      %716 = vmatmul.f32.gmra.mxu0 %v259
      %v717 = vpop.f32.mrf.mxu0
      %v718 = vadd.f32 0.0, %v717
      %719 = vmatmul.f32.gmra.mxu0 %v261
      %v720 = vpop.f32.mrf.mxu0
      %v721 = vadd.f32 0.0, %v720
      %722 = vmatmul.f32.gmra.mxu0 %v516
      %v723 = vpop.f32.mrf.mxu0
      %v724 = vadd.f32 0.0, %v723
      %725 = vmatmul.f32.gmra.mxu0 %v686
      %v726 = vpop.f32.mrf.mxu0
      %v727 = vadd.f32 0.0, %v726
      %728 = vdwg.mxu0
      %v729 = vadd.f32 %v671, %v706
      %v730 = vadd.f32 %v672, %v709
      %v731 = vadd.f32 %v673, %v712
      %v732 = vadd.f32 %v674, %v715
      %v733 = vadd.f32 %v675, %v718
      %v734 = vadd.f32 %v676, %v721
      %v735 = vadd.f32 %v677, %v724
      %v736 = vadd.f32 %v678, %v727
      %v737 = vrot.slane %v198, 2
      %v738 = vrot.slane %v199, 2
      %v739 = vsel %vm361, %v737, %v738
      %s740 = scalar_lea.vmem %s1, 128
      %v741 = vld [vmem:[%s740] sm:$0xff]
      %v742 = vld [vmem:[%s740 + $0x8] sm:$0xff]
      %v743 = vsel %vm246, %v739, 0
      %745 = vmatpush.msra.mxu0 0.0
      %746 = vmatpush.msra.mxu0 0.0
      %747 = vmatpush.msra.mxu0 0.0
      %748 = vmatpush.msra.mxu0 0.0
      %749 = vmatpush.msra.mxu0 0.0
      %750 = vmatpush.msra.mxu0 0.0
      %751 = vmatpush.msra.mxu0 0.0
      %752 = vmatpush.msra.mxu0 0.0
      %753 = vmatpush.msra.mxu0 0.0
      %754 = vmatpush.msra.mxu0 0.0
      %755 = vmatpush.msra.mxu0 0.0
      %756 = vmatpush.msra.mxu0 0.0
      %757 = vmatpush.msra.mxu0 0.0
      %758 = vmatpush.msra.mxu0 0.0
      %759 = vmatpush.msra.mxu0 %v742
      %760 = vmatpush.msra.mxu0 %v741
      %761 = vmatmul.f32.gmra.mxu0 %v393
      %v762 = vpop.f32.mrf.mxu0
      %v763 = vadd.f32 0.0, %v762
      %764 = vmatmul.f32.gmra.mxu0 %v395
      %v765 = vpop.f32.mrf.mxu0
      %v766 = vadd.f32 0.0, %v765
      %767 = vmatmul.f32.gmra.mxu0 %v397
      %v768 = vpop.f32.mrf.mxu0
      %v769 = vadd.f32 0.0, %v768
      %770 = vmatmul.f32.gmra.mxu0 %v399
      %v771 = vpop.f32.mrf.mxu0
      %v772 = vadd.f32 0.0, %v771
      %773 = vmatmul.f32.gmra.mxu0 %v401
      %v774 = vpop.f32.mrf.mxu0
      %v775 = vadd.f32 0.0, %v774
      %776 = vmatmul.f32.gmra.mxu0 %v403
      %v777 = vpop.f32.mrf.mxu0
      %v778 = vadd.f32 0.0, %v777
      %779 = vmatmul.f32.gmra.mxu0 %v573
      %v780 = vpop.f32.mrf.mxu0
      %v781 = vadd.f32 0.0, %v780
      %782 = vmatmul.f32.gmra.mxu0 %v743
      %v783 = vpop.f32.mrf.mxu0
      %v784 = vadd.f32 0.0, %v783
      %785 = vdwg.mxu0
      %v786 = vadd.f32 %v729, %v763
      %v787 = vadd.f32 %v730, %v766
      %v788 = vadd.f32 %v731, %v769
      %v789 = vadd.f32 %v732, %v772
      %v790 = vadd.f32 %v733, %v775
      %v791 = vadd.f32 %v734, %v778
      %v792 = vadd.f32 %v735, %v781
      %v793 = vadd.f32 %v736, %v784
      %vm794 = vcmask 261120
      %v795 = vsel %vm794, %v786, 0.0
      %v796 = vsel %vm794, %v787, 0.0
      %v797 = vadd.f32 %v795, %v796
      %v798 = vsel %vm794, %v788, 0.0
      %v799 = vadd.f32 %v797, %v798
      %v800 = vsel %vm794, %v789, 0.0
      %v801 = vadd.f32 %v799, %v800
      %v802 = vsel %vm794, %v790, 0.0
      %v803 = vadd.f32 %v801, %v802
      %v804 = vsel %vm794, %v791, 0.0
      %v805 = vadd.f32 %v803, %v804
      %v806 = vsel %vm794, %v792, 0.0
      %v807 = vadd.f32 %v805, %v806
      %v808 = vsel %vm794, %v793, 0.0
      %v809 = vadd.f32 %v807, %v808
      %v810 = vrot.slane %v809, 4
      %v811 = vadd.f32 %v809, %v810
      %v812 = vrot.slane %v811, 2
      %v813 = vadd.f32 %v811, %v812
      %v814 = vrot.slane %v813, 1
      %v815 = vadd.f32 %v813, %v814
      %v816 = vrcp.pop 64.0
      %v817 = vmul.f32 64.0, %v816
      %v818 = vsub.f32 1.0, %v817
      %v819 = vmul.f32 %v816, %v818
      %v820 = vadd.f32 %v816, %v819
      %vm821 = vweird.f32 %v816
      %v822 = vsel %vm821, %v816, %v820
      %v823 = vmul.f32 %v815, %v822
      %vm824 = vcmask 253952
      %825 = vst.msk [vmem:[%s179] sm:$0x1] %vm824, %v823
      %826 = vst.msk [vmem:[%s176] sm:$0xff] %vm794, %v786
      %827 = vst.msk [vmem:[%s176 + $0x8] sm:$0xff] %vm794, %v787
      %828 = vst.msk [vmem:[%s176 + $0x10] sm:$0xff] %vm794, %v788
      %829 = vst.msk [vmem:[%s176 + $0x18] sm:$0xff] %vm794, %v789
      %830 = vst.msk [vmem:[%s176 + $0x20] sm:$0xff] %vm794, %v790
      %831 = vst.msk [vmem:[%s176 + $0x28] sm:$0xff] %vm794, %v791
      %832 = vst.msk [vmem:[%s176 + $0x30] sm:$0xff] %vm794, %v792
      %833 = vst.msk [vmem:[%s176 + $0x38] sm:$0xff] %vm794, %v793
      %p834 = scmp.lt.s32.totalorder %s15, 1
      %s835 = scalar_select %p834, %s15, 1
      %s836 = smul.addr %s835, 8
      %s837 = smul.addr %s836, 8
      %s838 = scalar_lea.vmem %s2, %s837
      %p839 = scmp.lt.s32.totalorder %s15, 1
      %s840 = scalar_select %p839, %s15, 1
      %s841 = scalar_lea.vmem %s3, %s840
      // Predicated region
      $region29: #{hwab_pallas.8} parent=27 // pred_check
        %p842 = pneg %p80
      $region30: #{hwab_pallas.8} parent=27 // pred_check_branch
        %844 = sbr.rel (%p842) target = $region32
      $region31: #{hwab_pallas.8} parent=27 // pred_region
        _
      $region32: #{hwab_pallas.8} parent=27 // pred_fallthru
        _
      // Predicated region
      $region33: #{hwab_pallas.8} parent=27 // pred_check
        %p845 = pneg %p106
      $region34: #{hwab_pallas.8} parent=27 // pred_check_branch
        %847 = sbr.rel (%p845) target = $region36
      $region35: #{hwab_pallas.8} parent=27 // pred_region
        _
      $region36: #{hwab_pallas.8} parent=27 // pred_fallthru
        _
    $region28: #{hwab_pallas.8} parent=5 // pred_fallthru
      _
    %p848 = scmp.le.s32.totalorder 2, %s10
    // Predicated region
    $region37: #{hwab_pallas.8} parent=5 // pred_check
      %p849 = pneg %p848
    $region38: #{hwab_pallas.8} parent=5 // pred_check_branch
      %851 = sbr.rel (%p849) target = $region40
    $region39: #{hwab_pallas.8} parent=5 // pred_region
      %s852 = ssub.s32 %s10, 2
      // Predicated region
      $region41: #{hwab_pallas.8} parent=39 // pred_check
        %p853 = pneg %p86
      $region42: #{hwab_pallas.8} parent=39 // pred_check_branch
        %855 = sbr.rel (%p853) target = $region44
      $region43: #{hwab_pallas.8} parent=39 // pred_region
        %p856 = scmp.lt.s32.totalorder %s16, 1
        %s857 = scalar_select %p856, %s16, 1
        %s858 = smul.addr %s857, 8
        %s859 = smul.addr %s858, 8
        %s860 = scalar_lea.vmem %s2, %s859
      $region44: #{hwab_pallas.8} parent=39 // pred_fallthru
        _
      // Predicated region
      $region45: #{hwab_pallas.8} parent=39 // pred_check
        %p861 = pneg %p112
      $region46: #{hwab_pallas.8} parent=39 // pred_check_branch
        %863 = sbr.rel (%p861) target = $region48
      $region47: #{hwab_pallas.8} parent=39 // pred_region
        %p864 = scmp.lt.s32.totalorder %s16, 1
        %s865 = scalar_select %p864, %s16, 1
        %s866 = scalar_lea.vmem %s3, %s865
      $region48: #{hwab_pallas.8} parent=39 // pred_fallthru
        _
    $region40: #{hwab_pallas.8} parent=5 // pred_fallthru
      _
  $region6: #{hwab_pallas.8} parent=0 // loop_footer
    %s14 = sadd.s32 1, %s10
  $region7: #{hwab_pallas.8} parent=0 // loop_footer_branch
    %9 = sbr.rel target = $region3
  $region8: #{hwab_pallas.8} parent=0 // loop_exit
    _

// kernel: hwab_pallas.7
$region0: #{hwab_pallas.7}
  #allocation0 [shape = 'u32[]', space=smem, size = 0x4, offset = 0x4, fixed_abs, tag = 'smem constant byte address 0x4 - core index']
  #allocation1 [shape = 'u32[72,128]{1,0:T(1,128)}', space=vmem, size = 0x9000, scoped, tag = 'internal scratch']
  #allocation2 [shape = 'f32[1]{0:T(128)S(6)}', space=smem, size = 0x200, scoped, tag = 'scoped memory for hwab_pallas.7']
  %s0 = inlined_call_operand.vmem [shape: f32[2,10,10,32], index: 0, kind: input, shape index: {}]
  %s1 = inlined_call_operand.vmem [shape: f32[9,32,16], index: 1, kind: input, shape index: {}]
  %s2 = inlined_call_operand.<no memory space> [shape: f32[1], index: 2, kind: input, shape index: {}]
  %s3 = inlined_call_operand.vmem [shape: f32[2,10,10,16], index: 3, kind: output, shape index: {}]
  %s4 = sld [smem:[#allocation0]]
  $region45: #{hwab_pallas.7} parent=0
    _
  %s6 = ssub.s32 1, %s4
  %s7 = scalar_select 0, %s6, %s4
  %8 = sst [smem:[#allocation2]] %s2
  loop: start=0, step=1, limit=4
  $region2: #{hwab_pallas.7} parent=0 // loop_pre_header
    _
  $region3: #{hwab_pallas.7} parent=0 // loop_header
    %s10 = sphi 0, %s14
    %p11 = scmp.ge.s32.totalorder %s10, 4
    %s20 = sphi 0, %s22
    %s23 = sphi 0, %s20
    %s24 = sphi 0, %s23
    %s40 = sphi 0, %s24
    %s44 = sphi 0, %s44
    %s46 = sphi 0, %s44
    %s47 = sphi 0, %s46
    %s61 = sphi 0, %s47
    %s65 = sphi 0, %s65
    %s67 = sphi 0, %s65
    %s68 = sphi 0, %s67
    %s82 = sphi 0, %s68
    %s88 = sphi 0, %s90
    %s91 = sphi 0, %s88
    %s92 = sphi 0, %s91
    %s108 = sphi 0, %s92
  $region4: #{hwab_pallas.7} parent=0 // loop_header_branch
    %13 = sbr.rel (%p11) target = $region8
  $region5: #{hwab_pallas.7} parent=0 // loop_body
    %s15 = ssub.s32 %s10, 1
    %s16 = ssub.s32 %s10, 2
    %s17 = sadd.s32 %s10, 1
    %s18 = ssub.s32 %s10, %s17
    %p19 = scmp.eq.s32.totalorder %s18, 0
    %s21 = sadd.s32 %s20, 1
    %s22 = scalar_select %p19, %s20, %s21
    %p25 = pneg %p19
    %p26 = scmp.eq.s32.totalorder %s10, 1
    %p27 = por %p25, %p26
    %p28 = scmp.ne.s32.totalorder %s20, %s23
    %p29 = scmp.eq.s32.totalorder %s10, 0
    %p30 = por %p28, %p29
    %p31 = scmp.ne.s32.totalorder %s20, %s23
    %p32 = scmp.eq.s32.totalorder %s15, 1
    %p33 = por %p31, %p32
    %p34 = scmp.ne.s32.totalorder %s23, %s24
    %p35 = scmp.eq.s32.totalorder %s15, 0
    %p36 = por %p34, %p35
    %p37 = scmp.ne.s32.totalorder %s23, %s24
    %p38 = scmp.eq.s32.totalorder %s16, 1
    %p39 = por %p37, %p38
    %p41 = scmp.ne.s32.totalorder %s24, %s40
    %p42 = scmp.eq.s32.totalorder %s16, 0
    %p43 = por %p41, %p42
    %s45 = sadd.s32 %s44, 1
    %p48 = scmp.eq.s32.totalorder %s10, 1
    %p49 = scmp.ne.s32.totalorder %s44, %s46
    %p50 = scmp.eq.s32.totalorder %s10, 0
    %p51 = por %p49, %p50
    %p52 = scmp.ne.s32.totalorder %s44, %s46
    %p53 = scmp.eq.s32.totalorder %s15, 1
    %p54 = por %p52, %p53
    %p55 = scmp.ne.s32.totalorder %s46, %s47
    %p56 = scmp.eq.s32.totalorder %s15, 0
    %p57 = por %p55, %p56
    %p58 = scmp.ne.s32.totalorder %s46, %s47
    %p59 = scmp.eq.s32.totalorder %s16, 1
    %p60 = por %p58, %p59
    %p62 = scmp.ne.s32.totalorder %s47, %s61
    %p63 = scmp.eq.s32.totalorder %s16, 0
    %p64 = por %p62, %p63
    %s66 = sadd.s32 %s65, 1
    %p69 = scmp.eq.s32.totalorder %s10, 1
    %p70 = scmp.ne.s32.totalorder %s65, %s67
    %p71 = scmp.eq.s32.totalorder %s10, 0
    %p72 = por %p70, %p71
    %p73 = scmp.ne.s32.totalorder %s65, %s67
    %p74 = scmp.eq.s32.totalorder %s15, 1
    %p75 = por %p73, %p74
    %p76 = scmp.ne.s32.totalorder %s67, %s68
    %p77 = scmp.eq.s32.totalorder %s15, 0
    %p78 = por %p76, %p77
    %p79 = scmp.ne.s32.totalorder %s67, %s68
    %p80 = scmp.eq.s32.totalorder %s16, 1
    %p81 = por %p79, %p80
    %p83 = scmp.ne.s32.totalorder %s68, %s82
    %p84 = scmp.eq.s32.totalorder %s16, 0
    %p85 = por %p83, %p84
    %s86 = ssub.s32 %s10, %s17
    %p87 = scmp.eq.s32.totalorder %s86, 0
    %s89 = sadd.s32 %s88, 1
    %s90 = scalar_select %p87, %s88, %s89
    %p93 = pneg %p87
    %p94 = scmp.eq.s32.totalorder %s10, 1
    %p95 = por %p93, %p94
    %p96 = scmp.ne.s32.totalorder %s88, %s91
    %p97 = scmp.eq.s32.totalorder %s10, 0
    %p98 = por %p96, %p97
    %p99 = scmp.ne.s32.totalorder %s88, %s91
    %p100 = scmp.eq.s32.totalorder %s15, 1
    %p101 = por %p99, %p100
    %p102 = scmp.ne.s32.totalorder %s91, %s92
    %p103 = scmp.eq.s32.totalorder %s15, 0
    %p104 = por %p102, %p103
    %p105 = scmp.ne.s32.totalorder %s91, %s92
    %p106 = scmp.eq.s32.totalorder %s16, 1
    %p107 = por %p105, %p106
    %p109 = scmp.ne.s32.totalorder %s92, %s108
    %p110 = scmp.eq.s32.totalorder %s16, 0
    %p111 = por %p109, %p110
    %p112 = scmp.le.s32.totalorder 1, %s10
    %p113 = scmp.lt.s32.totalorder %s10, 3
    %p114 = pnand %p112, %p113
    %p115 = pneg %p114
    // Predicated region
    $region9: #{hwab_pallas.7} parent=5 // pred_check
      _
    $region10: #{hwab_pallas.7} parent=5 // pred_check_branch
      %117 = sbr.rel (%p114) target = $region12
    $region11: #{hwab_pallas.7} parent=5 // pred_region
      %s118 = ssub.s32 %s10, 1
      // Predicated region
      $region13: #{hwab_pallas.7} parent=11 // pred_check
        %p119 = pneg %p57
      $region14: #{hwab_pallas.7} parent=11 // pred_check_branch
        %121 = sbr.rel (%p119) target = $region16
      $region15: #{hwab_pallas.7} parent=11 // pred_region
        _
      $region16: #{hwab_pallas.7} parent=11 // pred_fallthru
        _
      // Predicated region
      $region17: #{hwab_pallas.7} parent=11 // pred_check
        %p122 = pneg %p78
      $region18: #{hwab_pallas.7} parent=11 // pred_check_branch
        %124 = sbr.rel (%p122) target = $region20
      $region19: #{hwab_pallas.7} parent=11 // pred_region
        _
      $region20: #{hwab_pallas.7} parent=11 // pred_fallthru
        _
    $region12: #{hwab_pallas.7} parent=5 // pred_fallthru
      _
    %p125 = scmp.lt.s32.totalorder %s10, 2
    // Predicated region
    $region21: #{hwab_pallas.7} parent=5 // pred_check
      %p126 = pneg %p125
    $region22: #{hwab_pallas.7} parent=5 // pred_check_branch
      %128 = sbr.rel (%p126) target = $region24
    $region23: #{hwab_pallas.7} parent=5 // pred_region
      // Predicated region
      $region25: #{hwab_pallas.7} parent=23 // pred_check
        %p129 = pneg %p30
      $region26: #{hwab_pallas.7} parent=23 // pred_check_branch
        %131 = sbr.rel (%p129) target = $region28
      $region27: #{hwab_pallas.7} parent=23 // pred_region
        %p132 = scmp.lt.s32.totalorder %s10, 1
        %s133 = scalar_select %p132, %s10, 1
        %s134 = smul.addr %s133, 20
        %s135 = smul.addr %s134, 8
        %s136 = scalar_lea.vmem %s0, %s135
      $region28: #{hwab_pallas.7} parent=23 // pred_fallthru
        _
    $region24: #{hwab_pallas.7} parent=5 // pred_fallthru
      _
    %p137 = scmp.le.s32.totalorder 1, %s10
    %p138 = scmp.lt.s32.totalorder %s10, 3
    %p139 = pnand %p137, %p138
    %p140 = pneg %p139
    // Predicated region
    $region29: #{hwab_pallas.7} parent=5 // pred_check
      _
    $region30: #{hwab_pallas.7} parent=5 // pred_check_branch
      %142 = sbr.rel (%p139) target = $region32
    $region31: #{hwab_pallas.7} parent=5 // pred_region
      %s143 = ssub.s32 %s10, 1
      %p144 = scmp.lt.s32.totalorder %s15, 1
      %s145 = scalar_select %p144, %s15, 1
      %s146 = smul.addr %s145, 20
      %s147 = smul.addr %s146, 8
      %s148 = scalar_lea.vmem %s0, %s147
      %p149 = pneg %p36
      %p150 = pneg %p33
      %p151 = pneg %p57
      %p152 = pneg %p54
      %p153 = pneg %p78
      %p154 = pneg %p75
      %p155 = pneg %p104
      %p156 = pneg %p101
      %p157 = scmp.lt.s32.totalorder %s15, 1
      %s158 = scalar_select %p157, %s15, 1
      %s159 = smul.addr %s158, 20
      %s160 = smul.addr %s159, 8
      %s161 = scalar_lea.vmem %s3, %s160
      %p162 = scmp.lt.s32.totalorder %s15, 1
      %s163 = scalar_select %p162, %s15, 1
      %s164 = smul.addr %s163, 20
      %s165 = smul.addr %s164, 8
      %s166 = scalar_lea.vmem %s0, %s165
      %p167 = scmp.lt.s32.totalorder %s15, 1
      %s168 = scalar_select %p167, %s15, 1
      %s169 = smul.addr %s168, 20
      %s170 = smul.addr %s169, 8
      %s171 = scalar_lea.vmem %s3, %s170
      %v172 = vld [vmem:[%s166] sm:$0xff]
      %v173 = vld [vmem:[%s166 + $0x8] sm:$0x3]
      %v174 = vld [vmem:[%s166 + $0x10] sm:$0xff]
      %v175 = vld [vmem:[%s166 + $0x18] sm:$0x3]
      %v176 = vld [vmem:[%s166 + $0x20] sm:$0xff]
      %v177 = vld [vmem:[%s166 + $0x28] sm:$0x3]
      %v178 = vld [vmem:[%s166 + $0x30] sm:$0xff]
      %v179 = vld [vmem:[%s166 + $0x38] sm:$0x3]
      %v180 = vld [vmem:[%s166 + $0x40] sm:$0xff]
      %v181 = vld [vmem:[%s166 + $0x48] sm:$0x3]
      %v182 = vld [vmem:[%s166 + $0x50] sm:$0xff]
      %v183 = vld [vmem:[%s166 + $0x58] sm:$0x3]
      %v184 = vld [vmem:[%s166 + $0x60] sm:$0xff]
      %v185 = vld [vmem:[%s166 + $0x68] sm:$0x3]
      %v186 = vld [vmem:[%s166 + $0x70] sm:$0xff]
      %v187 = vld [vmem:[%s166 + $0x78] sm:$0x3]
      %v188 = vld [vmem:[%s166 + $0x80] sm:$0xff]
      %v189 = vld [vmem:[%s166 + $0x88] sm:$0x3]
      %v190 = vld [vmem:[%s166 + $0x90] sm:$0xff]
      %v191 = vld [vmem:[%s166 + $0x98] sm:$0x3]
      %v192 = vld [vmem:[%s1] sm:$0xff]
      %v193 = vld [vmem:[%s1 + $0x8] sm:$0xff]
      %v194 = vld [vmem:[%s1 + $0x10] sm:$0xff]
      %v195 = vld [vmem:[%s1 + $0x18] sm:$0xff]
      %vm212 = vcmask 1046528
      %v213 = vrot.slane %v172, 1
      %v214 = vrot.slane %v173, 1
      %v215 = vsel %vm212, %v213, %v214
      %v216 = vrot.slane %v174, 1
      %v217 = vrot.slane %v175, 1
      %v218 = vsel %vm212, %v216, %v217
      %v219 = vrot.slane %v176, 1
      %v220 = vrot.slane %v177, 1
      %v221 = vsel %vm212, %v219, %v220
      %v222 = vrot.slane %v178, 1
      %v223 = vrot.slane %v179, 1
      %v224 = vsel %vm212, %v222, %v223
      %v225 = vrot.slane %v180, 1
      %v226 = vrot.slane %v181, 1
      %v227 = vsel %vm212, %v225, %v226
      %v228 = vrot.slane %v182, 1
      %v229 = vrot.slane %v183, 1
      %v230 = vsel %vm212, %v228, %v229
      %v231 = vrot.slane %v184, 1
      %v232 = vrot.slane %v185, 1
      %v233 = vsel %vm212, %v231, %v232
      %v234 = vrot.slane %v186, 1
      %v235 = vrot.slane %v187, 1
      %v236 = vsel %vm212, %v234, %v235
      %s237 = scalar_lea.vmem %s1, 32
      %v238 = vld [vmem:[%s237] sm:$0xff]
      %v239 = vld [vmem:[%s237 + $0x8] sm:$0xff]
      %v240 = vld [vmem:[%s237 + $0x10] sm:$0xff]
      %v241 = vld [vmem:[%s237 + $0x18] sm:$0xff]
      %vm242 = vcmask 261120
      %v243 = vsel %vm242, %v215, 0
      %v245 = vsel %vm242, %v218, 0
      %v247 = vsel %vm242, %v221, 0
      %v249 = vsel %vm242, %v224, 0
      %v251 = vsel %vm242, %v227, 0
      %v253 = vsel %vm242, %v230, 0
      %v255 = vsel %vm242, %v233, 0
      %v257 = vsel %vm242, %v236, 0
      %259 = vmatpush.msra.mxu0 0.0
      %260 = vmatpush.msra.mxu0 0.0
      %261 = vmatpush.msra.mxu0 0.0
      %262 = vmatpush.msra.mxu0 0.0
      %263 = vmatpush.msra.mxu0 0.0
      %264 = vmatpush.msra.mxu0 0.0
      %265 = vmatpush.msra.mxu0 0.0
      %266 = vmatpush.msra.mxu0 0.0
      %267 = vmatpush.msra.mxu0 0.0
      %268 = vmatpush.msra.mxu0 0.0
      %269 = vmatpush.msra.mxu0 0.0
      %270 = vmatpush.msra.mxu0 0.0
      %271 = vmatpush.msra.mxu0 %v241
      %272 = vmatpush.msra.mxu0 %v240
      %273 = vmatpush.msra.mxu0 %v239
      %274 = vmatpush.msra.mxu0 %v238
      %275 = vmatmul.f32.gmra.mxu0 %v243
      %v276 = vpop.f32.mrf.mxu0
      %v277 = vadd.f32 0.0, %v276
      %278 = vmatmul.f32.gmra.mxu0 %v245
      %v279 = vpop.f32.mrf.mxu0
      %v280 = vadd.f32 0.0, %v279
      %281 = vmatmul.f32.gmra.mxu0 %v247
      %v282 = vpop.f32.mrf.mxu0
      %v283 = vadd.f32 0.0, %v282
      %284 = vmatmul.f32.gmra.mxu0 %v249
      %v285 = vpop.f32.mrf.mxu0
      %v286 = vadd.f32 0.0, %v285
      %287 = vmatmul.f32.gmra.mxu0 %v251
      %v288 = vpop.f32.mrf.mxu0
      %v289 = vadd.f32 0.0, %v288
      %290 = vmatmul.f32.gmra.mxu0 %v253
      %v291 = vpop.f32.mrf.mxu0
      %v292 = vadd.f32 0.0, %v291
      %293 = vmatmul.f32.gmra.mxu0 %v255
      %v294 = vpop.f32.mrf.mxu0
      %v295 = vadd.f32 0.0, %v294
      %296 = vmatmul.f32.gmra.mxu0 %v257
      %v297 = vpop.f32.mrf.mxu0
      %v298 = vadd.f32 0.0, %v297
      %299 = vdwg.mxu0
      %v300 = vsel %vm242, %v172, 0
      %v302 = vsel %vm242, %v174, 0
      %v304 = vsel %vm242, %v176, 0
      %v306 = vsel %vm242, %v178, 0
      %v308 = vsel %vm242, %v180, 0
      %v310 = vsel %vm242, %v182, 0
      %v312 = vsel %vm242, %v184, 0
      %v314 = vsel %vm242, %v186, 0
      %316 = vmatpush.msra.mxu0 0.0
      %317 = vmatpush.msra.mxu0 0.0
      %318 = vmatpush.msra.mxu0 0.0
      %319 = vmatpush.msra.mxu0 0.0
      %320 = vmatpush.msra.mxu0 0.0
      %321 = vmatpush.msra.mxu0 0.0
      %322 = vmatpush.msra.mxu0 0.0
      %323 = vmatpush.msra.mxu0 0.0
      %324 = vmatpush.msra.mxu0 0.0
      %325 = vmatpush.msra.mxu0 0.0
      %326 = vmatpush.msra.mxu0 0.0
      %327 = vmatpush.msra.mxu0 0.0
      %328 = vmatpush.msra.mxu0 %v195
      %329 = vmatpush.msra.mxu0 %v194
      %330 = vmatpush.msra.mxu0 %v193
      %331 = vmatpush.msra.mxu0 %v192
      %332 = vmatmul.f32.gmra.mxu0 %v300
      %v333 = vpop.f32.mrf.mxu0
      %v334 = vadd.f32 %v277, %v333
      %335 = vmatmul.f32.gmra.mxu0 %v302
      %v336 = vpop.f32.mrf.mxu0
      %v337 = vadd.f32 %v280, %v336
      %338 = vmatmul.f32.gmra.mxu0 %v304
      %v339 = vpop.f32.mrf.mxu0
      %v340 = vadd.f32 %v283, %v339
      %341 = vmatmul.f32.gmra.mxu0 %v306
      %v342 = vpop.f32.mrf.mxu0
      %v343 = vadd.f32 %v286, %v342
      %344 = vmatmul.f32.gmra.mxu0 %v308
      %v345 = vpop.f32.mrf.mxu0
      %v346 = vadd.f32 %v289, %v345
      %347 = vmatmul.f32.gmra.mxu0 %v310
      %v348 = vpop.f32.mrf.mxu0
      %v349 = vadd.f32 %v292, %v348
      %350 = vmatmul.f32.gmra.mxu0 %v312
      %v351 = vpop.f32.mrf.mxu0
      %v352 = vadd.f32 %v295, %v351
      %353 = vmatmul.f32.gmra.mxu0 %v314
      %v354 = vpop.f32.mrf.mxu0
      %v355 = vadd.f32 %v298, %v354
      %356 = vdwg.mxu0
      %vm357 = vcmask 1045504
      %v358 = vrot.slane %v172, 2
      %v359 = vrot.slane %v173, 2
      %v360 = vsel %vm357, %v358, %v359
      %v361 = vrot.slane %v174, 2
      %v362 = vrot.slane %v175, 2
      %v363 = vsel %vm357, %v361, %v362
      %v364 = vrot.slane %v176, 2
      %v365 = vrot.slane %v177, 2
      %v366 = vsel %vm357, %v364, %v365
      %v367 = vrot.slane %v178, 2
      %v368 = vrot.slane %v179, 2
      %v369 = vsel %vm357, %v367, %v368
      %v370 = vrot.slane %v180, 2
      %v371 = vrot.slane %v181, 2
      %v372 = vsel %vm357, %v370, %v371
      %v373 = vrot.slane %v182, 2
      %v374 = vrot.slane %v183, 2
      %v375 = vsel %vm357, %v373, %v374
      %v376 = vrot.slane %v184, 2
      %v377 = vrot.slane %v185, 2
      %v378 = vsel %vm357, %v376, %v377
      %v379 = vrot.slane %v186, 2
      %v380 = vrot.slane %v187, 2
      %v381 = vsel %vm357, %v379, %v380
      %s382 = scalar_lea.vmem %s1, 64
      %v383 = vld [vmem:[%s382] sm:$0xff]
      %v384 = vld [vmem:[%s382 + $0x8] sm:$0xff]
      %v385 = vld [vmem:[%s382 + $0x10] sm:$0xff]
      %v386 = vld [vmem:[%s382 + $0x18] sm:$0xff]
      %v387 = vsel %vm242, %v360, 0
      %v389 = vsel %vm242, %v363, 0
      %v391 = vsel %vm242, %v366, 0
      %v393 = vsel %vm242, %v369, 0
      %v395 = vsel %vm242, %v372, 0
      %v397 = vsel %vm242, %v375, 0
      %v399 = vsel %vm242, %v378, 0
      %v401 = vsel %vm242, %v381, 0
      %403 = vmatpush.msra.mxu0 0.0
      %404 = vmatpush.msra.mxu0 0.0
      %405 = vmatpush.msra.mxu0 0.0
      %406 = vmatpush.msra.mxu0 0.0
      %407 = vmatpush.msra.mxu0 0.0
      %408 = vmatpush.msra.mxu0 0.0
      %409 = vmatpush.msra.mxu0 0.0
      %410 = vmatpush.msra.mxu0 0.0
      %411 = vmatpush.msra.mxu0 0.0
      %412 = vmatpush.msra.mxu0 0.0
      %413 = vmatpush.msra.mxu0 0.0
      %414 = vmatpush.msra.mxu0 0.0
      %415 = vmatpush.msra.mxu0 %v386
      %416 = vmatpush.msra.mxu0 %v385
      %417 = vmatpush.msra.mxu0 %v384
      %418 = vmatpush.msra.mxu0 %v383
      %419 = vmatmul.f32.gmra.mxu0 %v387
      %v420 = vpop.f32.mrf.mxu0
      %v421 = vadd.f32 0.0, %v420
      %422 = vmatmul.f32.gmra.mxu0 %v389
      %v423 = vpop.f32.mrf.mxu0
      %v424 = vadd.f32 0.0, %v423
      %425 = vmatmul.f32.gmra.mxu0 %v391
      %v426 = vpop.f32.mrf.mxu0
      %v427 = vadd.f32 0.0, %v426
      %428 = vmatmul.f32.gmra.mxu0 %v393
      %v429 = vpop.f32.mrf.mxu0
      %v430 = vadd.f32 0.0, %v429
      %431 = vmatmul.f32.gmra.mxu0 %v395
      %v432 = vpop.f32.mrf.mxu0
      %v433 = vadd.f32 0.0, %v432
      %434 = vmatmul.f32.gmra.mxu0 %v397
      %v435 = vpop.f32.mrf.mxu0
      %v436 = vadd.f32 0.0, %v435
      %437 = vmatmul.f32.gmra.mxu0 %v399
      %v438 = vpop.f32.mrf.mxu0
      %v439 = vadd.f32 0.0, %v438
      %440 = vmatmul.f32.gmra.mxu0 %v401
      %v441 = vpop.f32.mrf.mxu0
      %v442 = vadd.f32 0.0, %v441
      %443 = vdwg.mxu0
      %v444 = vadd.f32 %v334, %v421
      %v445 = vadd.f32 %v337, %v424
      %v446 = vadd.f32 %v340, %v427
      %v447 = vadd.f32 %v343, %v430
      %v448 = vadd.f32 %v346, %v433
      %v449 = vadd.f32 %v349, %v436
      %v450 = vadd.f32 %v352, %v439
      %v451 = vadd.f32 %v355, %v442
      %s452 = scalar_lea.vmem %s1, 96
      %v453 = vld [vmem:[%s452] sm:$0xff]
      %v454 = vld [vmem:[%s452 + $0x8] sm:$0xff]
      %v455 = vld [vmem:[%s452 + $0x10] sm:$0xff]
      %v456 = vld [vmem:[%s452 + $0x18] sm:$0xff]
      %v458 = vsel %vm242, %v188, 0
      %460 = vmatpush.msra.mxu0 0.0
      %461 = vmatpush.msra.mxu0 0.0
      %462 = vmatpush.msra.mxu0 0.0
      %463 = vmatpush.msra.mxu0 0.0
      %464 = vmatpush.msra.mxu0 0.0
      %465 = vmatpush.msra.mxu0 0.0
      %466 = vmatpush.msra.mxu0 0.0
      %467 = vmatpush.msra.mxu0 0.0
      %468 = vmatpush.msra.mxu0 0.0
      %469 = vmatpush.msra.mxu0 0.0
      %470 = vmatpush.msra.mxu0 0.0
      %471 = vmatpush.msra.mxu0 0.0
      %472 = vmatpush.msra.mxu0 %v456
      %473 = vmatpush.msra.mxu0 %v455
      %474 = vmatpush.msra.mxu0 %v454
      %475 = vmatpush.msra.mxu0 %v453
      %476 = vmatmul.f32.gmra.mxu0 %v302
      %v477 = vpop.f32.mrf.mxu0
      %v478 = vadd.f32 0.0, %v477
      %479 = vmatmul.f32.gmra.mxu0 %v304
      %v480 = vpop.f32.mrf.mxu0
      %v481 = vadd.f32 0.0, %v480
      %482 = vmatmul.f32.gmra.mxu0 %v306
      %v483 = vpop.f32.mrf.mxu0
      %v484 = vadd.f32 0.0, %v483
      %485 = vmatmul.f32.gmra.mxu0 %v308
      %v486 = vpop.f32.mrf.mxu0
      %v487 = vadd.f32 0.0, %v486
      %488 = vmatmul.f32.gmra.mxu0 %v310
      %v489 = vpop.f32.mrf.mxu0
      %v490 = vadd.f32 0.0, %v489
      %491 = vmatmul.f32.gmra.mxu0 %v312
      %v492 = vpop.f32.mrf.mxu0
      %v493 = vadd.f32 0.0, %v492
      %494 = vmatmul.f32.gmra.mxu0 %v314
      %v495 = vpop.f32.mrf.mxu0
      %v496 = vadd.f32 0.0, %v495
      %497 = vmatmul.f32.gmra.mxu0 %v458
      %v498 = vpop.f32.mrf.mxu0
      %v499 = vadd.f32 0.0, %v498
      %500 = vdwg.mxu0
      %v501 = vadd.f32 %v444, %v478
      %v502 = vadd.f32 %v445, %v481
      %v503 = vadd.f32 %v446, %v484
      %v504 = vadd.f32 %v447, %v487
      %v505 = vadd.f32 %v448, %v490
      %v506 = vadd.f32 %v449, %v493
      %v507 = vadd.f32 %v450, %v496
      %v508 = vadd.f32 %v451, %v499
      %v510 = vrot.slane %v188, 1
      %v511 = vrot.slane %v189, 1
      %v512 = vsel %vm212, %v510, %v511
      %s513 = scalar_lea.vmem %s1, 128
      %v514 = vld [vmem:[%s513] sm:$0xff]
      %v515 = vld [vmem:[%s513 + $0x8] sm:$0xff]
      %v516 = vld [vmem:[%s513 + $0x10] sm:$0xff]
      %v517 = vld [vmem:[%s513 + $0x18] sm:$0xff]
      %v518 = vsel %vm242, %v512, 0
      %520 = vmatpush.msra.mxu0 0.0
      %521 = vmatpush.msra.mxu0 0.0
      %522 = vmatpush.msra.mxu0 0.0
      %523 = vmatpush.msra.mxu0 0.0
      %524 = vmatpush.msra.mxu0 0.0
      %525 = vmatpush.msra.mxu0 0.0
      %526 = vmatpush.msra.mxu0 0.0
      %527 = vmatpush.msra.mxu0 0.0
      %528 = vmatpush.msra.mxu0 0.0
      %529 = vmatpush.msra.mxu0 0.0
      %530 = vmatpush.msra.mxu0 0.0
      %531 = vmatpush.msra.mxu0 0.0
      %532 = vmatpush.msra.mxu0 %v517
      %533 = vmatpush.msra.mxu0 %v516
      %534 = vmatpush.msra.mxu0 %v515
      %535 = vmatpush.msra.mxu0 %v514
      %536 = vmatmul.f32.gmra.mxu0 %v245
      %v537 = vpop.f32.mrf.mxu0
      %v538 = vadd.f32 0.0, %v537
      %539 = vmatmul.f32.gmra.mxu0 %v247
      %v540 = vpop.f32.mrf.mxu0
      %v541 = vadd.f32 0.0, %v540
      %542 = vmatmul.f32.gmra.mxu0 %v249
      %v543 = vpop.f32.mrf.mxu0
      %v544 = vadd.f32 0.0, %v543
      %545 = vmatmul.f32.gmra.mxu0 %v251
      %v546 = vpop.f32.mrf.mxu0
      %v547 = vadd.f32 0.0, %v546
      %548 = vmatmul.f32.gmra.mxu0 %v253
      %v549 = vpop.f32.mrf.mxu0
      %v550 = vadd.f32 0.0, %v549
      %551 = vmatmul.f32.gmra.mxu0 %v255
      %v552 = vpop.f32.mrf.mxu0
      %v553 = vadd.f32 0.0, %v552
      %554 = vmatmul.f32.gmra.mxu0 %v257
      %v555 = vpop.f32.mrf.mxu0
      %v556 = vadd.f32 0.0, %v555
      %557 = vmatmul.f32.gmra.mxu0 %v518
      %v558 = vpop.f32.mrf.mxu0
      %v559 = vadd.f32 0.0, %v558
      %560 = vdwg.mxu0
      %v561 = vadd.f32 %v501, %v538
      %v562 = vadd.f32 %v502, %v541
      %v563 = vadd.f32 %v503, %v544
      %v564 = vadd.f32 %v504, %v547
      %v565 = vadd.f32 %v505, %v550
      %v566 = vadd.f32 %v506, %v553
      %v567 = vadd.f32 %v507, %v556
      %v568 = vadd.f32 %v508, %v559
      %v569 = vrot.slane %v188, 2
      %v570 = vrot.slane %v189, 2
      %v571 = vsel %vm357, %v569, %v570
      %s572 = scalar_lea.vmem %s1, 160
      %v573 = vld [vmem:[%s572] sm:$0xff]
      %v574 = vld [vmem:[%s572 + $0x8] sm:$0xff]
      %v575 = vld [vmem:[%s572 + $0x10] sm:$0xff]
      %v576 = vld [vmem:[%s572 + $0x18] sm:$0xff]
      %v577 = vsel %vm242, %v571, 0
      %579 = vmatpush.msra.mxu0 0.0
      %580 = vmatpush.msra.mxu0 0.0
      %581 = vmatpush.msra.mxu0 0.0
      %582 = vmatpush.msra.mxu0 0.0
      %583 = vmatpush.msra.mxu0 0.0
      %584 = vmatpush.msra.mxu0 0.0
      %585 = vmatpush.msra.mxu0 0.0
      %586 = vmatpush.msra.mxu0 0.0
      %587 = vmatpush.msra.mxu0 0.0
      %588 = vmatpush.msra.mxu0 0.0
      %589 = vmatpush.msra.mxu0 0.0
      %590 = vmatpush.msra.mxu0 0.0
      %591 = vmatpush.msra.mxu0 %v576
      %592 = vmatpush.msra.mxu0 %v575
      %593 = vmatpush.msra.mxu0 %v574
      %594 = vmatpush.msra.mxu0 %v573
      %595 = vmatmul.f32.gmra.mxu0 %v389
      %v596 = vpop.f32.mrf.mxu0
      %v597 = vadd.f32 0.0, %v596
      %598 = vmatmul.f32.gmra.mxu0 %v391
      %v599 = vpop.f32.mrf.mxu0
      %v600 = vadd.f32 0.0, %v599
      %601 = vmatmul.f32.gmra.mxu0 %v393
      %v602 = vpop.f32.mrf.mxu0
      %v603 = vadd.f32 0.0, %v602
      %604 = vmatmul.f32.gmra.mxu0 %v395
      %v605 = vpop.f32.mrf.mxu0
      %v606 = vadd.f32 0.0, %v605
      %607 = vmatmul.f32.gmra.mxu0 %v397
      %v608 = vpop.f32.mrf.mxu0
      %v609 = vadd.f32 0.0, %v608
      %610 = vmatmul.f32.gmra.mxu0 %v399
      %v611 = vpop.f32.mrf.mxu0
      %v612 = vadd.f32 0.0, %v611
      %613 = vmatmul.f32.gmra.mxu0 %v401
      %v614 = vpop.f32.mrf.mxu0
      %v615 = vadd.f32 0.0, %v614
      %616 = vmatmul.f32.gmra.mxu0 %v577
      %v617 = vpop.f32.mrf.mxu0
      %v618 = vadd.f32 0.0, %v617
      %619 = vdwg.mxu0
      %v620 = vadd.f32 %v561, %v597
      %v621 = vadd.f32 %v562, %v600
      %v622 = vadd.f32 %v563, %v603
      %v623 = vadd.f32 %v564, %v606
      %v624 = vadd.f32 %v565, %v609
      %v625 = vadd.f32 %v566, %v612
      %v626 = vadd.f32 %v567, %v615
      %v627 = vadd.f32 %v568, %v618
      %s628 = scalar_lea.vmem %s1, 192
      %v629 = vld [vmem:[%s628] sm:$0xff]
      %v630 = vld [vmem:[%s628 + $0x8] sm:$0xff]
      %v631 = vld [vmem:[%s628 + $0x10] sm:$0xff]
      %v632 = vld [vmem:[%s628 + $0x18] sm:$0xff]
      %v634 = vsel %vm242, %v190, 0
      %636 = vmatpush.msra.mxu0 0.0
      %637 = vmatpush.msra.mxu0 0.0
      %638 = vmatpush.msra.mxu0 0.0
      %639 = vmatpush.msra.mxu0 0.0
      %640 = vmatpush.msra.mxu0 0.0
      %641 = vmatpush.msra.mxu0 0.0
      %642 = vmatpush.msra.mxu0 0.0
      %643 = vmatpush.msra.mxu0 0.0
      %644 = vmatpush.msra.mxu0 0.0
      %645 = vmatpush.msra.mxu0 0.0
      %646 = vmatpush.msra.mxu0 0.0
      %647 = vmatpush.msra.mxu0 0.0
      %648 = vmatpush.msra.mxu0 %v632
      %649 = vmatpush.msra.mxu0 %v631
      %650 = vmatpush.msra.mxu0 %v630
      %651 = vmatpush.msra.mxu0 %v629
      %652 = vmatmul.f32.gmra.mxu0 %v304
      %v653 = vpop.f32.mrf.mxu0
      %v654 = vadd.f32 0.0, %v653
      %655 = vmatmul.f32.gmra.mxu0 %v306
      %v656 = vpop.f32.mrf.mxu0
      %v657 = vadd.f32 0.0, %v656
      %658 = vmatmul.f32.gmra.mxu0 %v308
      %v659 = vpop.f32.mrf.mxu0
      %v660 = vadd.f32 0.0, %v659
      %661 = vmatmul.f32.gmra.mxu0 %v310
      %v662 = vpop.f32.mrf.mxu0
      %v663 = vadd.f32 0.0, %v662
      %664 = vmatmul.f32.gmra.mxu0 %v312
      %v665 = vpop.f32.mrf.mxu0
      %v666 = vadd.f32 0.0, %v665
      %667 = vmatmul.f32.gmra.mxu0 %v314
      %v668 = vpop.f32.mrf.mxu0
      %v669 = vadd.f32 0.0, %v668
      %670 = vmatmul.f32.gmra.mxu0 %v458
      %v671 = vpop.f32.mrf.mxu0
      %v672 = vadd.f32 0.0, %v671
      %673 = vmatmul.f32.gmra.mxu0 %v634
      %v674 = vpop.f32.mrf.mxu0
      %v675 = vadd.f32 0.0, %v674
      %676 = vdwg.mxu0
      %v677 = vadd.f32 %v620, %v654
      %v678 = vadd.f32 %v621, %v657
      %v679 = vadd.f32 %v622, %v660
      %v680 = vadd.f32 %v623, %v663
      %v681 = vadd.f32 %v624, %v666
      %v682 = vadd.f32 %v625, %v669
      %v683 = vadd.f32 %v626, %v672
      %v684 = vadd.f32 %v627, %v675
      %v686 = vrot.slane %v190, 1
      %v687 = vrot.slane %v191, 1
      %v688 = vsel %vm212, %v686, %v687
      %s689 = scalar_lea.vmem %s1, 224
      %v690 = vld [vmem:[%s689] sm:$0xff]
      %v691 = vld [vmem:[%s689 + $0x8] sm:$0xff]
      %v692 = vld [vmem:[%s689 + $0x10] sm:$0xff]
      %v693 = vld [vmem:[%s689 + $0x18] sm:$0xff]
      %v694 = vsel %vm242, %v688, 0
      %696 = vmatpush.msra.mxu0 0.0
      %697 = vmatpush.msra.mxu0 0.0
      %698 = vmatpush.msra.mxu0 0.0
      %699 = vmatpush.msra.mxu0 0.0
      %700 = vmatpush.msra.mxu0 0.0
      %701 = vmatpush.msra.mxu0 0.0
      %702 = vmatpush.msra.mxu0 0.0
      %703 = vmatpush.msra.mxu0 0.0
      %704 = vmatpush.msra.mxu0 0.0
      %705 = vmatpush.msra.mxu0 0.0
      %706 = vmatpush.msra.mxu0 0.0
      %707 = vmatpush.msra.mxu0 0.0
      %708 = vmatpush.msra.mxu0 %v693
      %709 = vmatpush.msra.mxu0 %v692
      %710 = vmatpush.msra.mxu0 %v691
      %711 = vmatpush.msra.mxu0 %v690
      %712 = vmatmul.f32.gmra.mxu0 %v247
      %v713 = vpop.f32.mrf.mxu0
      %v714 = vadd.f32 0.0, %v713
      %715 = vmatmul.f32.gmra.mxu0 %v249
      %v716 = vpop.f32.mrf.mxu0
      %v717 = vadd.f32 0.0, %v716
      %718 = vmatmul.f32.gmra.mxu0 %v251
      %v719 = vpop.f32.mrf.mxu0
      %v720 = vadd.f32 0.0, %v719
      %721 = vmatmul.f32.gmra.mxu0 %v253
      %v722 = vpop.f32.mrf.mxu0
      %v723 = vadd.f32 0.0, %v722
      %724 = vmatmul.f32.gmra.mxu0 %v255
      %v725 = vpop.f32.mrf.mxu0
      %v726 = vadd.f32 0.0, %v725
      %727 = vmatmul.f32.gmra.mxu0 %v257
      %v728 = vpop.f32.mrf.mxu0
      %v729 = vadd.f32 0.0, %v728
      %730 = vmatmul.f32.gmra.mxu0 %v518
      %v731 = vpop.f32.mrf.mxu0
      %v732 = vadd.f32 0.0, %v731
      %733 = vmatmul.f32.gmra.mxu0 %v694
      %v734 = vpop.f32.mrf.mxu0
      %v735 = vadd.f32 0.0, %v734
      %736 = vdwg.mxu0
      %v737 = vadd.f32 %v677, %v714
      %v738 = vadd.f32 %v678, %v717
      %v739 = vadd.f32 %v679, %v720
      %v740 = vadd.f32 %v680, %v723
      %v741 = vadd.f32 %v681, %v726
      %v742 = vadd.f32 %v682, %v729
      %v743 = vadd.f32 %v683, %v732
      %v744 = vadd.f32 %v684, %v735
      %v745 = vrot.slane %v190, 2
      %v746 = vrot.slane %v191, 2
      %v747 = vsel %vm357, %v745, %v746
      %s748 = scalar_lea.vmem %s1, 256
      %v749 = vld [vmem:[%s748] sm:$0xff]
      %v750 = vld [vmem:[%s748 + $0x8] sm:$0xff]
      %v751 = vld [vmem:[%s748 + $0x10] sm:$0xff]
      %v752 = vld [vmem:[%s748 + $0x18] sm:$0xff]
      %v753 = vsel %vm242, %v747, 0
      %755 = vmatpush.msra.mxu0 0.0
      %756 = vmatpush.msra.mxu0 0.0
      %757 = vmatpush.msra.mxu0 0.0
      %758 = vmatpush.msra.mxu0 0.0
      %759 = vmatpush.msra.mxu0 0.0
      %760 = vmatpush.msra.mxu0 0.0
      %761 = vmatpush.msra.mxu0 0.0
      %762 = vmatpush.msra.mxu0 0.0
      %763 = vmatpush.msra.mxu0 0.0
      %764 = vmatpush.msra.mxu0 0.0
      %765 = vmatpush.msra.mxu0 0.0
      %766 = vmatpush.msra.mxu0 0.0
      %767 = vmatpush.msra.mxu0 %v752
      %768 = vmatpush.msra.mxu0 %v751
      %769 = vmatpush.msra.mxu0 %v750
      %770 = vmatpush.msra.mxu0 %v749
      %771 = vmatmul.f32.gmra.mxu0 %v391
      %v772 = vpop.f32.mrf.mxu0
      %v773 = vadd.f32 0.0, %v772
      %774 = vmatmul.f32.gmra.mxu0 %v393
      %v775 = vpop.f32.mrf.mxu0
      %v776 = vadd.f32 0.0, %v775
      %777 = vmatmul.f32.gmra.mxu0 %v395
      %v778 = vpop.f32.mrf.mxu0
      %v779 = vadd.f32 0.0, %v778
      %780 = vmatmul.f32.gmra.mxu0 %v397
      %v781 = vpop.f32.mrf.mxu0
      %v782 = vadd.f32 0.0, %v781
      %783 = vmatmul.f32.gmra.mxu0 %v399
      %v784 = vpop.f32.mrf.mxu0
      %v785 = vadd.f32 0.0, %v784
      %786 = vmatmul.f32.gmra.mxu0 %v401
      %v787 = vpop.f32.mrf.mxu0
      %v788 = vadd.f32 0.0, %v787
      %789 = vmatmul.f32.gmra.mxu0 %v577
      %v790 = vpop.f32.mrf.mxu0
      %v791 = vadd.f32 0.0, %v790
      %792 = vmatmul.f32.gmra.mxu0 %v753
      %v793 = vpop.f32.mrf.mxu0
      %v794 = vadd.f32 0.0, %v793
      %795 = vdwg.mxu0
      %v796 = vadd.f32 %v737, %v773
      %v797 = vadd.f32 %v738, %v776
      %v798 = vadd.f32 %v739, %v779
      %v799 = vadd.f32 %v740, %v782
      %v800 = vadd.f32 %v741, %v785
      %v801 = vadd.f32 %v742, %v788
      %v802 = vadd.f32 %v743, %v791
      %v803 = vadd.f32 %v744, %v794
      %s804 = sld [smem:[#allocation2]]
      %vm805 = vcmp.ge.f32.partialorder %v796, 0.0
      %vm806 = vcmp.ge.f32.partialorder %v797, 0.0
      %vm807 = vcmp.ge.f32.partialorder %v798, 0.0
      %vm808 = vcmp.ge.f32.partialorder %v799, 0.0
      %vm809 = vcmp.ge.f32.partialorder %v800, 0.0
      %vm810 = vcmp.ge.f32.partialorder %v801, 0.0
      %vm811 = vcmp.ge.f32.partialorder %v802, 0.0
      %vm812 = vcmp.ge.f32.partialorder %v803, 0.0
      %v813 = vstv %s804
      %v814 = vmul.f32 %v813, %v796
      %v815 = vmul.f32 %v813, %v797
      %v816 = vmul.f32 %v813, %v798
      %v817 = vmul.f32 %v813, %v799
      %v818 = vmul.f32 %v813, %v800
      %v819 = vmul.f32 %v813, %v801
      %v820 = vmul.f32 %v813, %v802
      %v821 = vmul.f32 %v813, %v803
      %v822 = vsel %vm805, %v796, %v814
      %v823 = vsel %vm806, %v797, %v815
      %v824 = vsel %vm807, %v798, %v816
      %v825 = vsel %vm808, %v799, %v817
      %v826 = vsel %vm809, %v800, %v818
      %v827 = vsel %vm810, %v801, %v819
      %v828 = vsel %vm811, %v802, %v820
      %v829 = vsel %vm812, %v803, %v821
      %vm830 = vcmask 130048
      %831 = vst.msk [vmem:[%s171] sm:$0xff] %vm830, 0.0
      %vm832 = vcmask 123904
      %833 = vst.msk [vmem:[%s171 + $0x8] sm:$0x3] %vm832, 0.0
      %834 = vst.msk [vmem:[%s171 + $0x10] sm:$0xff] %vm830, 0.0
      %835 = vst.msk [vmem:[%s171 + $0x18] sm:$0x3] %vm832, 0.0
      %836 = vst.msk [vmem:[%s171 + $0x20] sm:$0xff] %vm830, 0.0
      %837 = vst.msk [vmem:[%s171 + $0x28] sm:$0x3] %vm832, 0.0
      %838 = vst.msk [vmem:[%s171 + $0x30] sm:$0xff] %vm830, 0.0
      %839 = vst.msk [vmem:[%s171 + $0x38] sm:$0x3] %vm832, 0.0
      %840 = vst.msk [vmem:[%s171 + $0x40] sm:$0xff] %vm830, 0.0
      %841 = vst.msk [vmem:[%s171 + $0x48] sm:$0x3] %vm832, 0.0
      %842 = vst.msk [vmem:[%s171 + $0x50] sm:$0xff] %vm830, 0.0
      %843 = vst.msk [vmem:[%s171 + $0x58] sm:$0x3] %vm832, 0.0
      %844 = vst.msk [vmem:[%s171 + $0x60] sm:$0xff] %vm830, 0.0
      %845 = vst.msk [vmem:[%s171 + $0x68] sm:$0x3] %vm832, 0.0
      %846 = vst.msk [vmem:[%s171 + $0x70] sm:$0xff] %vm830, 0.0
      %847 = vst.msk [vmem:[%s171 + $0x78] sm:$0x3] %vm832, 0.0
      %848 = vst.msk [vmem:[%s171 + $0x80] sm:$0xff] %vm830, 0.0
      %849 = vst.msk [vmem:[%s171 + $0x88] sm:$0x3] %vm832, 0.0
      %850 = vst.msk [vmem:[%s171 + $0x90] sm:$0xff] %vm830, 0.0
      %851 = vst.msk [vmem:[%s171 + $0x98] sm:$0x3] %vm832, 0.0
      %s852 = scalar_lea.vmem %s171, 16
      %853 = vst.msk [vmem:[%s852 + $0x1] sm:$0xff] %vm830, %v822
      %854 = vst.msk [vmem:[%s852 + $0x11] sm:$0xff] %vm830, %v823
      %855 = vst.msk [vmem:[%s852 + $0x21] sm:$0xff] %vm830, %v824
      %856 = vst.msk [vmem:[%s852 + $0x31] sm:$0xff] %vm830, %v825
      %857 = vst.msk [vmem:[%s852 + $0x41] sm:$0xff] %vm830, %v826
      %858 = vst.msk [vmem:[%s852 + $0x51] sm:$0xff] %vm830, %v827
      %859 = vst.msk [vmem:[%s852 + $0x61] sm:$0xff] %vm830, %v828
      %860 = vst.msk [vmem:[%s852 + $0x71] sm:$0xff] %vm830, %v829
      %p861 = scmp.lt.s32.totalorder %s15, 1
      %s862 = scalar_select %p861, %s15, 1
      %s863 = smul.addr %s862, 20
      %s864 = smul.addr %s863, 8
      %s865 = scalar_lea.vmem %s3, %s864
      // Predicated region
      $region33: #{hwab_pallas.7} parent=31 // pred_check
        %p866 = pneg %p101
      $region34: #{hwab_pallas.7} parent=31 // pred_check_branch
        %868 = sbr.rel (%p866) target = $region36
      $region35: #{hwab_pallas.7} parent=31 // pred_region
        _
      $region36: #{hwab_pallas.7} parent=31 // pred_fallthru
        _
    $region32: #{hwab_pallas.7} parent=5 // pred_fallthru
      _
    %p869 = scmp.le.s32.totalorder 2, %s10
    // Predicated region
    $region37: #{hwab_pallas.7} parent=5 // pred_check
      %p870 = pneg %p869
    $region38: #{hwab_pallas.7} parent=5 // pred_check_branch
      %872 = sbr.rel (%p870) target = $region40
    $region39: #{hwab_pallas.7} parent=5 // pred_region
      %s873 = ssub.s32 %s10, 2
      // Predicated region
      $region41: #{hwab_pallas.7} parent=39 // pred_check
        %p874 = pneg %p107
      $region42: #{hwab_pallas.7} parent=39 // pred_check_branch
        %876 = sbr.rel (%p874) target = $region44
      $region43: #{hwab_pallas.7} parent=39 // pred_region
        %p877 = scmp.lt.s32.totalorder %s16, 1
        %s878 = scalar_select %p877, %s16, 1
        %s879 = smul.addr %s878, 20
        %s880 = smul.addr %s879, 8
        %s881 = scalar_lea.vmem %s3, %s880
      $region44: #{hwab_pallas.7} parent=39 // pred_fallthru
        _
    $region40: #{hwab_pallas.7} parent=5 // pred_fallthru
      _
  $region6: #{hwab_pallas.7} parent=0 // loop_footer
    %s14 = sadd.s32 1, %s10
  $region7: #{hwab_pallas.7} parent=0 // loop_footer_branch
    %9 = sbr.rel target = $region3
  $region8: #{hwab_pallas.7} parent=0 // loop_exit
    _

// kernel: hwab_pallas.6
$region0: #{hwab_pallas.6}
  #allocation0 [shape = 'u32[]', space=smem, size = 0x4, offset = 0x4, fixed_abs, tag = 'smem constant byte address 0x4 - core index']
  #allocation1 [shape = 'u32[72,128]{1,0:T(1,128)}', space=vmem, size = 0x9000, scoped, tag = 'internal scratch']
  %s0 = inlined_call_operand.vmem [shape: f32[2,8,8,8], index: 0, kind: input, shape index: {}]
  %s1 = inlined_call_operand.vmem [shape: f32[2,8,8,8], index: 1, kind: input, shape index: {}]
  %s2 = inlined_call_operand.vmem [shape: f32[2,8,8,8], index: 2, kind: input, shape index: {}]
  %s3 = inlined_call_operand.vmem [shape: f32[2,8,8,8], index: 3, kind: input, shape index: {}]
  %s4 = inlined_call_operand.vmem [shape: f32[2,10,10,32], index: 4, kind: output, shape index: {}]
  %s5 = sld [smem:[#allocation0]]
  $region26: #{hwab_pallas.6} parent=0
    _
  %s7 = ssub.s32 1, %s5
  %s8 = scalar_select 0, %s7, %s5
  // Predicated region
  $region2: #{hwab_pallas.6} parent=0 // pred_check
    _
  $region3: #{hwab_pallas.6} parent=0 // pred_check_branch
    %10 = sbr.rel (0) target = $region5
  $region4: #{hwab_pallas.6} parent=0 // pred_region
    _
  $region5: #{hwab_pallas.6} parent=0 // pred_fallthru
    _
  // Predicated region
  $region6: #{hwab_pallas.6} parent=0 // pred_check
    _
  $region7: #{hwab_pallas.6} parent=0 // pred_check_branch
    %12 = sbr.rel (0) target = $region9
  $region8: #{hwab_pallas.6} parent=0 // pred_region
    _
  $region9: #{hwab_pallas.6} parent=0 // pred_fallthru
    _
  // Predicated region
  $region10: #{hwab_pallas.6} parent=0 // pred_check
    _
  $region11: #{hwab_pallas.6} parent=0 // pred_check_branch
    %14 = sbr.rel (0) target = $region13
  $region12: #{hwab_pallas.6} parent=0 // pred_region
    _
  $region13: #{hwab_pallas.6} parent=0 // pred_fallthru
    _
  // Predicated region
  $region14: #{hwab_pallas.6} parent=0 // pred_check
    _
  $region15: #{hwab_pallas.6} parent=0 // pred_check_branch
    %16 = sbr.rel (0) target = $region17
  $region16: #{hwab_pallas.6} parent=0 // pred_region
    _
  $region17: #{hwab_pallas.6} parent=0 // pred_fallthru
    _
  %v17 = vld [vmem:[%s0] sm:$0xff]
  %v18 = vld [vmem:[%s0 + $0x8] sm:$0xff]
  %v19 = vld [vmem:[%s0 + $0x10] sm:$0xff]
  %v20 = vld [vmem:[%s0 + $0x18] sm:$0xff]
  %v21 = vld [vmem:[%s0 + $0x20] sm:$0xff]
  %v22 = vld [vmem:[%s0 + $0x28] sm:$0xff]
  %v23 = vld [vmem:[%s0 + $0x30] sm:$0xff]
  %v24 = vld [vmem:[%s0 + $0x38] sm:$0xff]
  %v25 = vld [vmem:[%s0 + $0x40] sm:$0xff]
  %v26 = vld [vmem:[%s0 + $0x48] sm:$0xff]
  %v27 = vld [vmem:[%s0 + $0x50] sm:$0xff]
  %v28 = vld [vmem:[%s0 + $0x58] sm:$0xff]
  %v29 = vld [vmem:[%s0 + $0x60] sm:$0xff]
  %v30 = vld [vmem:[%s0 + $0x68] sm:$0xff]
  %v31 = vld [vmem:[%s0 + $0x70] sm:$0xff]
  %v32 = vld [vmem:[%s0 + $0x78] sm:$0xff]
  %v33 = vmul.f32 %v17, 0.5
  %v34 = vmul.f32 %v18, 0.5
  %v35 = vmul.f32 %v19, 0.5
  %v36 = vmul.f32 %v20, 0.5
  %v37 = vmul.f32 %v21, 0.5
  %v38 = vmul.f32 %v22, 0.5
  %v39 = vmul.f32 %v23, 0.5
  %v40 = vmul.f32 %v24, 0.5
  %v41 = vmul.f32 %v25, 0.5
  %v42 = vmul.f32 %v26, 0.5
  %v43 = vmul.f32 %v27, 0.5
  %v44 = vmul.f32 %v28, 0.5
  %v45 = vmul.f32 %v29, 0.5
  %v46 = vmul.f32 %v30, 0.5
  %v47 = vmul.f32 %v31, 0.5
  %v48 = vmul.f32 %v32, 0.5
  %v49 = vld [vmem:[%s1] sm:$0xff]
  %v50 = vld [vmem:[%s1 + $0x8] sm:$0xff]
  %v51 = vld [vmem:[%s1 + $0x10] sm:$0xff]
  %v52 = vld [vmem:[%s1 + $0x18] sm:$0xff]
  %v53 = vld [vmem:[%s1 + $0x20] sm:$0xff]
  %v54 = vld [vmem:[%s1 + $0x28] sm:$0xff]
  %v55 = vld [vmem:[%s1 + $0x30] sm:$0xff]
  %v56 = vld [vmem:[%s1 + $0x38] sm:$0xff]
  %v57 = vld [vmem:[%s1 + $0x40] sm:$0xff]
  %v58 = vld [vmem:[%s1 + $0x48] sm:$0xff]
  %v59 = vld [vmem:[%s1 + $0x50] sm:$0xff]
  %v60 = vld [vmem:[%s1 + $0x58] sm:$0xff]
  %v61 = vld [vmem:[%s1 + $0x60] sm:$0xff]
  %v62 = vld [vmem:[%s1 + $0x68] sm:$0xff]
  %v63 = vld [vmem:[%s1 + $0x70] sm:$0xff]
  %v64 = vld [vmem:[%s1 + $0x78] sm:$0xff]
  %v65 = vmul.f32 %v49, 0.5
  %v66 = vmul.f32 %v50, 0.5
  %v67 = vmul.f32 %v51, 0.5
  %v68 = vmul.f32 %v52, 0.5
  %v69 = vmul.f32 %v53, 0.5
  %v70 = vmul.f32 %v54, 0.5
  %v71 = vmul.f32 %v55, 0.5
  %v72 = vmul.f32 %v56, 0.5
  %v73 = vmul.f32 %v57, 0.5
  %v74 = vmul.f32 %v58, 0.5
  %v75 = vmul.f32 %v59, 0.5
  %v76 = vmul.f32 %v60, 0.5
  %v77 = vmul.f32 %v61, 0.5
  %v78 = vmul.f32 %v62, 0.5
  %v79 = vmul.f32 %v63, 0.5
  %v80 = vmul.f32 %v64, 0.5
  %v81 = vld [vmem:[%s2] sm:$0xff]
  %v82 = vld [vmem:[%s2 + $0x8] sm:$0xff]
  %v83 = vld [vmem:[%s2 + $0x10] sm:$0xff]
  %v84 = vld [vmem:[%s2 + $0x18] sm:$0xff]
  %v85 = vld [vmem:[%s2 + $0x20] sm:$0xff]
  %v86 = vld [vmem:[%s2 + $0x28] sm:$0xff]
  %v87 = vld [vmem:[%s2 + $0x30] sm:$0xff]
  %v88 = vld [vmem:[%s2 + $0x38] sm:$0xff]
  %v89 = vld [vmem:[%s2 + $0x40] sm:$0xff]
  %v90 = vld [vmem:[%s2 + $0x48] sm:$0xff]
  %v91 = vld [vmem:[%s2 + $0x50] sm:$0xff]
  %v92 = vld [vmem:[%s2 + $0x58] sm:$0xff]
  %v93 = vld [vmem:[%s2 + $0x60] sm:$0xff]
  %v94 = vld [vmem:[%s2 + $0x68] sm:$0xff]
  %v95 = vld [vmem:[%s2 + $0x70] sm:$0xff]
  %v96 = vld [vmem:[%s2 + $0x78] sm:$0xff]
  %v97 = vmul.f32 %v81, 0.5
  %v98 = vmul.f32 %v82, 0.5
  %v99 = vmul.f32 %v83, 0.5
  %v100 = vmul.f32 %v84, 0.5
  %v101 = vmul.f32 %v85, 0.5
  %v102 = vmul.f32 %v86, 0.5
  %v103 = vmul.f32 %v87, 0.5
  %v104 = vmul.f32 %v88, 0.5
  %v105 = vmul.f32 %v89, 0.5
  %v106 = vmul.f32 %v90, 0.5
  %v107 = vmul.f32 %v91, 0.5
  %v108 = vmul.f32 %v92, 0.5
  %v109 = vmul.f32 %v93, 0.5
  %v110 = vmul.f32 %v94, 0.5
  %v111 = vmul.f32 %v95, 0.5
  %v112 = vmul.f32 %v96, 0.5
  %v113 = vld [vmem:[%s3] sm:$0xff]
  %v114 = vld [vmem:[%s3 + $0x8] sm:$0xff]
  %v115 = vld [vmem:[%s3 + $0x10] sm:$0xff]
  %v116 = vld [vmem:[%s3 + $0x18] sm:$0xff]
  %v117 = vld [vmem:[%s3 + $0x20] sm:$0xff]
  %v118 = vld [vmem:[%s3 + $0x28] sm:$0xff]
  %v119 = vld [vmem:[%s3 + $0x30] sm:$0xff]
  %v120 = vld [vmem:[%s3 + $0x38] sm:$0xff]
  %v121 = vld [vmem:[%s3 + $0x40] sm:$0xff]
  %v122 = vld [vmem:[%s3 + $0x48] sm:$0xff]
  %v123 = vld [vmem:[%s3 + $0x50] sm:$0xff]
  %v124 = vld [vmem:[%s3 + $0x58] sm:$0xff]
  %v125 = vld [vmem:[%s3 + $0x60] sm:$0xff]
  %v126 = vld [vmem:[%s3 + $0x68] sm:$0xff]
  %v127 = vld [vmem:[%s3 + $0x70] sm:$0xff]
  %v128 = vld [vmem:[%s3 + $0x78] sm:$0xff]
  %v129 = vmul.f32 %v113, 0.5
  %v130 = vmul.f32 %v114, 0.5
  %v131 = vmul.f32 %v115, 0.5
  %v132 = vmul.f32 %v116, 0.5
  %v133 = vmul.f32 %v117, 0.5
  %v134 = vmul.f32 %v118, 0.5
  %v135 = vmul.f32 %v119, 0.5
  %v136 = vmul.f32 %v120, 0.5
  %v137 = vmul.f32 %v121, 0.5
  %v138 = vmul.f32 %v122, 0.5
  %v139 = vmul.f32 %v123, 0.5
  %v140 = vmul.f32 %v124, 0.5
  %v141 = vmul.f32 %v125, 0.5
  %v142 = vmul.f32 %v126, 0.5
  %v143 = vmul.f32 %v127, 0.5
  %v144 = vmul.f32 %v128, 0.5
  %vm145 = vcmask 261120
  %146 = vst.msk [vmem:[%s4] sm:$0xff] %vm145, 0.0
  %vm147 = vcmask 254976
  %148 = vst.msk [vmem:[%s4 + $0x8] sm:$0x3] %vm147, 0.0
  %149 = vst.msk [vmem:[%s4 + $0x10] sm:$0xff] %vm145, 0.0
  %150 = vst.msk [vmem:[%s4 + $0x18] sm:$0x3] %vm147, 0.0
  %151 = vst.msk [vmem:[%s4 + $0x20] sm:$0xff] %vm145, 0.0
  %152 = vst.msk [vmem:[%s4 + $0x28] sm:$0x3] %vm147, 0.0
  %153 = vst.msk [vmem:[%s4 + $0x30] sm:$0xff] %vm145, 0.0
  %154 = vst.msk [vmem:[%s4 + $0x38] sm:$0x3] %vm147, 0.0
  %155 = vst.msk [vmem:[%s4 + $0x40] sm:$0xff] %vm145, 0.0
  %156 = vst.msk [vmem:[%s4 + $0x48] sm:$0x3] %vm147, 0.0
  %157 = vst.msk [vmem:[%s4 + $0x50] sm:$0xff] %vm145, 0.0
  %158 = vst.msk [vmem:[%s4 + $0x58] sm:$0x3] %vm147, 0.0
  %159 = vst.msk [vmem:[%s4 + $0x60] sm:$0xff] %vm145, 0.0
  %160 = vst.msk [vmem:[%s4 + $0x68] sm:$0x3] %vm147, 0.0
  %161 = vst.msk [vmem:[%s4 + $0x70] sm:$0xff] %vm145, 0.0
  %162 = vst.msk [vmem:[%s4 + $0x78] sm:$0x3] %vm147, 0.0
  %163 = vst.msk [vmem:[%s4 + $0x80] sm:$0xff] %vm145, 0.0
  %164 = vst.msk [vmem:[%s4 + $0x88] sm:$0x3] %vm147, 0.0
  %165 = vst.msk [vmem:[%s4 + $0x90] sm:$0xff] %vm145, 0.0
  %166 = vst.msk [vmem:[%s4 + $0x98] sm:$0x3] %vm147, 0.0
  %167 = vst.msk [vmem:[%s4 + $0xa0] sm:$0xff] %vm145, 0.0
  %168 = vst.msk [vmem:[%s4 + $0xa8] sm:$0x3] %vm147, 0.0
  %169 = vst.msk [vmem:[%s4 + $0xb0] sm:$0xff] %vm145, 0.0
  %170 = vst.msk [vmem:[%s4 + $0xb8] sm:$0x3] %vm147, 0.0
  %171 = vst.msk [vmem:[%s4 + $0xc0] sm:$0xff] %vm145, 0.0
  %172 = vst.msk [vmem:[%s4 + $0xc8] sm:$0x3] %vm147, 0.0
  %173 = vst.msk [vmem:[%s4 + $0xd0] sm:$0xff] %vm145, 0.0
  %174 = vst.msk [vmem:[%s4 + $0xd8] sm:$0x3] %vm147, 0.0
  %175 = vst.msk [vmem:[%s4 + $0xe0] sm:$0xff] %vm145, 0.0
  %176 = vst.msk [vmem:[%s4 + $0xe8] sm:$0x3] %vm147, 0.0
  %177 = vst.msk [vmem:[%s4 + $0xf0] sm:$0xff] %vm145, 0.0
  %178 = vst.msk [vmem:[%s4 + $0xf8] sm:$0x3] %vm147, 0.0
  %179 = vst.msk [vmem:[%s4 + $0x100] sm:$0xff] %vm145, 0.0
  %180 = vst.msk [vmem:[%s4 + $0x108] sm:$0x3] %vm147, 0.0
  %181 = vst.msk [vmem:[%s4 + $0x110] sm:$0xff] %vm145, 0.0
  %182 = vst.msk [vmem:[%s4 + $0x118] sm:$0x3] %vm147, 0.0
  %183 = vst.msk [vmem:[%s4 + $0x120] sm:$0xff] %vm145, 0.0
  %184 = vst.msk [vmem:[%s4 + $0x128] sm:$0x3] %vm147, 0.0
  %185 = vst.msk [vmem:[%s4 + $0x130] sm:$0xff] %vm145, 0.0
  %186 = vst.msk [vmem:[%s4 + $0x138] sm:$0x3] %vm147, 0.0
  %v187 = vadd.f32 %v33, %v65
  %v188 = vadd.f32 %v34, %v66
  %v189 = vadd.f32 %v35, %v67
  %v190 = vadd.f32 %v36, %v68
  %v191 = vadd.f32 %v37, %v69
  %v192 = vadd.f32 %v38, %v70
  %v193 = vadd.f32 %v39, %v71
  %v194 = vadd.f32 %v40, %v72
  %v195 = vadd.f32 %v41, %v73
  %v196 = vadd.f32 %v42, %v74
  %v197 = vadd.f32 %v43, %v75
  %v198 = vadd.f32 %v44, %v76
  %v199 = vadd.f32 %v45, %v77
  %v200 = vadd.f32 %v46, %v78
  %v201 = vadd.f32 %v47, %v79
  %v202 = vadd.f32 %v48, %v80
  %v203 = vadd.f32 %v187, %v97
  %v204 = vadd.f32 %v188, %v98
  %v205 = vadd.f32 %v189, %v99
  %v206 = vadd.f32 %v190, %v100
  %v207 = vadd.f32 %v191, %v101
  %v208 = vadd.f32 %v192, %v102
  %v209 = vadd.f32 %v193, %v103
  %v210 = vadd.f32 %v194, %v104
  %v211 = vadd.f32 %v195, %v105
  %v212 = vadd.f32 %v196, %v106
  %v213 = vadd.f32 %v197, %v107
  %v214 = vadd.f32 %v198, %v108
  %v215 = vadd.f32 %v199, %v109
  %v216 = vadd.f32 %v200, %v110
  %v217 = vadd.f32 %v201, %v111
  %v218 = vadd.f32 %v202, %v112
  %v219 = vadd.f32 %v203, %v129
  %v220 = vadd.f32 %v204, %v130
  %v221 = vadd.f32 %v205, %v131
  %v222 = vadd.f32 %v206, %v132
  %v223 = vadd.f32 %v207, %v133
  %v224 = vadd.f32 %v208, %v134
  %v225 = vadd.f32 %v209, %v135
  %v226 = vadd.f32 %v210, %v136
  %v227 = vadd.f32 %v211, %v137
  %v228 = vadd.f32 %v212, %v138
  %v229 = vadd.f32 %v213, %v139
  %v230 = vadd.f32 %v214, %v140
  %v231 = vadd.f32 %v215, %v141
  %v232 = vadd.f32 %v216, %v142
  %v233 = vadd.f32 %v217, %v143
  %v234 = vadd.f32 %v218, %v144
  %s235 = scalar_lea.vmem %s4, 16
  %vm236 = vcmask 64512
  %237 = vst.msk [vmem:[%s235 + $0x1] sm:$0xff] %vm236, %v219
  %238 = vst.msk [vmem:[%s235 + $0x11] sm:$0xff] %vm236, %v220
  %239 = vst.msk [vmem:[%s235 + $0x21] sm:$0xff] %vm236, %v221
  %240 = vst.msk [vmem:[%s235 + $0x31] sm:$0xff] %vm236, %v222
  %241 = vst.msk [vmem:[%s235 + $0x41] sm:$0xff] %vm236, %v223
  %242 = vst.msk [vmem:[%s235 + $0x51] sm:$0xff] %vm236, %v224
  %243 = vst.msk [vmem:[%s235 + $0x61] sm:$0xff] %vm236, %v225
  %244 = vst.msk [vmem:[%s235 + $0x71] sm:$0xff] %vm236, %v226
  %245 = vst.msk [vmem:[%s235 + $0xa1] sm:$0xff] %vm236, %v227
  %246 = vst.msk [vmem:[%s235 + $0xb1] sm:$0xff] %vm236, %v228
  %247 = vst.msk [vmem:[%s235 + $0xc1] sm:$0xff] %vm236, %v229
  %248 = vst.msk [vmem:[%s235 + $0xd1] sm:$0xff] %vm236, %v230
  %249 = vst.msk [vmem:[%s235 + $0xe1] sm:$0xff] %vm236, %v231
  %250 = vst.msk [vmem:[%s235 + $0xf1] sm:$0xff] %vm236, %v232
  %251 = vst.msk [vmem:[%s235 + $0x101] sm:$0xff] %vm236, %v233
  %252 = vst.msk [vmem:[%s235 + $0x111] sm:$0xff] %vm236, %v234
  %v253 = vsub.f32 0.0, %v33
  %v254 = vsub.f32 0.0, %v34
  %v255 = vsub.f32 0.0, %v35
  %v256 = vsub.f32 0.0, %v36
  %v257 = vsub.f32 0.0, %v37
  %v258 = vsub.f32 0.0, %v38
  %v259 = vsub.f32 0.0, %v39
  %v260 = vsub.f32 0.0, %v40
  %v261 = vsub.f32 0.0, %v41
  %v262 = vsub.f32 0.0, %v42
  %v263 = vsub.f32 0.0, %v43
  %v264 = vsub.f32 0.0, %v44
  %v265 = vsub.f32 0.0, %v45
  %v266 = vsub.f32 0.0, %v46
  %v267 = vsub.f32 0.0, %v47
  %v268 = vsub.f32 0.0, %v48
  %v269 = vsub.f32 %v253, %v65
  %v270 = vsub.f32 %v254, %v66
  %v271 = vsub.f32 %v255, %v67
  %v272 = vsub.f32 %v256, %v68
  %v273 = vsub.f32 %v257, %v69
  %v274 = vsub.f32 %v258, %v70
  %v275 = vsub.f32 %v259, %v71
  %v276 = vsub.f32 %v260, %v72
  %v277 = vsub.f32 %v261, %v73
  %v278 = vsub.f32 %v262, %v74
  %v279 = vsub.f32 %v263, %v75
  %v280 = vsub.f32 %v264, %v76
  %v281 = vsub.f32 %v265, %v77
  %v282 = vsub.f32 %v266, %v78
  %v283 = vsub.f32 %v267, %v79
  %v284 = vsub.f32 %v268, %v80
  %v285 = vadd.f32 %v269, %v97
  %v286 = vadd.f32 %v270, %v98
  %v287 = vadd.f32 %v271, %v99
  %v288 = vadd.f32 %v272, %v100
  %v289 = vadd.f32 %v273, %v101
  %v290 = vadd.f32 %v274, %v102
  %v291 = vadd.f32 %v275, %v103
  %v292 = vadd.f32 %v276, %v104
  %v293 = vadd.f32 %v277, %v105
  %v294 = vadd.f32 %v278, %v106
  %v295 = vadd.f32 %v279, %v107
  %v296 = vadd.f32 %v280, %v108
  %v297 = vadd.f32 %v281, %v109
  %v298 = vadd.f32 %v282, %v110
  %v299 = vadd.f32 %v283, %v111
  %v300 = vadd.f32 %v284, %v112
  %v301 = vadd.f32 %v285, %v129
  %v302 = vadd.f32 %v286, %v130
  %v303 = vadd.f32 %v287, %v131
  %v304 = vadd.f32 %v288, %v132
  %v305 = vadd.f32 %v289, %v133
  %v306 = vadd.f32 %v290, %v134
  %v307 = vadd.f32 %v291, %v135
  %v308 = vadd.f32 %v292, %v136
  %v309 = vadd.f32 %v293, %v137
  %v310 = vadd.f32 %v294, %v138
  %v311 = vadd.f32 %v295, %v139
  %v312 = vadd.f32 %v296, %v140
  %v313 = vadd.f32 %v297, %v141
  %v314 = vadd.f32 %v298, %v142
  %v315 = vadd.f32 %v299, %v143
  %v316 = vadd.f32 %v300, %v144
  %333 = vrot.lane.b32.xlu0 %v301, 8
  %v334 = vpop.permute.xlu0 %333
  %335 = vrot.lane.b32.xlu0 %v302, 8
  %v336 = vpop.permute.xlu0 %335
  %337 = vrot.lane.b32.xlu0 %v303, 8
  %v338 = vpop.permute.xlu0 %337
  %339 = vrot.lane.b32.xlu0 %v304, 8
  %v340 = vpop.permute.xlu0 %339
  %341 = vrot.lane.b32.xlu0 %v305, 8
  %v342 = vpop.permute.xlu0 %341
  %343 = vrot.lane.b32.xlu0 %v306, 8
  %v344 = vpop.permute.xlu0 %343
  %345 = vrot.lane.b32.xlu0 %v307, 8
  %v346 = vpop.permute.xlu0 %345
  %347 = vrot.lane.b32.xlu0 %v308, 8
  %v348 = vpop.permute.xlu0 %347
  %349 = vrot.lane.b32.xlu0 %v309, 8
  %v350 = vpop.permute.xlu0 %349
  %351 = vrot.lane.b32.xlu0 %v310, 8
  %v352 = vpop.permute.xlu0 %351
  %353 = vrot.lane.b32.xlu0 %v311, 8
  %v354 = vpop.permute.xlu0 %353
  %355 = vrot.lane.b32.xlu0 %v312, 8
  %v356 = vpop.permute.xlu0 %355
  %357 = vrot.lane.b32.xlu0 %v313, 8
  %v358 = vpop.permute.xlu0 %357
  %359 = vrot.lane.b32.xlu0 %v314, 8
  %v360 = vpop.permute.xlu0 %359
  %361 = vrot.lane.b32.xlu0 %v315, 8
  %v362 = vpop.permute.xlu0 %361
  %363 = vrot.lane.b32.xlu0 %v316, 8
  %v364 = vpop.permute.xlu0 %363
  %vm381 = vcmask 130112
  %382 = vst.msk [vmem:[%s235 + $0x1] sm:$0xff] %vm381, %v334
  %383 = vst.msk [vmem:[%s235 + $0x11] sm:$0xff] %vm381, %v336
  %384 = vst.msk [vmem:[%s235 + $0x21] sm:$0xff] %vm381, %v338
  %385 = vst.msk [vmem:[%s235 + $0x31] sm:$0xff] %vm381, %v340
  %386 = vst.msk [vmem:[%s235 + $0x41] sm:$0xff] %vm381, %v342
  %387 = vst.msk [vmem:[%s235 + $0x51] sm:$0xff] %vm381, %v344
  %388 = vst.msk [vmem:[%s235 + $0x61] sm:$0xff] %vm381, %v346
  %389 = vst.msk [vmem:[%s235 + $0x71] sm:$0xff] %vm381, %v348
  %390 = vst.msk [vmem:[%s235 + $0xa1] sm:$0xff] %vm381, %v350
  %391 = vst.msk [vmem:[%s235 + $0xb1] sm:$0xff] %vm381, %v352
  %392 = vst.msk [vmem:[%s235 + $0xc1] sm:$0xff] %vm381, %v354
  %393 = vst.msk [vmem:[%s235 + $0xd1] sm:$0xff] %vm381, %v356
  %394 = vst.msk [vmem:[%s235 + $0xe1] sm:$0xff] %vm381, %v358
  %395 = vst.msk [vmem:[%s235 + $0xf1] sm:$0xff] %vm381, %v360
  %396 = vst.msk [vmem:[%s235 + $0x101] sm:$0xff] %vm381, %v362
  %397 = vst.msk [vmem:[%s235 + $0x111] sm:$0xff] %vm381, %v364
  %v398 = vadd.f32 %v253, %v65
  %v399 = vadd.f32 %v254, %v66
  %v400 = vadd.f32 %v255, %v67
  %v401 = vadd.f32 %v256, %v68
  %v402 = vadd.f32 %v257, %v69
  %v403 = vadd.f32 %v258, %v70
  %v404 = vadd.f32 %v259, %v71
  %v405 = vadd.f32 %v260, %v72
  %v406 = vadd.f32 %v261, %v73
  %v407 = vadd.f32 %v262, %v74
  %v408 = vadd.f32 %v263, %v75
  %v409 = vadd.f32 %v264, %v76
  %v410 = vadd.f32 %v265, %v77
  %v411 = vadd.f32 %v266, %v78
  %v412 = vadd.f32 %v267, %v79
  %v413 = vadd.f32 %v268, %v80
  %v414 = vsub.f32 %v398, %v97
  %v415 = vsub.f32 %v399, %v98
  %v416 = vsub.f32 %v400, %v99
  %v417 = vsub.f32 %v401, %v100
  %v418 = vsub.f32 %v402, %v101
  %v419 = vsub.f32 %v403, %v102
  %v420 = vsub.f32 %v404, %v103
  %v421 = vsub.f32 %v405, %v104
  %v422 = vsub.f32 %v406, %v105
  %v423 = vsub.f32 %v407, %v106
  %v424 = vsub.f32 %v408, %v107
  %v425 = vsub.f32 %v409, %v108
  %v426 = vsub.f32 %v410, %v109
  %v427 = vsub.f32 %v411, %v110
  %v428 = vsub.f32 %v412, %v111
  %v429 = vsub.f32 %v413, %v112
  %v430 = vadd.f32 %v414, %v129
  %v431 = vadd.f32 %v415, %v130
  %v432 = vadd.f32 %v416, %v131
  %v433 = vadd.f32 %v417, %v132
  %v434 = vadd.f32 %v418, %v133
  %v435 = vadd.f32 %v419, %v134
  %v436 = vadd.f32 %v420, %v135
  %v437 = vadd.f32 %v421, %v136
  %v438 = vadd.f32 %v422, %v137
  %v439 = vadd.f32 %v423, %v138
  %v440 = vadd.f32 %v424, %v139
  %v441 = vadd.f32 %v425, %v140
  %v442 = vadd.f32 %v426, %v141
  %v443 = vadd.f32 %v427, %v142
  %v444 = vadd.f32 %v428, %v143
  %v445 = vadd.f32 %v429, %v144
  %462 = vrot.lane.b32.xlu0 %v430, 16
  %v463 = vpop.permute.xlu0 %462
  %464 = vrot.lane.b32.xlu0 %v431, 16
  %v465 = vpop.permute.xlu0 %464
  %466 = vrot.lane.b32.xlu0 %v432, 16
  %v467 = vpop.permute.xlu0 %466
  %468 = vrot.lane.b32.xlu0 %v433, 16
  %v469 = vpop.permute.xlu0 %468
  %470 = vrot.lane.b32.xlu0 %v434, 16
  %v471 = vpop.permute.xlu0 %470
  %472 = vrot.lane.b32.xlu0 %v435, 16
  %v473 = vpop.permute.xlu0 %472
  %474 = vrot.lane.b32.xlu0 %v436, 16
  %v475 = vpop.permute.xlu0 %474
  %476 = vrot.lane.b32.xlu0 %v437, 16
  %v477 = vpop.permute.xlu0 %476
  %478 = vrot.lane.b32.xlu0 %v438, 16
  %v479 = vpop.permute.xlu0 %478
  %480 = vrot.lane.b32.xlu0 %v439, 16
  %v481 = vpop.permute.xlu0 %480
  %482 = vrot.lane.b32.xlu0 %v440, 16
  %v483 = vpop.permute.xlu0 %482
  %484 = vrot.lane.b32.xlu0 %v441, 16
  %v485 = vpop.permute.xlu0 %484
  %486 = vrot.lane.b32.xlu0 %v442, 16
  %v487 = vpop.permute.xlu0 %486
  %488 = vrot.lane.b32.xlu0 %v443, 16
  %v489 = vpop.permute.xlu0 %488
  %490 = vrot.lane.b32.xlu0 %v444, 16
  %v491 = vpop.permute.xlu0 %490
  %492 = vrot.lane.b32.xlu0 %v445, 16
  %v493 = vpop.permute.xlu0 %492
  %vm510 = vcmask 195712
  %511 = vst.msk [vmem:[%s235 + $0x1] sm:$0xff] %vm510, %v463
  %512 = vst.msk [vmem:[%s235 + $0x11] sm:$0xff] %vm510, %v465
  %513 = vst.msk [vmem:[%s235 + $0x21] sm:$0xff] %vm510, %v467
  %514 = vst.msk [vmem:[%s235 + $0x31] sm:$0xff] %vm510, %v469
  %515 = vst.msk [vmem:[%s235 + $0x41] sm:$0xff] %vm510, %v471
  %516 = vst.msk [vmem:[%s235 + $0x51] sm:$0xff] %vm510, %v473
  %517 = vst.msk [vmem:[%s235 + $0x61] sm:$0xff] %vm510, %v475
  %518 = vst.msk [vmem:[%s235 + $0x71] sm:$0xff] %vm510, %v477
  %519 = vst.msk [vmem:[%s235 + $0xa1] sm:$0xff] %vm510, %v479
  %520 = vst.msk [vmem:[%s235 + $0xb1] sm:$0xff] %vm510, %v481
  %521 = vst.msk [vmem:[%s235 + $0xc1] sm:$0xff] %vm510, %v483
  %522 = vst.msk [vmem:[%s235 + $0xd1] sm:$0xff] %vm510, %v485
  %523 = vst.msk [vmem:[%s235 + $0xe1] sm:$0xff] %vm510, %v487
  %524 = vst.msk [vmem:[%s235 + $0xf1] sm:$0xff] %vm510, %v489
  %525 = vst.msk [vmem:[%s235 + $0x101] sm:$0xff] %vm510, %v491
  %526 = vst.msk [vmem:[%s235 + $0x111] sm:$0xff] %vm510, %v493
  %v527 = vsub.f32 %v33, %v65
  %v528 = vsub.f32 %v34, %v66
  %v529 = vsub.f32 %v35, %v67
  %v530 = vsub.f32 %v36, %v68
  %v531 = vsub.f32 %v37, %v69
  %v532 = vsub.f32 %v38, %v70
  %v533 = vsub.f32 %v39, %v71
  %v534 = vsub.f32 %v40, %v72
  %v535 = vsub.f32 %v41, %v73
  %v536 = vsub.f32 %v42, %v74
  %v537 = vsub.f32 %v43, %v75
  %v538 = vsub.f32 %v44, %v76
  %v539 = vsub.f32 %v45, %v77
  %v540 = vsub.f32 %v46, %v78
  %v541 = vsub.f32 %v47, %v79
  %v542 = vsub.f32 %v48, %v80
  %v543 = vsub.f32 %v527, %v97
  %v544 = vsub.f32 %v528, %v98
  %v545 = vsub.f32 %v529, %v99
  %v546 = vsub.f32 %v530, %v100
  %v547 = vsub.f32 %v531, %v101
  %v548 = vsub.f32 %v532, %v102
  %v549 = vsub.f32 %v533, %v103
  %v550 = vsub.f32 %v534, %v104
  %v551 = vsub.f32 %v535, %v105
  %v552 = vsub.f32 %v536, %v106
  %v553 = vsub.f32 %v537, %v107
  %v554 = vsub.f32 %v538, %v108
  %v555 = vsub.f32 %v539, %v109
  %v556 = vsub.f32 %v540, %v110
  %v557 = vsub.f32 %v541, %v111
  %v558 = vsub.f32 %v542, %v112
  %v559 = vadd.f32 %v543, %v129
  %v560 = vadd.f32 %v544, %v130
  %v561 = vadd.f32 %v545, %v131
  %v562 = vadd.f32 %v546, %v132
  %v563 = vadd.f32 %v547, %v133
  %v564 = vadd.f32 %v548, %v134
  %v565 = vadd.f32 %v549, %v135
  %v566 = vadd.f32 %v550, %v136
  %v567 = vadd.f32 %v551, %v137
  %v568 = vadd.f32 %v552, %v138
  %v569 = vadd.f32 %v553, %v139
  %v570 = vadd.f32 %v554, %v140
  %v571 = vadd.f32 %v555, %v141
  %v572 = vadd.f32 %v556, %v142
  %v573 = vadd.f32 %v557, %v143
  %v574 = vadd.f32 %v558, %v144
  %591 = vrot.lane.b32.xlu0 %v559, 24
  %v592 = vpop.permute.xlu0 %591
  %593 = vrot.lane.b32.xlu0 %v560, 24
  %v594 = vpop.permute.xlu0 %593
  %595 = vrot.lane.b32.xlu0 %v561, 24
  %v596 = vpop.permute.xlu0 %595
  %597 = vrot.lane.b32.xlu0 %v562, 24
  %v598 = vpop.permute.xlu0 %597
  %599 = vrot.lane.b32.xlu0 %v563, 24
  %v600 = vpop.permute.xlu0 %599
  %601 = vrot.lane.b32.xlu0 %v564, 24
  %v602 = vpop.permute.xlu0 %601
  %603 = vrot.lane.b32.xlu0 %v565, 24
  %v604 = vpop.permute.xlu0 %603
  %605 = vrot.lane.b32.xlu0 %v566, 24
  %v606 = vpop.permute.xlu0 %605
  %607 = vrot.lane.b32.xlu0 %v567, 24
  %v608 = vpop.permute.xlu0 %607
  %609 = vrot.lane.b32.xlu0 %v568, 24
  %v610 = vpop.permute.xlu0 %609
  %611 = vrot.lane.b32.xlu0 %v569, 24
  %v612 = vpop.permute.xlu0 %611
  %613 = vrot.lane.b32.xlu0 %v570, 24
  %v614 = vpop.permute.xlu0 %613
  %615 = vrot.lane.b32.xlu0 %v571, 24
  %v616 = vpop.permute.xlu0 %615
  %617 = vrot.lane.b32.xlu0 %v572, 24
  %v618 = vpop.permute.xlu0 %617
  %619 = vrot.lane.b32.xlu0 %v573, 24
  %v620 = vpop.permute.xlu0 %619
  %621 = vrot.lane.b32.xlu0 %v574, 24
  %v622 = vpop.permute.xlu0 %621
  %vm639 = vcmask 261312
  %640 = vst.msk [vmem:[%s235 + $0x1] sm:$0xff] %vm639, %v592
  %641 = vst.msk [vmem:[%s235 + $0x11] sm:$0xff] %vm639, %v594
  %642 = vst.msk [vmem:[%s235 + $0x21] sm:$0xff] %vm639, %v596
  %643 = vst.msk [vmem:[%s235 + $0x31] sm:$0xff] %vm639, %v598
  %644 = vst.msk [vmem:[%s235 + $0x41] sm:$0xff] %vm639, %v600
  %645 = vst.msk [vmem:[%s235 + $0x51] sm:$0xff] %vm639, %v602
  %646 = vst.msk [vmem:[%s235 + $0x61] sm:$0xff] %vm639, %v604
  %647 = vst.msk [vmem:[%s235 + $0x71] sm:$0xff] %vm639, %v606
  %648 = vst.msk [vmem:[%s235 + $0xa1] sm:$0xff] %vm639, %v608
  %649 = vst.msk [vmem:[%s235 + $0xb1] sm:$0xff] %vm639, %v610
  %650 = vst.msk [vmem:[%s235 + $0xc1] sm:$0xff] %vm639, %v612
  %651 = vst.msk [vmem:[%s235 + $0xd1] sm:$0xff] %vm639, %v614
  %652 = vst.msk [vmem:[%s235 + $0xe1] sm:$0xff] %vm639, %v616
  %653 = vst.msk [vmem:[%s235 + $0xf1] sm:$0xff] %vm639, %v618
  %654 = vst.msk [vmem:[%s235 + $0x101] sm:$0xff] %vm639, %v620
  %655 = vst.msk [vmem:[%s235 + $0x111] sm:$0xff] %vm639, %v622
  // Predicated region
  $region18: #{hwab_pallas.6} parent=0 // pred_check
    _
  $region19: #{hwab_pallas.6} parent=0 // pred_check_branch
    %657 = sbr.rel (0) target = $region21
  $region20: #{hwab_pallas.6} parent=0 // pred_region
    _
  $region21: #{hwab_pallas.6} parent=0 // pred_fallthru
    _
  // Predicated region
  $region22: #{hwab_pallas.6} parent=0 // pred_check
    _
  $region23: #{hwab_pallas.6} parent=0 // pred_check_branch
    %659 = sbr.rel (0) target = $region25
  $region24: #{hwab_pallas.6} parent=0 // pred_region
    _
  $region25: #{hwab_pallas.6} parent=0 // pred_fallthru
    _

// kernel: hwab_pallas.11
$region0: #{hwab_pallas.11}
  #allocation0 [shape = 'u32[]', space=smem, size = 0x4, offset = 0x4, fixed_abs, tag = 'smem constant byte address 0x4 - core index']
  #allocation1 [shape = 'u32[72,128]{1,0:T(1,128)}', space=vmem, size = 0x9000, scoped, tag = 'internal scratch']
  #allocation2 [shape = 'f32[18,18,16]{2,1,0:T(8,128)}', space=vmem, size = 0x36000, scoped, tag = 'scratch operand']
  #allocation3 [shape = 'f32[1]{0:T(128)S(6)}', space=smem, size = 0x200, scoped, tag = 'scoped memory for hwab_pallas.11']
  %s0 = inlined_call_operand.vmem [shape: f32[2,16,16,8], index: 0, kind: input, shape index: {}]
  %s1 = inlined_call_operand.vmem [shape: f32[2,16,16,16], index: 1, kind: input, shape index: {}]
  %s2 = inlined_call_operand.vmem [shape: f32[9,16,16], index: 2, kind: input, shape index: {}]
  %s3 = inlined_call_operand.vmem [shape: f32[16,16], index: 3, kind: input, shape index: {}]
  %s4 = inlined_call_operand.<no memory space> [shape: f32[1], index: 4, kind: input, shape index: {}]
  %s5 = inlined_call_operand.vmem [shape: f32[2,16,16,16], index: 5, kind: output, shape index: {}]
  %s6 = sld [smem:[#allocation0]]
  $region53: #{hwab_pallas.11} parent=0
    _
  %s8 = ssub.s32 1, %s6
  %s9 = scalar_select 0, %s8, %s6
  %10 = sst [smem:[#allocation3]] %s4
  loop: start=0, step=1, limit=4
  $region2: #{hwab_pallas.11} parent=0 // loop_pre_header
    _
  $region3: #{hwab_pallas.11} parent=0 // loop_header
    %s12 = sphi 0, %s16
    %p13 = scmp.ge.s32.totalorder %s12, 4
    %s22 = sphi 0, %s24
    %s25 = sphi 0, %s22
    %s26 = sphi 0, %s25
    %s42 = sphi 0, %s26
    %s48 = sphi 0, %s50
    %s51 = sphi 0, %s48
    %s52 = sphi 0, %s51
    %s68 = sphi 0, %s52
    %s72 = sphi 0, %s72
    %s74 = sphi 0, %s72
    %s75 = sphi 0, %s74
    %s89 = sphi 0, %s75
    %s93 = sphi 0, %s93
    %s95 = sphi 0, %s93
    %s96 = sphi 0, %s95
    %s110 = sphi 0, %s96
    %s114 = sphi 0, %s114
    %s116 = sphi 0, %s114
    %s117 = sphi 0, %s116
    %s131 = sphi 0, %s117
    %s137 = sphi 0, %s139
    %s140 = sphi 0, %s137
    %s141 = sphi 0, %s140
    %s157 = sphi 0, %s141
  $region4: #{hwab_pallas.11} parent=0 // loop_header_branch
    %15 = sbr.rel (%p13) target = $region8
  $region5: #{hwab_pallas.11} parent=0 // loop_body
    %s17 = ssub.s32 %s12, 1
    %s18 = ssub.s32 %s12, 2
    %s19 = sadd.s32 %s12, 1
    %s20 = ssub.s32 %s12, %s19
    %p21 = scmp.eq.s32.totalorder %s20, 0
    %s23 = sadd.s32 %s22, 1
    %s24 = scalar_select %p21, %s22, %s23
    %p27 = pneg %p21
    %p28 = scmp.eq.s32.totalorder %s12, 1
    %p29 = por %p27, %p28
    %p30 = scmp.ne.s32.totalorder %s22, %s25
    %p31 = scmp.eq.s32.totalorder %s12, 0
    %p32 = por %p30, %p31
    %p33 = scmp.ne.s32.totalorder %s22, %s25
    %p34 = scmp.eq.s32.totalorder %s17, 1
    %p35 = por %p33, %p34
    %p36 = scmp.ne.s32.totalorder %s25, %s26
    %p37 = scmp.eq.s32.totalorder %s17, 0
    %p38 = por %p36, %p37
    %p39 = scmp.ne.s32.totalorder %s25, %s26
    %p40 = scmp.eq.s32.totalorder %s18, 1
    %p41 = por %p39, %p40
    %p43 = scmp.ne.s32.totalorder %s26, %s42
    %p44 = scmp.eq.s32.totalorder %s18, 0
    %p45 = por %p43, %p44
    %s46 = ssub.s32 %s12, %s19
    %p47 = scmp.eq.s32.totalorder %s46, 0
    %s49 = sadd.s32 %s48, 1
    %s50 = scalar_select %p47, %s48, %s49
    %p53 = pneg %p47
    %p54 = scmp.eq.s32.totalorder %s12, 1
    %p55 = por %p53, %p54
    %p56 = scmp.ne.s32.totalorder %s48, %s51
    %p57 = scmp.eq.s32.totalorder %s12, 0
    %p58 = por %p56, %p57
    %p59 = scmp.ne.s32.totalorder %s48, %s51
    %p60 = scmp.eq.s32.totalorder %s17, 1
    %p61 = por %p59, %p60
    %p62 = scmp.ne.s32.totalorder %s51, %s52
    %p63 = scmp.eq.s32.totalorder %s17, 0
    %p64 = por %p62, %p63
    %p65 = scmp.ne.s32.totalorder %s51, %s52
    %p66 = scmp.eq.s32.totalorder %s18, 1
    %p67 = por %p65, %p66
    %p69 = scmp.ne.s32.totalorder %s52, %s68
    %p70 = scmp.eq.s32.totalorder %s18, 0
    %p71 = por %p69, %p70
    %s73 = sadd.s32 %s72, 1
    %p76 = scmp.eq.s32.totalorder %s12, 1
    %p77 = scmp.ne.s32.totalorder %s72, %s74
    %p78 = scmp.eq.s32.totalorder %s12, 0
    %p79 = por %p77, %p78
    %p80 = scmp.ne.s32.totalorder %s72, %s74
    %p81 = scmp.eq.s32.totalorder %s17, 1
    %p82 = por %p80, %p81
    %p83 = scmp.ne.s32.totalorder %s74, %s75
    %p84 = scmp.eq.s32.totalorder %s17, 0
    %p85 = por %p83, %p84
    %p86 = scmp.ne.s32.totalorder %s74, %s75
    %p87 = scmp.eq.s32.totalorder %s18, 1
    %p88 = por %p86, %p87
    %p90 = scmp.ne.s32.totalorder %s75, %s89
    %p91 = scmp.eq.s32.totalorder %s18, 0
    %p92 = por %p90, %p91
    %s94 = sadd.s32 %s93, 1
    %p97 = scmp.eq.s32.totalorder %s12, 1
    %p98 = scmp.ne.s32.totalorder %s93, %s95
    %p99 = scmp.eq.s32.totalorder %s12, 0
    %p100 = por %p98, %p99
    %p101 = scmp.ne.s32.totalorder %s93, %s95
    %p102 = scmp.eq.s32.totalorder %s17, 1
    %p103 = por %p101, %p102
    %p104 = scmp.ne.s32.totalorder %s95, %s96
    %p105 = scmp.eq.s32.totalorder %s17, 0
    %p106 = por %p104, %p105
    %p107 = scmp.ne.s32.totalorder %s95, %s96
    %p108 = scmp.eq.s32.totalorder %s18, 1
    %p109 = por %p107, %p108
    %p111 = scmp.ne.s32.totalorder %s96, %s110
    %p112 = scmp.eq.s32.totalorder %s18, 0
    %p113 = por %p111, %p112
    %s115 = sadd.s32 %s114, 1
    %p118 = scmp.eq.s32.totalorder %s12, 1
    %p119 = scmp.ne.s32.totalorder %s114, %s116
    %p120 = scmp.eq.s32.totalorder %s12, 0
    %p121 = por %p119, %p120
    %p122 = scmp.ne.s32.totalorder %s114, %s116
    %p123 = scmp.eq.s32.totalorder %s17, 1
    %p124 = por %p122, %p123
    %p125 = scmp.ne.s32.totalorder %s116, %s117
    %p126 = scmp.eq.s32.totalorder %s17, 0
    %p127 = por %p125, %p126
    %p128 = scmp.ne.s32.totalorder %s116, %s117
    %p129 = scmp.eq.s32.totalorder %s18, 1
    %p130 = por %p128, %p129
    %p132 = scmp.ne.s32.totalorder %s117, %s131
    %p133 = scmp.eq.s32.totalorder %s18, 0
    %p134 = por %p132, %p133
    %s135 = ssub.s32 %s12, %s19
    %p136 = scmp.eq.s32.totalorder %s135, 0
    %s138 = sadd.s32 %s137, 1
    %s139 = scalar_select %p136, %s137, %s138
    %p142 = pneg %p136
    %p143 = scmp.eq.s32.totalorder %s12, 1
    %p144 = por %p142, %p143
    %p145 = scmp.ne.s32.totalorder %s137, %s140
    %p146 = scmp.eq.s32.totalorder %s12, 0
    %p147 = por %p145, %p146
    %p148 = scmp.ne.s32.totalorder %s137, %s140
    %p149 = scmp.eq.s32.totalorder %s17, 1
    %p150 = por %p148, %p149
    %p151 = scmp.ne.s32.totalorder %s140, %s141
    %p152 = scmp.eq.s32.totalorder %s17, 0
    %p153 = por %p151, %p152
    %p154 = scmp.ne.s32.totalorder %s140, %s141
    %p155 = scmp.eq.s32.totalorder %s18, 1
    %p156 = por %p154, %p155
    %p158 = scmp.ne.s32.totalorder %s141, %s157
    %p159 = scmp.eq.s32.totalorder %s18, 0
    %p160 = por %p158, %p159
    %p161 = scmp.le.s32.totalorder 1, %s12
    %p162 = scmp.lt.s32.totalorder %s12, 3
    %p163 = pnand %p161, %p162
    %p164 = pneg %p163
    // Predicated region
    $region9: #{hwab_pallas.11} parent=5 // pred_check
      _
    $region10: #{hwab_pallas.11} parent=5 // pred_check_branch
      %166 = sbr.rel (%p163) target = $region12
    $region11: #{hwab_pallas.11} parent=5 // pred_region
      %s167 = ssub.s32 %s12, 1
      // Predicated region
      $region13: #{hwab_pallas.11} parent=11 // pred_check
        %p168 = pneg %p85
      $region14: #{hwab_pallas.11} parent=11 // pred_check_branch
        %170 = sbr.rel (%p168) target = $region16
      $region15: #{hwab_pallas.11} parent=11 // pred_region
        _
      $region16: #{hwab_pallas.11} parent=11 // pred_fallthru
        _
      // Predicated region
      $region17: #{hwab_pallas.11} parent=11 // pred_check
        %p171 = pneg %p106
      $region18: #{hwab_pallas.11} parent=11 // pred_check_branch
        %173 = sbr.rel (%p171) target = $region20
      $region19: #{hwab_pallas.11} parent=11 // pred_region
        _
      $region20: #{hwab_pallas.11} parent=11 // pred_fallthru
        _
      // Predicated region
      $region21: #{hwab_pallas.11} parent=11 // pred_check
        %p174 = pneg %p127
      $region22: #{hwab_pallas.11} parent=11 // pred_check_branch
        %176 = sbr.rel (%p174) target = $region24
      $region23: #{hwab_pallas.11} parent=11 // pred_region
        _
      $region24: #{hwab_pallas.11} parent=11 // pred_fallthru
        _
    $region12: #{hwab_pallas.11} parent=5 // pred_fallthru
      _
    %p177 = scmp.lt.s32.totalorder %s12, 2
    // Predicated region
    $region25: #{hwab_pallas.11} parent=5 // pred_check
      %p178 = pneg %p177
    $region26: #{hwab_pallas.11} parent=5 // pred_check_branch
      %180 = sbr.rel (%p178) target = $region28
    $region27: #{hwab_pallas.11} parent=5 // pred_region
      // Predicated region
      $region29: #{hwab_pallas.11} parent=27 // pred_check
        %p181 = pneg %p32
      $region30: #{hwab_pallas.11} parent=27 // pred_check_branch
        %183 = sbr.rel (%p181) target = $region32
      $region31: #{hwab_pallas.11} parent=27 // pred_region
        %p184 = scmp.lt.s32.totalorder %s12, 1
        %s185 = scalar_select %p184, %s12, 1
        %s186 = smul.addr %s185, 32
        %s187 = smul.addr %s186, 8
        %s188 = scalar_lea.vmem %s0, %s187
      $region32: #{hwab_pallas.11} parent=27 // pred_fallthru
        _
      // Predicated region
      $region33: #{hwab_pallas.11} parent=27 // pred_check
        %p189 = pneg %p58
      $region34: #{hwab_pallas.11} parent=27 // pred_check_branch
        %191 = sbr.rel (%p189) target = $region36
      $region35: #{hwab_pallas.11} parent=27 // pred_region
        %p192 = scmp.lt.s32.totalorder %s12, 1
        %s193 = scalar_select %p192, %s12, 1
        %s194 = smul.addr %s193, 32
        %s195 = smul.addr %s194, 8
        %s196 = scalar_lea.vmem %s1, %s195
      $region36: #{hwab_pallas.11} parent=27 // pred_fallthru
        _
    $region28: #{hwab_pallas.11} parent=5 // pred_fallthru
      _
    %p197 = scmp.le.s32.totalorder 1, %s12
    %p198 = scmp.lt.s32.totalorder %s12, 3
    %p199 = pnand %p197, %p198
    %p200 = pneg %p199
    // Predicated region
    $region37: #{hwab_pallas.11} parent=5 // pred_check
      _
    $region38: #{hwab_pallas.11} parent=5 // pred_check_branch
      %202 = sbr.rel (%p199) target = $region40
    $region39: #{hwab_pallas.11} parent=5 // pred_region
      %s203 = ssub.s32 %s12, 1
      %p204 = scmp.lt.s32.totalorder %s17, 1
      %s205 = scalar_select %p204, %s17, 1
      %s206 = smul.addr %s205, 32
      %s207 = smul.addr %s206, 8
      %s208 = scalar_lea.vmem %s0, %s207
      %p209 = pneg %p38
      %p210 = pneg %p35
      %p211 = scmp.lt.s32.totalorder %s17, 1
      %s212 = scalar_select %p211, %s17, 1
      %s213 = smul.addr %s212, 32
      %s214 = smul.addr %s213, 8
      %s215 = scalar_lea.vmem %s1, %s214
      %p216 = pneg %p64
      %p217 = pneg %p61
      %p218 = pneg %p85
      %p219 = pneg %p82
      %p220 = pneg %p106
      %p221 = pneg %p103
      %p222 = pneg %p127
      %p223 = pneg %p124
      %p224 = pneg %p153
      %p225 = pneg %p150
      %p226 = scmp.lt.s32.totalorder %s17, 1
      %s227 = scalar_select %p226, %s17, 1
      %s228 = smul.addr %s227, 32
      %s229 = smul.addr %s228, 8
      %s230 = scalar_lea.vmem %s5, %s229
      %p231 = scmp.lt.s32.totalorder %s17, 1
      %s232 = scalar_select %p231, %s17, 1
      %s233 = smul.addr %s232, 32
      %s234 = smul.addr %s233, 8
      %s235 = scalar_lea.vmem %s0, %s234
      %p236 = scmp.lt.s32.totalorder %s17, 1
      %s237 = scalar_select %p236, %s17, 1
      %s238 = smul.addr %s237, 32
      %s239 = smul.addr %s238, 8
      %s240 = scalar_lea.vmem %s1, %s239
      %p241 = scmp.lt.s32.totalorder %s17, 1
      %s242 = scalar_select %p241, %s17, 1
      %s243 = smul.addr %s242, 32
      %s244 = smul.addr %s243, 8
      %s245 = scalar_lea.vmem %s5, %s244
      %v246 = vld [vmem:[%s240] sm:$0xff]
      %v247 = vld [vmem:[%s240 + $0x8] sm:$0xff]
      %v248 = vld [vmem:[%s240 + $0x10] sm:$0xff]
      %v249 = vld [vmem:[%s240 + $0x18] sm:$0xff]
      %v250 = vld [vmem:[%s240 + $0x20] sm:$0xff]
      %v251 = vld [vmem:[%s240 + $0x28] sm:$0xff]
      %v252 = vld [vmem:[%s240 + $0x30] sm:$0xff]
      %v253 = vld [vmem:[%s240 + $0x38] sm:$0xff]
      %v254 = vld [vmem:[%s240 + $0x40] sm:$0xff]
      %v255 = vld [vmem:[%s240 + $0x48] sm:$0xff]
      %v256 = vld [vmem:[%s240 + $0x50] sm:$0xff]
      %v257 = vld [vmem:[%s240 + $0x58] sm:$0xff]
      %v258 = vld [vmem:[%s240 + $0x60] sm:$0xff]
      %v259 = vld [vmem:[%s240 + $0x68] sm:$0xff]
      %v260 = vld [vmem:[%s240 + $0x70] sm:$0xff]
      %v261 = vld [vmem:[%s240 + $0x78] sm:$0xff]
      %v262 = vld [vmem:[%s240 + $0x80] sm:$0xff]
      %v263 = vld [vmem:[%s240 + $0x88] sm:$0xff]
      %v264 = vld [vmem:[%s240 + $0x90] sm:$0xff]
      %v265 = vld [vmem:[%s240 + $0x98] sm:$0xff]
      %v266 = vld [vmem:[%s240 + $0xa0] sm:$0xff]
      %v267 = vld [vmem:[%s240 + $0xa8] sm:$0xff]
      %v268 = vld [vmem:[%s240 + $0xb0] sm:$0xff]
      %v269 = vld [vmem:[%s240 + $0xb8] sm:$0xff]
      %v270 = vld [vmem:[%s240 + $0xc0] sm:$0xff]
      %v271 = vld [vmem:[%s240 + $0xc8] sm:$0xff]
      %v272 = vld [vmem:[%s240 + $0xd0] sm:$0xff]
      %v273 = vld [vmem:[%s240 + $0xd8] sm:$0xff]
      %v274 = vld [vmem:[%s240 + $0xe0] sm:$0xff]
      %v275 = vld [vmem:[%s240 + $0xe8] sm:$0xff]
      %v276 = vld [vmem:[%s240 + $0xf0] sm:$0xff]
      %v277 = vld [vmem:[%s240 + $0xf8] sm:$0xff]
      %vm278 = vcmask 130048
      %279 = vst.msk [vmem:[#allocation2] sm:$0xff] %vm278, 0.0
      %280 = vst.msk [vmem:[#allocation2 + $0x8] sm:$0xff] %vm278, 0.0
      %vm281 = vcmask 123904
      %282 = vst.msk [vmem:[#allocation2 + $0x10] sm:$0x3] %vm281, 0.0
      %283 = vst.msk [vmem:[#allocation2 + $0x18] sm:$0xff] %vm278, 0.0
      %284 = vst.msk [vmem:[#allocation2 + $0x20] sm:$0xff] %vm278, 0.0
      %285 = vst.msk [vmem:[#allocation2 + $0x28] sm:$0x3] %vm281, 0.0
      %286 = vst.msk [vmem:[#allocation2 + $0x30] sm:$0xff] %vm278, 0.0
      %287 = vst.msk [vmem:[#allocation2 + $0x38] sm:$0xff] %vm278, 0.0
      %288 = vst.msk [vmem:[#allocation2 + $0x40] sm:$0x3] %vm281, 0.0
      %289 = vst.msk [vmem:[#allocation2 + $0x48] sm:$0xff] %vm278, 0.0
      %290 = vst.msk [vmem:[#allocation2 + $0x50] sm:$0xff] %vm278, 0.0
      %291 = vst.msk [vmem:[#allocation2 + $0x58] sm:$0x3] %vm281, 0.0
      %292 = vst.msk [vmem:[#allocation2 + $0x60] sm:$0xff] %vm278, 0.0
      %293 = vst.msk [vmem:[#allocation2 + $0x68] sm:$0xff] %vm278, 0.0
      %294 = vst.msk [vmem:[#allocation2 + $0x70] sm:$0x3] %vm281, 0.0
      %295 = vst.msk [vmem:[#allocation2 + $0x78] sm:$0xff] %vm278, 0.0
      %296 = vst.msk [vmem:[#allocation2 + $0x80] sm:$0xff] %vm278, 0.0
      %297 = vst.msk [vmem:[#allocation2 + $0x88] sm:$0x3] %vm281, 0.0
      %298 = vst.msk [vmem:[#allocation2 + $0x90] sm:$0xff] %vm278, 0.0
      %299 = vst.msk [vmem:[#allocation2 + $0x98] sm:$0xff] %vm278, 0.0
      %300 = vst.msk [vmem:[#allocation2 + $0xa0] sm:$0x3] %vm281, 0.0
      %301 = vst.msk [vmem:[#allocation2 + $0xa8] sm:$0xff] %vm278, 0.0
      %302 = vst.msk [vmem:[#allocation2 + $0xb0] sm:$0xff] %vm278, 0.0
      %303 = vst.msk [vmem:[#allocation2 + $0xb8] sm:$0x3] %vm281, 0.0
      %304 = vst.msk [vmem:[#allocation2 + $0xc0] sm:$0xff] %vm278, 0.0
      %305 = vst.msk [vmem:[#allocation2 + $0xc8] sm:$0xff] %vm278, 0.0
      %306 = vst.msk [vmem:[#allocation2 + $0xd0] sm:$0x3] %vm281, 0.0
      %307 = vst.msk [vmem:[#allocation2 + $0xd8] sm:$0xff] %vm278, 0.0
      %308 = vst.msk [vmem:[#allocation2 + $0xe0] sm:$0xff] %vm278, 0.0
      %309 = vst.msk [vmem:[#allocation2 + $0xe8] sm:$0x3] %vm281, 0.0
      %310 = vst.msk [vmem:[#allocation2 + $0xf0] sm:$0xff] %vm278, 0.0
      %311 = vst.msk [vmem:[#allocation2 + $0xf8] sm:$0xff] %vm278, 0.0
      %312 = vst.msk [vmem:[#allocation2 + $0x100] sm:$0x3] %vm281, 0.0
      %313 = vst.msk [vmem:[#allocation2 + $0x108] sm:$0xff] %vm278, 0.0
      %314 = vst.msk [vmem:[#allocation2 + $0x110] sm:$0xff] %vm278, 0.0
      %315 = vst.msk [vmem:[#allocation2 + $0x118] sm:$0x3] %vm281, 0.0
      %316 = vst.msk [vmem:[#allocation2 + $0x120] sm:$0xff] %vm278, 0.0
      %317 = vst.msk [vmem:[#allocation2 + $0x128] sm:$0xff] %vm278, 0.0
      %318 = vst.msk [vmem:[#allocation2 + $0x130] sm:$0x3] %vm281, 0.0
      %319 = vst.msk [vmem:[#allocation2 + $0x138] sm:$0xff] %vm278, 0.0
      %320 = vst.msk [vmem:[#allocation2 + $0x140] sm:$0xff] %vm278, 0.0
      %321 = vst.msk [vmem:[#allocation2 + $0x148] sm:$0x3] %vm281, 0.0
      %322 = vst.msk [vmem:[#allocation2 + $0x150] sm:$0xff] %vm278, 0.0
      %323 = vst.msk [vmem:[#allocation2 + $0x158] sm:$0xff] %vm278, 0.0
      %324 = vst.msk [vmem:[#allocation2 + $0x160] sm:$0x3] %vm281, 0.0
      %325 = vst.msk [vmem:[#allocation2 + $0x168] sm:$0xff] %vm278, 0.0
      %326 = vst.msk [vmem:[#allocation2 + $0x170] sm:$0xff] %vm278, 0.0
      %327 = vst.msk [vmem:[#allocation2 + $0x178] sm:$0x3] %vm281, 0.0
      %328 = vst.msk [vmem:[#allocation2 + $0x180] sm:$0xff] %vm278, 0.0
      %329 = vst.msk [vmem:[#allocation2 + $0x188] sm:$0xff] %vm278, 0.0
      %330 = vst.msk [vmem:[#allocation2 + $0x190] sm:$0x3] %vm281, 0.0
      %331 = vst.msk [vmem:[#allocation2 + $0x198] sm:$0xff] %vm278, 0.0
      %332 = vst.msk [vmem:[#allocation2 + $0x1a0] sm:$0xff] %vm278, 0.0
      %333 = vst.msk [vmem:[#allocation2 + $0x1a8] sm:$0x3] %vm281, 0.0
      %v334 = vld [vmem:[%s235] sm:$0xff]
      %v335 = vld [vmem:[%s235 + $0x8] sm:$0xff]
      %v336 = vld [vmem:[%s235 + $0x10] sm:$0xff]
      %v337 = vld [vmem:[%s235 + $0x18] sm:$0xff]
      %v338 = vld [vmem:[%s235 + $0x20] sm:$0xff]
      %v339 = vld [vmem:[%s235 + $0x28] sm:$0xff]
      %v340 = vld [vmem:[%s235 + $0x30] sm:$0xff]
      %v341 = vld [vmem:[%s235 + $0x38] sm:$0xff]
      %v342 = vld [vmem:[%s235 + $0x40] sm:$0xff]
      %v343 = vld [vmem:[%s235 + $0x48] sm:$0xff]
      %v344 = vld [vmem:[%s235 + $0x50] sm:$0xff]
      %v345 = vld [vmem:[%s235 + $0x58] sm:$0xff]
      %v346 = vld [vmem:[%s235 + $0x60] sm:$0xff]
      %v347 = vld [vmem:[%s235 + $0x68] sm:$0xff]
      %v348 = vld [vmem:[%s235 + $0x70] sm:$0xff]
      %v349 = vld [vmem:[%s235 + $0x78] sm:$0xff]
      %v350 = vld [vmem:[%s235 + $0x80] sm:$0xff]
      %v351 = vld [vmem:[%s235 + $0x88] sm:$0xff]
      %v352 = vld [vmem:[%s235 + $0x90] sm:$0xff]
      %v353 = vld [vmem:[%s235 + $0x98] sm:$0xff]
      %v354 = vld [vmem:[%s235 + $0xa0] sm:$0xff]
      %v355 = vld [vmem:[%s235 + $0xa8] sm:$0xff]
      %v356 = vld [vmem:[%s235 + $0xb0] sm:$0xff]
      %v357 = vld [vmem:[%s235 + $0xb8] sm:$0xff]
      %v358 = vld [vmem:[%s235 + $0xc0] sm:$0xff]
      %v359 = vld [vmem:[%s235 + $0xc8] sm:$0xff]
      %v360 = vld [vmem:[%s235 + $0xd0] sm:$0xff]
      %v361 = vld [vmem:[%s235 + $0xd8] sm:$0xff]
      %v362 = vld [vmem:[%s235 + $0xe0] sm:$0xff]
      %v363 = vld [vmem:[%s235 + $0xe8] sm:$0xff]
      %v364 = vld [vmem:[%s235 + $0xf0] sm:$0xff]
      %v365 = vld [vmem:[%s235 + $0xf8] sm:$0xff]
      %s366 = scalar_lea.vmem [#allocation2], 24
      %vm367 = vcmask 64512
      %368 = vst.msk [vmem:[%s366 + $0x1] sm:$0xff] %vm367, %v334
      %369 = vst.msk [vmem:[%s366 + $0x9] sm:$0xff] %vm367, %v335
      %370 = vst.msk [vmem:[%s366 + $0x19] sm:$0xff] %vm367, %v336
      %371 = vst.msk [vmem:[%s366 + $0x21] sm:$0xff] %vm367, %v337
      %372 = vst.msk [vmem:[%s366 + $0x31] sm:$0xff] %vm367, %v338
      %373 = vst.msk [vmem:[%s366 + $0x39] sm:$0xff] %vm367, %v339
      %374 = vst.msk [vmem:[%s366 + $0x49] sm:$0xff] %vm367, %v340
      %375 = vst.msk [vmem:[%s366 + $0x51] sm:$0xff] %vm367, %v341
      %376 = vst.msk [vmem:[%s366 + $0x61] sm:$0xff] %vm367, %v342
      %377 = vst.msk [vmem:[%s366 + $0x69] sm:$0xff] %vm367, %v343
      %378 = vst.msk [vmem:[%s366 + $0x79] sm:$0xff] %vm367, %v344
      %379 = vst.msk [vmem:[%s366 + $0x81] sm:$0xff] %vm367, %v345
      %380 = vst.msk [vmem:[%s366 + $0x91] sm:$0xff] %vm367, %v346
      %381 = vst.msk [vmem:[%s366 + $0x99] sm:$0xff] %vm367, %v347
      %382 = vst.msk [vmem:[%s366 + $0xa9] sm:$0xff] %vm367, %v348
      %383 = vst.msk [vmem:[%s366 + $0xb1] sm:$0xff] %vm367, %v349
      %384 = vst.msk [vmem:[%s366 + $0xc1] sm:$0xff] %vm367, %v350
      %385 = vst.msk [vmem:[%s366 + $0xc9] sm:$0xff] %vm367, %v351
      %386 = vst.msk [vmem:[%s366 + $0xd9] sm:$0xff] %vm367, %v352
      %387 = vst.msk [vmem:[%s366 + $0xe1] sm:$0xff] %vm367, %v353
      %388 = vst.msk [vmem:[%s366 + $0xf1] sm:$0xff] %vm367, %v354
      %389 = vst.msk [vmem:[%s366 + $0xf9] sm:$0xff] %vm367, %v355
      %390 = vst.msk [vmem:[%s366 + $0x109] sm:$0xff] %vm367, %v356
      %391 = vst.msk [vmem:[%s366 + $0x111] sm:$0xff] %vm367, %v357
      %392 = vst.msk [vmem:[%s366 + $0x121] sm:$0xff] %vm367, %v358
      %393 = vst.msk [vmem:[%s366 + $0x129] sm:$0xff] %vm367, %v359
      %394 = vst.msk [vmem:[%s366 + $0x139] sm:$0xff] %vm367, %v360
      %395 = vst.msk [vmem:[%s366 + $0x141] sm:$0xff] %vm367, %v361
      %396 = vst.msk [vmem:[%s366 + $0x151] sm:$0xff] %vm367, %v362
      %397 = vst.msk [vmem:[%s366 + $0x159] sm:$0xff] %vm367, %v363
      %398 = vst.msk [vmem:[%s366 + $0x169] sm:$0xff] %vm367, %v364
      %399 = vst.msk [vmem:[%s366 + $0x171] sm:$0xff] %vm367, %v365
      %vm400 = vcmask 130112
      %401 = vst.msk [vmem:[%s366 + $0x1] sm:$0xff] %vm400, %v246
      %402 = vst.msk [vmem:[%s366 + $0x9] sm:$0xff] %vm400, %v247
      %403 = vst.msk [vmem:[%s366 + $0x19] sm:$0xff] %vm400, %v248
      %404 = vst.msk [vmem:[%s366 + $0x21] sm:$0xff] %vm400, %v249
      %405 = vst.msk [vmem:[%s366 + $0x31] sm:$0xff] %vm400, %v250
      %406 = vst.msk [vmem:[%s366 + $0x39] sm:$0xff] %vm400, %v251
      %407 = vst.msk [vmem:[%s366 + $0x49] sm:$0xff] %vm400, %v252
      %408 = vst.msk [vmem:[%s366 + $0x51] sm:$0xff] %vm400, %v253
      %409 = vst.msk [vmem:[%s366 + $0x61] sm:$0xff] %vm400, %v254
      %410 = vst.msk [vmem:[%s366 + $0x69] sm:$0xff] %vm400, %v255
      %411 = vst.msk [vmem:[%s366 + $0x79] sm:$0xff] %vm400, %v256
      %412 = vst.msk [vmem:[%s366 + $0x81] sm:$0xff] %vm400, %v257
      %413 = vst.msk [vmem:[%s366 + $0x91] sm:$0xff] %vm400, %v258
      %414 = vst.msk [vmem:[%s366 + $0x99] sm:$0xff] %vm400, %v259
      %415 = vst.msk [vmem:[%s366 + $0xa9] sm:$0xff] %vm400, %v260
      %416 = vst.msk [vmem:[%s366 + $0xb1] sm:$0xff] %vm400, %v261
      %417 = vst.msk [vmem:[%s366 + $0xc1] sm:$0xff] %vm400, %v262
      %418 = vst.msk [vmem:[%s366 + $0xc9] sm:$0xff] %vm400, %v263
      %419 = vst.msk [vmem:[%s366 + $0xd9] sm:$0xff] %vm400, %v264
      %420 = vst.msk [vmem:[%s366 + $0xe1] sm:$0xff] %vm400, %v265
      %421 = vst.msk [vmem:[%s366 + $0xf1] sm:$0xff] %vm400, %v266
      %422 = vst.msk [vmem:[%s366 + $0xf9] sm:$0xff] %vm400, %v267
      %423 = vst.msk [vmem:[%s366 + $0x109] sm:$0xff] %vm400, %v268
      %424 = vst.msk [vmem:[%s366 + $0x111] sm:$0xff] %vm400, %v269
      %425 = vst.msk [vmem:[%s366 + $0x121] sm:$0xff] %vm400, %v270
      %426 = vst.msk [vmem:[%s366 + $0x129] sm:$0xff] %vm400, %v271
      %427 = vst.msk [vmem:[%s366 + $0x139] sm:$0xff] %vm400, %v272
      %428 = vst.msk [vmem:[%s366 + $0x141] sm:$0xff] %vm400, %v273
      %429 = vst.msk [vmem:[%s366 + $0x151] sm:$0xff] %vm400, %v274
      %430 = vst.msk [vmem:[%s366 + $0x159] sm:$0xff] %vm400, %v275
      %431 = vst.msk [vmem:[%s366 + $0x169] sm:$0xff] %vm400, %v276
      %432 = vst.msk [vmem:[%s366 + $0x171] sm:$0xff] %vm400, %v277
      %v433 = vld [vmem:[#allocation2] sm:$0xff]
      %v434 = vld [vmem:[#allocation2 + $0x8] sm:$0xff]
      %v435 = vld [vmem:[#allocation2 + $0x10] sm:$0x3]
      %v436 = vld [vmem:[#allocation2 + $0x18] sm:$0xff]
      %v437 = vld [vmem:[#allocation2 + $0x20] sm:$0xff]
      %v438 = vld [vmem:[#allocation2 + $0x28] sm:$0x3]
      %v439 = vld [vmem:[#allocation2 + $0x30] sm:$0xff]
      %v440 = vld [vmem:[#allocation2 + $0x38] sm:$0xff]
      %v441 = vld [vmem:[#allocation2 + $0x40] sm:$0x3]
      %v442 = vld [vmem:[#allocation2 + $0x48] sm:$0xff]
      %v443 = vld [vmem:[#allocation2 + $0x50] sm:$0xff]
      %v444 = vld [vmem:[#allocation2 + $0x58] sm:$0x3]
      %v445 = vld [vmem:[#allocation2 + $0x60] sm:$0xff]
      %v446 = vld [vmem:[#allocation2 + $0x68] sm:$0xff]
      %v447 = vld [vmem:[#allocation2 + $0x70] sm:$0x3]
      %v448 = vld [vmem:[#allocation2 + $0x78] sm:$0xff]
      %v449 = vld [vmem:[#allocation2 + $0x80] sm:$0xff]
      %v450 = vld [vmem:[#allocation2 + $0x88] sm:$0x3]
      %v451 = vld [vmem:[#allocation2 + $0x90] sm:$0xff]
      %v452 = vld [vmem:[#allocation2 + $0x98] sm:$0xff]
      %v453 = vld [vmem:[#allocation2 + $0xa0] sm:$0x3]
      %v454 = vld [vmem:[#allocation2 + $0xa8] sm:$0xff]
      %v455 = vld [vmem:[#allocation2 + $0xb0] sm:$0xff]
      %v456 = vld [vmem:[#allocation2 + $0xb8] sm:$0x3]
      %v457 = vld [vmem:[#allocation2 + $0xc0] sm:$0xff]
      %v458 = vld [vmem:[#allocation2 + $0xc8] sm:$0xff]
      %v459 = vld [vmem:[#allocation2 + $0xd0] sm:$0x3]
      %v460 = vld [vmem:[#allocation2 + $0xd8] sm:$0xff]
      %v461 = vld [vmem:[#allocation2 + $0xe0] sm:$0xff]
      %v462 = vld [vmem:[#allocation2 + $0xe8] sm:$0x3]
      %v463 = vld [vmem:[#allocation2 + $0xf0] sm:$0xff]
      %v464 = vld [vmem:[#allocation2 + $0xf8] sm:$0xff]
      %v465 = vld [vmem:[#allocation2 + $0x100] sm:$0x3]
      %v466 = vld [vmem:[#allocation2 + $0x108] sm:$0xff]
      %v467 = vld [vmem:[#allocation2 + $0x110] sm:$0xff]
      %v468 = vld [vmem:[#allocation2 + $0x118] sm:$0x3]
      %v469 = vld [vmem:[#allocation2 + $0x120] sm:$0xff]
      %v470 = vld [vmem:[#allocation2 + $0x128] sm:$0xff]
      %v471 = vld [vmem:[#allocation2 + $0x130] sm:$0x3]
      %v472 = vld [vmem:[#allocation2 + $0x138] sm:$0xff]
      %v473 = vld [vmem:[#allocation2 + $0x140] sm:$0xff]
      %v474 = vld [vmem:[#allocation2 + $0x148] sm:$0x3]
      %v475 = vld [vmem:[#allocation2 + $0x150] sm:$0xff]
      %v476 = vld [vmem:[#allocation2 + $0x158] sm:$0xff]
      %v477 = vld [vmem:[#allocation2 + $0x160] sm:$0x3]
      %v478 = vld [vmem:[#allocation2 + $0x168] sm:$0xff]
      %v479 = vld [vmem:[#allocation2 + $0x170] sm:$0xff]
      %v480 = vld [vmem:[#allocation2 + $0x178] sm:$0x3]
      %v481 = vld [vmem:[#allocation2 + $0x180] sm:$0xff]
      %v482 = vld [vmem:[#allocation2 + $0x188] sm:$0xff]
      %v483 = vld [vmem:[#allocation2 + $0x190] sm:$0x3]
      %v484 = vld [vmem:[#allocation2 + $0x198] sm:$0xff]
      %v485 = vld [vmem:[#allocation2 + $0x1a0] sm:$0xff]
      %v486 = vld [vmem:[#allocation2 + $0x1a8] sm:$0x3]
      %v487 = vld [vmem:[%s2] sm:$0xff]
      %v488 = vld [vmem:[%s2 + $0x8] sm:$0xff]
      %vm537 = vcmask 1046528
      %v538 = vrot.slane %v433, 1
      %v539 = vrot.slane %v434, 1
      %v540 = vsel %vm537, %v538, %v539
      %v541 = vrot.slane %v435, 1
      %v542 = vsel %vm537, %v539, %v541
      %v543 = vrot.slane %v436, 1
      %v544 = vrot.slane %v437, 1
      %v545 = vsel %vm537, %v543, %v544
      %v546 = vrot.slane %v438, 1
      %v547 = vsel %vm537, %v544, %v546
      %v548 = vrot.slane %v439, 1
      %v549 = vrot.slane %v440, 1
      %v550 = vsel %vm537, %v548, %v549
      %v551 = vrot.slane %v441, 1
      %v552 = vsel %vm537, %v549, %v551
      %v553 = vrot.slane %v442, 1
      %v554 = vrot.slane %v443, 1
      %v555 = vsel %vm537, %v553, %v554
      %v556 = vrot.slane %v444, 1
      %v557 = vsel %vm537, %v554, %v556
      %v558 = vrot.slane %v445, 1
      %v559 = vrot.slane %v446, 1
      %v560 = vsel %vm537, %v558, %v559
      %v561 = vrot.slane %v447, 1
      %v562 = vsel %vm537, %v559, %v561
      %v563 = vrot.slane %v448, 1
      %v564 = vrot.slane %v449, 1
      %v565 = vsel %vm537, %v563, %v564
      %v566 = vrot.slane %v450, 1
      %v567 = vsel %vm537, %v564, %v566
      %v568 = vrot.slane %v451, 1
      %v569 = vrot.slane %v452, 1
      %v570 = vsel %vm537, %v568, %v569
      %v571 = vrot.slane %v453, 1
      %v572 = vsel %vm537, %v569, %v571
      %v573 = vrot.slane %v454, 1
      %v574 = vrot.slane %v455, 1
      %v575 = vsel %vm537, %v573, %v574
      %v576 = vrot.slane %v456, 1
      %v577 = vsel %vm537, %v574, %v576
      %v578 = vrot.slane %v457, 1
      %v579 = vrot.slane %v458, 1
      %v580 = vsel %vm537, %v578, %v579
      %v581 = vrot.slane %v459, 1
      %v582 = vsel %vm537, %v579, %v581
      %v583 = vrot.slane %v460, 1
      %v584 = vrot.slane %v461, 1
      %v585 = vsel %vm537, %v583, %v584
      %v586 = vrot.slane %v462, 1
      %v587 = vsel %vm537, %v584, %v586
      %v588 = vrot.slane %v463, 1
      %v589 = vrot.slane %v464, 1
      %v590 = vsel %vm537, %v588, %v589
      %v591 = vrot.slane %v465, 1
      %v592 = vsel %vm537, %v589, %v591
      %v593 = vrot.slane %v466, 1
      %v594 = vrot.slane %v467, 1
      %v595 = vsel %vm537, %v593, %v594
      %v596 = vrot.slane %v468, 1
      %v597 = vsel %vm537, %v594, %v596
      %v598 = vrot.slane %v469, 1
      %v599 = vrot.slane %v470, 1
      %v600 = vsel %vm537, %v598, %v599
      %v601 = vrot.slane %v471, 1
      %v602 = vsel %vm537, %v599, %v601
      %v603 = vrot.slane %v472, 1
      %v604 = vrot.slane %v473, 1
      %v605 = vsel %vm537, %v603, %v604
      %v606 = vrot.slane %v474, 1
      %v607 = vsel %vm537, %v604, %v606
      %v608 = vrot.slane %v475, 1
      %v609 = vrot.slane %v476, 1
      %v610 = vsel %vm537, %v608, %v609
      %v611 = vrot.slane %v477, 1
      %v612 = vsel %vm537, %v609, %v611
      %v613 = vrot.slane %v478, 1
      %v614 = vrot.slane %v479, 1
      %v615 = vsel %vm537, %v613, %v614
      %v616 = vrot.slane %v480, 1
      %v617 = vsel %vm537, %v614, %v616
      %s618 = scalar_lea.vmem %s2, 16
      %v619 = vld [vmem:[%s618] sm:$0xff]
      %v620 = vld [vmem:[%s618 + $0x8] sm:$0xff]
      %v621 = vsel %vm278, %v540, 0
      %v623 = vsel %vm278, %v542, 0
      %v625 = vsel %vm278, %v545, 0
      %v627 = vsel %vm278, %v547, 0
      %v629 = vsel %vm278, %v550, 0
      %v631 = vsel %vm278, %v552, 0
      %v633 = vsel %vm278, %v555, 0
      %v635 = vsel %vm278, %v557, 0
      %v637 = vsel %vm278, %v560, 0
      %v639 = vsel %vm278, %v562, 0
      %v641 = vsel %vm278, %v565, 0
      %v643 = vsel %vm278, %v567, 0
      %v645 = vsel %vm278, %v570, 0
      %v647 = vsel %vm278, %v572, 0
      %v649 = vsel %vm278, %v575, 0
      %v651 = vsel %vm278, %v577, 0
      %v653 = vsel %vm278, %v580, 0
      %v655 = vsel %vm278, %v582, 0
      %v657 = vsel %vm278, %v585, 0
      %v659 = vsel %vm278, %v587, 0
      %v661 = vsel %vm278, %v590, 0
      %v663 = vsel %vm278, %v592, 0
      %v665 = vsel %vm278, %v595, 0
      %v667 = vsel %vm278, %v597, 0
      %v669 = vsel %vm278, %v600, 0
      %v671 = vsel %vm278, %v602, 0
      %v673 = vsel %vm278, %v605, 0
      %v675 = vsel %vm278, %v607, 0
      %v677 = vsel %vm278, %v610, 0
      %v679 = vsel %vm278, %v612, 0
      %v681 = vsel %vm278, %v615, 0
      %v683 = vsel %vm278, %v617, 0
      %685 = vmatpush.msra.mxu0 0.0
      %686 = vmatpush.msra.mxu0 0.0
      %687 = vmatpush.msra.mxu0 0.0
      %688 = vmatpush.msra.mxu0 0.0
      %689 = vmatpush.msra.mxu0 0.0
      %690 = vmatpush.msra.mxu0 0.0
      %691 = vmatpush.msra.mxu0 0.0
      %692 = vmatpush.msra.mxu0 0.0
      %693 = vmatpush.msra.mxu0 0.0
      %694 = vmatpush.msra.mxu0 0.0
      %695 = vmatpush.msra.mxu0 0.0
      %696 = vmatpush.msra.mxu0 0.0
      %697 = vmatpush.msra.mxu0 0.0
      %698 = vmatpush.msra.mxu0 0.0
      %699 = vmatpush.msra.mxu0 %v620
      %700 = vmatpush.msra.mxu0 %v619
      %701 = vmatmul.f32.gmra.mxu0 %v621
      %v702 = vpop.f32.mrf.mxu0
      %v703 = vadd.f32 0.0, %v702
      %704 = vmatmul.f32.gmra.mxu0 %v623
      %v705 = vpop.f32.mrf.mxu0
      %v706 = vadd.f32 0.0, %v705
      %707 = vmatmul.f32.gmra.mxu0 %v625
      %v708 = vpop.f32.mrf.mxu0
      %v709 = vadd.f32 0.0, %v708
      %710 = vmatmul.f32.gmra.mxu0 %v627
      %v711 = vpop.f32.mrf.mxu0
      %v712 = vadd.f32 0.0, %v711
      %713 = vmatmul.f32.gmra.mxu0 %v629
      %v714 = vpop.f32.mrf.mxu0
      %v715 = vadd.f32 0.0, %v714
      %716 = vmatmul.f32.gmra.mxu0 %v631
      %v717 = vpop.f32.mrf.mxu0
      %v718 = vadd.f32 0.0, %v717
      %719 = vmatmul.f32.gmra.mxu0 %v633
      %v720 = vpop.f32.mrf.mxu0
      %v721 = vadd.f32 0.0, %v720
      %722 = vmatmul.f32.gmra.mxu0 %v635
      %v723 = vpop.f32.mrf.mxu0
      %v724 = vadd.f32 0.0, %v723
      %725 = vmatmul.f32.gmra.mxu0 %v637
      %v726 = vpop.f32.mrf.mxu0
      %v727 = vadd.f32 0.0, %v726
      %728 = vmatmul.f32.gmra.mxu0 %v639
      %v729 = vpop.f32.mrf.mxu0
      %v730 = vadd.f32 0.0, %v729
      %731 = vmatmul.f32.gmra.mxu0 %v641
      %v732 = vpop.f32.mrf.mxu0
      %v733 = vadd.f32 0.0, %v732
      %734 = vmatmul.f32.gmra.mxu0 %v643
      %v735 = vpop.f32.mrf.mxu0
      %v736 = vadd.f32 0.0, %v735
      %737 = vmatmul.f32.gmra.mxu0 %v645
      %v738 = vpop.f32.mrf.mxu0
      %v739 = vadd.f32 0.0, %v738
      %740 = vmatmul.f32.gmra.mxu0 %v647
      %v741 = vpop.f32.mrf.mxu0
      %v742 = vadd.f32 0.0, %v741
      %743 = vmatmul.f32.gmra.mxu0 %v649
      %v744 = vpop.f32.mrf.mxu0
      %v745 = vadd.f32 0.0, %v744
      %746 = vmatmul.f32.gmra.mxu0 %v651
      %v747 = vpop.f32.mrf.mxu0
      %v748 = vadd.f32 0.0, %v747
      %749 = vmatmul.f32.gmra.mxu0 %v653
      %v750 = vpop.f32.mrf.mxu0
      %v751 = vadd.f32 0.0, %v750
      %752 = vmatmul.f32.gmra.mxu0 %v655
      %v753 = vpop.f32.mrf.mxu0
      %v754 = vadd.f32 0.0, %v753
      %755 = vmatmul.f32.gmra.mxu0 %v657
      %v756 = vpop.f32.mrf.mxu0
      %v757 = vadd.f32 0.0, %v756
      %758 = vmatmul.f32.gmra.mxu0 %v659
      %v759 = vpop.f32.mrf.mxu0
      %v760 = vadd.f32 0.0, %v759
      %761 = vmatmul.f32.gmra.mxu0 %v661
      %v762 = vpop.f32.mrf.mxu0
      %v763 = vadd.f32 0.0, %v762
      %764 = vmatmul.f32.gmra.mxu0 %v663
      %v765 = vpop.f32.mrf.mxu0
      %v766 = vadd.f32 0.0, %v765
      %767 = vmatmul.f32.gmra.mxu0 %v665
      %v768 = vpop.f32.mrf.mxu0
      %v769 = vadd.f32 0.0, %v768
      %770 = vmatmul.f32.gmra.mxu0 %v667
      %v771 = vpop.f32.mrf.mxu0
      %v772 = vadd.f32 0.0, %v771
      %773 = vmatmul.f32.gmra.mxu0 %v669
      %v774 = vpop.f32.mrf.mxu0
      %v775 = vadd.f32 0.0, %v774
      %776 = vmatmul.f32.gmra.mxu0 %v671
      %v777 = vpop.f32.mrf.mxu0
      %v778 = vadd.f32 0.0, %v777
      %779 = vmatmul.f32.gmra.mxu0 %v673
      %v780 = vpop.f32.mrf.mxu0
      %v781 = vadd.f32 0.0, %v780
      %782 = vmatmul.f32.gmra.mxu0 %v675
      %v783 = vpop.f32.mrf.mxu0
      %v784 = vadd.f32 0.0, %v783
      %785 = vmatmul.f32.gmra.mxu0 %v677
      %v786 = vpop.f32.mrf.mxu0
      %v787 = vadd.f32 0.0, %v786
      %788 = vmatmul.f32.gmra.mxu0 %v679
      %v789 = vpop.f32.mrf.mxu0
      %v790 = vadd.f32 0.0, %v789
      %791 = vmatmul.f32.gmra.mxu0 %v681
      %v792 = vpop.f32.mrf.mxu0
      %v793 = vadd.f32 0.0, %v792
      %794 = vmatmul.f32.gmra.mxu0 %v683
      %v795 = vpop.f32.mrf.mxu0
      %v796 = vadd.f32 0.0, %v795
      %797 = vdwg.mxu0
      %v798 = vsel %vm278, %v433, 0
      %v800 = vsel %vm278, %v434, 0
      %v802 = vsel %vm278, %v436, 0
      %v804 = vsel %vm278, %v437, 0
      %v806 = vsel %vm278, %v439, 0
      %v808 = vsel %vm278, %v440, 0
      %v810 = vsel %vm278, %v442, 0
      %v812 = vsel %vm278, %v443, 0
      %v814 = vsel %vm278, %v445, 0
      %v816 = vsel %vm278, %v446, 0
      %v818 = vsel %vm278, %v448, 0
      %v820 = vsel %vm278, %v449, 0
      %v822 = vsel %vm278, %v451, 0
      %v824 = vsel %vm278, %v452, 0
      %v826 = vsel %vm278, %v454, 0
      %v828 = vsel %vm278, %v455, 0
      %v830 = vsel %vm278, %v457, 0
      %v832 = vsel %vm278, %v458, 0
      %v834 = vsel %vm278, %v460, 0
      %v836 = vsel %vm278, %v461, 0
      %v838 = vsel %vm278, %v463, 0
      %v840 = vsel %vm278, %v464, 0
      %v842 = vsel %vm278, %v466, 0
      %v844 = vsel %vm278, %v467, 0
      %v846 = vsel %vm278, %v469, 0
      %v848 = vsel %vm278, %v470, 0
      %v850 = vsel %vm278, %v472, 0
      %v852 = vsel %vm278, %v473, 0
      %v854 = vsel %vm278, %v475, 0
      %v856 = vsel %vm278, %v476, 0
      %v858 = vsel %vm278, %v478, 0
      %v860 = vsel %vm278, %v479, 0
      %862 = vmatpush.msra.mxu0 0.0
      %863 = vmatpush.msra.mxu0 0.0
      %864 = vmatpush.msra.mxu0 0.0
      %865 = vmatpush.msra.mxu0 0.0
      %866 = vmatpush.msra.mxu0 0.0
      %867 = vmatpush.msra.mxu0 0.0
      %868 = vmatpush.msra.mxu0 0.0
      %869 = vmatpush.msra.mxu0 0.0
      %870 = vmatpush.msra.mxu0 0.0
      %871 = vmatpush.msra.mxu0 0.0
      %872 = vmatpush.msra.mxu0 0.0
      %873 = vmatpush.msra.mxu0 0.0
      %874 = vmatpush.msra.mxu0 0.0
      %875 = vmatpush.msra.mxu0 0.0
      %876 = vmatpush.msra.mxu0 %v488
      %877 = vmatpush.msra.mxu0 %v487
      %878 = vmatmul.f32.gmra.mxu0 %v798
      %v879 = vpop.f32.mrf.mxu0
      %v880 = vadd.f32 %v703, %v879
      %881 = vmatmul.f32.gmra.mxu0 %v800
      %v882 = vpop.f32.mrf.mxu0
      %v883 = vadd.f32 %v706, %v882
      %884 = vmatmul.f32.gmra.mxu0 %v802
      %v885 = vpop.f32.mrf.mxu0
      %v886 = vadd.f32 %v709, %v885
      %887 = vmatmul.f32.gmra.mxu0 %v804
      %v888 = vpop.f32.mrf.mxu0
      %v889 = vadd.f32 %v712, %v888
      %890 = vmatmul.f32.gmra.mxu0 %v806
      %v891 = vpop.f32.mrf.mxu0
      %v892 = vadd.f32 %v715, %v891
      %893 = vmatmul.f32.gmra.mxu0 %v808
      %v894 = vpop.f32.mrf.mxu0
      %v895 = vadd.f32 %v718, %v894
      %896 = vmatmul.f32.gmra.mxu0 %v810
      %v897 = vpop.f32.mrf.mxu0
      %v898 = vadd.f32 %v721, %v897
      %899 = vmatmul.f32.gmra.mxu0 %v812
      %v900 = vpop.f32.mrf.mxu0
      %v901 = vadd.f32 %v724, %v900
      %902 = vmatmul.f32.gmra.mxu0 %v814
      %v903 = vpop.f32.mrf.mxu0
      %v904 = vadd.f32 %v727, %v903
      %905 = vmatmul.f32.gmra.mxu0 %v816
      %v906 = vpop.f32.mrf.mxu0
      %v907 = vadd.f32 %v730, %v906
      %908 = vmatmul.f32.gmra.mxu0 %v818
      %v909 = vpop.f32.mrf.mxu0
      %v910 = vadd.f32 %v733, %v909
      %911 = vmatmul.f32.gmra.mxu0 %v820
      %v912 = vpop.f32.mrf.mxu0
      %v913 = vadd.f32 %v736, %v912
      %914 = vmatmul.f32.gmra.mxu0 %v822
      %v915 = vpop.f32.mrf.mxu0
      %v916 = vadd.f32 %v739, %v915
      %917 = vmatmul.f32.gmra.mxu0 %v824
      %v918 = vpop.f32.mrf.mxu0
      %v919 = vadd.f32 %v742, %v918
      %920 = vmatmul.f32.gmra.mxu0 %v826
      %v921 = vpop.f32.mrf.mxu0
      %v922 = vadd.f32 %v745, %v921
      %923 = vmatmul.f32.gmra.mxu0 %v828
      %v924 = vpop.f32.mrf.mxu0
      %v925 = vadd.f32 %v748, %v924
      %926 = vmatmul.f32.gmra.mxu0 %v830
      %v927 = vpop.f32.mrf.mxu0
      %v928 = vadd.f32 %v751, %v927
      %929 = vmatmul.f32.gmra.mxu0 %v832
      %v930 = vpop.f32.mrf.mxu0
      %v931 = vadd.f32 %v754, %v930
      %932 = vmatmul.f32.gmra.mxu0 %v834
      %v933 = vpop.f32.mrf.mxu0
      %v934 = vadd.f32 %v757, %v933
      %935 = vmatmul.f32.gmra.mxu0 %v836
      %v936 = vpop.f32.mrf.mxu0
      %v937 = vadd.f32 %v760, %v936
      %938 = vmatmul.f32.gmra.mxu0 %v838
      %v939 = vpop.f32.mrf.mxu0
      %v940 = vadd.f32 %v763, %v939
      %941 = vmatmul.f32.gmra.mxu0 %v840
      %v942 = vpop.f32.mrf.mxu0
      %v943 = vadd.f32 %v766, %v942
      %944 = vmatmul.f32.gmra.mxu0 %v842
      %v945 = vpop.f32.mrf.mxu0
      %v946 = vadd.f32 %v769, %v945
      %947 = vmatmul.f32.gmra.mxu0 %v844
      %v948 = vpop.f32.mrf.mxu0
      %v949 = vadd.f32 %v772, %v948
      %950 = vmatmul.f32.gmra.mxu0 %v846
      %v951 = vpop.f32.mrf.mxu0
      %v952 = vadd.f32 %v775, %v951
      %953 = vmatmul.f32.gmra.mxu0 %v848
      %v954 = vpop.f32.mrf.mxu0
      %v955 = vadd.f32 %v778, %v954
      %956 = vmatmul.f32.gmra.mxu0 %v850
      %v957 = vpop.f32.mrf.mxu0
      %v958 = vadd.f32 %v781, %v957
      %959 = vmatmul.f32.gmra.mxu0 %v852
      %v960 = vpop.f32.mrf.mxu0
      %v961 = vadd.f32 %v784, %v960
      %962 = vmatmul.f32.gmra.mxu0 %v854
      %v963 = vpop.f32.mrf.mxu0
      %v964 = vadd.f32 %v787, %v963
      %965 = vmatmul.f32.gmra.mxu0 %v856
      %v966 = vpop.f32.mrf.mxu0
      %v967 = vadd.f32 %v790, %v966
      %968 = vmatmul.f32.gmra.mxu0 %v858
      %v969 = vpop.f32.mrf.mxu0
      %v970 = vadd.f32 %v793, %v969
      %971 = vmatmul.f32.gmra.mxu0 %v860
      %v972 = vpop.f32.mrf.mxu0
      %v973 = vadd.f32 %v796, %v972
      %974 = vdwg.mxu0
      %vm975 = vcmask 1045504
      %v976 = vrot.slane %v433, 2
      %v977 = vrot.slane %v434, 2
      %v978 = vsel %vm975, %v976, %v977
      %v979 = vrot.slane %v435, 2
      %v980 = vsel %vm975, %v977, %v979
      %v981 = vrot.slane %v436, 2
      %v982 = vrot.slane %v437, 2
      %v983 = vsel %vm975, %v981, %v982
      %v984 = vrot.slane %v438, 2
      %v985 = vsel %vm975, %v982, %v984
      %v986 = vrot.slane %v439, 2
      %v987 = vrot.slane %v440, 2
      %v988 = vsel %vm975, %v986, %v987
      %v989 = vrot.slane %v441, 2
      %v990 = vsel %vm975, %v987, %v989
      %v991 = vrot.slane %v442, 2
      %v992 = vrot.slane %v443, 2
      %v993 = vsel %vm975, %v991, %v992
      %v994 = vrot.slane %v444, 2
      %v995 = vsel %vm975, %v992, %v994
      %v996 = vrot.slane %v445, 2
      %v997 = vrot.slane %v446, 2
      %v998 = vsel %vm975, %v996, %v997
      %v999 = vrot.slane %v447, 2
      %v1000 = vsel %vm975, %v997, %v999
      %v1001 = vrot.slane %v448, 2
      %v1002 = vrot.slane %v449, 2
      %v1003 = vsel %vm975, %v1001, %v1002
      %v1004 = vrot.slane %v450, 2
      %v1005 = vsel %vm975, %v1002, %v1004
      %v1006 = vrot.slane %v451, 2
      %v1007 = vrot.slane %v452, 2
      %v1008 = vsel %vm975, %v1006, %v1007
      %v1009 = vrot.slane %v453, 2
      %v1010 = vsel %vm975, %v1007, %v1009
      %v1011 = vrot.slane %v454, 2
      %v1012 = vrot.slane %v455, 2
      %v1013 = vsel %vm975, %v1011, %v1012
      %v1014 = vrot.slane %v456, 2
      %v1015 = vsel %vm975, %v1012, %v1014
      %v1016 = vrot.slane %v457, 2
      %v1017 = vrot.slane %v458, 2
      %v1018 = vsel %vm975, %v1016, %v1017
      %v1019 = vrot.slane %v459, 2
      %v1020 = vsel %vm975, %v1017, %v1019
      %v1021 = vrot.slane %v460, 2
      %v1022 = vrot.slane %v461, 2
      %v1023 = vsel %vm975, %v1021, %v1022
      %v1024 = vrot.slane %v462, 2
      %v1025 = vsel %vm975, %v1022, %v1024
      %v1026 = vrot.slane %v463, 2
      %v1027 = vrot.slane %v464, 2
      %v1028 = vsel %vm975, %v1026, %v1027
      %v1029 = vrot.slane %v465, 2
      %v1030 = vsel %vm975, %v1027, %v1029
      %v1031 = vrot.slane %v466, 2
      %v1032 = vrot.slane %v467, 2
      %v1033 = vsel %vm975, %v1031, %v1032
      %v1034 = vrot.slane %v468, 2
      %v1035 = vsel %vm975, %v1032, %v1034
      %v1036 = vrot.slane %v469, 2
      %v1037 = vrot.slane %v470, 2
      %v1038 = vsel %vm975, %v1036, %v1037
      %v1039 = vrot.slane %v471, 2
      %v1040 = vsel %vm975, %v1037, %v1039
      %v1041 = vrot.slane %v472, 2
      %v1042 = vrot.slane %v473, 2
      %v1043 = vsel %vm975, %v1041, %v1042
      %v1044 = vrot.slane %v474, 2
      %v1045 = vsel %vm975, %v1042, %v1044
      %v1046 = vrot.slane %v475, 2
      %v1047 = vrot.slane %v476, 2
      %v1048 = vsel %vm975, %v1046, %v1047
      %v1049 = vrot.slane %v477, 2
      %v1050 = vsel %vm975, %v1047, %v1049
      %v1051 = vrot.slane %v478, 2
      %v1052 = vrot.slane %v479, 2
      %v1053 = vsel %vm975, %v1051, %v1052
      %v1054 = vrot.slane %v480, 2
      %v1055 = vsel %vm975, %v1052, %v1054
      %s1056 = scalar_lea.vmem %s2, 32
      %v1057 = vld [vmem:[%s1056] sm:$0xff]
      %v1058 = vld [vmem:[%s1056 + $0x8] sm:$0xff]
      %v1059 = vsel %vm278, %v978, 0
      %v1061 = vsel %vm278, %v980, 0
      %v1063 = vsel %vm278, %v983, 0
      %v1065 = vsel %vm278, %v985, 0
      %v1067 = vsel %vm278, %v988, 0
      %v1069 = vsel %vm278, %v990, 0
      %v1071 = vsel %vm278, %v993, 0
      %v1073 = vsel %vm278, %v995, 0
      %v1075 = vsel %vm278, %v998, 0
      %v1077 = vsel %vm278, %v1000, 0
      %v1079 = vsel %vm278, %v1003, 0
      %v1081 = vsel %vm278, %v1005, 0
      %v1083 = vsel %vm278, %v1008, 0
      %v1085 = vsel %vm278, %v1010, 0
      %v1087 = vsel %vm278, %v1013, 0
      %v1089 = vsel %vm278, %v1015, 0
      %v1091 = vsel %vm278, %v1018, 0
      %v1093 = vsel %vm278, %v1020, 0
      %v1095 = vsel %vm278, %v1023, 0
      %v1097 = vsel %vm278, %v1025, 0
      %v1099 = vsel %vm278, %v1028, 0
      %v1101 = vsel %vm278, %v1030, 0
      %v1103 = vsel %vm278, %v1033, 0
      %v1105 = vsel %vm278, %v1035, 0
      %v1107 = vsel %vm278, %v1038, 0
      %v1109 = vsel %vm278, %v1040, 0
      %v1111 = vsel %vm278, %v1043, 0
      %v1113 = vsel %vm278, %v1045, 0
      %v1115 = vsel %vm278, %v1048, 0
      %v1117 = vsel %vm278, %v1050, 0
      %v1119 = vsel %vm278, %v1053, 0
      %v1121 = vsel %vm278, %v1055, 0
      %1123 = vmatpush.msra.mxu0 0.0
      %1124 = vmatpush.msra.mxu0 0.0
      %1125 = vmatpush.msra.mxu0 0.0
      %1126 = vmatpush.msra.mxu0 0.0
      %1127 = vmatpush.msra.mxu0 0.0
      %1128 = vmatpush.msra.mxu0 0.0
      %1129 = vmatpush.msra.mxu0 0.0
      %1130 = vmatpush.msra.mxu0 0.0
      %1131 = vmatpush.msra.mxu0 0.0
      %1132 = vmatpush.msra.mxu0 0.0
      %1133 = vmatpush.msra.mxu0 0.0
      %1134 = vmatpush.msra.mxu0 0.0
      %1135 = vmatpush.msra.mxu0 0.0
      %1136 = vmatpush.msra.mxu0 0.0
      %1137 = vmatpush.msra.mxu0 %v1058
      %1138 = vmatpush.msra.mxu0 %v1057
      %1139 = vmatmul.f32.gmra.mxu0 %v1059
      %v1140 = vpop.f32.mrf.mxu0
      %v1141 = vadd.f32 0.0, %v1140
      %1142 = vmatmul.f32.gmra.mxu0 %v1061
      %v1143 = vpop.f32.mrf.mxu0
      %v1144 = vadd.f32 0.0, %v1143
      %1145 = vmatmul.f32.gmra.mxu0 %v1063
      %v1146 = vpop.f32.mrf.mxu0
      %v1147 = vadd.f32 0.0, %v1146
      %1148 = vmatmul.f32.gmra.mxu0 %v1065
      %v1149 = vpop.f32.mrf.mxu0
      %v1150 = vadd.f32 0.0, %v1149
      %1151 = vmatmul.f32.gmra.mxu0 %v1067
      %v1152 = vpop.f32.mrf.mxu0
      %v1153 = vadd.f32 0.0, %v1152
      %1154 = vmatmul.f32.gmra.mxu0 %v1069
      %v1155 = vpop.f32.mrf.mxu0
      %v1156 = vadd.f32 0.0, %v1155
      %1157 = vmatmul.f32.gmra.mxu0 %v1071
      %v1158 = vpop.f32.mrf.mxu0
      %v1159 = vadd.f32 0.0, %v1158
      %1160 = vmatmul.f32.gmra.mxu0 %v1073
      %v1161 = vpop.f32.mrf.mxu0
      %v1162 = vadd.f32 0.0, %v1161
      %1163 = vmatmul.f32.gmra.mxu0 %v1075
      %v1164 = vpop.f32.mrf.mxu0
      %v1165 = vadd.f32 0.0, %v1164
      %1166 = vmatmul.f32.gmra.mxu0 %v1077
      %v1167 = vpop.f32.mrf.mxu0
      %v1168 = vadd.f32 0.0, %v1167
      %1169 = vmatmul.f32.gmra.mxu0 %v1079
      %v1170 = vpop.f32.mrf.mxu0
      %v1171 = vadd.f32 0.0, %v1170
      %1172 = vmatmul.f32.gmra.mxu0 %v1081
      %v1173 = vpop.f32.mrf.mxu0
      %v1174 = vadd.f32 0.0, %v1173
      %1175 = vmatmul.f32.gmra.mxu0 %v1083
      %v1176 = vpop.f32.mrf.mxu0
      %v1177 = vadd.f32 0.0, %v1176
      %1178 = vmatmul.f32.gmra.mxu0 %v1085
      %v1179 = vpop.f32.mrf.mxu0
      %v1180 = vadd.f32 0.0, %v1179
      %1181 = vmatmul.f32.gmra.mxu0 %v1087
      %v1182 = vpop.f32.mrf.mxu0
      %v1183 = vadd.f32 0.0, %v1182
      %1184 = vmatmul.f32.gmra.mxu0 %v1089
      %v1185 = vpop.f32.mrf.mxu0
      %v1186 = vadd.f32 0.0, %v1185
      %1187 = vmatmul.f32.gmra.mxu0 %v1091
      %v1188 = vpop.f32.mrf.mxu0
      %v1189 = vadd.f32 0.0, %v1188
      %1190 = vmatmul.f32.gmra.mxu0 %v1093
      %v1191 = vpop.f32.mrf.mxu0
      %v1192 = vadd.f32 0.0, %v1191
      %1193 = vmatmul.f32.gmra.mxu0 %v1095
      %v1194 = vpop.f32.mrf.mxu0
      %v1195 = vadd.f32 0.0, %v1194
      %1196 = vmatmul.f32.gmra.mxu0 %v1097
      %v1197 = vpop.f32.mrf.mxu0
      %v1198 = vadd.f32 0.0, %v1197
      %1199 = vmatmul.f32.gmra.mxu0 %v1099
      %v1200 = vpop.f32.mrf.mxu0
      %v1201 = vadd.f32 0.0, %v1200
      %1202 = vmatmul.f32.gmra.mxu0 %v1101
      %v1203 = vpop.f32.mrf.mxu0
      %v1204 = vadd.f32 0.0, %v1203
      %1205 = vmatmul.f32.gmra.mxu0 %v1103
      %v1206 = vpop.f32.mrf.mxu0
      %v1207 = vadd.f32 0.0, %v1206
      %1208 = vmatmul.f32.gmra.mxu0 %v1105
      %v1209 = vpop.f32.mrf.mxu0
      %v1210 = vadd.f32 0.0, %v1209
      %1211 = vmatmul.f32.gmra.mxu0 %v1107
      %v1212 = vpop.f32.mrf.mxu0
      %v1213 = vadd.f32 0.0, %v1212
      %1214 = vmatmul.f32.gmra.mxu0 %v1109
      %v1215 = vpop.f32.mrf.mxu0
      %v1216 = vadd.f32 0.0, %v1215
      %1217 = vmatmul.f32.gmra.mxu0 %v1111
      %v1218 = vpop.f32.mrf.mxu0
      %v1219 = vadd.f32 0.0, %v1218
      %1220 = vmatmul.f32.gmra.mxu0 %v1113
      %v1221 = vpop.f32.mrf.mxu0
      %v1222 = vadd.f32 0.0, %v1221
      %1223 = vmatmul.f32.gmra.mxu0 %v1115
      %v1224 = vpop.f32.mrf.mxu0
      %v1225 = vadd.f32 0.0, %v1224
      %1226 = vmatmul.f32.gmra.mxu0 %v1117
      %v1227 = vpop.f32.mrf.mxu0
      %v1228 = vadd.f32 0.0, %v1227
      %1229 = vmatmul.f32.gmra.mxu0 %v1119
      %v1230 = vpop.f32.mrf.mxu0
      %v1231 = vadd.f32 0.0, %v1230
      %1232 = vmatmul.f32.gmra.mxu0 %v1121
      %v1233 = vpop.f32.mrf.mxu0
      %v1234 = vadd.f32 0.0, %v1233
      %1235 = vdwg.mxu0
      %v1236 = vadd.f32 %v880, %v1141
      %v1237 = vadd.f32 %v883, %v1144
      %v1238 = vadd.f32 %v886, %v1147
      %v1239 = vadd.f32 %v889, %v1150
      %v1240 = vadd.f32 %v892, %v1153
      %v1241 = vadd.f32 %v895, %v1156
      %v1242 = vadd.f32 %v898, %v1159
      %v1243 = vadd.f32 %v901, %v1162
      %v1244 = vadd.f32 %v904, %v1165
      %v1245 = vadd.f32 %v907, %v1168
      %v1246 = vadd.f32 %v910, %v1171
      %v1247 = vadd.f32 %v913, %v1174
      %v1248 = vadd.f32 %v916, %v1177
      %v1249 = vadd.f32 %v919, %v1180
      %v1250 = vadd.f32 %v922, %v1183
      %v1251 = vadd.f32 %v925, %v1186
      %v1252 = vadd.f32 %v928, %v1189
      %v1253 = vadd.f32 %v931, %v1192
      %v1254 = vadd.f32 %v934, %v1195
      %v1255 = vadd.f32 %v937, %v1198
      %v1256 = vadd.f32 %v940, %v1201
      %v1257 = vadd.f32 %v943, %v1204
      %v1258 = vadd.f32 %v946, %v1207
      %v1259 = vadd.f32 %v949, %v1210
      %v1260 = vadd.f32 %v952, %v1213
      %v1261 = vadd.f32 %v955, %v1216
      %v1262 = vadd.f32 %v958, %v1219
      %v1263 = vadd.f32 %v961, %v1222
      %v1264 = vadd.f32 %v964, %v1225
      %v1265 = vadd.f32 %v967, %v1228
      %v1266 = vadd.f32 %v970, %v1231
      %v1267 = vadd.f32 %v973, %v1234
      %s1268 = scalar_lea.vmem %s2, 48
      %v1269 = vld [vmem:[%s1268] sm:$0xff]
      %v1270 = vld [vmem:[%s1268 + $0x8] sm:$0xff]
      %v1272 = vsel %vm278, %v481, 0
      %v1275 = vsel %vm278, %v482, 0
      %1277 = vmatpush.msra.mxu0 0.0
      %1278 = vmatpush.msra.mxu0 0.0
      %1279 = vmatpush.msra.mxu0 0.0
      %1280 = vmatpush.msra.mxu0 0.0
      %1281 = vmatpush.msra.mxu0 0.0
      %1282 = vmatpush.msra.mxu0 0.0
      %1283 = vmatpush.msra.mxu0 0.0
      %1284 = vmatpush.msra.mxu0 0.0
      %1285 = vmatpush.msra.mxu0 0.0
      %1286 = vmatpush.msra.mxu0 0.0
      %1287 = vmatpush.msra.mxu0 0.0
      %1288 = vmatpush.msra.mxu0 0.0
      %1289 = vmatpush.msra.mxu0 0.0
      %1290 = vmatpush.msra.mxu0 0.0
      %1291 = vmatpush.msra.mxu0 %v1270
      %1292 = vmatpush.msra.mxu0 %v1269
      %1293 = vmatmul.f32.gmra.mxu0 %v802
      %v1294 = vpop.f32.mrf.mxu0
      %v1295 = vadd.f32 0.0, %v1294
      %1296 = vmatmul.f32.gmra.mxu0 %v804
      %v1297 = vpop.f32.mrf.mxu0
      %v1298 = vadd.f32 0.0, %v1297
      %1299 = vmatmul.f32.gmra.mxu0 %v806
      %v1300 = vpop.f32.mrf.mxu0
      %v1301 = vadd.f32 0.0, %v1300
      %1302 = vmatmul.f32.gmra.mxu0 %v808
      %v1303 = vpop.f32.mrf.mxu0
      %v1304 = vadd.f32 0.0, %v1303
      %1305 = vmatmul.f32.gmra.mxu0 %v810
      %v1306 = vpop.f32.mrf.mxu0
      %v1307 = vadd.f32 0.0, %v1306
      %1308 = vmatmul.f32.gmra.mxu0 %v812
      %v1309 = vpop.f32.mrf.mxu0
      %v1310 = vadd.f32 0.0, %v1309
      %1311 = vmatmul.f32.gmra.mxu0 %v814
      %v1312 = vpop.f32.mrf.mxu0
      %v1313 = vadd.f32 0.0, %v1312
      %1314 = vmatmul.f32.gmra.mxu0 %v816
      %v1315 = vpop.f32.mrf.mxu0
      %v1316 = vadd.f32 0.0, %v1315
      %1317 = vmatmul.f32.gmra.mxu0 %v818
      %v1318 = vpop.f32.mrf.mxu0
      %v1319 = vadd.f32 0.0, %v1318
      %1320 = vmatmul.f32.gmra.mxu0 %v820
      %v1321 = vpop.f32.mrf.mxu0
      %v1322 = vadd.f32 0.0, %v1321
      %1323 = vmatmul.f32.gmra.mxu0 %v822
      %v1324 = vpop.f32.mrf.mxu0
      %v1325 = vadd.f32 0.0, %v1324
      %1326 = vmatmul.f32.gmra.mxu0 %v824
      %v1327 = vpop.f32.mrf.mxu0
      %v1328 = vadd.f32 0.0, %v1327
      %1329 = vmatmul.f32.gmra.mxu0 %v826
      %v1330 = vpop.f32.mrf.mxu0
      %v1331 = vadd.f32 0.0, %v1330
      %1332 = vmatmul.f32.gmra.mxu0 %v828
      %v1333 = vpop.f32.mrf.mxu0
      %v1334 = vadd.f32 0.0, %v1333
      %1335 = vmatmul.f32.gmra.mxu0 %v830
      %v1336 = vpop.f32.mrf.mxu0
      %v1337 = vadd.f32 0.0, %v1336
      %1338 = vmatmul.f32.gmra.mxu0 %v832
      %v1339 = vpop.f32.mrf.mxu0
      %v1340 = vadd.f32 0.0, %v1339
      %1341 = vmatmul.f32.gmra.mxu0 %v834
      %v1342 = vpop.f32.mrf.mxu0
      %v1343 = vadd.f32 0.0, %v1342
      %1344 = vmatmul.f32.gmra.mxu0 %v836
      %v1345 = vpop.f32.mrf.mxu0
      %v1346 = vadd.f32 0.0, %v1345
      %1347 = vmatmul.f32.gmra.mxu0 %v838
      %v1348 = vpop.f32.mrf.mxu0
      %v1349 = vadd.f32 0.0, %v1348
      %1350 = vmatmul.f32.gmra.mxu0 %v840
      %v1351 = vpop.f32.mrf.mxu0
      %v1352 = vadd.f32 0.0, %v1351
      %1353 = vmatmul.f32.gmra.mxu0 %v842
      %v1354 = vpop.f32.mrf.mxu0
      %v1355 = vadd.f32 0.0, %v1354
      %1356 = vmatmul.f32.gmra.mxu0 %v844
      %v1357 = vpop.f32.mrf.mxu0
      %v1358 = vadd.f32 0.0, %v1357
      %1359 = vmatmul.f32.gmra.mxu0 %v846
      %v1360 = vpop.f32.mrf.mxu0
      %v1361 = vadd.f32 0.0, %v1360
      %1362 = vmatmul.f32.gmra.mxu0 %v848
      %v1363 = vpop.f32.mrf.mxu0
      %v1364 = vadd.f32 0.0, %v1363
      %1365 = vmatmul.f32.gmra.mxu0 %v850
      %v1366 = vpop.f32.mrf.mxu0
      %v1367 = vadd.f32 0.0, %v1366
      %1368 = vmatmul.f32.gmra.mxu0 %v852
      %v1369 = vpop.f32.mrf.mxu0
      %v1370 = vadd.f32 0.0, %v1369
      %1371 = vmatmul.f32.gmra.mxu0 %v854
      %v1372 = vpop.f32.mrf.mxu0
      %v1373 = vadd.f32 0.0, %v1372
      %1374 = vmatmul.f32.gmra.mxu0 %v856
      %v1375 = vpop.f32.mrf.mxu0
      %v1376 = vadd.f32 0.0, %v1375
      %1377 = vmatmul.f32.gmra.mxu0 %v858
      %v1378 = vpop.f32.mrf.mxu0
      %v1379 = vadd.f32 0.0, %v1378
      %1380 = vmatmul.f32.gmra.mxu0 %v860
      %v1381 = vpop.f32.mrf.mxu0
      %v1382 = vadd.f32 0.0, %v1381
      %1383 = vmatmul.f32.gmra.mxu0 %v1272
      %v1384 = vpop.f32.mrf.mxu0
      %v1385 = vadd.f32 0.0, %v1384
      %1386 = vmatmul.f32.gmra.mxu0 %v1275
      %v1387 = vpop.f32.mrf.mxu0
      %v1388 = vadd.f32 0.0, %v1387
      %1389 = vdwg.mxu0
      %v1390 = vadd.f32 %v1236, %v1295
      %v1391 = vadd.f32 %v1237, %v1298
      %v1392 = vadd.f32 %v1238, %v1301
      %v1393 = vadd.f32 %v1239, %v1304
      %v1394 = vadd.f32 %v1240, %v1307
      %v1395 = vadd.f32 %v1241, %v1310
      %v1396 = vadd.f32 %v1242, %v1313
      %v1397 = vadd.f32 %v1243, %v1316
      %v1398 = vadd.f32 %v1244, %v1319
      %v1399 = vadd.f32 %v1245, %v1322
      %v1400 = vadd.f32 %v1246, %v1325
      %v1401 = vadd.f32 %v1247, %v1328
      %v1402 = vadd.f32 %v1248, %v1331
      %v1403 = vadd.f32 %v1249, %v1334
      %v1404 = vadd.f32 %v1250, %v1337
      %v1405 = vadd.f32 %v1251, %v1340
      %v1406 = vadd.f32 %v1252, %v1343
      %v1407 = vadd.f32 %v1253, %v1346
      %v1408 = vadd.f32 %v1254, %v1349
      %v1409 = vadd.f32 %v1255, %v1352
      %v1410 = vadd.f32 %v1256, %v1355
      %v1411 = vadd.f32 %v1257, %v1358
      %v1412 = vadd.f32 %v1258, %v1361
      %v1413 = vadd.f32 %v1259, %v1364
      %v1414 = vadd.f32 %v1260, %v1367
      %v1415 = vadd.f32 %v1261, %v1370
      %v1416 = vadd.f32 %v1262, %v1373
      %v1417 = vadd.f32 %v1263, %v1376
      %v1418 = vadd.f32 %v1264, %v1379
      %v1419 = vadd.f32 %v1265, %v1382
      %v1420 = vadd.f32 %v1266, %v1385
      %v1421 = vadd.f32 %v1267, %v1388
      %v1423 = vrot.slane %v481, 1
      %v1424 = vrot.slane %v482, 1
      %v1425 = vsel %vm537, %v1423, %v1424
      %v1426 = vrot.slane %v483, 1
      %v1427 = vsel %vm537, %v1424, %v1426
      %s1428 = scalar_lea.vmem %s2, 64
      %v1429 = vld [vmem:[%s1428] sm:$0xff]
      %v1430 = vld [vmem:[%s1428 + $0x8] sm:$0xff]
      %v1431 = vsel %vm278, %v1425, 0
      %v1433 = vsel %vm278, %v1427, 0
      %1435 = vmatpush.msra.mxu0 0.0
      %1436 = vmatpush.msra.mxu0 0.0
      %1437 = vmatpush.msra.mxu0 0.0
      %1438 = vmatpush.msra.mxu0 0.0
      %1439 = vmatpush.msra.mxu0 0.0
      %1440 = vmatpush.msra.mxu0 0.0
      %1441 = vmatpush.msra.mxu0 0.0
      %1442 = vmatpush.msra.mxu0 0.0
      %1443 = vmatpush.msra.mxu0 0.0
      %1444 = vmatpush.msra.mxu0 0.0
      %1445 = vmatpush.msra.mxu0 0.0
      %1446 = vmatpush.msra.mxu0 0.0
      %1447 = vmatpush.msra.mxu0 0.0
      %1448 = vmatpush.msra.mxu0 0.0
      %1449 = vmatpush.msra.mxu0 %v1430
      %1450 = vmatpush.msra.mxu0 %v1429
      %1451 = vmatmul.f32.gmra.mxu0 %v625
      %v1452 = vpop.f32.mrf.mxu0
      %v1453 = vadd.f32 0.0, %v1452
      %1454 = vmatmul.f32.gmra.mxu0 %v627
      %v1455 = vpop.f32.mrf.mxu0
      %v1456 = vadd.f32 0.0, %v1455
      %1457 = vmatmul.f32.gmra.mxu0 %v629
      %v1458 = vpop.f32.mrf.mxu0
      %v1459 = vadd.f32 0.0, %v1458
      %1460 = vmatmul.f32.gmra.mxu0 %v631
      %v1461 = vpop.f32.mrf.mxu0
      %v1462 = vadd.f32 0.0, %v1461
      %1463 = vmatmul.f32.gmra.mxu0 %v633
      %v1464 = vpop.f32.mrf.mxu0
      %v1465 = vadd.f32 0.0, %v1464
      %1466 = vmatmul.f32.gmra.mxu0 %v635
      %v1467 = vpop.f32.mrf.mxu0
      %v1468 = vadd.f32 0.0, %v1467
      %1469 = vmatmul.f32.gmra.mxu0 %v637
      %v1470 = vpop.f32.mrf.mxu0
      %v1471 = vadd.f32 0.0, %v1470
      %1472 = vmatmul.f32.gmra.mxu0 %v639
      %v1473 = vpop.f32.mrf.mxu0
      %v1474 = vadd.f32 0.0, %v1473
      %1475 = vmatmul.f32.gmra.mxu0 %v641
      %v1476 = vpop.f32.mrf.mxu0
      %v1477 = vadd.f32 0.0, %v1476
      %1478 = vmatmul.f32.gmra.mxu0 %v643
      %v1479 = vpop.f32.mrf.mxu0
      %v1480 = vadd.f32 0.0, %v1479
      %1481 = vmatmul.f32.gmra.mxu0 %v645
      %v1482 = vpop.f32.mrf.mxu0
      %v1483 = vadd.f32 0.0, %v1482
      %1484 = vmatmul.f32.gmra.mxu0 %v647
      %v1485 = vpop.f32.mrf.mxu0
      %v1486 = vadd.f32 0.0, %v1485
      %1487 = vmatmul.f32.gmra.mxu0 %v649
      %v1488 = vpop.f32.mrf.mxu0
      %v1489 = vadd.f32 0.0, %v1488
      %1490 = vmatmul.f32.gmra.mxu0 %v651
      %v1491 = vpop.f32.mrf.mxu0
      %v1492 = vadd.f32 0.0, %v1491
      %1493 = vmatmul.f32.gmra.mxu0 %v653
      %v1494 = vpop.f32.mrf.mxu0
      %v1495 = vadd.f32 0.0, %v1494
      %1496 = vmatmul.f32.gmra.mxu0 %v655
      %v1497 = vpop.f32.mrf.mxu0
      %v1498 = vadd.f32 0.0, %v1497
      %1499 = vmatmul.f32.gmra.mxu0 %v657
      %v1500 = vpop.f32.mrf.mxu0
      %v1501 = vadd.f32 0.0, %v1500
      %1502 = vmatmul.f32.gmra.mxu0 %v659
      %v1503 = vpop.f32.mrf.mxu0
      %v1504 = vadd.f32 0.0, %v1503
      %1505 = vmatmul.f32.gmra.mxu0 %v661
      %v1506 = vpop.f32.mrf.mxu0
      %v1507 = vadd.f32 0.0, %v1506
      %1508 = vmatmul.f32.gmra.mxu0 %v663
      %v1509 = vpop.f32.mrf.mxu0
      %v1510 = vadd.f32 0.0, %v1509
      %1511 = vmatmul.f32.gmra.mxu0 %v665
      %v1512 = vpop.f32.mrf.mxu0
      %v1513 = vadd.f32 0.0, %v1512
      %1514 = vmatmul.f32.gmra.mxu0 %v667
      %v1515 = vpop.f32.mrf.mxu0
      %v1516 = vadd.f32 0.0, %v1515
      %1517 = vmatmul.f32.gmra.mxu0 %v669
      %v1518 = vpop.f32.mrf.mxu0
      %v1519 = vadd.f32 0.0, %v1518
      %1520 = vmatmul.f32.gmra.mxu0 %v671
      %v1521 = vpop.f32.mrf.mxu0
      %v1522 = vadd.f32 0.0, %v1521
      %1523 = vmatmul.f32.gmra.mxu0 %v673
      %v1524 = vpop.f32.mrf.mxu0
      %v1525 = vadd.f32 0.0, %v1524
      %1526 = vmatmul.f32.gmra.mxu0 %v675
      %v1527 = vpop.f32.mrf.mxu0
      %v1528 = vadd.f32 0.0, %v1527
      %1529 = vmatmul.f32.gmra.mxu0 %v677
      %v1530 = vpop.f32.mrf.mxu0
      %v1531 = vadd.f32 0.0, %v1530
      %1532 = vmatmul.f32.gmra.mxu0 %v679
      %v1533 = vpop.f32.mrf.mxu0
      %v1534 = vadd.f32 0.0, %v1533
      %1535 = vmatmul.f32.gmra.mxu0 %v681
      %v1536 = vpop.f32.mrf.mxu0
      %v1537 = vadd.f32 0.0, %v1536
      %1538 = vmatmul.f32.gmra.mxu0 %v683
      %v1539 = vpop.f32.mrf.mxu0
      %v1540 = vadd.f32 0.0, %v1539
      %1541 = vmatmul.f32.gmra.mxu0 %v1431
      %v1542 = vpop.f32.mrf.mxu0
      %v1543 = vadd.f32 0.0, %v1542
      %1544 = vmatmul.f32.gmra.mxu0 %v1433
      %v1545 = vpop.f32.mrf.mxu0
      %v1546 = vadd.f32 0.0, %v1545
      %1547 = vdwg.mxu0
      %v1548 = vadd.f32 %v1390, %v1453
      %v1549 = vadd.f32 %v1391, %v1456
      %v1550 = vadd.f32 %v1392, %v1459
      %v1551 = vadd.f32 %v1393, %v1462
      %v1552 = vadd.f32 %v1394, %v1465
      %v1553 = vadd.f32 %v1395, %v1468
      %v1554 = vadd.f32 %v1396, %v1471
      %v1555 = vadd.f32 %v1397, %v1474
      %v1556 = vadd.f32 %v1398, %v1477
      %v1557 = vadd.f32 %v1399, %v1480
      %v1558 = vadd.f32 %v1400, %v1483
      %v1559 = vadd.f32 %v1401, %v1486
      %v1560 = vadd.f32 %v1402, %v1489
      %v1561 = vadd.f32 %v1403, %v1492
      %v1562 = vadd.f32 %v1404, %v1495
      %v1563 = vadd.f32 %v1405, %v1498
      %v1564 = vadd.f32 %v1406, %v1501
      %v1565 = vadd.f32 %v1407, %v1504
      %v1566 = vadd.f32 %v1408, %v1507
      %v1567 = vadd.f32 %v1409, %v1510
      %v1568 = vadd.f32 %v1410, %v1513
      %v1569 = vadd.f32 %v1411, %v1516
      %v1570 = vadd.f32 %v1412, %v1519
      %v1571 = vadd.f32 %v1413, %v1522
      %v1572 = vadd.f32 %v1414, %v1525
      %v1573 = vadd.f32 %v1415, %v1528
      %v1574 = vadd.f32 %v1416, %v1531
      %v1575 = vadd.f32 %v1417, %v1534
      %v1576 = vadd.f32 %v1418, %v1537
      %v1577 = vadd.f32 %v1419, %v1540
      %v1578 = vadd.f32 %v1420, %v1543
      %v1579 = vadd.f32 %v1421, %v1546
      %v1580 = vrot.slane %v481, 2
      %v1581 = vrot.slane %v482, 2
      %v1582 = vsel %vm975, %v1580, %v1581
      %v1583 = vrot.slane %v483, 2
      %v1584 = vsel %vm975, %v1581, %v1583
      %s1585 = scalar_lea.vmem %s2, 80
      %v1586 = vld [vmem:[%s1585] sm:$0xff]
      %v1587 = vld [vmem:[%s1585 + $0x8] sm:$0xff]
      %v1588 = vsel %vm278, %v1582, 0
      %v1590 = vsel %vm278, %v1584, 0
      %1592 = vmatpush.msra.mxu0 0.0
      %1593 = vmatpush.msra.mxu0 0.0
      %1594 = vmatpush.msra.mxu0 0.0
      %1595 = vmatpush.msra.mxu0 0.0
      %1596 = vmatpush.msra.mxu0 0.0
      %1597 = vmatpush.msra.mxu0 0.0
      %1598 = vmatpush.msra.mxu0 0.0
      %1599 = vmatpush.msra.mxu0 0.0
      %1600 = vmatpush.msra.mxu0 0.0
      %1601 = vmatpush.msra.mxu0 0.0
      %1602 = vmatpush.msra.mxu0 0.0
      %1603 = vmatpush.msra.mxu0 0.0
      %1604 = vmatpush.msra.mxu0 0.0
      %1605 = vmatpush.msra.mxu0 0.0
      %1606 = vmatpush.msra.mxu0 %v1587
      %1607 = vmatpush.msra.mxu0 %v1586
      %1608 = vmatmul.f32.gmra.mxu0 %v1063
      %v1609 = vpop.f32.mrf.mxu0
      %v1610 = vadd.f32 0.0, %v1609
      %1611 = vmatmul.f32.gmra.mxu0 %v1065
      %v1612 = vpop.f32.mrf.mxu0
      %v1613 = vadd.f32 0.0, %v1612
      %1614 = vmatmul.f32.gmra.mxu0 %v1067
      %v1615 = vpop.f32.mrf.mxu0
      %v1616 = vadd.f32 0.0, %v1615
      %1617 = vmatmul.f32.gmra.mxu0 %v1069
      %v1618 = vpop.f32.mrf.mxu0
      %v1619 = vadd.f32 0.0, %v1618
      %1620 = vmatmul.f32.gmra.mxu0 %v1071
      %v1621 = vpop.f32.mrf.mxu0
      %v1622 = vadd.f32 0.0, %v1621
      %1623 = vmatmul.f32.gmra.mxu0 %v1073
      %v1624 = vpop.f32.mrf.mxu0
      %v1625 = vadd.f32 0.0, %v1624
      %1626 = vmatmul.f32.gmra.mxu0 %v1075
      %v1627 = vpop.f32.mrf.mxu0
      %v1628 = vadd.f32 0.0, %v1627
      %1629 = vmatmul.f32.gmra.mxu0 %v1077
      %v1630 = vpop.f32.mrf.mxu0
      %v1631 = vadd.f32 0.0, %v1630
      %1632 = vmatmul.f32.gmra.mxu0 %v1079
      %v1633 = vpop.f32.mrf.mxu0
      %v1634 = vadd.f32 0.0, %v1633
      %1635 = vmatmul.f32.gmra.mxu0 %v1081
      %v1636 = vpop.f32.mrf.mxu0
      %v1637 = vadd.f32 0.0, %v1636
      %1638 = vmatmul.f32.gmra.mxu0 %v1083
      %v1639 = vpop.f32.mrf.mxu0
      %v1640 = vadd.f32 0.0, %v1639
      %1641 = vmatmul.f32.gmra.mxu0 %v1085
      %v1642 = vpop.f32.mrf.mxu0
      %v1643 = vadd.f32 0.0, %v1642
      %1644 = vmatmul.f32.gmra.mxu0 %v1087
      %v1645 = vpop.f32.mrf.mxu0
      %v1646 = vadd.f32 0.0, %v1645
      %1647 = vmatmul.f32.gmra.mxu0 %v1089
      %v1648 = vpop.f32.mrf.mxu0
      %v1649 = vadd.f32 0.0, %v1648
      %1650 = vmatmul.f32.gmra.mxu0 %v1091
      %v1651 = vpop.f32.mrf.mxu0
      %v1652 = vadd.f32 0.0, %v1651
      %1653 = vmatmul.f32.gmra.mxu0 %v1093
      %v1654 = vpop.f32.mrf.mxu0
      %v1655 = vadd.f32 0.0, %v1654
      %1656 = vmatmul.f32.gmra.mxu0 %v1095
      %v1657 = vpop.f32.mrf.mxu0
      %v1658 = vadd.f32 0.0, %v1657
      %1659 = vmatmul.f32.gmra.mxu0 %v1097
      %v1660 = vpop.f32.mrf.mxu0
      %v1661 = vadd.f32 0.0, %v1660
      %1662 = vmatmul.f32.gmra.mxu0 %v1099
      %v1663 = vpop.f32.mrf.mxu0
      %v1664 = vadd.f32 0.0, %v1663
      %1665 = vmatmul.f32.gmra.mxu0 %v1101
      %v1666 = vpop.f32.mrf.mxu0
      %v1667 = vadd.f32 0.0, %v1666
      %1668 = vmatmul.f32.gmra.mxu0 %v1103
      %v1669 = vpop.f32.mrf.mxu0
      %v1670 = vadd.f32 0.0, %v1669
      %1671 = vmatmul.f32.gmra.mxu0 %v1105
      %v1672 = vpop.f32.mrf.mxu0
      %v1673 = vadd.f32 0.0, %v1672
      %1674 = vmatmul.f32.gmra.mxu0 %v1107
      %v1675 = vpop.f32.mrf.mxu0
      %v1676 = vadd.f32 0.0, %v1675
      %1677 = vmatmul.f32.gmra.mxu0 %v1109
      %v1678 = vpop.f32.mrf.mxu0
      %v1679 = vadd.f32 0.0, %v1678
      %1680 = vmatmul.f32.gmra.mxu0 %v1111
      %v1681 = vpop.f32.mrf.mxu0
      %v1682 = vadd.f32 0.0, %v1681
      %1683 = vmatmul.f32.gmra.mxu0 %v1113
      %v1684 = vpop.f32.mrf.mxu0
      %v1685 = vadd.f32 0.0, %v1684
      %1686 = vmatmul.f32.gmra.mxu0 %v1115
      %v1687 = vpop.f32.mrf.mxu0
      %v1688 = vadd.f32 0.0, %v1687
      %1689 = vmatmul.f32.gmra.mxu0 %v1117
      %v1690 = vpop.f32.mrf.mxu0
      %v1691 = vadd.f32 0.0, %v1690
      %1692 = vmatmul.f32.gmra.mxu0 %v1119
      %v1693 = vpop.f32.mrf.mxu0
      %v1694 = vadd.f32 0.0, %v1693
      %1695 = vmatmul.f32.gmra.mxu0 %v1121
      %v1696 = vpop.f32.mrf.mxu0
      %v1697 = vadd.f32 0.0, %v1696
      %1698 = vmatmul.f32.gmra.mxu0 %v1588
      %v1699 = vpop.f32.mrf.mxu0
      %v1700 = vadd.f32 0.0, %v1699
      %1701 = vmatmul.f32.gmra.mxu0 %v1590
      %v1702 = vpop.f32.mrf.mxu0
      %v1703 = vadd.f32 0.0, %v1702
      %1704 = vdwg.mxu0
      %v1705 = vadd.f32 %v1548, %v1610
      %v1706 = vadd.f32 %v1549, %v1613
      %v1707 = vadd.f32 %v1550, %v1616
      %v1708 = vadd.f32 %v1551, %v1619
      %v1709 = vadd.f32 %v1552, %v1622
      %v1710 = vadd.f32 %v1553, %v1625
      %v1711 = vadd.f32 %v1554, %v1628
      %v1712 = vadd.f32 %v1555, %v1631
      %v1713 = vadd.f32 %v1556, %v1634
      %v1714 = vadd.f32 %v1557, %v1637
      %v1715 = vadd.f32 %v1558, %v1640
      %v1716 = vadd.f32 %v1559, %v1643
      %v1717 = vadd.f32 %v1560, %v1646
      %v1718 = vadd.f32 %v1561, %v1649
      %v1719 = vadd.f32 %v1562, %v1652
      %v1720 = vadd.f32 %v1563, %v1655
      %v1721 = vadd.f32 %v1564, %v1658
      %v1722 = vadd.f32 %v1565, %v1661
      %v1723 = vadd.f32 %v1566, %v1664
      %v1724 = vadd.f32 %v1567, %v1667
      %v1725 = vadd.f32 %v1568, %v1670
      %v1726 = vadd.f32 %v1569, %v1673
      %v1727 = vadd.f32 %v1570, %v1676
      %v1728 = vadd.f32 %v1571, %v1679
      %v1729 = vadd.f32 %v1572, %v1682
      %v1730 = vadd.f32 %v1573, %v1685
      %v1731 = vadd.f32 %v1574, %v1688
      %v1732 = vadd.f32 %v1575, %v1691
      %v1733 = vadd.f32 %v1576, %v1694
      %v1734 = vadd.f32 %v1577, %v1697
      %v1735 = vadd.f32 %v1578, %v1700
      %v1736 = vadd.f32 %v1579, %v1703
      %s1737 = scalar_lea.vmem %s2, 96
      %v1738 = vld [vmem:[%s1737] sm:$0xff]
      %v1739 = vld [vmem:[%s1737 + $0x8] sm:$0xff]
      %v1741 = vsel %vm278, %v484, 0
      %v1744 = vsel %vm278, %v485, 0
      %1746 = vmatpush.msra.mxu0 0.0
      %1747 = vmatpush.msra.mxu0 0.0
      %1748 = vmatpush.msra.mxu0 0.0
      %1749 = vmatpush.msra.mxu0 0.0
      %1750 = vmatpush.msra.mxu0 0.0
      %1751 = vmatpush.msra.mxu0 0.0
      %1752 = vmatpush.msra.mxu0 0.0
      %1753 = vmatpush.msra.mxu0 0.0
      %1754 = vmatpush.msra.mxu0 0.0
      %1755 = vmatpush.msra.mxu0 0.0
      %1756 = vmatpush.msra.mxu0 0.0
      %1757 = vmatpush.msra.mxu0 0.0
      %1758 = vmatpush.msra.mxu0 0.0
      %1759 = vmatpush.msra.mxu0 0.0
      %1760 = vmatpush.msra.mxu0 %v1739
      %1761 = vmatpush.msra.mxu0 %v1738
      %1762 = vmatmul.f32.gmra.mxu0 %v806
      %v1763 = vpop.f32.mrf.mxu0
      %v1764 = vadd.f32 0.0, %v1763
      %1765 = vmatmul.f32.gmra.mxu0 %v808
      %v1766 = vpop.f32.mrf.mxu0
      %v1767 = vadd.f32 0.0, %v1766
      %1768 = vmatmul.f32.gmra.mxu0 %v810
      %v1769 = vpop.f32.mrf.mxu0
      %v1770 = vadd.f32 0.0, %v1769
      %1771 = vmatmul.f32.gmra.mxu0 %v812
      %v1772 = vpop.f32.mrf.mxu0
      %v1773 = vadd.f32 0.0, %v1772
      %1774 = vmatmul.f32.gmra.mxu0 %v814
      %v1775 = vpop.f32.mrf.mxu0
      %v1776 = vadd.f32 0.0, %v1775
      %1777 = vmatmul.f32.gmra.mxu0 %v816
      %v1778 = vpop.f32.mrf.mxu0
      %v1779 = vadd.f32 0.0, %v1778
      %1780 = vmatmul.f32.gmra.mxu0 %v818
      %v1781 = vpop.f32.mrf.mxu0
      %v1782 = vadd.f32 0.0, %v1781
      %1783 = vmatmul.f32.gmra.mxu0 %v820
      %v1784 = vpop.f32.mrf.mxu0
      %v1785 = vadd.f32 0.0, %v1784
      %1786 = vmatmul.f32.gmra.mxu0 %v822
      %v1787 = vpop.f32.mrf.mxu0
      %v1788 = vadd.f32 0.0, %v1787
      %1789 = vmatmul.f32.gmra.mxu0 %v824
      %v1790 = vpop.f32.mrf.mxu0
      %v1791 = vadd.f32 0.0, %v1790
      %1792 = vmatmul.f32.gmra.mxu0 %v826
      %v1793 = vpop.f32.mrf.mxu0
      %v1794 = vadd.f32 0.0, %v1793
      %1795 = vmatmul.f32.gmra.mxu0 %v828
      %v1796 = vpop.f32.mrf.mxu0
      %v1797 = vadd.f32 0.0, %v1796
      %1798 = vmatmul.f32.gmra.mxu0 %v830
      %v1799 = vpop.f32.mrf.mxu0
      %v1800 = vadd.f32 0.0, %v1799
      %1801 = vmatmul.f32.gmra.mxu0 %v832
      %v1802 = vpop.f32.mrf.mxu0
      %v1803 = vadd.f32 0.0, %v1802
      %1804 = vmatmul.f32.gmra.mxu0 %v834
      %v1805 = vpop.f32.mrf.mxu0
      %v1806 = vadd.f32 0.0, %v1805
      %1807 = vmatmul.f32.gmra.mxu0 %v836
      %v1808 = vpop.f32.mrf.mxu0
      %v1809 = vadd.f32 0.0, %v1808
      %1810 = vmatmul.f32.gmra.mxu0 %v838
      %v1811 = vpop.f32.mrf.mxu0
      %v1812 = vadd.f32 0.0, %v1811
      %1813 = vmatmul.f32.gmra.mxu0 %v840
      %v1814 = vpop.f32.mrf.mxu0
      %v1815 = vadd.f32 0.0, %v1814
      %1816 = vmatmul.f32.gmra.mxu0 %v842
      %v1817 = vpop.f32.mrf.mxu0
      %v1818 = vadd.f32 0.0, %v1817
      %1819 = vmatmul.f32.gmra.mxu0 %v844
      %v1820 = vpop.f32.mrf.mxu0
      %v1821 = vadd.f32 0.0, %v1820
      %1822 = vmatmul.f32.gmra.mxu0 %v846
      %v1823 = vpop.f32.mrf.mxu0
      %v1824 = vadd.f32 0.0, %v1823
      %1825 = vmatmul.f32.gmra.mxu0 %v848
      %v1826 = vpop.f32.mrf.mxu0
      %v1827 = vadd.f32 0.0, %v1826
      %1828 = vmatmul.f32.gmra.mxu0 %v850
      %v1829 = vpop.f32.mrf.mxu0
      %v1830 = vadd.f32 0.0, %v1829
      %1831 = vmatmul.f32.gmra.mxu0 %v852
      %v1832 = vpop.f32.mrf.mxu0
      %v1833 = vadd.f32 0.0, %v1832
      %1834 = vmatmul.f32.gmra.mxu0 %v854
      %v1835 = vpop.f32.mrf.mxu0
      %v1836 = vadd.f32 0.0, %v1835
      %1837 = vmatmul.f32.gmra.mxu0 %v856
      %v1838 = vpop.f32.mrf.mxu0
      %v1839 = vadd.f32 0.0, %v1838
      %1840 = vmatmul.f32.gmra.mxu0 %v858
      %v1841 = vpop.f32.mrf.mxu0
      %v1842 = vadd.f32 0.0, %v1841
      %1843 = vmatmul.f32.gmra.mxu0 %v860
      %v1844 = vpop.f32.mrf.mxu0
      %v1845 = vadd.f32 0.0, %v1844
      %1846 = vmatmul.f32.gmra.mxu0 %v1272
      %v1847 = vpop.f32.mrf.mxu0
      %v1848 = vadd.f32 0.0, %v1847
      %1849 = vmatmul.f32.gmra.mxu0 %v1275
      %v1850 = vpop.f32.mrf.mxu0
      %v1851 = vadd.f32 0.0, %v1850
      %1852 = vmatmul.f32.gmra.mxu0 %v1741
      %v1853 = vpop.f32.mrf.mxu0
      %v1854 = vadd.f32 0.0, %v1853
      %1855 = vmatmul.f32.gmra.mxu0 %v1744
      %v1856 = vpop.f32.mrf.mxu0
      %v1857 = vadd.f32 0.0, %v1856
      %1858 = vdwg.mxu0
      %v1859 = vadd.f32 %v1705, %v1764
      %v1860 = vadd.f32 %v1706, %v1767
      %v1861 = vadd.f32 %v1707, %v1770
      %v1862 = vadd.f32 %v1708, %v1773
      %v1863 = vadd.f32 %v1709, %v1776
      %v1864 = vadd.f32 %v1710, %v1779
      %v1865 = vadd.f32 %v1711, %v1782
      %v1866 = vadd.f32 %v1712, %v1785
      %v1867 = vadd.f32 %v1713, %v1788
      %v1868 = vadd.f32 %v1714, %v1791
      %v1869 = vadd.f32 %v1715, %v1794
      %v1870 = vadd.f32 %v1716, %v1797
      %v1871 = vadd.f32 %v1717, %v1800
      %v1872 = vadd.f32 %v1718, %v1803
      %v1873 = vadd.f32 %v1719, %v1806
      %v1874 = vadd.f32 %v1720, %v1809
      %v1875 = vadd.f32 %v1721, %v1812
      %v1876 = vadd.f32 %v1722, %v1815
      %v1877 = vadd.f32 %v1723, %v1818
      %v1878 = vadd.f32 %v1724, %v1821
      %v1879 = vadd.f32 %v1725, %v1824
      %v1880 = vadd.f32 %v1726, %v1827
      %v1881 = vadd.f32 %v1727, %v1830
      %v1882 = vadd.f32 %v1728, %v1833
      %v1883 = vadd.f32 %v1729, %v1836
      %v1884 = vadd.f32 %v1730, %v1839
      %v1885 = vadd.f32 %v1731, %v1842
      %v1886 = vadd.f32 %v1732, %v1845
      %v1887 = vadd.f32 %v1733, %v1848
      %v1888 = vadd.f32 %v1734, %v1851
      %v1889 = vadd.f32 %v1735, %v1854
      %v1890 = vadd.f32 %v1736, %v1857
      %v1892 = vrot.slane %v484, 1
      %v1893 = vrot.slane %v485, 1
      %v1894 = vsel %vm537, %v1892, %v1893
      %v1895 = vrot.slane %v486, 1
      %v1896 = vsel %vm537, %v1893, %v1895
      %s1897 = scalar_lea.vmem %s2, 112
      %v1898 = vld [vmem:[%s1897] sm:$0xff]
      %v1899 = vld [vmem:[%s1897 + $0x8] sm:$0xff]
      %v1900 = vsel %vm278, %v1894, 0
      %v1902 = vsel %vm278, %v1896, 0
      %1904 = vmatpush.msra.mxu0 0.0
      %1905 = vmatpush.msra.mxu0 0.0
      %1906 = vmatpush.msra.mxu0 0.0
      %1907 = vmatpush.msra.mxu0 0.0
      %1908 = vmatpush.msra.mxu0 0.0
      %1909 = vmatpush.msra.mxu0 0.0
      %1910 = vmatpush.msra.mxu0 0.0
      %1911 = vmatpush.msra.mxu0 0.0
      %1912 = vmatpush.msra.mxu0 0.0
      %1913 = vmatpush.msra.mxu0 0.0
      %1914 = vmatpush.msra.mxu0 0.0
      %1915 = vmatpush.msra.mxu0 0.0
      %1916 = vmatpush.msra.mxu0 0.0
      %1917 = vmatpush.msra.mxu0 0.0
      %1918 = vmatpush.msra.mxu0 %v1899
      %1919 = vmatpush.msra.mxu0 %v1898
      %1920 = vmatmul.f32.gmra.mxu0 %v629
      %v1921 = vpop.f32.mrf.mxu0
      %v1922 = vadd.f32 0.0, %v1921
      %1923 = vmatmul.f32.gmra.mxu0 %v631
      %v1924 = vpop.f32.mrf.mxu0
      %v1925 = vadd.f32 0.0, %v1924
      %1926 = vmatmul.f32.gmra.mxu0 %v633
      %v1927 = vpop.f32.mrf.mxu0
      %v1928 = vadd.f32 0.0, %v1927
      %1929 = vmatmul.f32.gmra.mxu0 %v635
      %v1930 = vpop.f32.mrf.mxu0
      %v1931 = vadd.f32 0.0, %v1930
      %1932 = vmatmul.f32.gmra.mxu0 %v637
      %v1933 = vpop.f32.mrf.mxu0
      %v1934 = vadd.f32 0.0, %v1933
      %1935 = vmatmul.f32.gmra.mxu0 %v639
      %v1936 = vpop.f32.mrf.mxu0
      %v1937 = vadd.f32 0.0, %v1936
      %1938 = vmatmul.f32.gmra.mxu0 %v641
      %v1939 = vpop.f32.mrf.mxu0
      %v1940 = vadd.f32 0.0, %v1939
      %1941 = vmatmul.f32.gmra.mxu0 %v643
      %v1942 = vpop.f32.mrf.mxu0
      %v1943 = vadd.f32 0.0, %v1942
      %1944 = vmatmul.f32.gmra.mxu0 %v645
      %v1945 = vpop.f32.mrf.mxu0
      %v1946 = vadd.f32 0.0, %v1945
      %1947 = vmatmul.f32.gmra.mxu0 %v647
      %v1948 = vpop.f32.mrf.mxu0
      %v1949 = vadd.f32 0.0, %v1948
      %1950 = vmatmul.f32.gmra.mxu0 %v649
      %v1951 = vpop.f32.mrf.mxu0
      %v1952 = vadd.f32 0.0, %v1951
      %1953 = vmatmul.f32.gmra.mxu0 %v651
      %v1954 = vpop.f32.mrf.mxu0
      %v1955 = vadd.f32 0.0, %v1954
      %1956 = vmatmul.f32.gmra.mxu0 %v653
      %v1957 = vpop.f32.mrf.mxu0
      %v1958 = vadd.f32 0.0, %v1957
      %1959 = vmatmul.f32.gmra.mxu0 %v655
      %v1960 = vpop.f32.mrf.mxu0
      %v1961 = vadd.f32 0.0, %v1960
      %1962 = vmatmul.f32.gmra.mxu0 %v657
      %v1963 = vpop.f32.mrf.mxu0
      %v1964 = vadd.f32 0.0, %v1963
      %1965 = vmatmul.f32.gmra.mxu0 %v659
      %v1966 = vpop.f32.mrf.mxu0
      %v1967 = vadd.f32 0.0, %v1966
      %1968 = vmatmul.f32.gmra.mxu0 %v661
      %v1969 = vpop.f32.mrf.mxu0
      %v1970 = vadd.f32 0.0, %v1969
      %1971 = vmatmul.f32.gmra.mxu0 %v663
      %v1972 = vpop.f32.mrf.mxu0
      %v1973 = vadd.f32 0.0, %v1972
      %1974 = vmatmul.f32.gmra.mxu0 %v665
      %v1975 = vpop.f32.mrf.mxu0
      %v1976 = vadd.f32 0.0, %v1975
      %1977 = vmatmul.f32.gmra.mxu0 %v667
      %v1978 = vpop.f32.mrf.mxu0
      %v1979 = vadd.f32 0.0, %v1978
      %1980 = vmatmul.f32.gmra.mxu0 %v669
      %v1981 = vpop.f32.mrf.mxu0
      %v1982 = vadd.f32 0.0, %v1981
      %1983 = vmatmul.f32.gmra.mxu0 %v671
      %v1984 = vpop.f32.mrf.mxu0
      %v1985 = vadd.f32 0.0, %v1984
      %1986 = vmatmul.f32.gmra.mxu0 %v673
      %v1987 = vpop.f32.mrf.mxu0
      %v1988 = vadd.f32 0.0, %v1987
      %1989 = vmatmul.f32.gmra.mxu0 %v675
      %v1990 = vpop.f32.mrf.mxu0
      %v1991 = vadd.f32 0.0, %v1990
      %1992 = vmatmul.f32.gmra.mxu0 %v677
      %v1993 = vpop.f32.mrf.mxu0
      %v1994 = vadd.f32 0.0, %v1993
      %1995 = vmatmul.f32.gmra.mxu0 %v679
      %v1996 = vpop.f32.mrf.mxu0
      %v1997 = vadd.f32 0.0, %v1996
      %1998 = vmatmul.f32.gmra.mxu0 %v681
      %v1999 = vpop.f32.mrf.mxu0
      %v2000 = vadd.f32 0.0, %v1999
      %2001 = vmatmul.f32.gmra.mxu0 %v683
      %v2002 = vpop.f32.mrf.mxu0
      %v2003 = vadd.f32 0.0, %v2002
      %2004 = vmatmul.f32.gmra.mxu0 %v1431
      %v2005 = vpop.f32.mrf.mxu0
      %v2006 = vadd.f32 0.0, %v2005
      %2007 = vmatmul.f32.gmra.mxu0 %v1433
      %v2008 = vpop.f32.mrf.mxu0
      %v2009 = vadd.f32 0.0, %v2008
      %2010 = vmatmul.f32.gmra.mxu0 %v1900
      %v2011 = vpop.f32.mrf.mxu0
      %v2012 = vadd.f32 0.0, %v2011
      %2013 = vmatmul.f32.gmra.mxu0 %v1902
      %v2014 = vpop.f32.mrf.mxu0
      %v2015 = vadd.f32 0.0, %v2014
      %2016 = vdwg.mxu0
      %v2017 = vadd.f32 %v1859, %v1922
      %v2018 = vadd.f32 %v1860, %v1925
      %v2019 = vadd.f32 %v1861, %v1928
      %v2020 = vadd.f32 %v1862, %v1931
      %v2021 = vadd.f32 %v1863, %v1934
      %v2022 = vadd.f32 %v1864, %v1937
      %v2023 = vadd.f32 %v1865, %v1940
      %v2024 = vadd.f32 %v1866, %v1943
      %v2025 = vadd.f32 %v1867, %v1946
      %v2026 = vadd.f32 %v1868, %v1949
      %v2027 = vadd.f32 %v1869, %v1952
      %v2028 = vadd.f32 %v1870, %v1955
      %v2029 = vadd.f32 %v1871, %v1958
      %v2030 = vadd.f32 %v1872, %v1961
      %v2031 = vadd.f32 %v1873, %v1964
      %v2032 = vadd.f32 %v1874, %v1967
      %v2033 = vadd.f32 %v1875, %v1970
      %v2034 = vadd.f32 %v1876, %v1973
      %v2035 = vadd.f32 %v1877, %v1976
      %v2036 = vadd.f32 %v1878, %v1979
      %v2037 = vadd.f32 %v1879, %v1982
      %v2038 = vadd.f32 %v1880, %v1985
      %v2039 = vadd.f32 %v1881, %v1988
      %v2040 = vadd.f32 %v1882, %v1991
      %v2041 = vadd.f32 %v1883, %v1994
      %v2042 = vadd.f32 %v1884, %v1997
      %v2043 = vadd.f32 %v1885, %v2000
      %v2044 = vadd.f32 %v1886, %v2003
      %v2045 = vadd.f32 %v1887, %v2006
      %v2046 = vadd.f32 %v1888, %v2009
      %v2047 = vadd.f32 %v1889, %v2012
      %v2048 = vadd.f32 %v1890, %v2015
      %v2049 = vrot.slane %v484, 2
      %v2050 = vrot.slane %v485, 2
      %v2051 = vsel %vm975, %v2049, %v2050
      %v2052 = vrot.slane %v486, 2
      %v2053 = vsel %vm975, %v2050, %v2052
      %s2054 = scalar_lea.vmem %s2, 128
      %v2055 = vld [vmem:[%s2054] sm:$0xff]
      %v2056 = vld [vmem:[%s2054 + $0x8] sm:$0xff]
      %v2057 = vsel %vm278, %v2051, 0
      %v2059 = vsel %vm278, %v2053, 0
      %2061 = vmatpush.msra.mxu0 0.0
      %2062 = vmatpush.msra.mxu0 0.0
      %2063 = vmatpush.msra.mxu0 0.0
      %2064 = vmatpush.msra.mxu0 0.0
      %2065 = vmatpush.msra.mxu0 0.0
      %2066 = vmatpush.msra.mxu0 0.0
      %2067 = vmatpush.msra.mxu0 0.0
      %2068 = vmatpush.msra.mxu0 0.0
      %2069 = vmatpush.msra.mxu0 0.0
      %2070 = vmatpush.msra.mxu0 0.0
      %2071 = vmatpush.msra.mxu0 0.0
      %2072 = vmatpush.msra.mxu0 0.0
      %2073 = vmatpush.msra.mxu0 0.0
      %2074 = vmatpush.msra.mxu0 0.0
      %2075 = vmatpush.msra.mxu0 %v2056
      %2076 = vmatpush.msra.mxu0 %v2055
      %2077 = vmatmul.f32.gmra.mxu0 %v1067
      %v2078 = vpop.f32.mrf.mxu0
      %v2079 = vadd.f32 0.0, %v2078
      %2080 = vmatmul.f32.gmra.mxu0 %v1069
      %v2081 = vpop.f32.mrf.mxu0
      %v2082 = vadd.f32 0.0, %v2081
      %2083 = vmatmul.f32.gmra.mxu0 %v1071
      %v2084 = vpop.f32.mrf.mxu0
      %v2085 = vadd.f32 0.0, %v2084
      %2086 = vmatmul.f32.gmra.mxu0 %v1073
      %v2087 = vpop.f32.mrf.mxu0
      %v2088 = vadd.f32 0.0, %v2087
      %2089 = vmatmul.f32.gmra.mxu0 %v1075
      %v2090 = vpop.f32.mrf.mxu0
      %v2091 = vadd.f32 0.0, %v2090
      %2092 = vmatmul.f32.gmra.mxu0 %v1077
      %v2093 = vpop.f32.mrf.mxu0
      %v2094 = vadd.f32 0.0, %v2093
      %2095 = vmatmul.f32.gmra.mxu0 %v1079
      %v2096 = vpop.f32.mrf.mxu0
      %v2097 = vadd.f32 0.0, %v2096
      %2098 = vmatmul.f32.gmra.mxu0 %v1081
      %v2099 = vpop.f32.mrf.mxu0
      %v2100 = vadd.f32 0.0, %v2099
      %2101 = vmatmul.f32.gmra.mxu0 %v1083
      %v2102 = vpop.f32.mrf.mxu0
      %v2103 = vadd.f32 0.0, %v2102
      %2104 = vmatmul.f32.gmra.mxu0 %v1085
      %v2105 = vpop.f32.mrf.mxu0
      %v2106 = vadd.f32 0.0, %v2105
      %2107 = vmatmul.f32.gmra.mxu0 %v1087
      %v2108 = vpop.f32.mrf.mxu0
      %v2109 = vadd.f32 0.0, %v2108
      %2110 = vmatmul.f32.gmra.mxu0 %v1089
      %v2111 = vpop.f32.mrf.mxu0
      %v2112 = vadd.f32 0.0, %v2111
      %2113 = vmatmul.f32.gmra.mxu0 %v1091
      %v2114 = vpop.f32.mrf.mxu0
      %v2115 = vadd.f32 0.0, %v2114
      %2116 = vmatmul.f32.gmra.mxu0 %v1093
      %v2117 = vpop.f32.mrf.mxu0
      %v2118 = vadd.f32 0.0, %v2117
      %2119 = vmatmul.f32.gmra.mxu0 %v1095
      %v2120 = vpop.f32.mrf.mxu0
      %v2121 = vadd.f32 0.0, %v2120
      %2122 = vmatmul.f32.gmra.mxu0 %v1097
      %v2123 = vpop.f32.mrf.mxu0
      %v2124 = vadd.f32 0.0, %v2123
      %2125 = vmatmul.f32.gmra.mxu0 %v1099
      %v2126 = vpop.f32.mrf.mxu0
      %v2127 = vadd.f32 0.0, %v2126
      %2128 = vmatmul.f32.gmra.mxu0 %v1101
      %v2129 = vpop.f32.mrf.mxu0
      %v2130 = vadd.f32 0.0, %v2129
      %2131 = vmatmul.f32.gmra.mxu0 %v1103
      %v2132 = vpop.f32.mrf.mxu0
      %v2133 = vadd.f32 0.0, %v2132
      %2134 = vmatmul.f32.gmra.mxu0 %v1105
      %v2135 = vpop.f32.mrf.mxu0
      %v2136 = vadd.f32 0.0, %v2135
      %2137 = vmatmul.f32.gmra.mxu0 %v1107
      %v2138 = vpop.f32.mrf.mxu0
      %v2139 = vadd.f32 0.0, %v2138
      %2140 = vmatmul.f32.gmra.mxu0 %v1109
      %v2141 = vpop.f32.mrf.mxu0
      %v2142 = vadd.f32 0.0, %v2141
      %2143 = vmatmul.f32.gmra.mxu0 %v1111
      %v2144 = vpop.f32.mrf.mxu0
      %v2145 = vadd.f32 0.0, %v2144
      %2146 = vmatmul.f32.gmra.mxu0 %v1113
      %v2147 = vpop.f32.mrf.mxu0
      %v2148 = vadd.f32 0.0, %v2147
      %2149 = vmatmul.f32.gmra.mxu0 %v1115
      %v2150 = vpop.f32.mrf.mxu0
      %v2151 = vadd.f32 0.0, %v2150
      %2152 = vmatmul.f32.gmra.mxu0 %v1117
      %v2153 = vpop.f32.mrf.mxu0
      %v2154 = vadd.f32 0.0, %v2153
      %2155 = vmatmul.f32.gmra.mxu0 %v1119
      %v2156 = vpop.f32.mrf.mxu0
      %v2157 = vadd.f32 0.0, %v2156
      %2158 = vmatmul.f32.gmra.mxu0 %v1121
      %v2159 = vpop.f32.mrf.mxu0
      %v2160 = vadd.f32 0.0, %v2159
      %2161 = vmatmul.f32.gmra.mxu0 %v1588
      %v2162 = vpop.f32.mrf.mxu0
      %v2163 = vadd.f32 0.0, %v2162
      %2164 = vmatmul.f32.gmra.mxu0 %v1590
      %v2165 = vpop.f32.mrf.mxu0
      %v2166 = vadd.f32 0.0, %v2165
      %2167 = vmatmul.f32.gmra.mxu0 %v2057
      %v2168 = vpop.f32.mrf.mxu0
      %v2169 = vadd.f32 0.0, %v2168
      %2170 = vmatmul.f32.gmra.mxu0 %v2059
      %v2171 = vpop.f32.mrf.mxu0
      %v2172 = vadd.f32 0.0, %v2171
      %2173 = vdwg.mxu0
      %v2174 = vadd.f32 %v2017, %v2079
      %v2175 = vadd.f32 %v2018, %v2082
      %v2176 = vadd.f32 %v2019, %v2085
      %v2177 = vadd.f32 %v2020, %v2088
      %v2178 = vadd.f32 %v2021, %v2091
      %v2179 = vadd.f32 %v2022, %v2094
      %v2180 = vadd.f32 %v2023, %v2097
      %v2181 = vadd.f32 %v2024, %v2100
      %v2182 = vadd.f32 %v2025, %v2103
      %v2183 = vadd.f32 %v2026, %v2106
      %v2184 = vadd.f32 %v2027, %v2109
      %v2185 = vadd.f32 %v2028, %v2112
      %v2186 = vadd.f32 %v2029, %v2115
      %v2187 = vadd.f32 %v2030, %v2118
      %v2188 = vadd.f32 %v2031, %v2121
      %v2189 = vadd.f32 %v2032, %v2124
      %v2190 = vadd.f32 %v2033, %v2127
      %v2191 = vadd.f32 %v2034, %v2130
      %v2192 = vadd.f32 %v2035, %v2133
      %v2193 = vadd.f32 %v2036, %v2136
      %v2194 = vadd.f32 %v2037, %v2139
      %v2195 = vadd.f32 %v2038, %v2142
      %v2196 = vadd.f32 %v2039, %v2145
      %v2197 = vadd.f32 %v2040, %v2148
      %v2198 = vadd.f32 %v2041, %v2151
      %v2199 = vadd.f32 %v2042, %v2154
      %v2200 = vadd.f32 %v2043, %v2157
      %v2201 = vadd.f32 %v2044, %v2160
      %v2202 = vadd.f32 %v2045, %v2163
      %v2203 = vadd.f32 %v2046, %v2166
      %v2204 = vadd.f32 %v2047, %v2169
      %v2205 = vadd.f32 %v2048, %v2172
      %s2206 = sld [smem:[#allocation3]]
      %vm2207 = vcmp.ge.f32.partialorder %v2174, 0.0
      %vm2208 = vcmp.ge.f32.partialorder %v2175, 0.0
      %vm2209 = vcmp.ge.f32.partialorder %v2176, 0.0
      %vm2210 = vcmp.ge.f32.partialorder %v2177, 0.0
      %vm2211 = vcmp.ge.f32.partialorder %v2178, 0.0
      %vm2212 = vcmp.ge.f32.partialorder %v2179, 0.0
      %vm2213 = vcmp.ge.f32.partialorder %v2180, 0.0
      %vm2214 = vcmp.ge.f32.partialorder %v2181, 0.0
      %vm2215 = vcmp.ge.f32.partialorder %v2182, 0.0
      %vm2216 = vcmp.ge.f32.partialorder %v2183, 0.0
      %vm2217 = vcmp.ge.f32.partialorder %v2184, 0.0
      %vm2218 = vcmp.ge.f32.partialorder %v2185, 0.0
      %vm2219 = vcmp.ge.f32.partialorder %v2186, 0.0
      %vm2220 = vcmp.ge.f32.partialorder %v2187, 0.0
      %vm2221 = vcmp.ge.f32.partialorder %v2188, 0.0
      %vm2222 = vcmp.ge.f32.partialorder %v2189, 0.0
      %vm2223 = vcmp.ge.f32.partialorder %v2190, 0.0
      %vm2224 = vcmp.ge.f32.partialorder %v2191, 0.0
      %vm2225 = vcmp.ge.f32.partialorder %v2192, 0.0
      %vm2226 = vcmp.ge.f32.partialorder %v2193, 0.0
      %vm2227 = vcmp.ge.f32.partialorder %v2194, 0.0
      %vm2228 = vcmp.ge.f32.partialorder %v2195, 0.0
      %vm2229 = vcmp.ge.f32.partialorder %v2196, 0.0
      %vm2230 = vcmp.ge.f32.partialorder %v2197, 0.0
      %vm2231 = vcmp.ge.f32.partialorder %v2198, 0.0
      %vm2232 = vcmp.ge.f32.partialorder %v2199, 0.0
      %vm2233 = vcmp.ge.f32.partialorder %v2200, 0.0
      %vm2234 = vcmp.ge.f32.partialorder %v2201, 0.0
      %vm2235 = vcmp.ge.f32.partialorder %v2202, 0.0
      %vm2236 = vcmp.ge.f32.partialorder %v2203, 0.0
      %vm2237 = vcmp.ge.f32.partialorder %v2204, 0.0
      %vm2238 = vcmp.ge.f32.partialorder %v2205, 0.0
      %v2239 = vstv %s2206
      %v2240 = vmul.f32 %v2239, %v2174
      %v2241 = vmul.f32 %v2239, %v2175
      %v2242 = vmul.f32 %v2239, %v2176
      %v2243 = vmul.f32 %v2239, %v2177
      %v2244 = vmul.f32 %v2239, %v2178
      %v2245 = vmul.f32 %v2239, %v2179
      %v2246 = vmul.f32 %v2239, %v2180
      %v2247 = vmul.f32 %v2239, %v2181
      %v2248 = vmul.f32 %v2239, %v2182
      %v2249 = vmul.f32 %v2239, %v2183
      %v2250 = vmul.f32 %v2239, %v2184
      %v2251 = vmul.f32 %v2239, %v2185
      %v2252 = vmul.f32 %v2239, %v2186
      %v2253 = vmul.f32 %v2239, %v2187
      %v2254 = vmul.f32 %v2239, %v2188
      %v2255 = vmul.f32 %v2239, %v2189
      %v2256 = vmul.f32 %v2239, %v2190
      %v2257 = vmul.f32 %v2239, %v2191
      %v2258 = vmul.f32 %v2239, %v2192
      %v2259 = vmul.f32 %v2239, %v2193
      %v2260 = vmul.f32 %v2239, %v2194
      %v2261 = vmul.f32 %v2239, %v2195
      %v2262 = vmul.f32 %v2239, %v2196
      %v2263 = vmul.f32 %v2239, %v2197
      %v2264 = vmul.f32 %v2239, %v2198
      %v2265 = vmul.f32 %v2239, %v2199
      %v2266 = vmul.f32 %v2239, %v2200
      %v2267 = vmul.f32 %v2239, %v2201
      %v2268 = vmul.f32 %v2239, %v2202
      %v2269 = vmul.f32 %v2239, %v2203
      %v2270 = vmul.f32 %v2239, %v2204
      %v2271 = vmul.f32 %v2239, %v2205
      %v2272 = vsel %vm2207, %v2174, %v2240
      %v2273 = vsel %vm2208, %v2175, %v2241
      %v2274 = vsel %vm2209, %v2176, %v2242
      %v2275 = vsel %vm2210, %v2177, %v2243
      %v2276 = vsel %vm2211, %v2178, %v2244
      %v2277 = vsel %vm2212, %v2179, %v2245
      %v2278 = vsel %vm2213, %v2180, %v2246
      %v2279 = vsel %vm2214, %v2181, %v2247
      %v2280 = vsel %vm2215, %v2182, %v2248
      %v2281 = vsel %vm2216, %v2183, %v2249
      %v2282 = vsel %vm2217, %v2184, %v2250
      %v2283 = vsel %vm2218, %v2185, %v2251
      %v2284 = vsel %vm2219, %v2186, %v2252
      %v2285 = vsel %vm2220, %v2187, %v2253
      %v2286 = vsel %vm2221, %v2188, %v2254
      %v2287 = vsel %vm2222, %v2189, %v2255
      %v2288 = vsel %vm2223, %v2190, %v2256
      %v2289 = vsel %vm2224, %v2191, %v2257
      %v2290 = vsel %vm2225, %v2192, %v2258
      %v2291 = vsel %vm2226, %v2193, %v2259
      %v2292 = vsel %vm2227, %v2194, %v2260
      %v2293 = vsel %vm2228, %v2195, %v2261
      %v2294 = vsel %vm2229, %v2196, %v2262
      %v2295 = vsel %vm2230, %v2197, %v2263
      %v2296 = vsel %vm2231, %v2198, %v2264
      %v2297 = vsel %vm2232, %v2199, %v2265
      %v2298 = vsel %vm2233, %v2200, %v2266
      %v2299 = vsel %vm2234, %v2201, %v2267
      %v2300 = vsel %vm2235, %v2202, %v2268
      %v2301 = vsel %vm2236, %v2203, %v2269
      %v2302 = vsel %vm2237, %v2204, %v2270
      %v2303 = vsel %vm2238, %v2205, %v2271
      %v2304 = vld [vmem:[%s3] sm:$0xff]
      %v2305 = vld [vmem:[%s3 + $0x8] sm:$0xff]
      %v2307 = vsel %vm278, %v246, 0
      %v2310 = vsel %vm278, %v247, 0
      %v2313 = vsel %vm278, %v248, 0
      %v2316 = vsel %vm278, %v249, 0
      %v2319 = vsel %vm278, %v250, 0
      %v2322 = vsel %vm278, %v251, 0
      %v2325 = vsel %vm278, %v252, 0
      %v2328 = vsel %vm278, %v253, 0
      %v2331 = vsel %vm278, %v254, 0
      %v2334 = vsel %vm278, %v255, 0
      %v2337 = vsel %vm278, %v256, 0
      %v2340 = vsel %vm278, %v257, 0
      %v2343 = vsel %vm278, %v258, 0
      %v2346 = vsel %vm278, %v259, 0
      %v2349 = vsel %vm278, %v260, 0
      %v2352 = vsel %vm278, %v261, 0
      %v2355 = vsel %vm278, %v262, 0
      %v2358 = vsel %vm278, %v263, 0
      %v2361 = vsel %vm278, %v264, 0
      %v2364 = vsel %vm278, %v265, 0
      %v2367 = vsel %vm278, %v266, 0
      %v2370 = vsel %vm278, %v267, 0
      %v2373 = vsel %vm278, %v268, 0
      %v2376 = vsel %vm278, %v269, 0
      %v2379 = vsel %vm278, %v270, 0
      %v2382 = vsel %vm278, %v271, 0
      %v2385 = vsel %vm278, %v272, 0
      %v2388 = vsel %vm278, %v273, 0
      %v2391 = vsel %vm278, %v274, 0
      %v2394 = vsel %vm278, %v275, 0
      %v2397 = vsel %vm278, %v276, 0
      %v2400 = vsel %vm278, %v277, 0
      %2402 = vmatpush.msra.mxu0 0.0
      %2403 = vmatpush.msra.mxu0 0.0
      %2404 = vmatpush.msra.mxu0 0.0
      %2405 = vmatpush.msra.mxu0 0.0
      %2406 = vmatpush.msra.mxu0 0.0
      %2407 = vmatpush.msra.mxu0 0.0
      %2408 = vmatpush.msra.mxu0 0.0
      %2409 = vmatpush.msra.mxu0 0.0
      %2410 = vmatpush.msra.mxu0 0.0
      %2411 = vmatpush.msra.mxu0 0.0
      %2412 = vmatpush.msra.mxu0 0.0
      %2413 = vmatpush.msra.mxu0 0.0
      %2414 = vmatpush.msra.mxu0 0.0
      %2415 = vmatpush.msra.mxu0 0.0
      %2416 = vmatpush.msra.mxu0 %v2305
      %2417 = vmatpush.msra.mxu0 %v2304
      %2418 = vmatmul.f32.gmra.mxu0 %v2307
      %v2419 = vpop.f32.mrf.mxu0
      %v2420 = vadd.f32 0.0, %v2419
      %2421 = vmatmul.f32.gmra.mxu0 %v2310
      %v2422 = vpop.f32.mrf.mxu0
      %v2423 = vadd.f32 0.0, %v2422
      %2424 = vmatmul.f32.gmra.mxu0 %v2313
      %v2425 = vpop.f32.mrf.mxu0
      %v2426 = vadd.f32 0.0, %v2425
      %2427 = vmatmul.f32.gmra.mxu0 %v2316
      %v2428 = vpop.f32.mrf.mxu0
      %v2429 = vadd.f32 0.0, %v2428
      %2430 = vmatmul.f32.gmra.mxu0 %v2319
      %v2431 = vpop.f32.mrf.mxu0
      %v2432 = vadd.f32 0.0, %v2431
      %2433 = vmatmul.f32.gmra.mxu0 %v2322
      %v2434 = vpop.f32.mrf.mxu0
      %v2435 = vadd.f32 0.0, %v2434
      %2436 = vmatmul.f32.gmra.mxu0 %v2325
      %v2437 = vpop.f32.mrf.mxu0
      %v2438 = vadd.f32 0.0, %v2437
      %2439 = vmatmul.f32.gmra.mxu0 %v2328
      %v2440 = vpop.f32.mrf.mxu0
      %v2441 = vadd.f32 0.0, %v2440
      %2442 = vmatmul.f32.gmra.mxu0 %v2331
      %v2443 = vpop.f32.mrf.mxu0
      %v2444 = vadd.f32 0.0, %v2443
      %2445 = vmatmul.f32.gmra.mxu0 %v2334
      %v2446 = vpop.f32.mrf.mxu0
      %v2447 = vadd.f32 0.0, %v2446
      %2448 = vmatmul.f32.gmra.mxu0 %v2337
      %v2449 = vpop.f32.mrf.mxu0
      %v2450 = vadd.f32 0.0, %v2449
      %2451 = vmatmul.f32.gmra.mxu0 %v2340
      %v2452 = vpop.f32.mrf.mxu0
      %v2453 = vadd.f32 0.0, %v2452
      %2454 = vmatmul.f32.gmra.mxu0 %v2343
      %v2455 = vpop.f32.mrf.mxu0
      %v2456 = vadd.f32 0.0, %v2455
      %2457 = vmatmul.f32.gmra.mxu0 %v2346
      %v2458 = vpop.f32.mrf.mxu0
      %v2459 = vadd.f32 0.0, %v2458
      %2460 = vmatmul.f32.gmra.mxu0 %v2349
      %v2461 = vpop.f32.mrf.mxu0
      %v2462 = vadd.f32 0.0, %v2461
      %2463 = vmatmul.f32.gmra.mxu0 %v2352
      %v2464 = vpop.f32.mrf.mxu0
      %v2465 = vadd.f32 0.0, %v2464
      %2466 = vmatmul.f32.gmra.mxu0 %v2355
      %v2467 = vpop.f32.mrf.mxu0
      %v2468 = vadd.f32 0.0, %v2467
      %2469 = vmatmul.f32.gmra.mxu0 %v2358
      %v2470 = vpop.f32.mrf.mxu0
      %v2471 = vadd.f32 0.0, %v2470
      %2472 = vmatmul.f32.gmra.mxu0 %v2361
      %v2473 = vpop.f32.mrf.mxu0
      %v2474 = vadd.f32 0.0, %v2473
      %2475 = vmatmul.f32.gmra.mxu0 %v2364
      %v2476 = vpop.f32.mrf.mxu0
      %v2477 = vadd.f32 0.0, %v2476
      %2478 = vmatmul.f32.gmra.mxu0 %v2367
      %v2479 = vpop.f32.mrf.mxu0
      %v2480 = vadd.f32 0.0, %v2479
      %2481 = vmatmul.f32.gmra.mxu0 %v2370
      %v2482 = vpop.f32.mrf.mxu0
      %v2483 = vadd.f32 0.0, %v2482
      %2484 = vmatmul.f32.gmra.mxu0 %v2373
      %v2485 = vpop.f32.mrf.mxu0
      %v2486 = vadd.f32 0.0, %v2485
      %2487 = vmatmul.f32.gmra.mxu0 %v2376
      %v2488 = vpop.f32.mrf.mxu0
      %v2489 = vadd.f32 0.0, %v2488
      %2490 = vmatmul.f32.gmra.mxu0 %v2379
      %v2491 = vpop.f32.mrf.mxu0
      %v2492 = vadd.f32 0.0, %v2491
      %2493 = vmatmul.f32.gmra.mxu0 %v2382
      %v2494 = vpop.f32.mrf.mxu0
      %v2495 = vadd.f32 0.0, %v2494
      %2496 = vmatmul.f32.gmra.mxu0 %v2385
      %v2497 = vpop.f32.mrf.mxu0
      %v2498 = vadd.f32 0.0, %v2497
      %2499 = vmatmul.f32.gmra.mxu0 %v2388
      %v2500 = vpop.f32.mrf.mxu0
      %v2501 = vadd.f32 0.0, %v2500
      %2502 = vmatmul.f32.gmra.mxu0 %v2391
      %v2503 = vpop.f32.mrf.mxu0
      %v2504 = vadd.f32 0.0, %v2503
      %2505 = vmatmul.f32.gmra.mxu0 %v2394
      %v2506 = vpop.f32.mrf.mxu0
      %v2507 = vadd.f32 0.0, %v2506
      %2508 = vmatmul.f32.gmra.mxu0 %v2397
      %v2509 = vpop.f32.mrf.mxu0
      %v2510 = vadd.f32 0.0, %v2509
      %2511 = vmatmul.f32.gmra.mxu0 %v2400
      %v2512 = vpop.f32.mrf.mxu0
      %v2513 = vadd.f32 0.0, %v2512
      %2514 = vdwg.mxu0
      %v2515 = vadd.f32 %v2272, %v2420
      %v2516 = vadd.f32 %v2273, %v2423
      %v2517 = vadd.f32 %v2274, %v2426
      %v2518 = vadd.f32 %v2275, %v2429
      %v2519 = vadd.f32 %v2276, %v2432
      %v2520 = vadd.f32 %v2277, %v2435
      %v2521 = vadd.f32 %v2278, %v2438
      %v2522 = vadd.f32 %v2279, %v2441
      %v2523 = vadd.f32 %v2280, %v2444
      %v2524 = vadd.f32 %v2281, %v2447
      %v2525 = vadd.f32 %v2282, %v2450
      %v2526 = vadd.f32 %v2283, %v2453
      %v2527 = vadd.f32 %v2284, %v2456
      %v2528 = vadd.f32 %v2285, %v2459
      %v2529 = vadd.f32 %v2286, %v2462
      %v2530 = vadd.f32 %v2287, %v2465
      %v2531 = vadd.f32 %v2288, %v2468
      %v2532 = vadd.f32 %v2289, %v2471
      %v2533 = vadd.f32 %v2290, %v2474
      %v2534 = vadd.f32 %v2291, %v2477
      %v2535 = vadd.f32 %v2292, %v2480
      %v2536 = vadd.f32 %v2293, %v2483
      %v2537 = vadd.f32 %v2294, %v2486
      %v2538 = vadd.f32 %v2295, %v2489
      %v2539 = vadd.f32 %v2296, %v2492
      %v2540 = vadd.f32 %v2297, %v2495
      %v2541 = vadd.f32 %v2298, %v2498
      %v2542 = vadd.f32 %v2299, %v2501
      %v2543 = vadd.f32 %v2300, %v2504
      %v2544 = vadd.f32 %v2301, %v2507
      %v2545 = vadd.f32 %v2302, %v2510
      %v2546 = vadd.f32 %v2303, %v2513
      %2547 = vst.msk [vmem:[%s245] sm:$0xff] %vm278, %v2515
      %2548 = vst.msk [vmem:[%s245 + $0x8] sm:$0xff] %vm278, %v2516
      %2549 = vst.msk [vmem:[%s245 + $0x10] sm:$0xff] %vm278, %v2517
      %2550 = vst.msk [vmem:[%s245 + $0x18] sm:$0xff] %vm278, %v2518
      %2551 = vst.msk [vmem:[%s245 + $0x20] sm:$0xff] %vm278, %v2519
      %2552 = vst.msk [vmem:[%s245 + $0x28] sm:$0xff] %vm278, %v2520
      %2553 = vst.msk [vmem:[%s245 + $0x30] sm:$0xff] %vm278, %v2521
      %2554 = vst.msk [vmem:[%s245 + $0x38] sm:$0xff] %vm278, %v2522
      %2555 = vst.msk [vmem:[%s245 + $0x40] sm:$0xff] %vm278, %v2523
      %2556 = vst.msk [vmem:[%s245 + $0x48] sm:$0xff] %vm278, %v2524
      %2557 = vst.msk [vmem:[%s245 + $0x50] sm:$0xff] %vm278, %v2525
      %2558 = vst.msk [vmem:[%s245 + $0x58] sm:$0xff] %vm278, %v2526
      %2559 = vst.msk [vmem:[%s245 + $0x60] sm:$0xff] %vm278, %v2527
      %2560 = vst.msk [vmem:[%s245 + $0x68] sm:$0xff] %vm278, %v2528
      %2561 = vst.msk [vmem:[%s245 + $0x70] sm:$0xff] %vm278, %v2529
      %2562 = vst.msk [vmem:[%s245 + $0x78] sm:$0xff] %vm278, %v2530
      %2563 = vst.msk [vmem:[%s245 + $0x80] sm:$0xff] %vm278, %v2531
      %2564 = vst.msk [vmem:[%s245 + $0x88] sm:$0xff] %vm278, %v2532
      %2565 = vst.msk [vmem:[%s245 + $0x90] sm:$0xff] %vm278, %v2533
      %2566 = vst.msk [vmem:[%s245 + $0x98] sm:$0xff] %vm278, %v2534
      %2567 = vst.msk [vmem:[%s245 + $0xa0] sm:$0xff] %vm278, %v2535
      %2568 = vst.msk [vmem:[%s245 + $0xa8] sm:$0xff] %vm278, %v2536
      %2569 = vst.msk [vmem:[%s245 + $0xb0] sm:$0xff] %vm278, %v2537
      %2570 = vst.msk [vmem:[%s245 + $0xb8] sm:$0xff] %vm278, %v2538
      %2571 = vst.msk [vmem:[%s245 + $0xc0] sm:$0xff] %vm278, %v2539
      %2572 = vst.msk [vmem:[%s245 + $0xc8] sm:$0xff] %vm278, %v2540
      %2573 = vst.msk [vmem:[%s245 + $0xd0] sm:$0xff] %vm278, %v2541
      %2574 = vst.msk [vmem:[%s245 + $0xd8] sm:$0xff] %vm278, %v2542
      %2575 = vst.msk [vmem:[%s245 + $0xe0] sm:$0xff] %vm278, %v2543
      %2576 = vst.msk [vmem:[%s245 + $0xe8] sm:$0xff] %vm278, %v2544
      %2577 = vst.msk [vmem:[%s245 + $0xf0] sm:$0xff] %vm278, %v2545
      %2578 = vst.msk [vmem:[%s245 + $0xf8] sm:$0xff] %vm278, %v2546
      %p2579 = scmp.lt.s32.totalorder %s17, 1
      %s2580 = scalar_select %p2579, %s17, 1
      %s2581 = smul.addr %s2580, 32
      %s2582 = smul.addr %s2581, 8
      %s2583 = scalar_lea.vmem %s5, %s2582
      // Predicated region
      $region41: #{hwab_pallas.11} parent=39 // pred_check
        %p2584 = pneg %p150
      $region42: #{hwab_pallas.11} parent=39 // pred_check_branch
        %2586 = sbr.rel (%p2584) target = $region44
      $region43: #{hwab_pallas.11} parent=39 // pred_region
        _
      $region44: #{hwab_pallas.11} parent=39 // pred_fallthru
        _
    $region40: #{hwab_pallas.11} parent=5 // pred_fallthru
      _
    %p2587 = scmp.le.s32.totalorder 2, %s12
    // Predicated region
    $region45: #{hwab_pallas.11} parent=5 // pred_check
      %p2588 = pneg %p2587
    $region46: #{hwab_pallas.11} parent=5 // pred_check_branch
      %2590 = sbr.rel (%p2588) target = $region48
    $region47: #{hwab_pallas.11} parent=5 // pred_region
      %s2591 = ssub.s32 %s12, 2
      // Predicated region
      $region49: #{hwab_pallas.11} parent=47 // pred_check
        %p2592 = pneg %p156
      $region50: #{hwab_pallas.11} parent=47 // pred_check_branch
        %2594 = sbr.rel (%p2592) target = $region52
      $region51: #{hwab_pallas.11} parent=47 // pred_region
        %p2595 = scmp.lt.s32.totalorder %s18, 1
        %s2596 = scalar_select %p2595, %s18, 1
        %s2597 = smul.addr %s2596, 32
        %s2598 = smul.addr %s2597, 8
        %s2599 = scalar_lea.vmem %s5, %s2598
      $region52: #{hwab_pallas.11} parent=47 // pred_fallthru
        _
    $region48: #{hwab_pallas.11} parent=5 // pred_fallthru
      _
  $region6: #{hwab_pallas.11} parent=0 // loop_footer
    %s16 = sadd.s32 1, %s12
  $region7: #{hwab_pallas.11} parent=0 // loop_footer_branch
    %11 = sbr.rel target = $region3
  $region8: #{hwab_pallas.11} parent=0 // loop_exit
    _

// kernel: hwab_pallas.10
$region0: #{hwab_pallas.10}
  #allocation0 [shape = 'u32[]', space=smem, size = 0x4, offset = 0x4, fixed_abs, tag = 'smem constant byte address 0x4 - core index']
  #allocation1 [shape = 'u32[72,128]{1,0:T(1,128)}', space=vmem, size = 0x9000, scoped, tag = 'internal scratch']
  #allocation2 [shape = 'f32[2,12,12,1]{3,2,1,0:T(8,128)}', space=vmem, size = 0x30000, scoped, tag = 'scratch operand']
  %s0 = inlined_call_operand.vmem [shape: f32[2,8,8,32], index: 0, kind: input, shape index: {}]
  %s1 = inlined_call_operand.vmem [shape: f32[2,1,32], index: 1, kind: input, shape index: {}]
  %s2 = inlined_call_operand.vmem [shape: f32[2,10,10,32], index: 2, kind: input, shape index: {}]
  %s3 = inlined_call_operand.vmem [shape: f32[50], index: 3, kind: input, shape index: {}]
  %s4 = inlined_call_operand.vmem [shape: f32[32,32], index: 4, kind: input, shape index: {}]
  %s5 = inlined_call_operand.vmem [shape: f32[32,32], index: 5, kind: input, shape index: {}]
  %s6 = inlined_call_operand.vmem [shape: f32[2,8,8,8], index: 6, kind: output, shape index: {0}]
  %s7 = inlined_call_operand.vmem [shape: f32[2,8,8,8], index: 7, kind: output, shape index: {1}]
  %s8 = inlined_call_operand.vmem [shape: f32[2,8,8,8], index: 8, kind: output, shape index: {2}]
  %s9 = inlined_call_operand.vmem [shape: f32[2,8,8,8], index: 9, kind: output, shape index: {3}]
  %10 = xla_tuple %s6, %s7, %s8, %s9
  %s11 = sld [smem:[#allocation0]]
  $region85: #{hwab_pallas.10} parent=0
    _
  %s13 = ssub.s32 1, %s11
  %s14 = scalar_select 0, %s13, %s11
  $region1: #{hwab_pallas.10} parent=0
    #allocation3 [shape = 'u8[512]{0}', space=smem, size = 0x200, scoped, tag = 'input window, operand 3, single buffered']
    #allocation4 [shape = 's32[2]{0}', space=sflag, size = 0x8, scoped, tag = 'scoped memory for hwab_pallas.10']
    %15 = vsyncpa [#allocation4], 0
    loop: start=0, step=1, limit=4
    $region2: #{hwab_pallas.10} parent=1 // loop_pre_header
      _
    $region3: #{hwab_pallas.10} parent=1 // loop_header
      %s17 = sphi 0, %s21
      %p18 = scmp.ge.s32.totalorder %s17, 4
      %s27 = sphi 0, %s29
      %s30 = sphi 0, %s27
      %s31 = sphi 0, %s30
      %s47 = sphi 0, %s31
      %s53 = sphi 0, %s55
      %s56 = sphi 0, %s53
      %s57 = sphi 0, %s56
      %s73 = sphi 0, %s57
      %s79 = sphi 0, %s81
      %s82 = sphi 0, %s79
      %s83 = sphi 0, %s82
      %s99 = sphi 0, %s83
      %s103 = sphi 0, %s103
      %s105 = sphi 0, %s103
      %s106 = sphi 0, %s105
      %s120 = sphi 0, %s106
      %s124 = sphi 0, %s124
      %s126 = sphi 0, %s124
      %s127 = sphi 0, %s126
      %s141 = sphi 0, %s127
      %s145 = sphi 0, %s145
      %s147 = sphi 0, %s145
      %s148 = sphi 0, %s147
      %s162 = sphi 0, %s148
      %s168 = sphi 0, %s170
      %s171 = sphi 0, %s168
      %s172 = sphi 0, %s171
      %s188 = sphi 0, %s172
      %s194 = sphi 0, %s196
      %s197 = sphi 0, %s194
      %s198 = sphi 0, %s197
      %s214 = sphi 0, %s198
      %s220 = sphi 0, %s222
      %s223 = sphi 0, %s220
      %s224 = sphi 0, %s223
      %s240 = sphi 0, %s224
      %s246 = sphi 0, %s248
      %s249 = sphi 0, %s246
      %s250 = sphi 0, %s249
      %s266 = sphi 0, %s250
    $region4: #{hwab_pallas.10} parent=1 // loop_header_branch
      %20 = sbr.rel (%p18) target = $region8
    $region5: #{hwab_pallas.10} parent=1 // loop_body
      %s22 = ssub.s32 %s17, 1
      %s23 = ssub.s32 %s17, 2
      %s24 = sadd.s32 %s17, 1
      %s25 = ssub.s32 %s17, %s24
      %p26 = scmp.eq.s32.totalorder %s25, 0
      %s28 = sadd.s32 %s27, 1
      %s29 = scalar_select %p26, %s27, %s28
      %p32 = pneg %p26
      %p33 = scmp.eq.s32.totalorder %s17, 1
      %p34 = por %p32, %p33
      %p35 = scmp.ne.s32.totalorder %s27, %s30
      %p36 = scmp.eq.s32.totalorder %s17, 0
      %p37 = por %p35, %p36
      %p38 = scmp.ne.s32.totalorder %s27, %s30
      %p39 = scmp.eq.s32.totalorder %s22, 1
      %p40 = por %p38, %p39
      %p41 = scmp.ne.s32.totalorder %s30, %s31
      %p42 = scmp.eq.s32.totalorder %s22, 0
      %p43 = por %p41, %p42
      %p44 = scmp.ne.s32.totalorder %s30, %s31
      %p45 = scmp.eq.s32.totalorder %s23, 1
      %p46 = por %p44, %p45
      %p48 = scmp.ne.s32.totalorder %s31, %s47
      %p49 = scmp.eq.s32.totalorder %s23, 0
      %p50 = por %p48, %p49
      %s51 = ssub.s32 %s17, %s24
      %p52 = scmp.eq.s32.totalorder %s51, 0
      %s54 = sadd.s32 %s53, 1
      %s55 = scalar_select %p52, %s53, %s54
      %p58 = pneg %p52
      %p59 = scmp.eq.s32.totalorder %s17, 1
      %p60 = por %p58, %p59
      %p61 = scmp.ne.s32.totalorder %s53, %s56
      %p62 = scmp.eq.s32.totalorder %s17, 0
      %p63 = por %p61, %p62
      %p64 = scmp.ne.s32.totalorder %s53, %s56
      %p65 = scmp.eq.s32.totalorder %s22, 1
      %p66 = por %p64, %p65
      %p67 = scmp.ne.s32.totalorder %s56, %s57
      %p68 = scmp.eq.s32.totalorder %s22, 0
      %p69 = por %p67, %p68
      %p70 = scmp.ne.s32.totalorder %s56, %s57
      %p71 = scmp.eq.s32.totalorder %s23, 1
      %p72 = por %p70, %p71
      %p74 = scmp.ne.s32.totalorder %s57, %s73
      %p75 = scmp.eq.s32.totalorder %s23, 0
      %p76 = por %p74, %p75
      %s77 = ssub.s32 %s17, %s24
      %p78 = scmp.eq.s32.totalorder %s77, 0
      %s80 = sadd.s32 %s79, 1
      %s81 = scalar_select %p78, %s79, %s80
      %p84 = pneg %p78
      %p85 = scmp.eq.s32.totalorder %s17, 1
      %p86 = por %p84, %p85
      %p87 = scmp.ne.s32.totalorder %s79, %s82
      %p88 = scmp.eq.s32.totalorder %s17, 0
      %p89 = por %p87, %p88
      %p90 = scmp.ne.s32.totalorder %s79, %s82
      %p91 = scmp.eq.s32.totalorder %s22, 1
      %p92 = por %p90, %p91
      %p93 = scmp.ne.s32.totalorder %s82, %s83
      %p94 = scmp.eq.s32.totalorder %s22, 0
      %p95 = por %p93, %p94
      %p96 = scmp.ne.s32.totalorder %s82, %s83
      %p97 = scmp.eq.s32.totalorder %s23, 1
      %p98 = por %p96, %p97
      %p100 = scmp.ne.s32.totalorder %s83, %s99
      %p101 = scmp.eq.s32.totalorder %s23, 0
      %p102 = por %p100, %p101
      %s104 = sadd.s32 %s103, 1
      %p107 = scmp.eq.s32.totalorder %s17, 1
      %p108 = scmp.ne.s32.totalorder %s103, %s105
      %p109 = scmp.eq.s32.totalorder %s17, 0
      %p110 = por %p108, %p109
      %p111 = scmp.ne.s32.totalorder %s103, %s105
      %p112 = scmp.eq.s32.totalorder %s22, 1
      %p113 = por %p111, %p112
      %p114 = scmp.ne.s32.totalorder %s105, %s106
      %p115 = scmp.eq.s32.totalorder %s22, 0
      %p116 = por %p114, %p115
      %p117 = scmp.ne.s32.totalorder %s105, %s106
      %p118 = scmp.eq.s32.totalorder %s23, 1
      %p119 = por %p117, %p118
      %p121 = scmp.ne.s32.totalorder %s106, %s120
      %p122 = scmp.eq.s32.totalorder %s23, 0
      %p123 = por %p121, %p122
      %s125 = sadd.s32 %s124, 1
      %p128 = scmp.eq.s32.totalorder %s17, 1
      %p129 = scmp.ne.s32.totalorder %s124, %s126
      %p130 = scmp.eq.s32.totalorder %s17, 0
      %p131 = por %p129, %p130
      %p132 = scmp.ne.s32.totalorder %s124, %s126
      %p133 = scmp.eq.s32.totalorder %s22, 1
      %p134 = por %p132, %p133
      %p135 = scmp.ne.s32.totalorder %s126, %s127
      %p136 = scmp.eq.s32.totalorder %s22, 0
      %p137 = por %p135, %p136
      %p138 = scmp.ne.s32.totalorder %s126, %s127
      %p139 = scmp.eq.s32.totalorder %s23, 1
      %p140 = por %p138, %p139
      %p142 = scmp.ne.s32.totalorder %s127, %s141
      %p143 = scmp.eq.s32.totalorder %s23, 0
      %p144 = por %p142, %p143
      %s146 = sadd.s32 %s145, 1
      %p149 = scmp.eq.s32.totalorder %s17, 1
      %p150 = scmp.ne.s32.totalorder %s145, %s147
      %p151 = scmp.eq.s32.totalorder %s17, 0
      %p152 = por %p150, %p151
      %p153 = scmp.ne.s32.totalorder %s145, %s147
      %p154 = scmp.eq.s32.totalorder %s22, 1
      %p155 = por %p153, %p154
      %p156 = scmp.ne.s32.totalorder %s147, %s148
      %p157 = scmp.eq.s32.totalorder %s22, 0
      %p158 = por %p156, %p157
      %p159 = scmp.ne.s32.totalorder %s147, %s148
      %p160 = scmp.eq.s32.totalorder %s23, 1
      %p161 = por %p159, %p160
      %p163 = scmp.ne.s32.totalorder %s148, %s162
      %p164 = scmp.eq.s32.totalorder %s23, 0
      %p165 = por %p163, %p164
      %s166 = ssub.s32 %s17, %s24
      %p167 = scmp.eq.s32.totalorder %s166, 0
      %s169 = sadd.s32 %s168, 1
      %s170 = scalar_select %p167, %s168, %s169
      %p173 = pneg %p167
      %p174 = scmp.eq.s32.totalorder %s17, 1
      %p175 = por %p173, %p174
      %p176 = scmp.ne.s32.totalorder %s168, %s171
      %p177 = scmp.eq.s32.totalorder %s17, 0
      %p178 = por %p176, %p177
      %p179 = scmp.ne.s32.totalorder %s168, %s171
      %p180 = scmp.eq.s32.totalorder %s22, 1
      %p181 = por %p179, %p180
      %p182 = scmp.ne.s32.totalorder %s171, %s172
      %p183 = scmp.eq.s32.totalorder %s22, 0
      %p184 = por %p182, %p183
      %p185 = scmp.ne.s32.totalorder %s171, %s172
      %p186 = scmp.eq.s32.totalorder %s23, 1
      %p187 = por %p185, %p186
      %p189 = scmp.ne.s32.totalorder %s172, %s188
      %p190 = scmp.eq.s32.totalorder %s23, 0
      %p191 = por %p189, %p190
      %s192 = ssub.s32 %s17, %s24
      %p193 = scmp.eq.s32.totalorder %s192, 0
      %s195 = sadd.s32 %s194, 1
      %s196 = scalar_select %p193, %s194, %s195
      %p199 = pneg %p193
      %p200 = scmp.eq.s32.totalorder %s17, 1
      %p201 = por %p199, %p200
      %p202 = scmp.ne.s32.totalorder %s194, %s197
      %p203 = scmp.eq.s32.totalorder %s17, 0
      %p204 = por %p202, %p203
      %p205 = scmp.ne.s32.totalorder %s194, %s197
      %p206 = scmp.eq.s32.totalorder %s22, 1
      %p207 = por %p205, %p206
      %p208 = scmp.ne.s32.totalorder %s197, %s198
      %p209 = scmp.eq.s32.totalorder %s22, 0
      %p210 = por %p208, %p209
      %p211 = scmp.ne.s32.totalorder %s197, %s198
      %p212 = scmp.eq.s32.totalorder %s23, 1
      %p213 = por %p211, %p212
      %p215 = scmp.ne.s32.totalorder %s198, %s214
      %p216 = scmp.eq.s32.totalorder %s23, 0
      %p217 = por %p215, %p216
      %s218 = ssub.s32 %s17, %s24
      %p219 = scmp.eq.s32.totalorder %s218, 0
      %s221 = sadd.s32 %s220, 1
      %s222 = scalar_select %p219, %s220, %s221
      %p225 = pneg %p219
      %p226 = scmp.eq.s32.totalorder %s17, 1
      %p227 = por %p225, %p226
      %p228 = scmp.ne.s32.totalorder %s220, %s223
      %p229 = scmp.eq.s32.totalorder %s17, 0
      %p230 = por %p228, %p229
      %p231 = scmp.ne.s32.totalorder %s220, %s223
      %p232 = scmp.eq.s32.totalorder %s22, 1
      %p233 = por %p231, %p232
      %p234 = scmp.ne.s32.totalorder %s223, %s224
      %p235 = scmp.eq.s32.totalorder %s22, 0
      %p236 = por %p234, %p235
      %p237 = scmp.ne.s32.totalorder %s223, %s224
      %p238 = scmp.eq.s32.totalorder %s23, 1
      %p239 = por %p237, %p238
      %p241 = scmp.ne.s32.totalorder %s224, %s240
      %p242 = scmp.eq.s32.totalorder %s23, 0
      %p243 = por %p241, %p242
      %s244 = ssub.s32 %s17, %s24
      %p245 = scmp.eq.s32.totalorder %s244, 0
      %s247 = sadd.s32 %s246, 1
      %s248 = scalar_select %p245, %s246, %s247
      %p251 = pneg %p245
      %p252 = scmp.eq.s32.totalorder %s17, 1
      %p253 = por %p251, %p252
      %p254 = scmp.ne.s32.totalorder %s246, %s249
      %p255 = scmp.eq.s32.totalorder %s17, 0
      %p256 = por %p254, %p255
      %p257 = scmp.ne.s32.totalorder %s246, %s249
      %p258 = scmp.eq.s32.totalorder %s22, 1
      %p259 = por %p257, %p258
      %p260 = scmp.ne.s32.totalorder %s249, %s250
      %p261 = scmp.eq.s32.totalorder %s22, 0
      %p262 = por %p260, %p261
      %p263 = scmp.ne.s32.totalorder %s249, %s250
      %p264 = scmp.eq.s32.totalorder %s23, 1
      %p265 = por %p263, %p264
      %p267 = scmp.ne.s32.totalorder %s250, %s266
      %p268 = scmp.eq.s32.totalorder %s23, 0
      %p269 = por %p267, %p268
      %p270 = scmp.le.s32.totalorder 1, %s17
      %p271 = scmp.lt.s32.totalorder %s17, 3
      %p272 = pnand %p270, %p271
      %p273 = pneg %p272
      // Predicated region
      $region9: #{hwab_pallas.10} parent=5 // pred_check
        _
      $region10: #{hwab_pallas.10} parent=5 // pred_check_branch
        %275 = sbr.rel (%p272) target = $region12
      $region11: #{hwab_pallas.10} parent=5 // pred_region
        %s276 = ssub.s32 %s17, 1
        // Predicated region
        $region13: #{hwab_pallas.10} parent=11 // pred_check
          %p277 = pneg %p116
        $region14: #{hwab_pallas.10} parent=11 // pred_check_branch
          %279 = sbr.rel (%p277) target = $region16
        $region15: #{hwab_pallas.10} parent=11 // pred_region
          %281 = vsyncadd [#allocation4], 0
          %s283 = sshll.u32 %s3, 4
          %s284 = int_to_ptr.vmem [resolvable:$true] %s283
          %286 = dma.vmem_to_smem %s284, 16, [#allocation3], [#allocation4]
        $region16: #{hwab_pallas.10} parent=11 // pred_fallthru
          _
        // Predicated region
        $region17: #{hwab_pallas.10} parent=11 // pred_check
          %p287 = pneg %p137
        $region18: #{hwab_pallas.10} parent=11 // pred_check_branch
          %289 = sbr.rel (%p287) target = $region20
        $region19: #{hwab_pallas.10} parent=11 // pred_region
          _
        $region20: #{hwab_pallas.10} parent=11 // pred_fallthru
          _
        // Predicated region
        $region21: #{hwab_pallas.10} parent=11 // pred_check
          %p290 = pneg %p158
        $region22: #{hwab_pallas.10} parent=11 // pred_check_branch
          %292 = sbr.rel (%p290) target = $region24
        $region23: #{hwab_pallas.10} parent=11 // pred_region
          _
        $region24: #{hwab_pallas.10} parent=11 // pred_fallthru
          _
      $region12: #{hwab_pallas.10} parent=5 // pred_fallthru
        _
      %p293 = scmp.lt.s32.totalorder %s17, 2
      // Predicated region
      $region25: #{hwab_pallas.10} parent=5 // pred_check
        %p294 = pneg %p293
      $region26: #{hwab_pallas.10} parent=5 // pred_check_branch
        %296 = sbr.rel (%p294) target = $region28
      $region27: #{hwab_pallas.10} parent=5 // pred_region
        // Predicated region
        $region29: #{hwab_pallas.10} parent=27 // pred_check
          %p297 = pneg %p37
        $region30: #{hwab_pallas.10} parent=27 // pred_check_branch
          %299 = sbr.rel (%p297) target = $region32
        $region31: #{hwab_pallas.10} parent=27 // pred_region
          %p300 = scmp.lt.s32.totalorder %s17, 1
          %s301 = scalar_select %p300, %s17, 1
          %s302 = smul.addr %s301, 8
          %s303 = smul.addr %s302, 8
          %s304 = scalar_lea.vmem %s0, %s303
        $region32: #{hwab_pallas.10} parent=27 // pred_fallthru
          _
        // Predicated region
        $region33: #{hwab_pallas.10} parent=27 // pred_check
          %p305 = pneg %p63
        $region34: #{hwab_pallas.10} parent=27 // pred_check_branch
          %307 = sbr.rel (%p305) target = $region36
        $region35: #{hwab_pallas.10} parent=27 // pred_region
          %p308 = scmp.lt.s32.totalorder %s17, 1
          %s309 = scalar_select %p308, %s17, 1
          %s310 = scalar_lea.vmem %s1, %s309
        $region36: #{hwab_pallas.10} parent=27 // pred_fallthru
          _
        // Predicated region
        $region37: #{hwab_pallas.10} parent=27 // pred_check
          %p311 = pneg %p89
        $region38: #{hwab_pallas.10} parent=27 // pred_check_branch
          %313 = sbr.rel (%p311) target = $region40
        $region39: #{hwab_pallas.10} parent=27 // pred_region
          %p314 = scmp.lt.s32.totalorder %s17, 1
          %s315 = scalar_select %p314, %s17, 1
          %s316 = smul.addr %s315, 20
          %s317 = smul.addr %s316, 8
          %s318 = scalar_lea.vmem %s2, %s317
        $region40: #{hwab_pallas.10} parent=27 // pred_fallthru
          _
      $region28: #{hwab_pallas.10} parent=5 // pred_fallthru
        _
      %p319 = scmp.le.s32.totalorder 1, %s17
      %p320 = scmp.lt.s32.totalorder %s17, 3
      %p321 = pnand %p319, %p320
      %p322 = pneg %p321
      // Predicated region
      $region41: #{hwab_pallas.10} parent=5 // pred_check
        _
      $region42: #{hwab_pallas.10} parent=5 // pred_check_branch
        %324 = sbr.rel (%p321) target = $region44
      $region43: #{hwab_pallas.10} parent=5 // pred_region
        %s325 = ssub.s32 %s17, 1
        // Predicated region
        $region45: #{hwab_pallas.10} parent=43 // pred_check
          %p326 = pneg %p116
        $region46: #{hwab_pallas.10} parent=43 // pred_check_branch
          %328 = sbr.rel (%p326) target = $region48
        $region47: #{hwab_pallas.10} parent=43 // pred_region
          %330 = dma.done [#allocation4], 16
        $region48: #{hwab_pallas.10} parent=43 // pred_fallthru
          _
        %331 = sfence
        %p332 = scmp.lt.s32.totalorder %s22, 1
        %s333 = scalar_select %p332, %s22, 1
        %s334 = smul.addr %s333, 8
        %s335 = smul.addr %s334, 8
        %s336 = scalar_lea.vmem %s0, %s335
        %p337 = pneg %p43
        %p338 = pneg %p40
        %p339 = scmp.lt.s32.totalorder %s22, 1
        %s340 = scalar_select %p339, %s22, 1
        %s341 = scalar_lea.vmem %s1, %s340
        %p342 = pneg %p69
        %p343 = pneg %p66
        %p344 = scmp.lt.s32.totalorder %s22, 1
        %s345 = scalar_select %p344, %s22, 1
        %s346 = smul.addr %s345, 20
        %s347 = smul.addr %s346, 8
        %s348 = scalar_lea.vmem %s2, %s347
        %p349 = pneg %p95
        %p350 = pneg %p92
        %p351 = pneg %p116
        %p352 = pneg %p113
        %p353 = pneg %p137
        %p354 = pneg %p134
        %p355 = pneg %p158
        %p356 = pneg %p155
        %p357 = pneg %p184
        %p358 = pneg %p181
        %p359 = scmp.lt.s32.totalorder %s22, 1
        %s360 = scalar_select %p359, %s22, 1
        %s361 = smul.addr %s360, 8
        %s362 = smul.addr %s361, 8
        %s363 = scalar_lea.vmem %s6, %s362
        %p364 = pneg %p210
        %p365 = pneg %p207
        %p366 = scmp.lt.s32.totalorder %s22, 1
        %s367 = scalar_select %p366, %s22, 1
        %s368 = smul.addr %s367, 8
        %s369 = smul.addr %s368, 8
        %s370 = scalar_lea.vmem %s7, %s369
        %p371 = pneg %p236
        %p372 = pneg %p233
        %p373 = scmp.lt.s32.totalorder %s22, 1
        %s374 = scalar_select %p373, %s22, 1
        %s375 = smul.addr %s374, 8
        %s376 = smul.addr %s375, 8
        %s377 = scalar_lea.vmem %s8, %s376
        %p378 = pneg %p262
        %p379 = pneg %p259
        %p380 = scmp.lt.s32.totalorder %s22, 1
        %s381 = scalar_select %p380, %s22, 1
        %s382 = smul.addr %s381, 8
        %s383 = smul.addr %s382, 8
        %s384 = scalar_lea.vmem %s9, %s383
        %p385 = scmp.lt.s32.totalorder %s22, 1
        %s386 = scalar_select %p385, %s22, 1
        %s387 = smul.addr %s386, 8
        %s388 = smul.addr %s387, 8
        %s389 = scalar_lea.vmem %s0, %s388
        %p390 = scmp.lt.s32.totalorder %s22, 1
        %s391 = scalar_select %p390, %s22, 1
        %s392 = scalar_lea.vmem %s1, %s391
        %p393 = scmp.lt.s32.totalorder %s22, 1
        %s394 = scalar_select %p393, %s22, 1
        %s395 = smul.addr %s394, 20
        %s396 = smul.addr %s395, 8
        %s397 = scalar_lea.vmem %s2, %s396
        %p398 = scmp.lt.s32.totalorder %s22, 1
        %s399 = scalar_select %p398, %s22, 1
        %s400 = smul.addr %s399, 8
        %s401 = smul.addr %s400, 8
        %s402 = scalar_lea.vmem %s6, %s401
        %p403 = scmp.lt.s32.totalorder %s22, 1
        %s404 = scalar_select %p403, %s22, 1
        %s405 = smul.addr %s404, 8
        %s406 = smul.addr %s405, 8
        %s407 = scalar_lea.vmem %s7, %s406
        %p408 = scmp.lt.s32.totalorder %s22, 1
        %s409 = scalar_select %p408, %s22, 1
        %s410 = smul.addr %s409, 8
        %s411 = smul.addr %s410, 8
        %s412 = scalar_lea.vmem %s8, %s411
        %p413 = scmp.lt.s32.totalorder %s22, 1
        %s414 = scalar_select %p413, %s22, 1
        %s415 = smul.addr %s414, 8
        %s416 = smul.addr %s415, 8
        %s417 = scalar_lea.vmem %s9, %s416
        %v418 = vld [vmem:[%s389] sm:$0xff]
        %v419 = vld [vmem:[%s389 + $0x8] sm:$0xff]
        %v420 = vld [vmem:[%s389 + $0x10] sm:$0xff]
        %v421 = vld [vmem:[%s389 + $0x18] sm:$0xff]
        %v422 = vld [vmem:[%s389 + $0x20] sm:$0xff]
        %v423 = vld [vmem:[%s389 + $0x28] sm:$0xff]
        %v424 = vld [vmem:[%s389 + $0x30] sm:$0xff]
        %v425 = vld [vmem:[%s389 + $0x38] sm:$0xff]
        %vm426 = vcmask 7168
        %427 = vst.msk [vmem:[#allocation2] sm:$0xff] %vm426, 0.0
        %vm428 = vcmask 3072
        %429 = vst.msk [vmem:[#allocation2 + $0x8] sm:$0xf] %vm428, 0.0
        %430 = vst.msk [vmem:[#allocation2 + $0x10] sm:$0xff] %vm426, 0.0
        %431 = vst.msk [vmem:[#allocation2 + $0x18] sm:$0xf] %vm428, 0.0
        %432 = vst.msk [vmem:[#allocation2 + $0x20] sm:$0xff] %vm426, 0.0
        %433 = vst.msk [vmem:[#allocation2 + $0x28] sm:$0xf] %vm428, 0.0
        %434 = vst.msk [vmem:[#allocation2 + $0x30] sm:$0xff] %vm426, 0.0
        %435 = vst.msk [vmem:[#allocation2 + $0x38] sm:$0xf] %vm428, 0.0
        %436 = vst.msk [vmem:[#allocation2 + $0x40] sm:$0xff] %vm426, 0.0
        %437 = vst.msk [vmem:[#allocation2 + $0x48] sm:$0xf] %vm428, 0.0
        %438 = vst.msk [vmem:[#allocation2 + $0x50] sm:$0xff] %vm426, 0.0
        %439 = vst.msk [vmem:[#allocation2 + $0x58] sm:$0xf] %vm428, 0.0
        %440 = vst.msk [vmem:[#allocation2 + $0x60] sm:$0xff] %vm426, 0.0
        %441 = vst.msk [vmem:[#allocation2 + $0x68] sm:$0xf] %vm428, 0.0
        %442 = vst.msk [vmem:[#allocation2 + $0x70] sm:$0xff] %vm426, 0.0
        %443 = vst.msk [vmem:[#allocation2 + $0x78] sm:$0xf] %vm428, 0.0
        %444 = vst.msk [vmem:[#allocation2 + $0x80] sm:$0xff] %vm426, 0.0
        %445 = vst.msk [vmem:[#allocation2 + $0x88] sm:$0xf] %vm428, 0.0
        %446 = vst.msk [vmem:[#allocation2 + $0x90] sm:$0xff] %vm426, 0.0
        %447 = vst.msk [vmem:[#allocation2 + $0x98] sm:$0xf] %vm428, 0.0
        %448 = vst.msk [vmem:[#allocation2 + $0xa0] sm:$0xff] %vm426, 0.0
        %449 = vst.msk [vmem:[#allocation2 + $0xa8] sm:$0xf] %vm428, 0.0
        %450 = vst.msk [vmem:[#allocation2 + $0xb0] sm:$0xff] %vm426, 0.0
        %451 = vst.msk [vmem:[#allocation2 + $0xb8] sm:$0xf] %vm428, 0.0
        %452 = vst.msk [vmem:[#allocation2 + $0xc0] sm:$0xff] %vm426, 0.0
        %453 = vst.msk [vmem:[#allocation2 + $0xc8] sm:$0xf] %vm428, 0.0
        %454 = vst.msk [vmem:[#allocation2 + $0xd0] sm:$0xff] %vm426, 0.0
        %455 = vst.msk [vmem:[#allocation2 + $0xd8] sm:$0xf] %vm428, 0.0
        %456 = vst.msk [vmem:[#allocation2 + $0xe0] sm:$0xff] %vm426, 0.0
        %457 = vst.msk [vmem:[#allocation2 + $0xe8] sm:$0xf] %vm428, 0.0
        %458 = vst.msk [vmem:[#allocation2 + $0xf0] sm:$0xff] %vm426, 0.0
        %459 = vst.msk [vmem:[#allocation2 + $0xf8] sm:$0xf] %vm428, 0.0
        %460 = vst.msk [vmem:[#allocation2 + $0x100] sm:$0xff] %vm426, 0.0
        %461 = vst.msk [vmem:[#allocation2 + $0x108] sm:$0xf] %vm428, 0.0
        %462 = vst.msk [vmem:[#allocation2 + $0x110] sm:$0xff] %vm426, 0.0
        %463 = vst.msk [vmem:[#allocation2 + $0x118] sm:$0xf] %vm428, 0.0
        %464 = vst.msk [vmem:[#allocation2 + $0x120] sm:$0xff] %vm426, 0.0
        %465 = vst.msk [vmem:[#allocation2 + $0x128] sm:$0xf] %vm428, 0.0
        %466 = vst.msk [vmem:[#allocation2 + $0x130] sm:$0xff] %vm426, 0.0
        %467 = vst.msk [vmem:[#allocation2 + $0x138] sm:$0xf] %vm428, 0.0
        %468 = vst.msk [vmem:[#allocation2 + $0x140] sm:$0xff] %vm426, 0.0
        %469 = vst.msk [vmem:[#allocation2 + $0x148] sm:$0xf] %vm428, 0.0
        %470 = vst.msk [vmem:[#allocation2 + $0x150] sm:$0xff] %vm426, 0.0
        %471 = vst.msk [vmem:[#allocation2 + $0x158] sm:$0xf] %vm428, 0.0
        %472 = vst.msk [vmem:[#allocation2 + $0x160] sm:$0xff] %vm426, 0.0
        %473 = vst.msk [vmem:[#allocation2 + $0x168] sm:$0xf] %vm428, 0.0
        %474 = vst.msk [vmem:[#allocation2 + $0x170] sm:$0xff] %vm426, 0.0
        %475 = vst.msk [vmem:[#allocation2 + $0x178] sm:$0xf] %vm428, 0.0
        %vm476 = vcmask 261120
        %v477 = vsel %vm476, %v418, -inf
        %478 = vmax.xlane.f32.xlu0 %v477
        %v479 = vpop.xlane.xlu0 %478
        %v480 = vsel %vm476, %v419, -inf
        %481 = vmax.xlane.f32.xlu0 %v480
        %v482 = vpop.xlane.xlu0 %481
        %v483 = vsel %vm476, %v420, -inf
        %484 = vmax.xlane.f32.xlu0 %v483
        %v485 = vpop.xlane.xlu0 %484
        %v486 = vsel %vm476, %v421, -inf
        %487 = vmax.xlane.f32.xlu0 %v486
        %v488 = vpop.xlane.xlu0 %487
        %v489 = vsel %vm476, %v422, -inf
        %490 = vmax.xlane.f32.xlu0 %v489
        %v491 = vpop.xlane.xlu0 %490
        %v492 = vsel %vm476, %v423, -inf
        %493 = vmax.xlane.f32.xlu0 %v492
        %v494 = vpop.xlane.xlu0 %493
        %v495 = vsel %vm476, %v424, -inf
        %496 = vmax.xlane.f32.xlu0 %v495
        %v497 = vpop.xlane.xlu0 %496
        %v498 = vsel %vm476, %v425, -inf
        %499 = vmax.xlane.f32.xlu0 %v498
        %v500 = vpop.xlane.xlu0 %499
        %s501 = scalar_lea.vmem [#allocation2], 32
        %502 = vst.msk [vmem:[%s501 + $0x2] sm:$0xff] %vm426, %v479
        %503 = vst.msk [vmem:[%s501 + $0x12] sm:$0xff] %vm426, %v482
        %504 = vst.msk [vmem:[%s501 + $0x22] sm:$0xff] %vm426, %v485
        %505 = vst.msk [vmem:[%s501 + $0x32] sm:$0xff] %vm426, %v488
        %506 = vst.msk [vmem:[%s501 + $0x42] sm:$0xff] %vm426, %v491
        %507 = vst.msk [vmem:[%s501 + $0x52] sm:$0xff] %vm426, %v494
        %508 = vst.msk [vmem:[%s501 + $0x62] sm:$0xff] %vm426, %v497
        %509 = vst.msk [vmem:[%s501 + $0x72] sm:$0xff] %vm426, %v500
        %v510 = vsel %vm476, %v418, 0.0
        %511 = vadd.xlane.f32.xlu0 %v510
        %v512 = vpop.xlane.xlu0 %511
        %v513 = vsel %vm476, %v419, 0.0
        %514 = vadd.xlane.f32.xlu0 %v513
        %v515 = vpop.xlane.xlu0 %514
        %v516 = vsel %vm476, %v420, 0.0
        %517 = vadd.xlane.f32.xlu0 %v516
        %v518 = vpop.xlane.xlu0 %517
        %v519 = vsel %vm476, %v421, 0.0
        %520 = vadd.xlane.f32.xlu0 %v519
        %v521 = vpop.xlane.xlu0 %520
        %v522 = vsel %vm476, %v422, 0.0
        %523 = vadd.xlane.f32.xlu0 %v522
        %v524 = vpop.xlane.xlu0 %523
        %v525 = vsel %vm476, %v423, 0.0
        %526 = vadd.xlane.f32.xlu0 %v525
        %v527 = vpop.xlane.xlu0 %526
        %v528 = vsel %vm476, %v424, 0.0
        %529 = vadd.xlane.f32.xlu0 %v528
        %v530 = vpop.xlane.xlu0 %529
        %v531 = vsel %vm476, %v425, 0.0
        %532 = vadd.xlane.f32.xlu0 %v531
        %v533 = vpop.xlane.xlu0 %532
        %v534 = vrcp.pop 32.0
        %v535 = vmul.f32 32.0, %v534
        %v536 = vsub.f32 1.0, %v535
        %v537 = vmul.f32 %v534, %v536
        %v538 = vadd.f32 %v534, %v537
        %vm539 = vweird.f32 %v534
        %v540 = vsel %vm539, %v534, %v538
        %v541 = vmul.f32 %v512, %v540
        %v542 = vmul.f32 %v515, %v540
        %v543 = vmul.f32 %v518, %v540
        %v544 = vmul.f32 %v521, %v540
        %v545 = vmul.f32 %v524, %v540
        %v546 = vmul.f32 %v527, %v540
        %v547 = vmul.f32 %v530, %v540
        %v548 = vmul.f32 %v533, %v540
        %s549 = scalar_lea.vmem [#allocation2], 224
        %550 = vst.msk [vmem:[%s549 + $0x2] sm:$0xff] %vm426, %v541
        %551 = vst.msk [vmem:[%s549 + $0x12] sm:$0xff] %vm426, %v542
        %552 = vst.msk [vmem:[%s549 + $0x22] sm:$0xff] %vm426, %v543
        %553 = vst.msk [vmem:[%s549 + $0x32] sm:$0xff] %vm426, %v544
        %554 = vst.msk [vmem:[%s549 + $0x42] sm:$0xff] %vm426, %v545
        %555 = vst.msk [vmem:[%s549 + $0x52] sm:$0xff] %vm426, %v546
        %556 = vst.msk [vmem:[%s549 + $0x62] sm:$0xff] %vm426, %v547
        %557 = vst.msk [vmem:[%s549 + $0x72] sm:$0xff] %vm426, %v548
        %v558 = vld [vmem:[#allocation2] sm:$0xff]
        %v559 = vld [vmem:[#allocation2 + $0x8] sm:$0xf]
        %v560 = vld [vmem:[#allocation2 + $0x10] sm:$0xff]
        %v561 = vld [vmem:[#allocation2 + $0x18] sm:$0xf]
        %v562 = vld [vmem:[#allocation2 + $0x20] sm:$0xff]
        %v563 = vld [vmem:[#allocation2 + $0x28] sm:$0xf]
        %v564 = vld [vmem:[#allocation2 + $0x30] sm:$0xff]
        %v565 = vld [vmem:[#allocation2 + $0x38] sm:$0xf]
        %v566 = vld [vmem:[#allocation2 + $0x40] sm:$0xff]
        %v567 = vld [vmem:[#allocation2 + $0x48] sm:$0xf]
        %v568 = vld [vmem:[#allocation2 + $0x50] sm:$0xff]
        %v569 = vld [vmem:[#allocation2 + $0x58] sm:$0xf]
        %v570 = vld [vmem:[#allocation2 + $0x60] sm:$0xff]
        %v571 = vld [vmem:[#allocation2 + $0x68] sm:$0xf]
        %v572 = vld [vmem:[#allocation2 + $0x70] sm:$0xff]
        %v573 = vld [vmem:[#allocation2 + $0x78] sm:$0xf]
        %v574 = vld [vmem:[#allocation2 + $0x80] sm:$0xff]
        %v575 = vld [vmem:[#allocation2 + $0x88] sm:$0xf]
        %v576 = vld [vmem:[#allocation2 + $0x90] sm:$0xff]
        %v577 = vld [vmem:[#allocation2 + $0x98] sm:$0xf]
        %v578 = vld [vmem:[#allocation2 + $0xa0] sm:$0xff]
        %v579 = vld [vmem:[#allocation2 + $0xa8] sm:$0xf]
        %v580 = vld [vmem:[#allocation2 + $0xb0] sm:$0xff]
        %v581 = vld [vmem:[#allocation2 + $0xb8] sm:$0xf]
        %v582 = vld [vmem:[#allocation2 + $0xc0] sm:$0xff]
        %v583 = vld [vmem:[#allocation2 + $0xc8] sm:$0xf]
        %v584 = vld [vmem:[#allocation2 + $0xd0] sm:$0xff]
        %v585 = vld [vmem:[#allocation2 + $0xd8] sm:$0xf]
        %v586 = vld [vmem:[#allocation2 + $0xe0] sm:$0xff]
        %v587 = vld [vmem:[#allocation2 + $0xe8] sm:$0xf]
        %v588 = vld [vmem:[#allocation2 + $0xf0] sm:$0xff]
        %v589 = vld [vmem:[#allocation2 + $0xf8] sm:$0xf]
        %v590 = vld [vmem:[#allocation2 + $0x100] sm:$0xff]
        %v591 = vld [vmem:[#allocation2 + $0x108] sm:$0xf]
        %v592 = vld [vmem:[#allocation2 + $0x110] sm:$0xff]
        %v593 = vld [vmem:[#allocation2 + $0x118] sm:$0xf]
        %v594 = vld [vmem:[#allocation2 + $0x120] sm:$0xff]
        %v595 = vld [vmem:[#allocation2 + $0x128] sm:$0xf]
        %v596 = vld [vmem:[#allocation2 + $0x130] sm:$0xff]
        %v597 = vld [vmem:[#allocation2 + $0x138] sm:$0xf]
        %v598 = vld [vmem:[#allocation2 + $0x140] sm:$0xff]
        %v599 = vld [vmem:[#allocation2 + $0x148] sm:$0xf]
        %v600 = vld [vmem:[#allocation2 + $0x150] sm:$0xff]
        %v601 = vld [vmem:[#allocation2 + $0x158] sm:$0xf]
        %v602 = vld [vmem:[#allocation2 + $0x160] sm:$0xff]
        %v603 = vld [vmem:[#allocation2 + $0x168] sm:$0xf]
        %v604 = vld [vmem:[#allocation2 + $0x170] sm:$0xff]
        %v605 = vld [vmem:[#allocation2 + $0x178] sm:$0xf]
        %s606 = sld [smem:[#allocation3]]
        %v607 = vstv %s606
        %v608 = vmul.f32 %v607, %v558
        %v609 = vmul.f32 %v607, %v560
        %v610 = vmul.f32 %v607, %v562
        %v611 = vmul.f32 %v607, %v564
        %v612 = vmul.f32 %v607, %v566
        %v613 = vmul.f32 %v607, %v568
        %v614 = vmul.f32 %v607, %v570
        %v615 = vmul.f32 %v607, %v572
        %v616 = vadd.f32 %v608, 0.0
        %v617 = vadd.f32 %v609, 0.0
        %v618 = vadd.f32 %v610, 0.0
        %v619 = vadd.f32 %v611, 0.0
        %v620 = vadd.f32 %v612, 0.0
        %v621 = vadd.f32 %v613, 0.0
        %v622 = vadd.f32 %v614, 0.0
        %v623 = vadd.f32 %v615, 0.0
        %s624 = sld [smem:[#allocation3 + $0x1]]
        %v625 = vstv %s624
        %v626 = vmul.f32 %v625, %v558
        %v627 = vmul.f32 %v625, %v559
        %v628 = vmul.f32 %v625, %v560
        %v629 = vmul.f32 %v625, %v561
        %v630 = vmul.f32 %v625, %v562
        %v631 = vmul.f32 %v625, %v563
        %v632 = vmul.f32 %v625, %v564
        %v633 = vmul.f32 %v625, %v565
        %v634 = vmul.f32 %v625, %v566
        %v635 = vmul.f32 %v625, %v567
        %v636 = vmul.f32 %v625, %v568
        %v637 = vmul.f32 %v625, %v569
        %v638 = vmul.f32 %v625, %v570
        %v639 = vmul.f32 %v625, %v571
        %v640 = vmul.f32 %v625, %v572
        %v641 = vmul.f32 %v625, %v573
        %vm658 = vcmask 1046528
        %v659 = vrot.slane %v626, 1
        %v660 = vrot.slane %v627, 1
        %v661 = vsel %vm658, %v659, %v660
        %v662 = vrot.slane %v628, 1
        %v663 = vrot.slane %v629, 1
        %v664 = vsel %vm658, %v662, %v663
        %v665 = vrot.slane %v630, 1
        %v666 = vrot.slane %v631, 1
        %v667 = vsel %vm658, %v665, %v666
        %v668 = vrot.slane %v632, 1
        %v669 = vrot.slane %v633, 1
        %v670 = vsel %vm658, %v668, %v669
        %v671 = vrot.slane %v634, 1
        %v672 = vrot.slane %v635, 1
        %v673 = vsel %vm658, %v671, %v672
        %v674 = vrot.slane %v636, 1
        %v675 = vrot.slane %v637, 1
        %v676 = vsel %vm658, %v674, %v675
        %v677 = vrot.slane %v638, 1
        %v678 = vrot.slane %v639, 1
        %v679 = vsel %vm658, %v677, %v678
        %v680 = vrot.slane %v640, 1
        %v681 = vrot.slane %v641, 1
        %v682 = vsel %vm658, %v680, %v681
        %v691 = vadd.f32 %v616, %v661
        %v692 = vadd.f32 %v617, %v664
        %v693 = vadd.f32 %v618, %v667
        %v694 = vadd.f32 %v619, %v670
        %v695 = vadd.f32 %v620, %v673
        %v696 = vadd.f32 %v621, %v676
        %v697 = vadd.f32 %v622, %v679
        %v698 = vadd.f32 %v623, %v682
        %s699 = sld [smem:[#allocation3 + $0x2]]
        %v700 = vstv %s699
        %v701 = vmul.f32 %v700, %v558
        %v702 = vmul.f32 %v700, %v559
        %v703 = vmul.f32 %v700, %v560
        %v704 = vmul.f32 %v700, %v561
        %v705 = vmul.f32 %v700, %v562
        %v706 = vmul.f32 %v700, %v563
        %v707 = vmul.f32 %v700, %v564
        %v708 = vmul.f32 %v700, %v565
        %v709 = vmul.f32 %v700, %v566
        %v710 = vmul.f32 %v700, %v567
        %v711 = vmul.f32 %v700, %v568
        %v712 = vmul.f32 %v700, %v569
        %v713 = vmul.f32 %v700, %v570
        %v714 = vmul.f32 %v700, %v571
        %v715 = vmul.f32 %v700, %v572
        %v716 = vmul.f32 %v700, %v573
        %vm733 = vcmask 1045504
        %v734 = vrot.slane %v701, 2
        %v735 = vrot.slane %v702, 2
        %v736 = vsel %vm733, %v734, %v735
        %v737 = vrot.slane %v703, 2
        %v738 = vrot.slane %v704, 2
        %v739 = vsel %vm733, %v737, %v738
        %v740 = vrot.slane %v705, 2
        %v741 = vrot.slane %v706, 2
        %v742 = vsel %vm733, %v740, %v741
        %v743 = vrot.slane %v707, 2
        %v744 = vrot.slane %v708, 2
        %v745 = vsel %vm733, %v743, %v744
        %v746 = vrot.slane %v709, 2
        %v747 = vrot.slane %v710, 2
        %v748 = vsel %vm733, %v746, %v747
        %v749 = vrot.slane %v711, 2
        %v750 = vrot.slane %v712, 2
        %v751 = vsel %vm733, %v749, %v750
        %v752 = vrot.slane %v713, 2
        %v753 = vrot.slane %v714, 2
        %v754 = vsel %vm733, %v752, %v753
        %v755 = vrot.slane %v715, 2
        %v756 = vrot.slane %v716, 2
        %v757 = vsel %vm733, %v755, %v756
        %v766 = vadd.f32 %v691, %v736
        %v767 = vadd.f32 %v692, %v739
        %v768 = vadd.f32 %v693, %v742
        %v769 = vadd.f32 %v694, %v745
        %v770 = vadd.f32 %v695, %v748
        %v771 = vadd.f32 %v696, %v751
        %v772 = vadd.f32 %v697, %v754
        %v773 = vadd.f32 %v698, %v757
        %s774 = sld [smem:[#allocation3 + $0x3]]
        %v775 = vstv %s774
        %v776 = vmul.f32 %v775, %v558
        %v777 = vmul.f32 %v775, %v559
        %v778 = vmul.f32 %v775, %v560
        %v779 = vmul.f32 %v775, %v561
        %v780 = vmul.f32 %v775, %v562
        %v781 = vmul.f32 %v775, %v563
        %v782 = vmul.f32 %v775, %v564
        %v783 = vmul.f32 %v775, %v565
        %v784 = vmul.f32 %v775, %v566
        %v785 = vmul.f32 %v775, %v567
        %v786 = vmul.f32 %v775, %v568
        %v787 = vmul.f32 %v775, %v569
        %v788 = vmul.f32 %v775, %v570
        %v789 = vmul.f32 %v775, %v571
        %v790 = vmul.f32 %v775, %v572
        %v791 = vmul.f32 %v775, %v573
        %vm808 = vcmask 1044480
        %v809 = vrot.slane %v776, 3
        %v810 = vrot.slane %v777, 3
        %v811 = vsel %vm808, %v809, %v810
        %v812 = vrot.slane %v778, 3
        %v813 = vrot.slane %v779, 3
        %v814 = vsel %vm808, %v812, %v813
        %v815 = vrot.slane %v780, 3
        %v816 = vrot.slane %v781, 3
        %v817 = vsel %vm808, %v815, %v816
        %v818 = vrot.slane %v782, 3
        %v819 = vrot.slane %v783, 3
        %v820 = vsel %vm808, %v818, %v819
        %v821 = vrot.slane %v784, 3
        %v822 = vrot.slane %v785, 3
        %v823 = vsel %vm808, %v821, %v822
        %v824 = vrot.slane %v786, 3
        %v825 = vrot.slane %v787, 3
        %v826 = vsel %vm808, %v824, %v825
        %v827 = vrot.slane %v788, 3
        %v828 = vrot.slane %v789, 3
        %v829 = vsel %vm808, %v827, %v828
        %v830 = vrot.slane %v790, 3
        %v831 = vrot.slane %v791, 3
        %v832 = vsel %vm808, %v830, %v831
        %v841 = vadd.f32 %v766, %v811
        %v842 = vadd.f32 %v767, %v814
        %v843 = vadd.f32 %v768, %v817
        %v844 = vadd.f32 %v769, %v820
        %v845 = vadd.f32 %v770, %v823
        %v846 = vadd.f32 %v771, %v826
        %v847 = vadd.f32 %v772, %v829
        %v848 = vadd.f32 %v773, %v832
        %s849 = sld [smem:[#allocation3 + $0x4]]
        %v850 = vstv %s849
        %v851 = vmul.f32 %v850, %v558
        %v852 = vmul.f32 %v850, %v559
        %v853 = vmul.f32 %v850, %v560
        %v854 = vmul.f32 %v850, %v561
        %v855 = vmul.f32 %v850, %v562
        %v856 = vmul.f32 %v850, %v563
        %v857 = vmul.f32 %v850, %v564
        %v858 = vmul.f32 %v850, %v565
        %v859 = vmul.f32 %v850, %v566
        %v860 = vmul.f32 %v850, %v567
        %v861 = vmul.f32 %v850, %v568
        %v862 = vmul.f32 %v850, %v569
        %v863 = vmul.f32 %v850, %v570
        %v864 = vmul.f32 %v850, %v571
        %v865 = vmul.f32 %v850, %v572
        %v866 = vmul.f32 %v850, %v573
        %vm883 = vcmask 1043456
        %v884 = vrot.slane %v851, 4
        %v885 = vrot.slane %v852, 4
        %v886 = vsel %vm883, %v884, %v885
        %v887 = vrot.slane %v853, 4
        %v888 = vrot.slane %v854, 4
        %v889 = vsel %vm883, %v887, %v888
        %v890 = vrot.slane %v855, 4
        %v891 = vrot.slane %v856, 4
        %v892 = vsel %vm883, %v890, %v891
        %v893 = vrot.slane %v857, 4
        %v894 = vrot.slane %v858, 4
        %v895 = vsel %vm883, %v893, %v894
        %v896 = vrot.slane %v859, 4
        %v897 = vrot.slane %v860, 4
        %v898 = vsel %vm883, %v896, %v897
        %v899 = vrot.slane %v861, 4
        %v900 = vrot.slane %v862, 4
        %v901 = vsel %vm883, %v899, %v900
        %v902 = vrot.slane %v863, 4
        %v903 = vrot.slane %v864, 4
        %v904 = vsel %vm883, %v902, %v903
        %v905 = vrot.slane %v865, 4
        %v906 = vrot.slane %v866, 4
        %v907 = vsel %vm883, %v905, %v906
        %v916 = vadd.f32 %v841, %v886
        %v917 = vadd.f32 %v842, %v889
        %v918 = vadd.f32 %v843, %v892
        %v919 = vadd.f32 %v844, %v895
        %v920 = vadd.f32 %v845, %v898
        %v921 = vadd.f32 %v846, %v901
        %v922 = vadd.f32 %v847, %v904
        %v923 = vadd.f32 %v848, %v907
        %s924 = sld [smem:[#allocation3 + $0x5]]
        %v925 = vstv %s924
        %v926 = vmul.f32 %v925, %v560
        %v927 = vmul.f32 %v925, %v562
        %v928 = vmul.f32 %v925, %v564
        %v929 = vmul.f32 %v925, %v566
        %v930 = vmul.f32 %v925, %v568
        %v931 = vmul.f32 %v925, %v570
        %v932 = vmul.f32 %v925, %v572
        %v933 = vmul.f32 %v925, %v574
        %v934 = vadd.f32 %v916, %v926
        %v935 = vadd.f32 %v917, %v927
        %v936 = vadd.f32 %v918, %v928
        %v937 = vadd.f32 %v919, %v929
        %v938 = vadd.f32 %v920, %v930
        %v939 = vadd.f32 %v921, %v931
        %v940 = vadd.f32 %v922, %v932
        %v941 = vadd.f32 %v923, %v933
        %s942 = sld [smem:[#allocation3 + $0x6]]
        %v943 = vstv %s942
        %v944 = vmul.f32 %v943, %v560
        %v945 = vmul.f32 %v943, %v561
        %v946 = vmul.f32 %v943, %v562
        %v947 = vmul.f32 %v943, %v563
        %v948 = vmul.f32 %v943, %v564
        %v949 = vmul.f32 %v943, %v565
        %v950 = vmul.f32 %v943, %v566
        %v951 = vmul.f32 %v943, %v567
        %v952 = vmul.f32 %v943, %v568
        %v953 = vmul.f32 %v943, %v569
        %v954 = vmul.f32 %v943, %v570
        %v955 = vmul.f32 %v943, %v571
        %v956 = vmul.f32 %v943, %v572
        %v957 = vmul.f32 %v943, %v573
        %v958 = vmul.f32 %v943, %v574
        %v959 = vmul.f32 %v943, %v575
        %v976 = vrot.slane %v944, 1
        %v977 = vrot.slane %v945, 1
        %v978 = vsel %vm658, %v976, %v977
        %v979 = vrot.slane %v946, 1
        %v980 = vrot.slane %v947, 1
        %v981 = vsel %vm658, %v979, %v980
        %v982 = vrot.slane %v948, 1
        %v983 = vrot.slane %v949, 1
        %v984 = vsel %vm658, %v982, %v983
        %v985 = vrot.slane %v950, 1
        %v986 = vrot.slane %v951, 1
        %v987 = vsel %vm658, %v985, %v986
        %v988 = vrot.slane %v952, 1
        %v989 = vrot.slane %v953, 1
        %v990 = vsel %vm658, %v988, %v989
        %v991 = vrot.slane %v954, 1
        %v992 = vrot.slane %v955, 1
        %v993 = vsel %vm658, %v991, %v992
        %v994 = vrot.slane %v956, 1
        %v995 = vrot.slane %v957, 1
        %v996 = vsel %vm658, %v994, %v995
        %v997 = vrot.slane %v958, 1
        %v998 = vrot.slane %v959, 1
        %v999 = vsel %vm658, %v997, %v998
        %v1008 = vadd.f32 %v934, %v978
        %v1009 = vadd.f32 %v935, %v981
        %v1010 = vadd.f32 %v936, %v984
        %v1011 = vadd.f32 %v937, %v987
        %v1012 = vadd.f32 %v938, %v990
        %v1013 = vadd.f32 %v939, %v993
        %v1014 = vadd.f32 %v940, %v996
        %v1015 = vadd.f32 %v941, %v999
        %s1016 = sld [smem:[#allocation3 + $0x7]]
        %v1017 = vstv %s1016
        %v1018 = vmul.f32 %v1017, %v560
        %v1019 = vmul.f32 %v1017, %v561
        %v1020 = vmul.f32 %v1017, %v562
        %v1021 = vmul.f32 %v1017, %v563
        %v1022 = vmul.f32 %v1017, %v564
        %v1023 = vmul.f32 %v1017, %v565
        %v1024 = vmul.f32 %v1017, %v566
        %v1025 = vmul.f32 %v1017, %v567
        %v1026 = vmul.f32 %v1017, %v568
        %v1027 = vmul.f32 %v1017, %v569
        %v1028 = vmul.f32 %v1017, %v570
        %v1029 = vmul.f32 %v1017, %v571
        %v1030 = vmul.f32 %v1017, %v572
        %v1031 = vmul.f32 %v1017, %v573
        %v1032 = vmul.f32 %v1017, %v574
        %v1033 = vmul.f32 %v1017, %v575
        %v1050 = vrot.slane %v1018, 2
        %v1051 = vrot.slane %v1019, 2
        %v1052 = vsel %vm733, %v1050, %v1051
        %v1053 = vrot.slane %v1020, 2
        %v1054 = vrot.slane %v1021, 2
        %v1055 = vsel %vm733, %v1053, %v1054
        %v1056 = vrot.slane %v1022, 2
        %v1057 = vrot.slane %v1023, 2
        %v1058 = vsel %vm733, %v1056, %v1057
        %v1059 = vrot.slane %v1024, 2
        %v1060 = vrot.slane %v1025, 2
        %v1061 = vsel %vm733, %v1059, %v1060
        %v1062 = vrot.slane %v1026, 2
        %v1063 = vrot.slane %v1027, 2
        %v1064 = vsel %vm733, %v1062, %v1063
        %v1065 = vrot.slane %v1028, 2
        %v1066 = vrot.slane %v1029, 2
        %v1067 = vsel %vm733, %v1065, %v1066
        %v1068 = vrot.slane %v1030, 2
        %v1069 = vrot.slane %v1031, 2
        %v1070 = vsel %vm733, %v1068, %v1069
        %v1071 = vrot.slane %v1032, 2
        %v1072 = vrot.slane %v1033, 2
        %v1073 = vsel %vm733, %v1071, %v1072
        %v1082 = vadd.f32 %v1008, %v1052
        %v1083 = vadd.f32 %v1009, %v1055
        %v1084 = vadd.f32 %v1010, %v1058
        %v1085 = vadd.f32 %v1011, %v1061
        %v1086 = vadd.f32 %v1012, %v1064
        %v1087 = vadd.f32 %v1013, %v1067
        %v1088 = vadd.f32 %v1014, %v1070
        %v1089 = vadd.f32 %v1015, %v1073
        %s1090 = sld [smem:[#allocation3 + $0x8]]
        %v1091 = vstv %s1090
        %v1092 = vmul.f32 %v1091, %v560
        %v1093 = vmul.f32 %v1091, %v561
        %v1094 = vmul.f32 %v1091, %v562
        %v1095 = vmul.f32 %v1091, %v563
        %v1096 = vmul.f32 %v1091, %v564
        %v1097 = vmul.f32 %v1091, %v565
        %v1098 = vmul.f32 %v1091, %v566
        %v1099 = vmul.f32 %v1091, %v567
        %v1100 = vmul.f32 %v1091, %v568
        %v1101 = vmul.f32 %v1091, %v569
        %v1102 = vmul.f32 %v1091, %v570
        %v1103 = vmul.f32 %v1091, %v571
        %v1104 = vmul.f32 %v1091, %v572
        %v1105 = vmul.f32 %v1091, %v573
        %v1106 = vmul.f32 %v1091, %v574
        %v1107 = vmul.f32 %v1091, %v575
        %v1124 = vrot.slane %v1092, 3
        %v1125 = vrot.slane %v1093, 3
        %v1126 = vsel %vm808, %v1124, %v1125
        %v1127 = vrot.slane %v1094, 3
        %v1128 = vrot.slane %v1095, 3
        %v1129 = vsel %vm808, %v1127, %v1128
        %v1130 = vrot.slane %v1096, 3
        %v1131 = vrot.slane %v1097, 3
        %v1132 = vsel %vm808, %v1130, %v1131
        %v1133 = vrot.slane %v1098, 3
        %v1134 = vrot.slane %v1099, 3
        %v1135 = vsel %vm808, %v1133, %v1134
        %v1136 = vrot.slane %v1100, 3
        %v1137 = vrot.slane %v1101, 3
        %v1138 = vsel %vm808, %v1136, %v1137
        %v1139 = vrot.slane %v1102, 3
        %v1140 = vrot.slane %v1103, 3
        %v1141 = vsel %vm808, %v1139, %v1140
        %v1142 = vrot.slane %v1104, 3
        %v1143 = vrot.slane %v1105, 3
        %v1144 = vsel %vm808, %v1142, %v1143
        %v1145 = vrot.slane %v1106, 3
        %v1146 = vrot.slane %v1107, 3
        %v1147 = vsel %vm808, %v1145, %v1146
        %v1156 = vadd.f32 %v1082, %v1126
        %v1157 = vadd.f32 %v1083, %v1129
        %v1158 = vadd.f32 %v1084, %v1132
        %v1159 = vadd.f32 %v1085, %v1135
        %v1160 = vadd.f32 %v1086, %v1138
        %v1161 = vadd.f32 %v1087, %v1141
        %v1162 = vadd.f32 %v1088, %v1144
        %v1163 = vadd.f32 %v1089, %v1147
        %s1164 = sld [smem:[#allocation3 + $0x9]]
        %v1165 = vstv %s1164
        %v1166 = vmul.f32 %v1165, %v560
        %v1167 = vmul.f32 %v1165, %v561
        %v1168 = vmul.f32 %v1165, %v562
        %v1169 = vmul.f32 %v1165, %v563
        %v1170 = vmul.f32 %v1165, %v564
        %v1171 = vmul.f32 %v1165, %v565
        %v1172 = vmul.f32 %v1165, %v566
        %v1173 = vmul.f32 %v1165, %v567
        %v1174 = vmul.f32 %v1165, %v568
        %v1175 = vmul.f32 %v1165, %v569
        %v1176 = vmul.f32 %v1165, %v570
        %v1177 = vmul.f32 %v1165, %v571
        %v1178 = vmul.f32 %v1165, %v572
        %v1179 = vmul.f32 %v1165, %v573
        %v1180 = vmul.f32 %v1165, %v574
        %v1181 = vmul.f32 %v1165, %v575
        %v1198 = vrot.slane %v1166, 4
        %v1199 = vrot.slane %v1167, 4
        %v1200 = vsel %vm883, %v1198, %v1199
        %v1201 = vrot.slane %v1168, 4
        %v1202 = vrot.slane %v1169, 4
        %v1203 = vsel %vm883, %v1201, %v1202
        %v1204 = vrot.slane %v1170, 4
        %v1205 = vrot.slane %v1171, 4
        %v1206 = vsel %vm883, %v1204, %v1205
        %v1207 = vrot.slane %v1172, 4
        %v1208 = vrot.slane %v1173, 4
        %v1209 = vsel %vm883, %v1207, %v1208
        %v1210 = vrot.slane %v1174, 4
        %v1211 = vrot.slane %v1175, 4
        %v1212 = vsel %vm883, %v1210, %v1211
        %v1213 = vrot.slane %v1176, 4
        %v1214 = vrot.slane %v1177, 4
        %v1215 = vsel %vm883, %v1213, %v1214
        %v1216 = vrot.slane %v1178, 4
        %v1217 = vrot.slane %v1179, 4
        %v1218 = vsel %vm883, %v1216, %v1217
        %v1219 = vrot.slane %v1180, 4
        %v1220 = vrot.slane %v1181, 4
        %v1221 = vsel %vm883, %v1219, %v1220
        %v1230 = vadd.f32 %v1156, %v1200
        %v1231 = vadd.f32 %v1157, %v1203
        %v1232 = vadd.f32 %v1158, %v1206
        %v1233 = vadd.f32 %v1159, %v1209
        %v1234 = vadd.f32 %v1160, %v1212
        %v1235 = vadd.f32 %v1161, %v1215
        %v1236 = vadd.f32 %v1162, %v1218
        %v1237 = vadd.f32 %v1163, %v1221
        %s1238 = sld [smem:[#allocation3 + $0xa]]
        %v1239 = vstv %s1238
        %v1240 = vmul.f32 %v1239, %v562
        %v1241 = vmul.f32 %v1239, %v564
        %v1242 = vmul.f32 %v1239, %v566
        %v1243 = vmul.f32 %v1239, %v568
        %v1244 = vmul.f32 %v1239, %v570
        %v1245 = vmul.f32 %v1239, %v572
        %v1246 = vmul.f32 %v1239, %v574
        %v1247 = vmul.f32 %v1239, %v576
        %v1248 = vadd.f32 %v1230, %v1240
        %v1249 = vadd.f32 %v1231, %v1241
        %v1250 = vadd.f32 %v1232, %v1242
        %v1251 = vadd.f32 %v1233, %v1243
        %v1252 = vadd.f32 %v1234, %v1244
        %v1253 = vadd.f32 %v1235, %v1245
        %v1254 = vadd.f32 %v1236, %v1246
        %v1255 = vadd.f32 %v1237, %v1247
        %s1256 = sld [smem:[#allocation3 + $0xb]]
        %v1257 = vstv %s1256
        %v1258 = vmul.f32 %v1257, %v562
        %v1259 = vmul.f32 %v1257, %v563
        %v1260 = vmul.f32 %v1257, %v564
        %v1261 = vmul.f32 %v1257, %v565
        %v1262 = vmul.f32 %v1257, %v566
        %v1263 = vmul.f32 %v1257, %v567
        %v1264 = vmul.f32 %v1257, %v568
        %v1265 = vmul.f32 %v1257, %v569
        %v1266 = vmul.f32 %v1257, %v570
        %v1267 = vmul.f32 %v1257, %v571
        %v1268 = vmul.f32 %v1257, %v572
        %v1269 = vmul.f32 %v1257, %v573
        %v1270 = vmul.f32 %v1257, %v574
        %v1271 = vmul.f32 %v1257, %v575
        %v1272 = vmul.f32 %v1257, %v576
        %v1273 = vmul.f32 %v1257, %v577
        %v1290 = vrot.slane %v1258, 1
        %v1291 = vrot.slane %v1259, 1
        %v1292 = vsel %vm658, %v1290, %v1291
        %v1293 = vrot.slane %v1260, 1
        %v1294 = vrot.slane %v1261, 1
        %v1295 = vsel %vm658, %v1293, %v1294
        %v1296 = vrot.slane %v1262, 1
        %v1297 = vrot.slane %v1263, 1
        %v1298 = vsel %vm658, %v1296, %v1297
        %v1299 = vrot.slane %v1264, 1
        %v1300 = vrot.slane %v1265, 1
        %v1301 = vsel %vm658, %v1299, %v1300
        %v1302 = vrot.slane %v1266, 1
        %v1303 = vrot.slane %v1267, 1
        %v1304 = vsel %vm658, %v1302, %v1303
        %v1305 = vrot.slane %v1268, 1
        %v1306 = vrot.slane %v1269, 1
        %v1307 = vsel %vm658, %v1305, %v1306
        %v1308 = vrot.slane %v1270, 1
        %v1309 = vrot.slane %v1271, 1
        %v1310 = vsel %vm658, %v1308, %v1309
        %v1311 = vrot.slane %v1272, 1
        %v1312 = vrot.slane %v1273, 1
        %v1313 = vsel %vm658, %v1311, %v1312
        %v1322 = vadd.f32 %v1248, %v1292
        %v1323 = vadd.f32 %v1249, %v1295
        %v1324 = vadd.f32 %v1250, %v1298
        %v1325 = vadd.f32 %v1251, %v1301
        %v1326 = vadd.f32 %v1252, %v1304
        %v1327 = vadd.f32 %v1253, %v1307
        %v1328 = vadd.f32 %v1254, %v1310
        %v1329 = vadd.f32 %v1255, %v1313
        %s1330 = sld [smem:[#allocation3 + $0xc]]
        %v1331 = vstv %s1330
        %v1332 = vmul.f32 %v1331, %v562
        %v1333 = vmul.f32 %v1331, %v563
        %v1334 = vmul.f32 %v1331, %v564
        %v1335 = vmul.f32 %v1331, %v565
        %v1336 = vmul.f32 %v1331, %v566
        %v1337 = vmul.f32 %v1331, %v567
        %v1338 = vmul.f32 %v1331, %v568
        %v1339 = vmul.f32 %v1331, %v569
        %v1340 = vmul.f32 %v1331, %v570
        %v1341 = vmul.f32 %v1331, %v571
        %v1342 = vmul.f32 %v1331, %v572
        %v1343 = vmul.f32 %v1331, %v573
        %v1344 = vmul.f32 %v1331, %v574
        %v1345 = vmul.f32 %v1331, %v575
        %v1346 = vmul.f32 %v1331, %v576
        %v1347 = vmul.f32 %v1331, %v577
        %v1364 = vrot.slane %v1332, 2
        %v1365 = vrot.slane %v1333, 2
        %v1366 = vsel %vm733, %v1364, %v1365
        %v1367 = vrot.slane %v1334, 2
        %v1368 = vrot.slane %v1335, 2
        %v1369 = vsel %vm733, %v1367, %v1368
        %v1370 = vrot.slane %v1336, 2
        %v1371 = vrot.slane %v1337, 2
        %v1372 = vsel %vm733, %v1370, %v1371
        %v1373 = vrot.slane %v1338, 2
        %v1374 = vrot.slane %v1339, 2
        %v1375 = vsel %vm733, %v1373, %v1374
        %v1376 = vrot.slane %v1340, 2
        %v1377 = vrot.slane %v1341, 2
        %v1378 = vsel %vm733, %v1376, %v1377
        %v1379 = vrot.slane %v1342, 2
        %v1380 = vrot.slane %v1343, 2
        %v1381 = vsel %vm733, %v1379, %v1380
        %v1382 = vrot.slane %v1344, 2
        %v1383 = vrot.slane %v1345, 2
        %v1384 = vsel %vm733, %v1382, %v1383
        %v1385 = vrot.slane %v1346, 2
        %v1386 = vrot.slane %v1347, 2
        %v1387 = vsel %vm733, %v1385, %v1386
        %v1396 = vadd.f32 %v1322, %v1366
        %v1397 = vadd.f32 %v1323, %v1369
        %v1398 = vadd.f32 %v1324, %v1372
        %v1399 = vadd.f32 %v1325, %v1375
        %v1400 = vadd.f32 %v1326, %v1378
        %v1401 = vadd.f32 %v1327, %v1381
        %v1402 = vadd.f32 %v1328, %v1384
        %v1403 = vadd.f32 %v1329, %v1387
        %s1404 = sld [smem:[#allocation3 + $0xd]]
        %v1405 = vstv %s1404
        %v1406 = vmul.f32 %v1405, %v562
        %v1407 = vmul.f32 %v1405, %v563
        %v1408 = vmul.f32 %v1405, %v564
        %v1409 = vmul.f32 %v1405, %v565
        %v1410 = vmul.f32 %v1405, %v566
        %v1411 = vmul.f32 %v1405, %v567
        %v1412 = vmul.f32 %v1405, %v568
        %v1413 = vmul.f32 %v1405, %v569
        %v1414 = vmul.f32 %v1405, %v570
        %v1415 = vmul.f32 %v1405, %v571
        %v1416 = vmul.f32 %v1405, %v572
        %v1417 = vmul.f32 %v1405, %v573
        %v1418 = vmul.f32 %v1405, %v574
        %v1419 = vmul.f32 %v1405, %v575
        %v1420 = vmul.f32 %v1405, %v576
        %v1421 = vmul.f32 %v1405, %v577
        %v1438 = vrot.slane %v1406, 3
        %v1439 = vrot.slane %v1407, 3
        %v1440 = vsel %vm808, %v1438, %v1439
        %v1441 = vrot.slane %v1408, 3
        %v1442 = vrot.slane %v1409, 3
        %v1443 = vsel %vm808, %v1441, %v1442
        %v1444 = vrot.slane %v1410, 3
        %v1445 = vrot.slane %v1411, 3
        %v1446 = vsel %vm808, %v1444, %v1445
        %v1447 = vrot.slane %v1412, 3
        %v1448 = vrot.slane %v1413, 3
        %v1449 = vsel %vm808, %v1447, %v1448
        %v1450 = vrot.slane %v1414, 3
        %v1451 = vrot.slane %v1415, 3
        %v1452 = vsel %vm808, %v1450, %v1451
        %v1453 = vrot.slane %v1416, 3
        %v1454 = vrot.slane %v1417, 3
        %v1455 = vsel %vm808, %v1453, %v1454
        %v1456 = vrot.slane %v1418, 3
        %v1457 = vrot.slane %v1419, 3
        %v1458 = vsel %vm808, %v1456, %v1457
        %v1459 = vrot.slane %v1420, 3
        %v1460 = vrot.slane %v1421, 3
        %v1461 = vsel %vm808, %v1459, %v1460
        %v1470 = vadd.f32 %v1396, %v1440
        %v1471 = vadd.f32 %v1397, %v1443
        %v1472 = vadd.f32 %v1398, %v1446
        %v1473 = vadd.f32 %v1399, %v1449
        %v1474 = vadd.f32 %v1400, %v1452
        %v1475 = vadd.f32 %v1401, %v1455
        %v1476 = vadd.f32 %v1402, %v1458
        %v1477 = vadd.f32 %v1403, %v1461
        %s1478 = sld [smem:[#allocation3 + $0xe]]
        %v1479 = vstv %s1478
        %v1480 = vmul.f32 %v1479, %v562
        %v1481 = vmul.f32 %v1479, %v563
        %v1482 = vmul.f32 %v1479, %v564
        %v1483 = vmul.f32 %v1479, %v565
        %v1484 = vmul.f32 %v1479, %v566
        %v1485 = vmul.f32 %v1479, %v567
        %v1486 = vmul.f32 %v1479, %v568
        %v1487 = vmul.f32 %v1479, %v569
        %v1488 = vmul.f32 %v1479, %v570
        %v1489 = vmul.f32 %v1479, %v571
        %v1490 = vmul.f32 %v1479, %v572
        %v1491 = vmul.f32 %v1479, %v573
        %v1492 = vmul.f32 %v1479, %v574
        %v1493 = vmul.f32 %v1479, %v575
        %v1494 = vmul.f32 %v1479, %v576
        %v1495 = vmul.f32 %v1479, %v577
        %v1512 = vrot.slane %v1480, 4
        %v1513 = vrot.slane %v1481, 4
        %v1514 = vsel %vm883, %v1512, %v1513
        %v1515 = vrot.slane %v1482, 4
        %v1516 = vrot.slane %v1483, 4
        %v1517 = vsel %vm883, %v1515, %v1516
        %v1518 = vrot.slane %v1484, 4
        %v1519 = vrot.slane %v1485, 4
        %v1520 = vsel %vm883, %v1518, %v1519
        %v1521 = vrot.slane %v1486, 4
        %v1522 = vrot.slane %v1487, 4
        %v1523 = vsel %vm883, %v1521, %v1522
        %v1524 = vrot.slane %v1488, 4
        %v1525 = vrot.slane %v1489, 4
        %v1526 = vsel %vm883, %v1524, %v1525
        %v1527 = vrot.slane %v1490, 4
        %v1528 = vrot.slane %v1491, 4
        %v1529 = vsel %vm883, %v1527, %v1528
        %v1530 = vrot.slane %v1492, 4
        %v1531 = vrot.slane %v1493, 4
        %v1532 = vsel %vm883, %v1530, %v1531
        %v1533 = vrot.slane %v1494, 4
        %v1534 = vrot.slane %v1495, 4
        %v1535 = vsel %vm883, %v1533, %v1534
        %v1544 = vadd.f32 %v1470, %v1514
        %v1545 = vadd.f32 %v1471, %v1517
        %v1546 = vadd.f32 %v1472, %v1520
        %v1547 = vadd.f32 %v1473, %v1523
        %v1548 = vadd.f32 %v1474, %v1526
        %v1549 = vadd.f32 %v1475, %v1529
        %v1550 = vadd.f32 %v1476, %v1532
        %v1551 = vadd.f32 %v1477, %v1535
        %s1552 = sld [smem:[#allocation3 + $0xf]]
        %v1553 = vstv %s1552
        %v1554 = vmul.f32 %v1553, %v564
        %v1555 = vmul.f32 %v1553, %v566
        %v1556 = vmul.f32 %v1553, %v568
        %v1557 = vmul.f32 %v1553, %v570
        %v1558 = vmul.f32 %v1553, %v572
        %v1559 = vmul.f32 %v1553, %v574
        %v1560 = vmul.f32 %v1553, %v576
        %v1561 = vmul.f32 %v1553, %v578
        %v1562 = vadd.f32 %v1544, %v1554
        %v1563 = vadd.f32 %v1545, %v1555
        %v1564 = vadd.f32 %v1546, %v1556
        %v1565 = vadd.f32 %v1547, %v1557
        %v1566 = vadd.f32 %v1548, %v1558
        %v1567 = vadd.f32 %v1549, %v1559
        %v1568 = vadd.f32 %v1550, %v1560
        %v1569 = vadd.f32 %v1551, %v1561
        %s1570 = sld [smem:[#allocation3 + $0x10]]
        %v1571 = vstv %s1570
        %v1572 = vmul.f32 %v1571, %v564
        %v1573 = vmul.f32 %v1571, %v565
        %v1574 = vmul.f32 %v1571, %v566
        %v1575 = vmul.f32 %v1571, %v567
        %v1576 = vmul.f32 %v1571, %v568
        %v1577 = vmul.f32 %v1571, %v569
        %v1578 = vmul.f32 %v1571, %v570
        %v1579 = vmul.f32 %v1571, %v571
        %v1580 = vmul.f32 %v1571, %v572
        %v1581 = vmul.f32 %v1571, %v573
        %v1582 = vmul.f32 %v1571, %v574
        %v1583 = vmul.f32 %v1571, %v575
        %v1584 = vmul.f32 %v1571, %v576
        %v1585 = vmul.f32 %v1571, %v577
        %v1586 = vmul.f32 %v1571, %v578
        %v1587 = vmul.f32 %v1571, %v579
        %v1604 = vrot.slane %v1572, 1
        %v1605 = vrot.slane %v1573, 1
        %v1606 = vsel %vm658, %v1604, %v1605
        %v1607 = vrot.slane %v1574, 1
        %v1608 = vrot.slane %v1575, 1
        %v1609 = vsel %vm658, %v1607, %v1608
        %v1610 = vrot.slane %v1576, 1
        %v1611 = vrot.slane %v1577, 1
        %v1612 = vsel %vm658, %v1610, %v1611
        %v1613 = vrot.slane %v1578, 1
        %v1614 = vrot.slane %v1579, 1
        %v1615 = vsel %vm658, %v1613, %v1614
        %v1616 = vrot.slane %v1580, 1
        %v1617 = vrot.slane %v1581, 1
        %v1618 = vsel %vm658, %v1616, %v1617
        %v1619 = vrot.slane %v1582, 1
        %v1620 = vrot.slane %v1583, 1
        %v1621 = vsel %vm658, %v1619, %v1620
        %v1622 = vrot.slane %v1584, 1
        %v1623 = vrot.slane %v1585, 1
        %v1624 = vsel %vm658, %v1622, %v1623
        %v1625 = vrot.slane %v1586, 1
        %v1626 = vrot.slane %v1587, 1
        %v1627 = vsel %vm658, %v1625, %v1626
        %v1636 = vadd.f32 %v1562, %v1606
        %v1637 = vadd.f32 %v1563, %v1609
        %v1638 = vadd.f32 %v1564, %v1612
        %v1639 = vadd.f32 %v1565, %v1615
        %v1640 = vadd.f32 %v1566, %v1618
        %v1641 = vadd.f32 %v1567, %v1621
        %v1642 = vadd.f32 %v1568, %v1624
        %v1643 = vadd.f32 %v1569, %v1627
        %s1644 = sld [smem:[#allocation3 + $0x11]]
        %v1645 = vstv %s1644
        %v1646 = vmul.f32 %v1645, %v564
        %v1647 = vmul.f32 %v1645, %v565
        %v1648 = vmul.f32 %v1645, %v566
        %v1649 = vmul.f32 %v1645, %v567
        %v1650 = vmul.f32 %v1645, %v568
        %v1651 = vmul.f32 %v1645, %v569
        %v1652 = vmul.f32 %v1645, %v570
        %v1653 = vmul.f32 %v1645, %v571
        %v1654 = vmul.f32 %v1645, %v572
        %v1655 = vmul.f32 %v1645, %v573
        %v1656 = vmul.f32 %v1645, %v574
        %v1657 = vmul.f32 %v1645, %v575
        %v1658 = vmul.f32 %v1645, %v576
        %v1659 = vmul.f32 %v1645, %v577
        %v1660 = vmul.f32 %v1645, %v578
        %v1661 = vmul.f32 %v1645, %v579
        %v1678 = vrot.slane %v1646, 2
        %v1679 = vrot.slane %v1647, 2
        %v1680 = vsel %vm733, %v1678, %v1679
        %v1681 = vrot.slane %v1648, 2
        %v1682 = vrot.slane %v1649, 2
        %v1683 = vsel %vm733, %v1681, %v1682
        %v1684 = vrot.slane %v1650, 2
        %v1685 = vrot.slane %v1651, 2
        %v1686 = vsel %vm733, %v1684, %v1685
        %v1687 = vrot.slane %v1652, 2
        %v1688 = vrot.slane %v1653, 2
        %v1689 = vsel %vm733, %v1687, %v1688
        %v1690 = vrot.slane %v1654, 2
        %v1691 = vrot.slane %v1655, 2
        %v1692 = vsel %vm733, %v1690, %v1691
        %v1693 = vrot.slane %v1656, 2
        %v1694 = vrot.slane %v1657, 2
        %v1695 = vsel %vm733, %v1693, %v1694
        %v1696 = vrot.slane %v1658, 2
        %v1697 = vrot.slane %v1659, 2
        %v1698 = vsel %vm733, %v1696, %v1697
        %v1699 = vrot.slane %v1660, 2
        %v1700 = vrot.slane %v1661, 2
        %v1701 = vsel %vm733, %v1699, %v1700
        %v1710 = vadd.f32 %v1636, %v1680
        %v1711 = vadd.f32 %v1637, %v1683
        %v1712 = vadd.f32 %v1638, %v1686
        %v1713 = vadd.f32 %v1639, %v1689
        %v1714 = vadd.f32 %v1640, %v1692
        %v1715 = vadd.f32 %v1641, %v1695
        %v1716 = vadd.f32 %v1642, %v1698
        %v1717 = vadd.f32 %v1643, %v1701
        %s1718 = sld [smem:[#allocation3 + $0x12]]
        %v1719 = vstv %s1718
        %v1720 = vmul.f32 %v1719, %v564
        %v1721 = vmul.f32 %v1719, %v565
        %v1722 = vmul.f32 %v1719, %v566
        %v1723 = vmul.f32 %v1719, %v567
        %v1724 = vmul.f32 %v1719, %v568
        %v1725 = vmul.f32 %v1719, %v569
        %v1726 = vmul.f32 %v1719, %v570
        %v1727 = vmul.f32 %v1719, %v571
        %v1728 = vmul.f32 %v1719, %v572
        %v1729 = vmul.f32 %v1719, %v573
        %v1730 = vmul.f32 %v1719, %v574
        %v1731 = vmul.f32 %v1719, %v575
        %v1732 = vmul.f32 %v1719, %v576
        %v1733 = vmul.f32 %v1719, %v577
        %v1734 = vmul.f32 %v1719, %v578
        %v1735 = vmul.f32 %v1719, %v579
        %v1752 = vrot.slane %v1720, 3
        %v1753 = vrot.slane %v1721, 3
        %v1754 = vsel %vm808, %v1752, %v1753
        %v1755 = vrot.slane %v1722, 3
        %v1756 = vrot.slane %v1723, 3
        %v1757 = vsel %vm808, %v1755, %v1756
        %v1758 = vrot.slane %v1724, 3
        %v1759 = vrot.slane %v1725, 3
        %v1760 = vsel %vm808, %v1758, %v1759
        %v1761 = vrot.slane %v1726, 3
        %v1762 = vrot.slane %v1727, 3
        %v1763 = vsel %vm808, %v1761, %v1762
        %v1764 = vrot.slane %v1728, 3
        %v1765 = vrot.slane %v1729, 3
        %v1766 = vsel %vm808, %v1764, %v1765
        %v1767 = vrot.slane %v1730, 3
        %v1768 = vrot.slane %v1731, 3
        %v1769 = vsel %vm808, %v1767, %v1768
        %v1770 = vrot.slane %v1732, 3
        %v1771 = vrot.slane %v1733, 3
        %v1772 = vsel %vm808, %v1770, %v1771
        %v1773 = vrot.slane %v1734, 3
        %v1774 = vrot.slane %v1735, 3
        %v1775 = vsel %vm808, %v1773, %v1774
        %v1784 = vadd.f32 %v1710, %v1754
        %v1785 = vadd.f32 %v1711, %v1757
        %v1786 = vadd.f32 %v1712, %v1760
        %v1787 = vadd.f32 %v1713, %v1763
        %v1788 = vadd.f32 %v1714, %v1766
        %v1789 = vadd.f32 %v1715, %v1769
        %v1790 = vadd.f32 %v1716, %v1772
        %v1791 = vadd.f32 %v1717, %v1775
        %s1792 = sld [smem:[#allocation3 + $0x13]]
        %v1793 = vstv %s1792
        %v1794 = vmul.f32 %v1793, %v564
        %v1795 = vmul.f32 %v1793, %v565
        %v1796 = vmul.f32 %v1793, %v566
        %v1797 = vmul.f32 %v1793, %v567
        %v1798 = vmul.f32 %v1793, %v568
        %v1799 = vmul.f32 %v1793, %v569
        %v1800 = vmul.f32 %v1793, %v570
        %v1801 = vmul.f32 %v1793, %v571
        %v1802 = vmul.f32 %v1793, %v572
        %v1803 = vmul.f32 %v1793, %v573
        %v1804 = vmul.f32 %v1793, %v574
        %v1805 = vmul.f32 %v1793, %v575
        %v1806 = vmul.f32 %v1793, %v576
        %v1807 = vmul.f32 %v1793, %v577
        %v1808 = vmul.f32 %v1793, %v578
        %v1809 = vmul.f32 %v1793, %v579
        %v1826 = vrot.slane %v1794, 4
        %v1827 = vrot.slane %v1795, 4
        %v1828 = vsel %vm883, %v1826, %v1827
        %v1829 = vrot.slane %v1796, 4
        %v1830 = vrot.slane %v1797, 4
        %v1831 = vsel %vm883, %v1829, %v1830
        %v1832 = vrot.slane %v1798, 4
        %v1833 = vrot.slane %v1799, 4
        %v1834 = vsel %vm883, %v1832, %v1833
        %v1835 = vrot.slane %v1800, 4
        %v1836 = vrot.slane %v1801, 4
        %v1837 = vsel %vm883, %v1835, %v1836
        %v1838 = vrot.slane %v1802, 4
        %v1839 = vrot.slane %v1803, 4
        %v1840 = vsel %vm883, %v1838, %v1839
        %v1841 = vrot.slane %v1804, 4
        %v1842 = vrot.slane %v1805, 4
        %v1843 = vsel %vm883, %v1841, %v1842
        %v1844 = vrot.slane %v1806, 4
        %v1845 = vrot.slane %v1807, 4
        %v1846 = vsel %vm883, %v1844, %v1845
        %v1847 = vrot.slane %v1808, 4
        %v1848 = vrot.slane %v1809, 4
        %v1849 = vsel %vm883, %v1847, %v1848
        %v1858 = vadd.f32 %v1784, %v1828
        %v1859 = vadd.f32 %v1785, %v1831
        %v1860 = vadd.f32 %v1786, %v1834
        %v1861 = vadd.f32 %v1787, %v1837
        %v1862 = vadd.f32 %v1788, %v1840
        %v1863 = vadd.f32 %v1789, %v1843
        %v1864 = vadd.f32 %v1790, %v1846
        %v1865 = vadd.f32 %v1791, %v1849
        %s1866 = sld [smem:[#allocation3 + $0x14]]
        %v1867 = vstv %s1866
        %v1868 = vmul.f32 %v1867, %v566
        %v1869 = vmul.f32 %v1867, %v568
        %v1870 = vmul.f32 %v1867, %v570
        %v1871 = vmul.f32 %v1867, %v572
        %v1872 = vmul.f32 %v1867, %v574
        %v1873 = vmul.f32 %v1867, %v576
        %v1874 = vmul.f32 %v1867, %v578
        %v1875 = vmul.f32 %v1867, %v580
        %v1876 = vadd.f32 %v1858, %v1868
        %v1877 = vadd.f32 %v1859, %v1869
        %v1878 = vadd.f32 %v1860, %v1870
        %v1879 = vadd.f32 %v1861, %v1871
        %v1880 = vadd.f32 %v1862, %v1872
        %v1881 = vadd.f32 %v1863, %v1873
        %v1882 = vadd.f32 %v1864, %v1874
        %v1883 = vadd.f32 %v1865, %v1875
        %s1884 = sld [smem:[#allocation3 + $0x15]]
        %v1885 = vstv %s1884
        %v1886 = vmul.f32 %v1885, %v566
        %v1887 = vmul.f32 %v1885, %v567
        %v1888 = vmul.f32 %v1885, %v568
        %v1889 = vmul.f32 %v1885, %v569
        %v1890 = vmul.f32 %v1885, %v570
        %v1891 = vmul.f32 %v1885, %v571
        %v1892 = vmul.f32 %v1885, %v572
        %v1893 = vmul.f32 %v1885, %v573
        %v1894 = vmul.f32 %v1885, %v574
        %v1895 = vmul.f32 %v1885, %v575
        %v1896 = vmul.f32 %v1885, %v576
        %v1897 = vmul.f32 %v1885, %v577
        %v1898 = vmul.f32 %v1885, %v578
        %v1899 = vmul.f32 %v1885, %v579
        %v1900 = vmul.f32 %v1885, %v580
        %v1901 = vmul.f32 %v1885, %v581
        %v1918 = vrot.slane %v1886, 1
        %v1919 = vrot.slane %v1887, 1
        %v1920 = vsel %vm658, %v1918, %v1919
        %v1921 = vrot.slane %v1888, 1
        %v1922 = vrot.slane %v1889, 1
        %v1923 = vsel %vm658, %v1921, %v1922
        %v1924 = vrot.slane %v1890, 1
        %v1925 = vrot.slane %v1891, 1
        %v1926 = vsel %vm658, %v1924, %v1925
        %v1927 = vrot.slane %v1892, 1
        %v1928 = vrot.slane %v1893, 1
        %v1929 = vsel %vm658, %v1927, %v1928
        %v1930 = vrot.slane %v1894, 1
        %v1931 = vrot.slane %v1895, 1
        %v1932 = vsel %vm658, %v1930, %v1931
        %v1933 = vrot.slane %v1896, 1
        %v1934 = vrot.slane %v1897, 1
        %v1935 = vsel %vm658, %v1933, %v1934
        %v1936 = vrot.slane %v1898, 1
        %v1937 = vrot.slane %v1899, 1
        %v1938 = vsel %vm658, %v1936, %v1937
        %v1939 = vrot.slane %v1900, 1
        %v1940 = vrot.slane %v1901, 1
        %v1941 = vsel %vm658, %v1939, %v1940
        %v1950 = vadd.f32 %v1876, %v1920
        %v1951 = vadd.f32 %v1877, %v1923
        %v1952 = vadd.f32 %v1878, %v1926
        %v1953 = vadd.f32 %v1879, %v1929
        %v1954 = vadd.f32 %v1880, %v1932
        %v1955 = vadd.f32 %v1881, %v1935
        %v1956 = vadd.f32 %v1882, %v1938
        %v1957 = vadd.f32 %v1883, %v1941
        %s1958 = sld [smem:[#allocation3 + $0x16]]
        %v1959 = vstv %s1958
        %v1960 = vmul.f32 %v1959, %v566
        %v1961 = vmul.f32 %v1959, %v567
        %v1962 = vmul.f32 %v1959, %v568
        %v1963 = vmul.f32 %v1959, %v569
        %v1964 = vmul.f32 %v1959, %v570
        %v1965 = vmul.f32 %v1959, %v571
        %v1966 = vmul.f32 %v1959, %v572
        %v1967 = vmul.f32 %v1959, %v573
        %v1968 = vmul.f32 %v1959, %v574
        %v1969 = vmul.f32 %v1959, %v575
        %v1970 = vmul.f32 %v1959, %v576
        %v1971 = vmul.f32 %v1959, %v577
        %v1972 = vmul.f32 %v1959, %v578
        %v1973 = vmul.f32 %v1959, %v579
        %v1974 = vmul.f32 %v1959, %v580
        %v1975 = vmul.f32 %v1959, %v581
        %v1992 = vrot.slane %v1960, 2
        %v1993 = vrot.slane %v1961, 2
        %v1994 = vsel %vm733, %v1992, %v1993
        %v1995 = vrot.slane %v1962, 2
        %v1996 = vrot.slane %v1963, 2
        %v1997 = vsel %vm733, %v1995, %v1996
        %v1998 = vrot.slane %v1964, 2
        %v1999 = vrot.slane %v1965, 2
        %v2000 = vsel %vm733, %v1998, %v1999
        %v2001 = vrot.slane %v1966, 2
        %v2002 = vrot.slane %v1967, 2
        %v2003 = vsel %vm733, %v2001, %v2002
        %v2004 = vrot.slane %v1968, 2
        %v2005 = vrot.slane %v1969, 2
        %v2006 = vsel %vm733, %v2004, %v2005
        %v2007 = vrot.slane %v1970, 2
        %v2008 = vrot.slane %v1971, 2
        %v2009 = vsel %vm733, %v2007, %v2008
        %v2010 = vrot.slane %v1972, 2
        %v2011 = vrot.slane %v1973, 2
        %v2012 = vsel %vm733, %v2010, %v2011
        %v2013 = vrot.slane %v1974, 2
        %v2014 = vrot.slane %v1975, 2
        %v2015 = vsel %vm733, %v2013, %v2014
        %v2024 = vadd.f32 %v1950, %v1994
        %v2025 = vadd.f32 %v1951, %v1997
        %v2026 = vadd.f32 %v1952, %v2000
        %v2027 = vadd.f32 %v1953, %v2003
        %v2028 = vadd.f32 %v1954, %v2006
        %v2029 = vadd.f32 %v1955, %v2009
        %v2030 = vadd.f32 %v1956, %v2012
        %v2031 = vadd.f32 %v1957, %v2015
        %s2032 = sld [smem:[#allocation3 + $0x17]]
        %v2033 = vstv %s2032
        %v2034 = vmul.f32 %v2033, %v566
        %v2035 = vmul.f32 %v2033, %v567
        %v2036 = vmul.f32 %v2033, %v568
        %v2037 = vmul.f32 %v2033, %v569
        %v2038 = vmul.f32 %v2033, %v570
        %v2039 = vmul.f32 %v2033, %v571
        %v2040 = vmul.f32 %v2033, %v572
        %v2041 = vmul.f32 %v2033, %v573
        %v2042 = vmul.f32 %v2033, %v574
        %v2043 = vmul.f32 %v2033, %v575
        %v2044 = vmul.f32 %v2033, %v576
        %v2045 = vmul.f32 %v2033, %v577
        %v2046 = vmul.f32 %v2033, %v578
        %v2047 = vmul.f32 %v2033, %v579
        %v2048 = vmul.f32 %v2033, %v580
        %v2049 = vmul.f32 %v2033, %v581
        %v2066 = vrot.slane %v2034, 3
        %v2067 = vrot.slane %v2035, 3
        %v2068 = vsel %vm808, %v2066, %v2067
        %v2069 = vrot.slane %v2036, 3
        %v2070 = vrot.slane %v2037, 3
        %v2071 = vsel %vm808, %v2069, %v2070
        %v2072 = vrot.slane %v2038, 3
        %v2073 = vrot.slane %v2039, 3
        %v2074 = vsel %vm808, %v2072, %v2073
        %v2075 = vrot.slane %v2040, 3
        %v2076 = vrot.slane %v2041, 3
        %v2077 = vsel %vm808, %v2075, %v2076
        %v2078 = vrot.slane %v2042, 3
        %v2079 = vrot.slane %v2043, 3
        %v2080 = vsel %vm808, %v2078, %v2079
        %v2081 = vrot.slane %v2044, 3
        %v2082 = vrot.slane %v2045, 3
        %v2083 = vsel %vm808, %v2081, %v2082
        %v2084 = vrot.slane %v2046, 3
        %v2085 = vrot.slane %v2047, 3
        %v2086 = vsel %vm808, %v2084, %v2085
        %v2087 = vrot.slane %v2048, 3
        %v2088 = vrot.slane %v2049, 3
        %v2089 = vsel %vm808, %v2087, %v2088
        %v2098 = vadd.f32 %v2024, %v2068
        %v2099 = vadd.f32 %v2025, %v2071
        %v2100 = vadd.f32 %v2026, %v2074
        %v2101 = vadd.f32 %v2027, %v2077
        %v2102 = vadd.f32 %v2028, %v2080
        %v2103 = vadd.f32 %v2029, %v2083
        %v2104 = vadd.f32 %v2030, %v2086
        %v2105 = vadd.f32 %v2031, %v2089
        %s2106 = sld [smem:[#allocation3 + $0x18]]
        %v2107 = vstv %s2106
        %v2108 = vmul.f32 %v2107, %v566
        %v2109 = vmul.f32 %v2107, %v567
        %v2110 = vmul.f32 %v2107, %v568
        %v2111 = vmul.f32 %v2107, %v569
        %v2112 = vmul.f32 %v2107, %v570
        %v2113 = vmul.f32 %v2107, %v571
        %v2114 = vmul.f32 %v2107, %v572
        %v2115 = vmul.f32 %v2107, %v573
        %v2116 = vmul.f32 %v2107, %v574
        %v2117 = vmul.f32 %v2107, %v575
        %v2118 = vmul.f32 %v2107, %v576
        %v2119 = vmul.f32 %v2107, %v577
        %v2120 = vmul.f32 %v2107, %v578
        %v2121 = vmul.f32 %v2107, %v579
        %v2122 = vmul.f32 %v2107, %v580
        %v2123 = vmul.f32 %v2107, %v581
        %v2140 = vrot.slane %v2108, 4
        %v2141 = vrot.slane %v2109, 4
        %v2142 = vsel %vm883, %v2140, %v2141
        %v2143 = vrot.slane %v2110, 4
        %v2144 = vrot.slane %v2111, 4
        %v2145 = vsel %vm883, %v2143, %v2144
        %v2146 = vrot.slane %v2112, 4
        %v2147 = vrot.slane %v2113, 4
        %v2148 = vsel %vm883, %v2146, %v2147
        %v2149 = vrot.slane %v2114, 4
        %v2150 = vrot.slane %v2115, 4
        %v2151 = vsel %vm883, %v2149, %v2150
        %v2152 = vrot.slane %v2116, 4
        %v2153 = vrot.slane %v2117, 4
        %v2154 = vsel %vm883, %v2152, %v2153
        %v2155 = vrot.slane %v2118, 4
        %v2156 = vrot.slane %v2119, 4
        %v2157 = vsel %vm883, %v2155, %v2156
        %v2158 = vrot.slane %v2120, 4
        %v2159 = vrot.slane %v2121, 4
        %v2160 = vsel %vm883, %v2158, %v2159
        %v2161 = vrot.slane %v2122, 4
        %v2162 = vrot.slane %v2123, 4
        %v2163 = vsel %vm883, %v2161, %v2162
        %v2172 = vadd.f32 %v2098, %v2142
        %v2173 = vadd.f32 %v2099, %v2145
        %v2174 = vadd.f32 %v2100, %v2148
        %v2175 = vadd.f32 %v2101, %v2151
        %v2176 = vadd.f32 %v2102, %v2154
        %v2177 = vadd.f32 %v2103, %v2157
        %v2178 = vadd.f32 %v2104, %v2160
        %v2179 = vadd.f32 %v2105, %v2163
        %s2180 = sld [smem:[#allocation3 + $0x19]]
        %v2181 = vstv %s2180
        %v2182 = vmul.f32 %v2181, %v582
        %v2183 = vmul.f32 %v2181, %v584
        %v2184 = vmul.f32 %v2181, %v586
        %v2185 = vmul.f32 %v2181, %v588
        %v2186 = vmul.f32 %v2181, %v590
        %v2187 = vmul.f32 %v2181, %v592
        %v2188 = vmul.f32 %v2181, %v594
        %v2189 = vmul.f32 %v2181, %v596
        %v2190 = vadd.f32 %v2172, %v2182
        %v2191 = vadd.f32 %v2173, %v2183
        %v2192 = vadd.f32 %v2174, %v2184
        %v2193 = vadd.f32 %v2175, %v2185
        %v2194 = vadd.f32 %v2176, %v2186
        %v2195 = vadd.f32 %v2177, %v2187
        %v2196 = vadd.f32 %v2178, %v2188
        %v2197 = vadd.f32 %v2179, %v2189
        %s2198 = sld [smem:[#allocation3 + $0x1a]]
        %v2199 = vstv %s2198
        %v2200 = vmul.f32 %v2199, %v582
        %v2201 = vmul.f32 %v2199, %v583
        %v2202 = vmul.f32 %v2199, %v584
        %v2203 = vmul.f32 %v2199, %v585
        %v2204 = vmul.f32 %v2199, %v586
        %v2205 = vmul.f32 %v2199, %v587
        %v2206 = vmul.f32 %v2199, %v588
        %v2207 = vmul.f32 %v2199, %v589
        %v2208 = vmul.f32 %v2199, %v590
        %v2209 = vmul.f32 %v2199, %v591
        %v2210 = vmul.f32 %v2199, %v592
        %v2211 = vmul.f32 %v2199, %v593
        %v2212 = vmul.f32 %v2199, %v594
        %v2213 = vmul.f32 %v2199, %v595
        %v2214 = vmul.f32 %v2199, %v596
        %v2215 = vmul.f32 %v2199, %v597
        %v2232 = vrot.slane %v2200, 1
        %v2233 = vrot.slane %v2201, 1
        %v2234 = vsel %vm658, %v2232, %v2233
        %v2235 = vrot.slane %v2202, 1
        %v2236 = vrot.slane %v2203, 1
        %v2237 = vsel %vm658, %v2235, %v2236
        %v2238 = vrot.slane %v2204, 1
        %v2239 = vrot.slane %v2205, 1
        %v2240 = vsel %vm658, %v2238, %v2239
        %v2241 = vrot.slane %v2206, 1
        %v2242 = vrot.slane %v2207, 1
        %v2243 = vsel %vm658, %v2241, %v2242
        %v2244 = vrot.slane %v2208, 1
        %v2245 = vrot.slane %v2209, 1
        %v2246 = vsel %vm658, %v2244, %v2245
        %v2247 = vrot.slane %v2210, 1
        %v2248 = vrot.slane %v2211, 1
        %v2249 = vsel %vm658, %v2247, %v2248
        %v2250 = vrot.slane %v2212, 1
        %v2251 = vrot.slane %v2213, 1
        %v2252 = vsel %vm658, %v2250, %v2251
        %v2253 = vrot.slane %v2214, 1
        %v2254 = vrot.slane %v2215, 1
        %v2255 = vsel %vm658, %v2253, %v2254
        %v2264 = vadd.f32 %v2190, %v2234
        %v2265 = vadd.f32 %v2191, %v2237
        %v2266 = vadd.f32 %v2192, %v2240
        %v2267 = vadd.f32 %v2193, %v2243
        %v2268 = vadd.f32 %v2194, %v2246
        %v2269 = vadd.f32 %v2195, %v2249
        %v2270 = vadd.f32 %v2196, %v2252
        %v2271 = vadd.f32 %v2197, %v2255
        %s2272 = sld [smem:[#allocation3 + $0x1b]]
        %v2273 = vstv %s2272
        %v2274 = vmul.f32 %v2273, %v582
        %v2275 = vmul.f32 %v2273, %v583
        %v2276 = vmul.f32 %v2273, %v584
        %v2277 = vmul.f32 %v2273, %v585
        %v2278 = vmul.f32 %v2273, %v586
        %v2279 = vmul.f32 %v2273, %v587
        %v2280 = vmul.f32 %v2273, %v588
        %v2281 = vmul.f32 %v2273, %v589
        %v2282 = vmul.f32 %v2273, %v590
        %v2283 = vmul.f32 %v2273, %v591
        %v2284 = vmul.f32 %v2273, %v592
        %v2285 = vmul.f32 %v2273, %v593
        %v2286 = vmul.f32 %v2273, %v594
        %v2287 = vmul.f32 %v2273, %v595
        %v2288 = vmul.f32 %v2273, %v596
        %v2289 = vmul.f32 %v2273, %v597
        %v2306 = vrot.slane %v2274, 2
        %v2307 = vrot.slane %v2275, 2
        %v2308 = vsel %vm733, %v2306, %v2307
        %v2309 = vrot.slane %v2276, 2
        %v2310 = vrot.slane %v2277, 2
        %v2311 = vsel %vm733, %v2309, %v2310
        %v2312 = vrot.slane %v2278, 2
        %v2313 = vrot.slane %v2279, 2
        %v2314 = vsel %vm733, %v2312, %v2313
        %v2315 = vrot.slane %v2280, 2
        %v2316 = vrot.slane %v2281, 2
        %v2317 = vsel %vm733, %v2315, %v2316
        %v2318 = vrot.slane %v2282, 2
        %v2319 = vrot.slane %v2283, 2
        %v2320 = vsel %vm733, %v2318, %v2319
        %v2321 = vrot.slane %v2284, 2
        %v2322 = vrot.slane %v2285, 2
        %v2323 = vsel %vm733, %v2321, %v2322
        %v2324 = vrot.slane %v2286, 2
        %v2325 = vrot.slane %v2287, 2
        %v2326 = vsel %vm733, %v2324, %v2325
        %v2327 = vrot.slane %v2288, 2
        %v2328 = vrot.slane %v2289, 2
        %v2329 = vsel %vm733, %v2327, %v2328
        %v2338 = vadd.f32 %v2264, %v2308
        %v2339 = vadd.f32 %v2265, %v2311
        %v2340 = vadd.f32 %v2266, %v2314
        %v2341 = vadd.f32 %v2267, %v2317
        %v2342 = vadd.f32 %v2268, %v2320
        %v2343 = vadd.f32 %v2269, %v2323
        %v2344 = vadd.f32 %v2270, %v2326
        %v2345 = vadd.f32 %v2271, %v2329
        %s2346 = sld [smem:[#allocation3 + $0x1c]]
        %v2347 = vstv %s2346
        %v2348 = vmul.f32 %v2347, %v582
        %v2349 = vmul.f32 %v2347, %v583
        %v2350 = vmul.f32 %v2347, %v584
        %v2351 = vmul.f32 %v2347, %v585
        %v2352 = vmul.f32 %v2347, %v586
        %v2353 = vmul.f32 %v2347, %v587
        %v2354 = vmul.f32 %v2347, %v588
        %v2355 = vmul.f32 %v2347, %v589
        %v2356 = vmul.f32 %v2347, %v590
        %v2357 = vmul.f32 %v2347, %v591
        %v2358 = vmul.f32 %v2347, %v592
        %v2359 = vmul.f32 %v2347, %v593
        %v2360 = vmul.f32 %v2347, %v594
        %v2361 = vmul.f32 %v2347, %v595
        %v2362 = vmul.f32 %v2347, %v596
        %v2363 = vmul.f32 %v2347, %v597
        %v2380 = vrot.slane %v2348, 3
        %v2381 = vrot.slane %v2349, 3
        %v2382 = vsel %vm808, %v2380, %v2381
        %v2383 = vrot.slane %v2350, 3
        %v2384 = vrot.slane %v2351, 3
        %v2385 = vsel %vm808, %v2383, %v2384
        %v2386 = vrot.slane %v2352, 3
        %v2387 = vrot.slane %v2353, 3
        %v2388 = vsel %vm808, %v2386, %v2387
        %v2389 = vrot.slane %v2354, 3
        %v2390 = vrot.slane %v2355, 3
        %v2391 = vsel %vm808, %v2389, %v2390
        %v2392 = vrot.slane %v2356, 3
        %v2393 = vrot.slane %v2357, 3
        %v2394 = vsel %vm808, %v2392, %v2393
        %v2395 = vrot.slane %v2358, 3
        %v2396 = vrot.slane %v2359, 3
        %v2397 = vsel %vm808, %v2395, %v2396
        %v2398 = vrot.slane %v2360, 3
        %v2399 = vrot.slane %v2361, 3
        %v2400 = vsel %vm808, %v2398, %v2399
        %v2401 = vrot.slane %v2362, 3
        %v2402 = vrot.slane %v2363, 3
        %v2403 = vsel %vm808, %v2401, %v2402
        %v2412 = vadd.f32 %v2338, %v2382
        %v2413 = vadd.f32 %v2339, %v2385
        %v2414 = vadd.f32 %v2340, %v2388
        %v2415 = vadd.f32 %v2341, %v2391
        %v2416 = vadd.f32 %v2342, %v2394
        %v2417 = vadd.f32 %v2343, %v2397
        %v2418 = vadd.f32 %v2344, %v2400
        %v2419 = vadd.f32 %v2345, %v2403
        %s2420 = sld [smem:[#allocation3 + $0x1d]]
        %v2421 = vstv %s2420
        %v2422 = vmul.f32 %v2421, %v582
        %v2423 = vmul.f32 %v2421, %v583
        %v2424 = vmul.f32 %v2421, %v584
        %v2425 = vmul.f32 %v2421, %v585
        %v2426 = vmul.f32 %v2421, %v586
        %v2427 = vmul.f32 %v2421, %v587
        %v2428 = vmul.f32 %v2421, %v588
        %v2429 = vmul.f32 %v2421, %v589
        %v2430 = vmul.f32 %v2421, %v590
        %v2431 = vmul.f32 %v2421, %v591
        %v2432 = vmul.f32 %v2421, %v592
        %v2433 = vmul.f32 %v2421, %v593
        %v2434 = vmul.f32 %v2421, %v594
        %v2435 = vmul.f32 %v2421, %v595
        %v2436 = vmul.f32 %v2421, %v596
        %v2437 = vmul.f32 %v2421, %v597
        %v2454 = vrot.slane %v2422, 4
        %v2455 = vrot.slane %v2423, 4
        %v2456 = vsel %vm883, %v2454, %v2455
        %v2457 = vrot.slane %v2424, 4
        %v2458 = vrot.slane %v2425, 4
        %v2459 = vsel %vm883, %v2457, %v2458
        %v2460 = vrot.slane %v2426, 4
        %v2461 = vrot.slane %v2427, 4
        %v2462 = vsel %vm883, %v2460, %v2461
        %v2463 = vrot.slane %v2428, 4
        %v2464 = vrot.slane %v2429, 4
        %v2465 = vsel %vm883, %v2463, %v2464
        %v2466 = vrot.slane %v2430, 4
        %v2467 = vrot.slane %v2431, 4
        %v2468 = vsel %vm883, %v2466, %v2467
        %v2469 = vrot.slane %v2432, 4
        %v2470 = vrot.slane %v2433, 4
        %v2471 = vsel %vm883, %v2469, %v2470
        %v2472 = vrot.slane %v2434, 4
        %v2473 = vrot.slane %v2435, 4
        %v2474 = vsel %vm883, %v2472, %v2473
        %v2475 = vrot.slane %v2436, 4
        %v2476 = vrot.slane %v2437, 4
        %v2477 = vsel %vm883, %v2475, %v2476
        %v2486 = vadd.f32 %v2412, %v2456
        %v2487 = vadd.f32 %v2413, %v2459
        %v2488 = vadd.f32 %v2414, %v2462
        %v2489 = vadd.f32 %v2415, %v2465
        %v2490 = vadd.f32 %v2416, %v2468
        %v2491 = vadd.f32 %v2417, %v2471
        %v2492 = vadd.f32 %v2418, %v2474
        %v2493 = vadd.f32 %v2419, %v2477
        %s2494 = sld [smem:[#allocation3 + $0x1e]]
        %v2495 = vstv %s2494
        %v2496 = vmul.f32 %v2495, %v584
        %v2497 = vmul.f32 %v2495, %v586
        %v2498 = vmul.f32 %v2495, %v588
        %v2499 = vmul.f32 %v2495, %v590
        %v2500 = vmul.f32 %v2495, %v592
        %v2501 = vmul.f32 %v2495, %v594
        %v2502 = vmul.f32 %v2495, %v596
        %v2503 = vmul.f32 %v2495, %v598
        %v2504 = vadd.f32 %v2486, %v2496
        %v2505 = vadd.f32 %v2487, %v2497
        %v2506 = vadd.f32 %v2488, %v2498
        %v2507 = vadd.f32 %v2489, %v2499
        %v2508 = vadd.f32 %v2490, %v2500
        %v2509 = vadd.f32 %v2491, %v2501
        %v2510 = vadd.f32 %v2492, %v2502
        %v2511 = vadd.f32 %v2493, %v2503
        %s2512 = sld [smem:[#allocation3 + $0x1f]]
        %v2513 = vstv %s2512
        %v2514 = vmul.f32 %v2513, %v584
        %v2515 = vmul.f32 %v2513, %v585
        %v2516 = vmul.f32 %v2513, %v586
        %v2517 = vmul.f32 %v2513, %v587
        %v2518 = vmul.f32 %v2513, %v588
        %v2519 = vmul.f32 %v2513, %v589
        %v2520 = vmul.f32 %v2513, %v590
        %v2521 = vmul.f32 %v2513, %v591
        %v2522 = vmul.f32 %v2513, %v592
        %v2523 = vmul.f32 %v2513, %v593
        %v2524 = vmul.f32 %v2513, %v594
        %v2525 = vmul.f32 %v2513, %v595
        %v2526 = vmul.f32 %v2513, %v596
        %v2527 = vmul.f32 %v2513, %v597
        %v2528 = vmul.f32 %v2513, %v598
        %v2529 = vmul.f32 %v2513, %v599
        %v2546 = vrot.slane %v2514, 1
        %v2547 = vrot.slane %v2515, 1
        %v2548 = vsel %vm658, %v2546, %v2547
        %v2549 = vrot.slane %v2516, 1
        %v2550 = vrot.slane %v2517, 1
        %v2551 = vsel %vm658, %v2549, %v2550
        %v2552 = vrot.slane %v2518, 1
        %v2553 = vrot.slane %v2519, 1
        %v2554 = vsel %vm658, %v2552, %v2553
        %v2555 = vrot.slane %v2520, 1
        %v2556 = vrot.slane %v2521, 1
        %v2557 = vsel %vm658, %v2555, %v2556
        %v2558 = vrot.slane %v2522, 1
        %v2559 = vrot.slane %v2523, 1
        %v2560 = vsel %vm658, %v2558, %v2559
        %v2561 = vrot.slane %v2524, 1
        %v2562 = vrot.slane %v2525, 1
        %v2563 = vsel %vm658, %v2561, %v2562
        %v2564 = vrot.slane %v2526, 1
        %v2565 = vrot.slane %v2527, 1
        %v2566 = vsel %vm658, %v2564, %v2565
        %v2567 = vrot.slane %v2528, 1
        %v2568 = vrot.slane %v2529, 1
        %v2569 = vsel %vm658, %v2567, %v2568
        %v2578 = vadd.f32 %v2504, %v2548
        %v2579 = vadd.f32 %v2505, %v2551
        %v2580 = vadd.f32 %v2506, %v2554
        %v2581 = vadd.f32 %v2507, %v2557
        %v2582 = vadd.f32 %v2508, %v2560
        %v2583 = vadd.f32 %v2509, %v2563
        %v2584 = vadd.f32 %v2510, %v2566
        %v2585 = vadd.f32 %v2511, %v2569
        %s2586 = sld [smem:[#allocation3 + $0x20]]
        %v2587 = vstv %s2586
        %v2588 = vmul.f32 %v2587, %v584
        %v2589 = vmul.f32 %v2587, %v585
        %v2590 = vmul.f32 %v2587, %v586
        %v2591 = vmul.f32 %v2587, %v587
        %v2592 = vmul.f32 %v2587, %v588
        %v2593 = vmul.f32 %v2587, %v589
        %v2594 = vmul.f32 %v2587, %v590
        %v2595 = vmul.f32 %v2587, %v591
        %v2596 = vmul.f32 %v2587, %v592
        %v2597 = vmul.f32 %v2587, %v593
        %v2598 = vmul.f32 %v2587, %v594
        %v2599 = vmul.f32 %v2587, %v595
        %v2600 = vmul.f32 %v2587, %v596
        %v2601 = vmul.f32 %v2587, %v597
        %v2602 = vmul.f32 %v2587, %v598
        %v2603 = vmul.f32 %v2587, %v599
        %v2620 = vrot.slane %v2588, 2
        %v2621 = vrot.slane %v2589, 2
        %v2622 = vsel %vm733, %v2620, %v2621
        %v2623 = vrot.slane %v2590, 2
        %v2624 = vrot.slane %v2591, 2
        %v2625 = vsel %vm733, %v2623, %v2624
        %v2626 = vrot.slane %v2592, 2
        %v2627 = vrot.slane %v2593, 2
        %v2628 = vsel %vm733, %v2626, %v2627
        %v2629 = vrot.slane %v2594, 2
        %v2630 = vrot.slane %v2595, 2
        %v2631 = vsel %vm733, %v2629, %v2630
        %v2632 = vrot.slane %v2596, 2
        %v2633 = vrot.slane %v2597, 2
        %v2634 = vsel %vm733, %v2632, %v2633
        %v2635 = vrot.slane %v2598, 2
        %v2636 = vrot.slane %v2599, 2
        %v2637 = vsel %vm733, %v2635, %v2636
        %v2638 = vrot.slane %v2600, 2
        %v2639 = vrot.slane %v2601, 2
        %v2640 = vsel %vm733, %v2638, %v2639
        %v2641 = vrot.slane %v2602, 2
        %v2642 = vrot.slane %v2603, 2
        %v2643 = vsel %vm733, %v2641, %v2642
        %v2652 = vadd.f32 %v2578, %v2622
        %v2653 = vadd.f32 %v2579, %v2625
        %v2654 = vadd.f32 %v2580, %v2628
        %v2655 = vadd.f32 %v2581, %v2631
        %v2656 = vadd.f32 %v2582, %v2634
        %v2657 = vadd.f32 %v2583, %v2637
        %v2658 = vadd.f32 %v2584, %v2640
        %v2659 = vadd.f32 %v2585, %v2643
        %s2660 = sld [smem:[#allocation3 + $0x21]]
        %v2661 = vstv %s2660
        %v2662 = vmul.f32 %v2661, %v584
        %v2663 = vmul.f32 %v2661, %v585
        %v2664 = vmul.f32 %v2661, %v586
        %v2665 = vmul.f32 %v2661, %v587
        %v2666 = vmul.f32 %v2661, %v588
        %v2667 = vmul.f32 %v2661, %v589
        %v2668 = vmul.f32 %v2661, %v590
        %v2669 = vmul.f32 %v2661, %v591
        %v2670 = vmul.f32 %v2661, %v592
        %v2671 = vmul.f32 %v2661, %v593
        %v2672 = vmul.f32 %v2661, %v594
        %v2673 = vmul.f32 %v2661, %v595
        %v2674 = vmul.f32 %v2661, %v596
        %v2675 = vmul.f32 %v2661, %v597
        %v2676 = vmul.f32 %v2661, %v598
        %v2677 = vmul.f32 %v2661, %v599
        %v2694 = vrot.slane %v2662, 3
        %v2695 = vrot.slane %v2663, 3
        %v2696 = vsel %vm808, %v2694, %v2695
        %v2697 = vrot.slane %v2664, 3
        %v2698 = vrot.slane %v2665, 3
        %v2699 = vsel %vm808, %v2697, %v2698
        %v2700 = vrot.slane %v2666, 3
        %v2701 = vrot.slane %v2667, 3
        %v2702 = vsel %vm808, %v2700, %v2701
        %v2703 = vrot.slane %v2668, 3
        %v2704 = vrot.slane %v2669, 3
        %v2705 = vsel %vm808, %v2703, %v2704
        %v2706 = vrot.slane %v2670, 3
        %v2707 = vrot.slane %v2671, 3
        %v2708 = vsel %vm808, %v2706, %v2707
        %v2709 = vrot.slane %v2672, 3
        %v2710 = vrot.slane %v2673, 3
        %v2711 = vsel %vm808, %v2709, %v2710
        %v2712 = vrot.slane %v2674, 3
        %v2713 = vrot.slane %v2675, 3
        %v2714 = vsel %vm808, %v2712, %v2713
        %v2715 = vrot.slane %v2676, 3
        %v2716 = vrot.slane %v2677, 3
        %v2717 = vsel %vm808, %v2715, %v2716
        %v2726 = vadd.f32 %v2652, %v2696
        %v2727 = vadd.f32 %v2653, %v2699
        %v2728 = vadd.f32 %v2654, %v2702
        %v2729 = vadd.f32 %v2655, %v2705
        %v2730 = vadd.f32 %v2656, %v2708
        %v2731 = vadd.f32 %v2657, %v2711
        %v2732 = vadd.f32 %v2658, %v2714
        %v2733 = vadd.f32 %v2659, %v2717
        %s2734 = sld [smem:[#allocation3 + $0x22]]
        %v2735 = vstv %s2734
        %v2736 = vmul.f32 %v2735, %v584
        %v2737 = vmul.f32 %v2735, %v585
        %v2738 = vmul.f32 %v2735, %v586
        %v2739 = vmul.f32 %v2735, %v587
        %v2740 = vmul.f32 %v2735, %v588
        %v2741 = vmul.f32 %v2735, %v589
        %v2742 = vmul.f32 %v2735, %v590
        %v2743 = vmul.f32 %v2735, %v591
        %v2744 = vmul.f32 %v2735, %v592
        %v2745 = vmul.f32 %v2735, %v593
        %v2746 = vmul.f32 %v2735, %v594
        %v2747 = vmul.f32 %v2735, %v595
        %v2748 = vmul.f32 %v2735, %v596
        %v2749 = vmul.f32 %v2735, %v597
        %v2750 = vmul.f32 %v2735, %v598
        %v2751 = vmul.f32 %v2735, %v599
        %v2768 = vrot.slane %v2736, 4
        %v2769 = vrot.slane %v2737, 4
        %v2770 = vsel %vm883, %v2768, %v2769
        %v2771 = vrot.slane %v2738, 4
        %v2772 = vrot.slane %v2739, 4
        %v2773 = vsel %vm883, %v2771, %v2772
        %v2774 = vrot.slane %v2740, 4
        %v2775 = vrot.slane %v2741, 4
        %v2776 = vsel %vm883, %v2774, %v2775
        %v2777 = vrot.slane %v2742, 4
        %v2778 = vrot.slane %v2743, 4
        %v2779 = vsel %vm883, %v2777, %v2778
        %v2780 = vrot.slane %v2744, 4
        %v2781 = vrot.slane %v2745, 4
        %v2782 = vsel %vm883, %v2780, %v2781
        %v2783 = vrot.slane %v2746, 4
        %v2784 = vrot.slane %v2747, 4
        %v2785 = vsel %vm883, %v2783, %v2784
        %v2786 = vrot.slane %v2748, 4
        %v2787 = vrot.slane %v2749, 4
        %v2788 = vsel %vm883, %v2786, %v2787
        %v2789 = vrot.slane %v2750, 4
        %v2790 = vrot.slane %v2751, 4
        %v2791 = vsel %vm883, %v2789, %v2790
        %v2800 = vadd.f32 %v2726, %v2770
        %v2801 = vadd.f32 %v2727, %v2773
        %v2802 = vadd.f32 %v2728, %v2776
        %v2803 = vadd.f32 %v2729, %v2779
        %v2804 = vadd.f32 %v2730, %v2782
        %v2805 = vadd.f32 %v2731, %v2785
        %v2806 = vadd.f32 %v2732, %v2788
        %v2807 = vadd.f32 %v2733, %v2791
        %s2808 = sld [smem:[#allocation3 + $0x23]]
        %v2809 = vstv %s2808
        %v2810 = vmul.f32 %v2809, %v586
        %v2811 = vmul.f32 %v2809, %v588
        %v2812 = vmul.f32 %v2809, %v590
        %v2813 = vmul.f32 %v2809, %v592
        %v2814 = vmul.f32 %v2809, %v594
        %v2815 = vmul.f32 %v2809, %v596
        %v2816 = vmul.f32 %v2809, %v598
        %v2817 = vmul.f32 %v2809, %v600
        %v2818 = vadd.f32 %v2800, %v2810
        %v2819 = vadd.f32 %v2801, %v2811
        %v2820 = vadd.f32 %v2802, %v2812
        %v2821 = vadd.f32 %v2803, %v2813
        %v2822 = vadd.f32 %v2804, %v2814
        %v2823 = vadd.f32 %v2805, %v2815
        %v2824 = vadd.f32 %v2806, %v2816
        %v2825 = vadd.f32 %v2807, %v2817
        %s2826 = sld [smem:[#allocation3 + $0x24]]
        %v2827 = vstv %s2826
        %v2828 = vmul.f32 %v2827, %v586
        %v2829 = vmul.f32 %v2827, %v587
        %v2830 = vmul.f32 %v2827, %v588
        %v2831 = vmul.f32 %v2827, %v589
        %v2832 = vmul.f32 %v2827, %v590
        %v2833 = vmul.f32 %v2827, %v591
        %v2834 = vmul.f32 %v2827, %v592
        %v2835 = vmul.f32 %v2827, %v593
        %v2836 = vmul.f32 %v2827, %v594
        %v2837 = vmul.f32 %v2827, %v595
        %v2838 = vmul.f32 %v2827, %v596
        %v2839 = vmul.f32 %v2827, %v597
        %v2840 = vmul.f32 %v2827, %v598
        %v2841 = vmul.f32 %v2827, %v599
        %v2842 = vmul.f32 %v2827, %v600
        %v2843 = vmul.f32 %v2827, %v601
        %v2860 = vrot.slane %v2828, 1
        %v2861 = vrot.slane %v2829, 1
        %v2862 = vsel %vm658, %v2860, %v2861
        %v2863 = vrot.slane %v2830, 1
        %v2864 = vrot.slane %v2831, 1
        %v2865 = vsel %vm658, %v2863, %v2864
        %v2866 = vrot.slane %v2832, 1
        %v2867 = vrot.slane %v2833, 1
        %v2868 = vsel %vm658, %v2866, %v2867
        %v2869 = vrot.slane %v2834, 1
        %v2870 = vrot.slane %v2835, 1
        %v2871 = vsel %vm658, %v2869, %v2870
        %v2872 = vrot.slane %v2836, 1
        %v2873 = vrot.slane %v2837, 1
        %v2874 = vsel %vm658, %v2872, %v2873
        %v2875 = vrot.slane %v2838, 1
        %v2876 = vrot.slane %v2839, 1
        %v2877 = vsel %vm658, %v2875, %v2876
        %v2878 = vrot.slane %v2840, 1
        %v2879 = vrot.slane %v2841, 1
        %v2880 = vsel %vm658, %v2878, %v2879
        %v2881 = vrot.slane %v2842, 1
        %v2882 = vrot.slane %v2843, 1
        %v2883 = vsel %vm658, %v2881, %v2882
        %v2892 = vadd.f32 %v2818, %v2862
        %v2893 = vadd.f32 %v2819, %v2865
        %v2894 = vadd.f32 %v2820, %v2868
        %v2895 = vadd.f32 %v2821, %v2871
        %v2896 = vadd.f32 %v2822, %v2874
        %v2897 = vadd.f32 %v2823, %v2877
        %v2898 = vadd.f32 %v2824, %v2880
        %v2899 = vadd.f32 %v2825, %v2883
        %s2900 = sld [smem:[#allocation3 + $0x25]]
        %v2901 = vstv %s2900
        %v2902 = vmul.f32 %v2901, %v586
        %v2903 = vmul.f32 %v2901, %v587
        %v2904 = vmul.f32 %v2901, %v588
        %v2905 = vmul.f32 %v2901, %v589
        %v2906 = vmul.f32 %v2901, %v590
        %v2907 = vmul.f32 %v2901, %v591
        %v2908 = vmul.f32 %v2901, %v592
        %v2909 = vmul.f32 %v2901, %v593
        %v2910 = vmul.f32 %v2901, %v594
        %v2911 = vmul.f32 %v2901, %v595
        %v2912 = vmul.f32 %v2901, %v596
        %v2913 = vmul.f32 %v2901, %v597
        %v2914 = vmul.f32 %v2901, %v598
        %v2915 = vmul.f32 %v2901, %v599
        %v2916 = vmul.f32 %v2901, %v600
        %v2917 = vmul.f32 %v2901, %v601
        %v2934 = vrot.slane %v2902, 2
        %v2935 = vrot.slane %v2903, 2
        %v2936 = vsel %vm733, %v2934, %v2935
        %v2937 = vrot.slane %v2904, 2
        %v2938 = vrot.slane %v2905, 2
        %v2939 = vsel %vm733, %v2937, %v2938
        %v2940 = vrot.slane %v2906, 2
        %v2941 = vrot.slane %v2907, 2
        %v2942 = vsel %vm733, %v2940, %v2941
        %v2943 = vrot.slane %v2908, 2
        %v2944 = vrot.slane %v2909, 2
        %v2945 = vsel %vm733, %v2943, %v2944
        %v2946 = vrot.slane %v2910, 2
        %v2947 = vrot.slane %v2911, 2
        %v2948 = vsel %vm733, %v2946, %v2947
        %v2949 = vrot.slane %v2912, 2
        %v2950 = vrot.slane %v2913, 2
        %v2951 = vsel %vm733, %v2949, %v2950
        %v2952 = vrot.slane %v2914, 2
        %v2953 = vrot.slane %v2915, 2
        %v2954 = vsel %vm733, %v2952, %v2953
        %v2955 = vrot.slane %v2916, 2
        %v2956 = vrot.slane %v2917, 2
        %v2957 = vsel %vm733, %v2955, %v2956
        %v2966 = vadd.f32 %v2892, %v2936
        %v2967 = vadd.f32 %v2893, %v2939
        %v2968 = vadd.f32 %v2894, %v2942
        %v2969 = vadd.f32 %v2895, %v2945
        %v2970 = vadd.f32 %v2896, %v2948
        %v2971 = vadd.f32 %v2897, %v2951
        %v2972 = vadd.f32 %v2898, %v2954
        %v2973 = vadd.f32 %v2899, %v2957
        %s2974 = sld [smem:[#allocation3 + $0x26]]
        %v2975 = vstv %s2974
        %v2976 = vmul.f32 %v2975, %v586
        %v2977 = vmul.f32 %v2975, %v587
        %v2978 = vmul.f32 %v2975, %v588
        %v2979 = vmul.f32 %v2975, %v589
        %v2980 = vmul.f32 %v2975, %v590
        %v2981 = vmul.f32 %v2975, %v591
        %v2982 = vmul.f32 %v2975, %v592
        %v2983 = vmul.f32 %v2975, %v593
        %v2984 = vmul.f32 %v2975, %v594
        %v2985 = vmul.f32 %v2975, %v595
        %v2986 = vmul.f32 %v2975, %v596
        %v2987 = vmul.f32 %v2975, %v597
        %v2988 = vmul.f32 %v2975, %v598
        %v2989 = vmul.f32 %v2975, %v599
        %v2990 = vmul.f32 %v2975, %v600
        %v2991 = vmul.f32 %v2975, %v601
        %v3008 = vrot.slane %v2976, 3
        %v3009 = vrot.slane %v2977, 3
        %v3010 = vsel %vm808, %v3008, %v3009
        %v3011 = vrot.slane %v2978, 3
        %v3012 = vrot.slane %v2979, 3
        %v3013 = vsel %vm808, %v3011, %v3012
        %v3014 = vrot.slane %v2980, 3
        %v3015 = vrot.slane %v2981, 3
        %v3016 = vsel %vm808, %v3014, %v3015
        %v3017 = vrot.slane %v2982, 3
        %v3018 = vrot.slane %v2983, 3
        %v3019 = vsel %vm808, %v3017, %v3018
        %v3020 = vrot.slane %v2984, 3
        %v3021 = vrot.slane %v2985, 3
        %v3022 = vsel %vm808, %v3020, %v3021
        %v3023 = vrot.slane %v2986, 3
        %v3024 = vrot.slane %v2987, 3
        %v3025 = vsel %vm808, %v3023, %v3024
        %v3026 = vrot.slane %v2988, 3
        %v3027 = vrot.slane %v2989, 3
        %v3028 = vsel %vm808, %v3026, %v3027
        %v3029 = vrot.slane %v2990, 3
        %v3030 = vrot.slane %v2991, 3
        %v3031 = vsel %vm808, %v3029, %v3030
        %v3040 = vadd.f32 %v2966, %v3010
        %v3041 = vadd.f32 %v2967, %v3013
        %v3042 = vadd.f32 %v2968, %v3016
        %v3043 = vadd.f32 %v2969, %v3019
        %v3044 = vadd.f32 %v2970, %v3022
        %v3045 = vadd.f32 %v2971, %v3025
        %v3046 = vadd.f32 %v2972, %v3028
        %v3047 = vadd.f32 %v2973, %v3031
        %s3048 = sld [smem:[#allocation3 + $0x27]]
        %v3049 = vstv %s3048
        %v3050 = vmul.f32 %v3049, %v586
        %v3051 = vmul.f32 %v3049, %v587
        %v3052 = vmul.f32 %v3049, %v588
        %v3053 = vmul.f32 %v3049, %v589
        %v3054 = vmul.f32 %v3049, %v590
        %v3055 = vmul.f32 %v3049, %v591
        %v3056 = vmul.f32 %v3049, %v592
        %v3057 = vmul.f32 %v3049, %v593
        %v3058 = vmul.f32 %v3049, %v594
        %v3059 = vmul.f32 %v3049, %v595
        %v3060 = vmul.f32 %v3049, %v596
        %v3061 = vmul.f32 %v3049, %v597
        %v3062 = vmul.f32 %v3049, %v598
        %v3063 = vmul.f32 %v3049, %v599
        %v3064 = vmul.f32 %v3049, %v600
        %v3065 = vmul.f32 %v3049, %v601
        %v3082 = vrot.slane %v3050, 4
        %v3083 = vrot.slane %v3051, 4
        %v3084 = vsel %vm883, %v3082, %v3083
        %v3085 = vrot.slane %v3052, 4
        %v3086 = vrot.slane %v3053, 4
        %v3087 = vsel %vm883, %v3085, %v3086
        %v3088 = vrot.slane %v3054, 4
        %v3089 = vrot.slane %v3055, 4
        %v3090 = vsel %vm883, %v3088, %v3089
        %v3091 = vrot.slane %v3056, 4
        %v3092 = vrot.slane %v3057, 4
        %v3093 = vsel %vm883, %v3091, %v3092
        %v3094 = vrot.slane %v3058, 4
        %v3095 = vrot.slane %v3059, 4
        %v3096 = vsel %vm883, %v3094, %v3095
        %v3097 = vrot.slane %v3060, 4
        %v3098 = vrot.slane %v3061, 4
        %v3099 = vsel %vm883, %v3097, %v3098
        %v3100 = vrot.slane %v3062, 4
        %v3101 = vrot.slane %v3063, 4
        %v3102 = vsel %vm883, %v3100, %v3101
        %v3103 = vrot.slane %v3064, 4
        %v3104 = vrot.slane %v3065, 4
        %v3105 = vsel %vm883, %v3103, %v3104
        %v3114 = vadd.f32 %v3040, %v3084
        %v3115 = vadd.f32 %v3041, %v3087
        %v3116 = vadd.f32 %v3042, %v3090
        %v3117 = vadd.f32 %v3043, %v3093
        %v3118 = vadd.f32 %v3044, %v3096
        %v3119 = vadd.f32 %v3045, %v3099
        %v3120 = vadd.f32 %v3046, %v3102
        %v3121 = vadd.f32 %v3047, %v3105
        %s3122 = sld [smem:[#allocation3 + $0x28]]
        %v3123 = vstv %s3122
        %v3124 = vmul.f32 %v3123, %v588
        %v3125 = vmul.f32 %v3123, %v590
        %v3126 = vmul.f32 %v3123, %v592
        %v3127 = vmul.f32 %v3123, %v594
        %v3128 = vmul.f32 %v3123, %v596
        %v3129 = vmul.f32 %v3123, %v598
        %v3130 = vmul.f32 %v3123, %v600
        %v3131 = vmul.f32 %v3123, %v602
        %v3132 = vadd.f32 %v3114, %v3124
        %v3133 = vadd.f32 %v3115, %v3125
        %v3134 = vadd.f32 %v3116, %v3126
        %v3135 = vadd.f32 %v3117, %v3127
        %v3136 = vadd.f32 %v3118, %v3128
        %v3137 = vadd.f32 %v3119, %v3129
        %v3138 = vadd.f32 %v3120, %v3130
        %v3139 = vadd.f32 %v3121, %v3131
        %s3140 = sld [smem:[#allocation3 + $0x29]]
        %v3141 = vstv %s3140
        %v3142 = vmul.f32 %v3141, %v588
        %v3143 = vmul.f32 %v3141, %v589
        %v3144 = vmul.f32 %v3141, %v590
        %v3145 = vmul.f32 %v3141, %v591
        %v3146 = vmul.f32 %v3141, %v592
        %v3147 = vmul.f32 %v3141, %v593
        %v3148 = vmul.f32 %v3141, %v594
        %v3149 = vmul.f32 %v3141, %v595
        %v3150 = vmul.f32 %v3141, %v596
        %v3151 = vmul.f32 %v3141, %v597
        %v3152 = vmul.f32 %v3141, %v598
        %v3153 = vmul.f32 %v3141, %v599
        %v3154 = vmul.f32 %v3141, %v600
        %v3155 = vmul.f32 %v3141, %v601
        %v3156 = vmul.f32 %v3141, %v602
        %v3157 = vmul.f32 %v3141, %v603
        %v3174 = vrot.slane %v3142, 1
        %v3175 = vrot.slane %v3143, 1
        %v3176 = vsel %vm658, %v3174, %v3175
        %v3177 = vrot.slane %v3144, 1
        %v3178 = vrot.slane %v3145, 1
        %v3179 = vsel %vm658, %v3177, %v3178
        %v3180 = vrot.slane %v3146, 1
        %v3181 = vrot.slane %v3147, 1
        %v3182 = vsel %vm658, %v3180, %v3181
        %v3183 = vrot.slane %v3148, 1
        %v3184 = vrot.slane %v3149, 1
        %v3185 = vsel %vm658, %v3183, %v3184
        %v3186 = vrot.slane %v3150, 1
        %v3187 = vrot.slane %v3151, 1
        %v3188 = vsel %vm658, %v3186, %v3187
        %v3189 = vrot.slane %v3152, 1
        %v3190 = vrot.slane %v3153, 1
        %v3191 = vsel %vm658, %v3189, %v3190
        %v3192 = vrot.slane %v3154, 1
        %v3193 = vrot.slane %v3155, 1
        %v3194 = vsel %vm658, %v3192, %v3193
        %v3195 = vrot.slane %v3156, 1
        %v3196 = vrot.slane %v3157, 1
        %v3197 = vsel %vm658, %v3195, %v3196
        %v3206 = vadd.f32 %v3132, %v3176
        %v3207 = vadd.f32 %v3133, %v3179
        %v3208 = vadd.f32 %v3134, %v3182
        %v3209 = vadd.f32 %v3135, %v3185
        %v3210 = vadd.f32 %v3136, %v3188
        %v3211 = vadd.f32 %v3137, %v3191
        %v3212 = vadd.f32 %v3138, %v3194
        %v3213 = vadd.f32 %v3139, %v3197
        %s3214 = sld [smem:[#allocation3 + $0x2a]]
        %v3215 = vstv %s3214
        %v3216 = vmul.f32 %v3215, %v588
        %v3217 = vmul.f32 %v3215, %v589
        %v3218 = vmul.f32 %v3215, %v590
        %v3219 = vmul.f32 %v3215, %v591
        %v3220 = vmul.f32 %v3215, %v592
        %v3221 = vmul.f32 %v3215, %v593
        %v3222 = vmul.f32 %v3215, %v594
        %v3223 = vmul.f32 %v3215, %v595
        %v3224 = vmul.f32 %v3215, %v596
        %v3225 = vmul.f32 %v3215, %v597
        %v3226 = vmul.f32 %v3215, %v598
        %v3227 = vmul.f32 %v3215, %v599
        %v3228 = vmul.f32 %v3215, %v600
        %v3229 = vmul.f32 %v3215, %v601
        %v3230 = vmul.f32 %v3215, %v602
        %v3231 = vmul.f32 %v3215, %v603
        %v3248 = vrot.slane %v3216, 2
        %v3249 = vrot.slane %v3217, 2
        %v3250 = vsel %vm733, %v3248, %v3249
        %v3251 = vrot.slane %v3218, 2
        %v3252 = vrot.slane %v3219, 2
        %v3253 = vsel %vm733, %v3251, %v3252
        %v3254 = vrot.slane %v3220, 2
        %v3255 = vrot.slane %v3221, 2
        %v3256 = vsel %vm733, %v3254, %v3255
        %v3257 = vrot.slane %v3222, 2
        %v3258 = vrot.slane %v3223, 2
        %v3259 = vsel %vm733, %v3257, %v3258
        %v3260 = vrot.slane %v3224, 2
        %v3261 = vrot.slane %v3225, 2
        %v3262 = vsel %vm733, %v3260, %v3261
        %v3263 = vrot.slane %v3226, 2
        %v3264 = vrot.slane %v3227, 2
        %v3265 = vsel %vm733, %v3263, %v3264
        %v3266 = vrot.slane %v3228, 2
        %v3267 = vrot.slane %v3229, 2
        %v3268 = vsel %vm733, %v3266, %v3267
        %v3269 = vrot.slane %v3230, 2
        %v3270 = vrot.slane %v3231, 2
        %v3271 = vsel %vm733, %v3269, %v3270
        %v3280 = vadd.f32 %v3206, %v3250
        %v3281 = vadd.f32 %v3207, %v3253
        %v3282 = vadd.f32 %v3208, %v3256
        %v3283 = vadd.f32 %v3209, %v3259
        %v3284 = vadd.f32 %v3210, %v3262
        %v3285 = vadd.f32 %v3211, %v3265
        %v3286 = vadd.f32 %v3212, %v3268
        %v3287 = vadd.f32 %v3213, %v3271
        %s3288 = sld [smem:[#allocation3 + $0x2b]]
        %v3289 = vstv %s3288
        %v3290 = vmul.f32 %v3289, %v588
        %v3291 = vmul.f32 %v3289, %v589
        %v3292 = vmul.f32 %v3289, %v590
        %v3293 = vmul.f32 %v3289, %v591
        %v3294 = vmul.f32 %v3289, %v592
        %v3295 = vmul.f32 %v3289, %v593
        %v3296 = vmul.f32 %v3289, %v594
        %v3297 = vmul.f32 %v3289, %v595
        %v3298 = vmul.f32 %v3289, %v596
        %v3299 = vmul.f32 %v3289, %v597
        %v3300 = vmul.f32 %v3289, %v598
        %v3301 = vmul.f32 %v3289, %v599
        %v3302 = vmul.f32 %v3289, %v600
        %v3303 = vmul.f32 %v3289, %v601
        %v3304 = vmul.f32 %v3289, %v602
        %v3305 = vmul.f32 %v3289, %v603
        %v3322 = vrot.slane %v3290, 3
        %v3323 = vrot.slane %v3291, 3
        %v3324 = vsel %vm808, %v3322, %v3323
        %v3325 = vrot.slane %v3292, 3
        %v3326 = vrot.slane %v3293, 3
        %v3327 = vsel %vm808, %v3325, %v3326
        %v3328 = vrot.slane %v3294, 3
        %v3329 = vrot.slane %v3295, 3
        %v3330 = vsel %vm808, %v3328, %v3329
        %v3331 = vrot.slane %v3296, 3
        %v3332 = vrot.slane %v3297, 3
        %v3333 = vsel %vm808, %v3331, %v3332
        %v3334 = vrot.slane %v3298, 3
        %v3335 = vrot.slane %v3299, 3
        %v3336 = vsel %vm808, %v3334, %v3335
        %v3337 = vrot.slane %v3300, 3
        %v3338 = vrot.slane %v3301, 3
        %v3339 = vsel %vm808, %v3337, %v3338
        %v3340 = vrot.slane %v3302, 3
        %v3341 = vrot.slane %v3303, 3
        %v3342 = vsel %vm808, %v3340, %v3341
        %v3343 = vrot.slane %v3304, 3
        %v3344 = vrot.slane %v3305, 3
        %v3345 = vsel %vm808, %v3343, %v3344
        %v3354 = vadd.f32 %v3280, %v3324
        %v3355 = vadd.f32 %v3281, %v3327
        %v3356 = vadd.f32 %v3282, %v3330
        %v3357 = vadd.f32 %v3283, %v3333
        %v3358 = vadd.f32 %v3284, %v3336
        %v3359 = vadd.f32 %v3285, %v3339
        %v3360 = vadd.f32 %v3286, %v3342
        %v3361 = vadd.f32 %v3287, %v3345
        %s3362 = sld [smem:[#allocation3 + $0x2c]]
        %v3363 = vstv %s3362
        %v3364 = vmul.f32 %v3363, %v588
        %v3365 = vmul.f32 %v3363, %v589
        %v3366 = vmul.f32 %v3363, %v590
        %v3367 = vmul.f32 %v3363, %v591
        %v3368 = vmul.f32 %v3363, %v592
        %v3369 = vmul.f32 %v3363, %v593
        %v3370 = vmul.f32 %v3363, %v594
        %v3371 = vmul.f32 %v3363, %v595
        %v3372 = vmul.f32 %v3363, %v596
        %v3373 = vmul.f32 %v3363, %v597
        %v3374 = vmul.f32 %v3363, %v598
        %v3375 = vmul.f32 %v3363, %v599
        %v3376 = vmul.f32 %v3363, %v600
        %v3377 = vmul.f32 %v3363, %v601
        %v3378 = vmul.f32 %v3363, %v602
        %v3379 = vmul.f32 %v3363, %v603
        %v3396 = vrot.slane %v3364, 4
        %v3397 = vrot.slane %v3365, 4
        %v3398 = vsel %vm883, %v3396, %v3397
        %v3399 = vrot.slane %v3366, 4
        %v3400 = vrot.slane %v3367, 4
        %v3401 = vsel %vm883, %v3399, %v3400
        %v3402 = vrot.slane %v3368, 4
        %v3403 = vrot.slane %v3369, 4
        %v3404 = vsel %vm883, %v3402, %v3403
        %v3405 = vrot.slane %v3370, 4
        %v3406 = vrot.slane %v3371, 4
        %v3407 = vsel %vm883, %v3405, %v3406
        %v3408 = vrot.slane %v3372, 4
        %v3409 = vrot.slane %v3373, 4
        %v3410 = vsel %vm883, %v3408, %v3409
        %v3411 = vrot.slane %v3374, 4
        %v3412 = vrot.slane %v3375, 4
        %v3413 = vsel %vm883, %v3411, %v3412
        %v3414 = vrot.slane %v3376, 4
        %v3415 = vrot.slane %v3377, 4
        %v3416 = vsel %vm883, %v3414, %v3415
        %v3417 = vrot.slane %v3378, 4
        %v3418 = vrot.slane %v3379, 4
        %v3419 = vsel %vm883, %v3417, %v3418
        %v3428 = vadd.f32 %v3354, %v3398
        %v3429 = vadd.f32 %v3355, %v3401
        %v3430 = vadd.f32 %v3356, %v3404
        %v3431 = vadd.f32 %v3357, %v3407
        %v3432 = vadd.f32 %v3358, %v3410
        %v3433 = vadd.f32 %v3359, %v3413
        %v3434 = vadd.f32 %v3360, %v3416
        %v3435 = vadd.f32 %v3361, %v3419
        %s3436 = sld [smem:[#allocation3 + $0x2d]]
        %v3437 = vstv %s3436
        %v3438 = vmul.f32 %v3437, %v590
        %v3439 = vmul.f32 %v3437, %v592
        %v3440 = vmul.f32 %v3437, %v594
        %v3441 = vmul.f32 %v3437, %v596
        %v3442 = vmul.f32 %v3437, %v598
        %v3443 = vmul.f32 %v3437, %v600
        %v3444 = vmul.f32 %v3437, %v602
        %v3445 = vmul.f32 %v3437, %v604
        %v3446 = vadd.f32 %v3428, %v3438
        %v3447 = vadd.f32 %v3429, %v3439
        %v3448 = vadd.f32 %v3430, %v3440
        %v3449 = vadd.f32 %v3431, %v3441
        %v3450 = vadd.f32 %v3432, %v3442
        %v3451 = vadd.f32 %v3433, %v3443
        %v3452 = vadd.f32 %v3434, %v3444
        %v3453 = vadd.f32 %v3435, %v3445
        %s3454 = sld [smem:[#allocation3 + $0x2e]]
        %v3455 = vstv %s3454
        %v3456 = vmul.f32 %v3455, %v590
        %v3457 = vmul.f32 %v3455, %v591
        %v3458 = vmul.f32 %v3455, %v592
        %v3459 = vmul.f32 %v3455, %v593
        %v3460 = vmul.f32 %v3455, %v594
        %v3461 = vmul.f32 %v3455, %v595
        %v3462 = vmul.f32 %v3455, %v596
        %v3463 = vmul.f32 %v3455, %v597
        %v3464 = vmul.f32 %v3455, %v598
        %v3465 = vmul.f32 %v3455, %v599
        %v3466 = vmul.f32 %v3455, %v600
        %v3467 = vmul.f32 %v3455, %v601
        %v3468 = vmul.f32 %v3455, %v602
        %v3469 = vmul.f32 %v3455, %v603
        %v3470 = vmul.f32 %v3455, %v604
        %v3471 = vmul.f32 %v3455, %v605
        %v3488 = vrot.slane %v3456, 1
        %v3489 = vrot.slane %v3457, 1
        %v3490 = vsel %vm658, %v3488, %v3489
        %v3491 = vrot.slane %v3458, 1
        %v3492 = vrot.slane %v3459, 1
        %v3493 = vsel %vm658, %v3491, %v3492
        %v3494 = vrot.slane %v3460, 1
        %v3495 = vrot.slane %v3461, 1
        %v3496 = vsel %vm658, %v3494, %v3495
        %v3497 = vrot.slane %v3462, 1
        %v3498 = vrot.slane %v3463, 1
        %v3499 = vsel %vm658, %v3497, %v3498
        %v3500 = vrot.slane %v3464, 1
        %v3501 = vrot.slane %v3465, 1
        %v3502 = vsel %vm658, %v3500, %v3501
        %v3503 = vrot.slane %v3466, 1
        %v3504 = vrot.slane %v3467, 1
        %v3505 = vsel %vm658, %v3503, %v3504
        %v3506 = vrot.slane %v3468, 1
        %v3507 = vrot.slane %v3469, 1
        %v3508 = vsel %vm658, %v3506, %v3507
        %v3509 = vrot.slane %v3470, 1
        %v3510 = vrot.slane %v3471, 1
        %v3511 = vsel %vm658, %v3509, %v3510
        %v3520 = vadd.f32 %v3446, %v3490
        %v3521 = vadd.f32 %v3447, %v3493
        %v3522 = vadd.f32 %v3448, %v3496
        %v3523 = vadd.f32 %v3449, %v3499
        %v3524 = vadd.f32 %v3450, %v3502
        %v3525 = vadd.f32 %v3451, %v3505
        %v3526 = vadd.f32 %v3452, %v3508
        %v3527 = vadd.f32 %v3453, %v3511
        %s3528 = sld [smem:[#allocation3 + $0x2f]]
        %v3529 = vstv %s3528
        %v3530 = vmul.f32 %v3529, %v590
        %v3531 = vmul.f32 %v3529, %v591
        %v3532 = vmul.f32 %v3529, %v592
        %v3533 = vmul.f32 %v3529, %v593
        %v3534 = vmul.f32 %v3529, %v594
        %v3535 = vmul.f32 %v3529, %v595
        %v3536 = vmul.f32 %v3529, %v596
        %v3537 = vmul.f32 %v3529, %v597
        %v3538 = vmul.f32 %v3529, %v598
        %v3539 = vmul.f32 %v3529, %v599
        %v3540 = vmul.f32 %v3529, %v600
        %v3541 = vmul.f32 %v3529, %v601
        %v3542 = vmul.f32 %v3529, %v602
        %v3543 = vmul.f32 %v3529, %v603
        %v3544 = vmul.f32 %v3529, %v604
        %v3545 = vmul.f32 %v3529, %v605
        %v3562 = vrot.slane %v3530, 2
        %v3563 = vrot.slane %v3531, 2
        %v3564 = vsel %vm733, %v3562, %v3563
        %v3565 = vrot.slane %v3532, 2
        %v3566 = vrot.slane %v3533, 2
        %v3567 = vsel %vm733, %v3565, %v3566
        %v3568 = vrot.slane %v3534, 2
        %v3569 = vrot.slane %v3535, 2
        %v3570 = vsel %vm733, %v3568, %v3569
        %v3571 = vrot.slane %v3536, 2
        %v3572 = vrot.slane %v3537, 2
        %v3573 = vsel %vm733, %v3571, %v3572
        %v3574 = vrot.slane %v3538, 2
        %v3575 = vrot.slane %v3539, 2
        %v3576 = vsel %vm733, %v3574, %v3575
        %v3577 = vrot.slane %v3540, 2
        %v3578 = vrot.slane %v3541, 2
        %v3579 = vsel %vm733, %v3577, %v3578
        %v3580 = vrot.slane %v3542, 2
        %v3581 = vrot.slane %v3543, 2
        %v3582 = vsel %vm733, %v3580, %v3581
        %v3583 = vrot.slane %v3544, 2
        %v3584 = vrot.slane %v3545, 2
        %v3585 = vsel %vm733, %v3583, %v3584
        %v3594 = vadd.f32 %v3520, %v3564
        %v3595 = vadd.f32 %v3521, %v3567
        %v3596 = vadd.f32 %v3522, %v3570
        %v3597 = vadd.f32 %v3523, %v3573
        %v3598 = vadd.f32 %v3524, %v3576
        %v3599 = vadd.f32 %v3525, %v3579
        %v3600 = vadd.f32 %v3526, %v3582
        %v3601 = vadd.f32 %v3527, %v3585
        %s3602 = sld [smem:[#allocation3 + $0x30]]
        %v3603 = vstv %s3602
        %v3604 = vmul.f32 %v3603, %v590
        %v3605 = vmul.f32 %v3603, %v591
        %v3606 = vmul.f32 %v3603, %v592
        %v3607 = vmul.f32 %v3603, %v593
        %v3608 = vmul.f32 %v3603, %v594
        %v3609 = vmul.f32 %v3603, %v595
        %v3610 = vmul.f32 %v3603, %v596
        %v3611 = vmul.f32 %v3603, %v597
        %v3612 = vmul.f32 %v3603, %v598
        %v3613 = vmul.f32 %v3603, %v599
        %v3614 = vmul.f32 %v3603, %v600
        %v3615 = vmul.f32 %v3603, %v601
        %v3616 = vmul.f32 %v3603, %v602
        %v3617 = vmul.f32 %v3603, %v603
        %v3618 = vmul.f32 %v3603, %v604
        %v3619 = vmul.f32 %v3603, %v605
        %v3636 = vrot.slane %v3604, 3
        %v3637 = vrot.slane %v3605, 3
        %v3638 = vsel %vm808, %v3636, %v3637
        %v3639 = vrot.slane %v3606, 3
        %v3640 = vrot.slane %v3607, 3
        %v3641 = vsel %vm808, %v3639, %v3640
        %v3642 = vrot.slane %v3608, 3
        %v3643 = vrot.slane %v3609, 3
        %v3644 = vsel %vm808, %v3642, %v3643
        %v3645 = vrot.slane %v3610, 3
        %v3646 = vrot.slane %v3611, 3
        %v3647 = vsel %vm808, %v3645, %v3646
        %v3648 = vrot.slane %v3612, 3
        %v3649 = vrot.slane %v3613, 3
        %v3650 = vsel %vm808, %v3648, %v3649
        %v3651 = vrot.slane %v3614, 3
        %v3652 = vrot.slane %v3615, 3
        %v3653 = vsel %vm808, %v3651, %v3652
        %v3654 = vrot.slane %v3616, 3
        %v3655 = vrot.slane %v3617, 3
        %v3656 = vsel %vm808, %v3654, %v3655
        %v3657 = vrot.slane %v3618, 3
        %v3658 = vrot.slane %v3619, 3
        %v3659 = vsel %vm808, %v3657, %v3658
        %v3668 = vadd.f32 %v3594, %v3638
        %v3669 = vadd.f32 %v3595, %v3641
        %v3670 = vadd.f32 %v3596, %v3644
        %v3671 = vadd.f32 %v3597, %v3647
        %v3672 = vadd.f32 %v3598, %v3650
        %v3673 = vadd.f32 %v3599, %v3653
        %v3674 = vadd.f32 %v3600, %v3656
        %v3675 = vadd.f32 %v3601, %v3659
        %s3676 = sld [smem:[#allocation3 + $0x31]]
        %v3677 = vstv %s3676
        %v3678 = vmul.f32 %v3677, %v590
        %v3679 = vmul.f32 %v3677, %v591
        %v3680 = vmul.f32 %v3677, %v592
        %v3681 = vmul.f32 %v3677, %v593
        %v3682 = vmul.f32 %v3677, %v594
        %v3683 = vmul.f32 %v3677, %v595
        %v3684 = vmul.f32 %v3677, %v596
        %v3685 = vmul.f32 %v3677, %v597
        %v3686 = vmul.f32 %v3677, %v598
        %v3687 = vmul.f32 %v3677, %v599
        %v3688 = vmul.f32 %v3677, %v600
        %v3689 = vmul.f32 %v3677, %v601
        %v3690 = vmul.f32 %v3677, %v602
        %v3691 = vmul.f32 %v3677, %v603
        %v3692 = vmul.f32 %v3677, %v604
        %v3693 = vmul.f32 %v3677, %v605
        %v3710 = vrot.slane %v3678, 4
        %v3711 = vrot.slane %v3679, 4
        %v3712 = vsel %vm883, %v3710, %v3711
        %v3713 = vrot.slane %v3680, 4
        %v3714 = vrot.slane %v3681, 4
        %v3715 = vsel %vm883, %v3713, %v3714
        %v3716 = vrot.slane %v3682, 4
        %v3717 = vrot.slane %v3683, 4
        %v3718 = vsel %vm883, %v3716, %v3717
        %v3719 = vrot.slane %v3684, 4
        %v3720 = vrot.slane %v3685, 4
        %v3721 = vsel %vm883, %v3719, %v3720
        %v3722 = vrot.slane %v3686, 4
        %v3723 = vrot.slane %v3687, 4
        %v3724 = vsel %vm883, %v3722, %v3723
        %v3725 = vrot.slane %v3688, 4
        %v3726 = vrot.slane %v3689, 4
        %v3727 = vsel %vm883, %v3725, %v3726
        %v3728 = vrot.slane %v3690, 4
        %v3729 = vrot.slane %v3691, 4
        %v3730 = vsel %vm883, %v3728, %v3729
        %v3731 = vrot.slane %v3692, 4
        %v3732 = vrot.slane %v3693, 4
        %v3733 = vsel %vm883, %v3731, %v3732
        %v3742 = vadd.f32 %v3668, %v3712
        %v3743 = vadd.f32 %v3669, %v3715
        %v3744 = vadd.f32 %v3670, %v3718
        %v3745 = vadd.f32 %v3671, %v3721
        %v3746 = vadd.f32 %v3672, %v3724
        %v3747 = vadd.f32 %v3673, %v3727
        %v3748 = vadd.f32 %v3674, %v3730
        %v3749 = vadd.f32 %v3675, %v3733
        %v3750 = vxor.u32 %v3742, 2147483648
        %v3751 = vxor.u32 %v3743, 2147483648
        %v3752 = vxor.u32 %v3744, 2147483648
        %v3753 = vxor.u32 %v3745, 2147483648
        %v3754 = vxor.u32 %v3746, 2147483648
        %v3755 = vxor.u32 %v3747, 2147483648
        %v3756 = vxor.u32 %v3748, 2147483648
        %v3757 = vxor.u32 %v3749, 2147483648
        %v3758 = vmul.f32 %v3750, 1.442695
        %v3759 = vpow.pop %v3758
        %v3760 = vmul.f32 %v3751, 1.442695
        %v3761 = vpow.pop %v3760
        %v3762 = vmul.f32 %v3752, 1.442695
        %v3763 = vpow.pop %v3762
        %v3764 = vmul.f32 %v3753, 1.442695
        %v3765 = vpow.pop %v3764
        %v3766 = vmul.f32 %v3754, 1.442695
        %v3767 = vpow.pop %v3766
        %v3768 = vmul.f32 %v3755, 1.442695
        %v3769 = vpow.pop %v3768
        %v3770 = vmul.f32 %v3756, 1.442695
        %v3771 = vpow.pop %v3770
        %v3772 = vmul.f32 %v3757, 1.442695
        %v3773 = vpow.pop %v3772
        %v3774 = vadd.f32 %v3759, 1.0
        %v3775 = vadd.f32 %v3761, 1.0
        %v3776 = vadd.f32 %v3763, 1.0
        %v3777 = vadd.f32 %v3765, 1.0
        %v3778 = vadd.f32 %v3767, 1.0
        %v3779 = vadd.f32 %v3769, 1.0
        %v3780 = vadd.f32 %v3771, 1.0
        %v3781 = vadd.f32 %v3773, 1.0
        %v3782 = vrcp.pop %v3774
        %v3783 = vmul.f32 %v3774, %v3782
        %v3784 = vsub.f32 1.0, %v3783
        %v3785 = vmul.f32 %v3782, %v3784
        %v3786 = vadd.f32 %v3782, %v3785
        %vm3787 = vweird.f32 %v3774
        %vm3788 = vweird.f32 %v3782
        %vm3789 = vmor %vm3787, %vm3788
        %v3790 = vsel %vm3789, %v3782, %v3786
        %v3791 = vand.u32 2147483647, %v3774
        %vm3792 = vcmp.eq.f32.partialorder %v3791, 8.507059e+37
        %v3793 = vand.u32 %v3774, 2147483648
        %v3794 = vor.u32 1.1754944e-38, %v3793
        %v3795 = vsel %vm3792, %v3794, %v3790
        %v3796 = vmul.f32 1.0, %v3795
        %v3797 = vrcp.pop %v3775
        %v3798 = vmul.f32 %v3775, %v3797
        %v3799 = vsub.f32 1.0, %v3798
        %v3800 = vmul.f32 %v3797, %v3799
        %v3801 = vadd.f32 %v3797, %v3800
        %vm3802 = vweird.f32 %v3775
        %vm3803 = vweird.f32 %v3797
        %vm3804 = vmor %vm3802, %vm3803
        %v3805 = vsel %vm3804, %v3797, %v3801
        %v3806 = vand.u32 2147483647, %v3775
        %vm3807 = vcmp.eq.f32.partialorder %v3806, 8.507059e+37
        %v3808 = vand.u32 %v3775, 2147483648
        %v3809 = vor.u32 1.1754944e-38, %v3808
        %v3810 = vsel %vm3807, %v3809, %v3805
        %v3811 = vmul.f32 1.0, %v3810
        %v3812 = vrcp.pop %v3776
        %v3813 = vmul.f32 %v3776, %v3812
        %v3814 = vsub.f32 1.0, %v3813
        %v3815 = vmul.f32 %v3812, %v3814
        %v3816 = vadd.f32 %v3812, %v3815
        %vm3817 = vweird.f32 %v3776
        %vm3818 = vweird.f32 %v3812
        %vm3819 = vmor %vm3817, %vm3818
        %v3820 = vsel %vm3819, %v3812, %v3816
        %v3821 = vand.u32 2147483647, %v3776
        %vm3822 = vcmp.eq.f32.partialorder %v3821, 8.507059e+37
        %v3823 = vand.u32 %v3776, 2147483648
        %v3824 = vor.u32 1.1754944e-38, %v3823
        %v3825 = vsel %vm3822, %v3824, %v3820
        %v3826 = vmul.f32 1.0, %v3825
        %v3827 = vrcp.pop %v3777
        %v3828 = vmul.f32 %v3777, %v3827
        %v3829 = vsub.f32 1.0, %v3828
        %v3830 = vmul.f32 %v3827, %v3829
        %v3831 = vadd.f32 %v3827, %v3830
        %vm3832 = vweird.f32 %v3777
        %vm3833 = vweird.f32 %v3827
        %vm3834 = vmor %vm3832, %vm3833
        %v3835 = vsel %vm3834, %v3827, %v3831
        %v3836 = vand.u32 2147483647, %v3777
        %vm3837 = vcmp.eq.f32.partialorder %v3836, 8.507059e+37
        %v3838 = vand.u32 %v3777, 2147483648
        %v3839 = vor.u32 1.1754944e-38, %v3838
        %v3840 = vsel %vm3837, %v3839, %v3835
        %v3841 = vmul.f32 1.0, %v3840
        %v3842 = vrcp.pop %v3778
        %v3843 = vmul.f32 %v3778, %v3842
        %v3844 = vsub.f32 1.0, %v3843
        %v3845 = vmul.f32 %v3842, %v3844
        %v3846 = vadd.f32 %v3842, %v3845
        %vm3847 = vweird.f32 %v3778
        %vm3848 = vweird.f32 %v3842
        %vm3849 = vmor %vm3847, %vm3848
        %v3850 = vsel %vm3849, %v3842, %v3846
        %v3851 = vand.u32 2147483647, %v3778
        %vm3852 = vcmp.eq.f32.partialorder %v3851, 8.507059e+37
        %v3853 = vand.u32 %v3778, 2147483648
        %v3854 = vor.u32 1.1754944e-38, %v3853
        %v3855 = vsel %vm3852, %v3854, %v3850
        %v3856 = vmul.f32 1.0, %v3855
        %v3857 = vrcp.pop %v3779
        %v3858 = vmul.f32 %v3779, %v3857
        %v3859 = vsub.f32 1.0, %v3858
        %v3860 = vmul.f32 %v3857, %v3859
        %v3861 = vadd.f32 %v3857, %v3860
        %vm3862 = vweird.f32 %v3779
        %vm3863 = vweird.f32 %v3857
        %vm3864 = vmor %vm3862, %vm3863
        %v3865 = vsel %vm3864, %v3857, %v3861
        %v3866 = vand.u32 2147483647, %v3779
        %vm3867 = vcmp.eq.f32.partialorder %v3866, 8.507059e+37
        %v3868 = vand.u32 %v3779, 2147483648
        %v3869 = vor.u32 1.1754944e-38, %v3868
        %v3870 = vsel %vm3867, %v3869, %v3865
        %v3871 = vmul.f32 1.0, %v3870
        %v3872 = vrcp.pop %v3780
        %v3873 = vmul.f32 %v3780, %v3872
        %v3874 = vsub.f32 1.0, %v3873
        %v3875 = vmul.f32 %v3872, %v3874
        %v3876 = vadd.f32 %v3872, %v3875
        %vm3877 = vweird.f32 %v3780
        %vm3878 = vweird.f32 %v3872
        %vm3879 = vmor %vm3877, %vm3878
        %v3880 = vsel %vm3879, %v3872, %v3876
        %v3881 = vand.u32 2147483647, %v3780
        %vm3882 = vcmp.eq.f32.partialorder %v3881, 8.507059e+37
        %v3883 = vand.u32 %v3780, 2147483648
        %v3884 = vor.u32 1.1754944e-38, %v3883
        %v3885 = vsel %vm3882, %v3884, %v3880
        %v3886 = vmul.f32 1.0, %v3885
        %v3887 = vrcp.pop %v3781
        %v3888 = vmul.f32 %v3781, %v3887
        %v3889 = vsub.f32 1.0, %v3888
        %v3890 = vmul.f32 %v3887, %v3889
        %v3891 = vadd.f32 %v3887, %v3890
        %vm3892 = vweird.f32 %v3781
        %vm3893 = vweird.f32 %v3887
        %vm3894 = vmor %vm3892, %vm3893
        %v3895 = vsel %vm3894, %v3887, %v3891
        %v3896 = vand.u32 2147483647, %v3781
        %vm3897 = vcmp.eq.f32.partialorder %v3896, 8.507059e+37
        %v3898 = vand.u32 %v3781, 2147483648
        %v3899 = vor.u32 1.1754944e-38, %v3898
        %v3900 = vsel %vm3897, %v3899, %v3895
        %v3901 = vmul.f32 1.0, %v3900
        %3903 = vset.pattern.permute.xlu0 0
        %3904 = vperm.xlu0 %3903, %v3796
        %v3905 = vpop.permute.xlu0 %3904
        %3908 = vset.pattern.permute.xlu0 0
        %3909 = vperm.xlu0 %3908, %v3811
        %v3910 = vpop.permute.xlu0 %3909
        %3913 = vset.pattern.permute.xlu0 0
        %3914 = vperm.xlu0 %3913, %v3826
        %v3915 = vpop.permute.xlu0 %3914
        %3918 = vset.pattern.permute.xlu0 0
        %3919 = vperm.xlu0 %3918, %v3841
        %v3920 = vpop.permute.xlu0 %3919
        %3923 = vset.pattern.permute.xlu0 0
        %3924 = vperm.xlu0 %3923, %v3856
        %v3925 = vpop.permute.xlu0 %3924
        %3928 = vset.pattern.permute.xlu0 0
        %3929 = vperm.xlu0 %3928, %v3871
        %v3930 = vpop.permute.xlu0 %3929
        %3933 = vset.pattern.permute.xlu0 0
        %3934 = vperm.xlu0 %3933, %v3886
        %v3935 = vpop.permute.xlu0 %3934
        %3938 = vset.pattern.permute.xlu0 0
        %3939 = vperm.xlu0 %3938, %v3901
        %v3940 = vpop.permute.xlu0 %3939
        %v3942 = vmul.f32 %v418, %v3905
        %v3943 = vmul.f32 %v419, %v3910
        %v3944 = vmul.f32 %v420, %v3915
        %v3945 = vmul.f32 %v421, %v3920
        %v3946 = vmul.f32 %v422, %v3925
        %v3947 = vmul.f32 %v423, %v3930
        %v3948 = vmul.f32 %v424, %v3935
        %v3949 = vmul.f32 %v425, %v3940
        %v3950 = vld [vmem:[%s392] sm:$0x1]
        %v3952 = vperm.slane %v3950, 0
        %v3954 = vmul.f32 %v418, %v3952
        %v3955 = vmul.f32 %v419, %v3952
        %v3956 = vmul.f32 %v420, %v3952
        %v3957 = vmul.f32 %v421, %v3952
        %v3958 = vmul.f32 %v422, %v3952
        %v3959 = vmul.f32 %v423, %v3952
        %v3960 = vmul.f32 %v424, %v3952
        %v3961 = vmul.f32 %v425, %v3952
        %v3962 = vld [vmem:[%s4] sm:$0xff]
        %v3963 = vld [vmem:[%s4 + $0x8] sm:$0xff]
        %v3964 = vld [vmem:[%s4 + $0x10] sm:$0xff]
        %v3965 = vld [vmem:[%s4 + $0x18] sm:$0xff]
        %v3966 = vld [vmem:[%s5] sm:$0xff]
        %v3967 = vld [vmem:[%s5 + $0x8] sm:$0xff]
        %v3968 = vld [vmem:[%s5 + $0x10] sm:$0xff]
        %v3969 = vld [vmem:[%s5 + $0x18] sm:$0xff]
        %v3971 = vsel %vm476, %v3954, 0
        %v3974 = vsel %vm476, %v3955, 0
        %v3977 = vsel %vm476, %v3956, 0
        %v3980 = vsel %vm476, %v3957, 0
        %v3983 = vsel %vm476, %v3958, 0
        %v3986 = vsel %vm476, %v3959, 0
        %v3989 = vsel %vm476, %v3960, 0
        %v3992 = vsel %vm476, %v3961, 0
        %3994 = vmatpush.msra.mxu0 0.0
        %3995 = vmatpush.msra.mxu0 0.0
        %3996 = vmatpush.msra.mxu0 0.0
        %3997 = vmatpush.msra.mxu0 0.0
        %3998 = vmatpush.msra.mxu0 0.0
        %3999 = vmatpush.msra.mxu0 0.0
        %4000 = vmatpush.msra.mxu0 0.0
        %4001 = vmatpush.msra.mxu0 0.0
        %4002 = vmatpush.msra.mxu0 0.0
        %4003 = vmatpush.msra.mxu0 0.0
        %4004 = vmatpush.msra.mxu0 0.0
        %4005 = vmatpush.msra.mxu0 0.0
        %4006 = vmatpush.msra.mxu0 %v3969
        %4007 = vmatpush.msra.mxu0 %v3968
        %4008 = vmatpush.msra.mxu0 %v3967
        %4009 = vmatpush.msra.mxu0 %v3966
        %4010 = vmatmul.f32.gmra.mxu0 %v3971
        %v4011 = vpop.f32.mrf.mxu0
        %v4012 = vadd.f32 0.0, %v4011
        %4013 = vmatmul.f32.gmra.mxu0 %v3974
        %v4014 = vpop.f32.mrf.mxu0
        %v4015 = vadd.f32 0.0, %v4014
        %4016 = vmatmul.f32.gmra.mxu0 %v3977
        %v4017 = vpop.f32.mrf.mxu0
        %v4018 = vadd.f32 0.0, %v4017
        %4019 = vmatmul.f32.gmra.mxu0 %v3980
        %v4020 = vpop.f32.mrf.mxu0
        %v4021 = vadd.f32 0.0, %v4020
        %4022 = vmatmul.f32.gmra.mxu0 %v3983
        %v4023 = vpop.f32.mrf.mxu0
        %v4024 = vadd.f32 0.0, %v4023
        %4025 = vmatmul.f32.gmra.mxu0 %v3986
        %v4026 = vpop.f32.mrf.mxu0
        %v4027 = vadd.f32 0.0, %v4026
        %4028 = vmatmul.f32.gmra.mxu0 %v3989
        %v4029 = vpop.f32.mrf.mxu0
        %v4030 = vadd.f32 0.0, %v4029
        %4031 = vmatmul.f32.gmra.mxu0 %v3992
        %v4032 = vpop.f32.mrf.mxu0
        %v4033 = vadd.f32 0.0, %v4032
        %4034 = vdwg.mxu0
        %v4036 = vsel %vm476, %v3942, 0
        %v4039 = vsel %vm476, %v3943, 0
        %v4042 = vsel %vm476, %v3944, 0
        %v4045 = vsel %vm476, %v3945, 0
        %v4048 = vsel %vm476, %v3946, 0
        %v4051 = vsel %vm476, %v3947, 0
        %v4054 = vsel %vm476, %v3948, 0
        %v4057 = vsel %vm476, %v3949, 0
        %4059 = vmatpush.msra.mxu0 0.0
        %4060 = vmatpush.msra.mxu0 0.0
        %4061 = vmatpush.msra.mxu0 0.0
        %4062 = vmatpush.msra.mxu0 0.0
        %4063 = vmatpush.msra.mxu0 0.0
        %4064 = vmatpush.msra.mxu0 0.0
        %4065 = vmatpush.msra.mxu0 0.0
        %4066 = vmatpush.msra.mxu0 0.0
        %4067 = vmatpush.msra.mxu0 0.0
        %4068 = vmatpush.msra.mxu0 0.0
        %4069 = vmatpush.msra.mxu0 0.0
        %4070 = vmatpush.msra.mxu0 0.0
        %4071 = vmatpush.msra.mxu0 %v3965
        %4072 = vmatpush.msra.mxu0 %v3964
        %4073 = vmatpush.msra.mxu0 %v3963
        %4074 = vmatpush.msra.mxu0 %v3962
        %4075 = vmatmul.f32.gmra.mxu0 %v4036
        %v4076 = vpop.f32.mrf.mxu0
        %v4077 = vadd.f32 %v4012, %v4076
        %4078 = vmatmul.f32.gmra.mxu0 %v4039
        %v4079 = vpop.f32.mrf.mxu0
        %v4080 = vadd.f32 %v4015, %v4079
        %4081 = vmatmul.f32.gmra.mxu0 %v4042
        %v4082 = vpop.f32.mrf.mxu0
        %v4083 = vadd.f32 %v4018, %v4082
        %4084 = vmatmul.f32.gmra.mxu0 %v4045
        %v4085 = vpop.f32.mrf.mxu0
        %v4086 = vadd.f32 %v4021, %v4085
        %4087 = vmatmul.f32.gmra.mxu0 %v4048
        %v4088 = vpop.f32.mrf.mxu0
        %v4089 = vadd.f32 %v4024, %v4088
        %4090 = vmatmul.f32.gmra.mxu0 %v4051
        %v4091 = vpop.f32.mrf.mxu0
        %v4092 = vadd.f32 %v4027, %v4091
        %4093 = vmatmul.f32.gmra.mxu0 %v4054
        %v4094 = vpop.f32.mrf.mxu0
        %v4095 = vadd.f32 %v4030, %v4094
        %4096 = vmatmul.f32.gmra.mxu0 %v4057
        %v4097 = vpop.f32.mrf.mxu0
        %v4098 = vadd.f32 %v4033, %v4097
        %4099 = vdwg.mxu0
        %s4100 = scalar_lea.vmem %s397, 16
        %v4101 = vld [vmem:[%s4100 + $0x1] sm:$0xff]
        %v4102 = vld [vmem:[%s4100 + $0x11] sm:$0xff]
        %v4103 = vld [vmem:[%s4100 + $0x21] sm:$0xff]
        %v4104 = vld [vmem:[%s4100 + $0x31] sm:$0xff]
        %v4105 = vld [vmem:[%s4100 + $0x41] sm:$0xff]
        %v4106 = vld [vmem:[%s4100 + $0x51] sm:$0xff]
        %v4107 = vld [vmem:[%s4100 + $0x61] sm:$0xff]
        %v4108 = vld [vmem:[%s4100 + $0x71] sm:$0xff]
        %v4109 = vadd.f32 %v4077, %v4101
        %v4110 = vadd.f32 %v4080, %v4102
        %v4111 = vadd.f32 %v4083, %v4103
        %v4112 = vadd.f32 %v4086, %v4104
        %v4113 = vadd.f32 %v4089, %v4105
        %v4114 = vadd.f32 %v4092, %v4106
        %v4115 = vadd.f32 %v4095, %v4107
        %v4116 = vadd.f32 %v4098, %v4108
        %v4117 = vmul.f32 %v4109, 0.5
        %v4118 = vmul.f32 %v4110, 0.5
        %v4119 = vmul.f32 %v4111, 0.5
        %v4120 = vmul.f32 %v4112, 0.5
        %v4121 = vmul.f32 %v4113, 0.5
        %v4122 = vmul.f32 %v4114, 0.5
        %v4123 = vmul.f32 %v4115, 0.5
        %v4124 = vmul.f32 %v4116, 0.5
        %4133 = vrot.lane.b32.xlu0 %v4117, 120
        %v4134 = vpop.permute.xlu0 %4133
        %4135 = vrot.lane.b32.xlu0 %v4118, 120
        %v4136 = vpop.permute.xlu0 %4135
        %4137 = vrot.lane.b32.xlu0 %v4119, 120
        %v4138 = vpop.permute.xlu0 %4137
        %4139 = vrot.lane.b32.xlu0 %v4120, 120
        %v4140 = vpop.permute.xlu0 %4139
        %4141 = vrot.lane.b32.xlu0 %v4121, 120
        %v4142 = vpop.permute.xlu0 %4141
        %4143 = vrot.lane.b32.xlu0 %v4122, 120
        %v4144 = vpop.permute.xlu0 %4143
        %4145 = vrot.lane.b32.xlu0 %v4123, 120
        %v4146 = vpop.permute.xlu0 %4145
        %4147 = vrot.lane.b32.xlu0 %v4124, 120
        %v4148 = vpop.permute.xlu0 %4147
        %v4157 = vsub.f32 %v4117, %v4134
        %v4158 = vsub.f32 %v4118, %v4136
        %v4159 = vsub.f32 %v4119, %v4138
        %v4160 = vsub.f32 %v4120, %v4140
        %v4161 = vsub.f32 %v4121, %v4142
        %v4162 = vsub.f32 %v4122, %v4144
        %v4163 = vsub.f32 %v4123, %v4146
        %v4164 = vsub.f32 %v4124, %v4148
        %4165 = vrot.lane.b32.xlu0 %v4117, 112
        %v4166 = vpop.permute.xlu0 %4165
        %4167 = vrot.lane.b32.xlu0 %v4118, 112
        %v4168 = vpop.permute.xlu0 %4167
        %4169 = vrot.lane.b32.xlu0 %v4119, 112
        %v4170 = vpop.permute.xlu0 %4169
        %4171 = vrot.lane.b32.xlu0 %v4120, 112
        %v4172 = vpop.permute.xlu0 %4171
        %4173 = vrot.lane.b32.xlu0 %v4121, 112
        %v4174 = vpop.permute.xlu0 %4173
        %4175 = vrot.lane.b32.xlu0 %v4122, 112
        %v4176 = vpop.permute.xlu0 %4175
        %4177 = vrot.lane.b32.xlu0 %v4123, 112
        %v4178 = vpop.permute.xlu0 %4177
        %4179 = vrot.lane.b32.xlu0 %v4124, 112
        %v4180 = vpop.permute.xlu0 %4179
        %v4189 = vsub.f32 %v4157, %v4166
        %v4190 = vsub.f32 %v4158, %v4168
        %v4191 = vsub.f32 %v4159, %v4170
        %v4192 = vsub.f32 %v4160, %v4172
        %v4193 = vsub.f32 %v4161, %v4174
        %v4194 = vsub.f32 %v4162, %v4176
        %v4195 = vsub.f32 %v4163, %v4178
        %v4196 = vsub.f32 %v4164, %v4180
        %4197 = vrot.lane.b32.xlu0 %v4117, 104
        %v4198 = vpop.permute.xlu0 %4197
        %4199 = vrot.lane.b32.xlu0 %v4118, 104
        %v4200 = vpop.permute.xlu0 %4199
        %4201 = vrot.lane.b32.xlu0 %v4119, 104
        %v4202 = vpop.permute.xlu0 %4201
        %4203 = vrot.lane.b32.xlu0 %v4120, 104
        %v4204 = vpop.permute.xlu0 %4203
        %4205 = vrot.lane.b32.xlu0 %v4121, 104
        %v4206 = vpop.permute.xlu0 %4205
        %4207 = vrot.lane.b32.xlu0 %v4122, 104
        %v4208 = vpop.permute.xlu0 %4207
        %4209 = vrot.lane.b32.xlu0 %v4123, 104
        %v4210 = vpop.permute.xlu0 %4209
        %4211 = vrot.lane.b32.xlu0 %v4124, 104
        %v4212 = vpop.permute.xlu0 %4211
        %v4221 = vadd.f32 %v4189, %v4198
        %v4222 = vadd.f32 %v4190, %v4200
        %v4223 = vadd.f32 %v4191, %v4202
        %v4224 = vadd.f32 %v4192, %v4204
        %v4225 = vadd.f32 %v4193, %v4206
        %v4226 = vadd.f32 %v4194, %v4208
        %v4227 = vadd.f32 %v4195, %v4210
        %v4228 = vadd.f32 %v4196, %v4212
        %vm4229 = vcmask 64512
        %4230 = vst.msk [vmem:[%s402] sm:$0xff] %vm4229, %v4221
        %4231 = vst.msk [vmem:[%s402 + $0x8] sm:$0xff] %vm4229, %v4222
        %4232 = vst.msk [vmem:[%s402 + $0x10] sm:$0xff] %vm4229, %v4223
        %4233 = vst.msk [vmem:[%s402 + $0x18] sm:$0xff] %vm4229, %v4224
        %4234 = vst.msk [vmem:[%s402 + $0x20] sm:$0xff] %vm4229, %v4225
        %4235 = vst.msk [vmem:[%s402 + $0x28] sm:$0xff] %vm4229, %v4226
        %4236 = vst.msk [vmem:[%s402 + $0x30] sm:$0xff] %vm4229, %v4227
        %4237 = vst.msk [vmem:[%s402 + $0x38] sm:$0xff] %vm4229, %v4228
        %v4238 = vadd.f32 %v4157, %v4166
        %v4239 = vadd.f32 %v4158, %v4168
        %v4240 = vadd.f32 %v4159, %v4170
        %v4241 = vadd.f32 %v4160, %v4172
        %v4242 = vadd.f32 %v4161, %v4174
        %v4243 = vadd.f32 %v4162, %v4176
        %v4244 = vadd.f32 %v4163, %v4178
        %v4245 = vadd.f32 %v4164, %v4180
        %v4246 = vsub.f32 %v4238, %v4198
        %v4247 = vsub.f32 %v4239, %v4200
        %v4248 = vsub.f32 %v4240, %v4202
        %v4249 = vsub.f32 %v4241, %v4204
        %v4250 = vsub.f32 %v4242, %v4206
        %v4251 = vsub.f32 %v4243, %v4208
        %v4252 = vsub.f32 %v4244, %v4210
        %v4253 = vsub.f32 %v4245, %v4212
        %4254 = vst.msk [vmem:[%s407] sm:$0xff] %vm4229, %v4246
        %4255 = vst.msk [vmem:[%s407 + $0x8] sm:$0xff] %vm4229, %v4247
        %4256 = vst.msk [vmem:[%s407 + $0x10] sm:$0xff] %vm4229, %v4248
        %4257 = vst.msk [vmem:[%s407 + $0x18] sm:$0xff] %vm4229, %v4249
        %4258 = vst.msk [vmem:[%s407 + $0x20] sm:$0xff] %vm4229, %v4250
        %4259 = vst.msk [vmem:[%s407 + $0x28] sm:$0xff] %vm4229, %v4251
        %4260 = vst.msk [vmem:[%s407 + $0x30] sm:$0xff] %vm4229, %v4252
        %4261 = vst.msk [vmem:[%s407 + $0x38] sm:$0xff] %vm4229, %v4253
        %v4262 = vadd.f32 %v4117, %v4134
        %v4263 = vadd.f32 %v4118, %v4136
        %v4264 = vadd.f32 %v4119, %v4138
        %v4265 = vadd.f32 %v4120, %v4140
        %v4266 = vadd.f32 %v4121, %v4142
        %v4267 = vadd.f32 %v4122, %v4144
        %v4268 = vadd.f32 %v4123, %v4146
        %v4269 = vadd.f32 %v4124, %v4148
        %v4270 = vsub.f32 %v4262, %v4166
        %v4271 = vsub.f32 %v4263, %v4168
        %v4272 = vsub.f32 %v4264, %v4170
        %v4273 = vsub.f32 %v4265, %v4172
        %v4274 = vsub.f32 %v4266, %v4174
        %v4275 = vsub.f32 %v4267, %v4176
        %v4276 = vsub.f32 %v4268, %v4178
        %v4277 = vsub.f32 %v4269, %v4180
        %v4278 = vsub.f32 %v4270, %v4198
        %v4279 = vsub.f32 %v4271, %v4200
        %v4280 = vsub.f32 %v4272, %v4202
        %v4281 = vsub.f32 %v4273, %v4204
        %v4282 = vsub.f32 %v4274, %v4206
        %v4283 = vsub.f32 %v4275, %v4208
        %v4284 = vsub.f32 %v4276, %v4210
        %v4285 = vsub.f32 %v4277, %v4212
        %4286 = vst.msk [vmem:[%s412] sm:$0xff] %vm4229, %v4278
        %4287 = vst.msk [vmem:[%s412 + $0x8] sm:$0xff] %vm4229, %v4279
        %4288 = vst.msk [vmem:[%s412 + $0x10] sm:$0xff] %vm4229, %v4280
        %4289 = vst.msk [vmem:[%s412 + $0x18] sm:$0xff] %vm4229, %v4281
        %4290 = vst.msk [vmem:[%s412 + $0x20] sm:$0xff] %vm4229, %v4282
        %4291 = vst.msk [vmem:[%s412 + $0x28] sm:$0xff] %vm4229, %v4283
        %4292 = vst.msk [vmem:[%s412 + $0x30] sm:$0xff] %vm4229, %v4284
        %4293 = vst.msk [vmem:[%s412 + $0x38] sm:$0xff] %vm4229, %v4285
        %v4294 = vadd.f32 %v4262, %v4166
        %v4295 = vadd.f32 %v4263, %v4168
        %v4296 = vadd.f32 %v4264, %v4170
        %v4297 = vadd.f32 %v4265, %v4172
        %v4298 = vadd.f32 %v4266, %v4174
        %v4299 = vadd.f32 %v4267, %v4176
        %v4300 = vadd.f32 %v4268, %v4178
        %v4301 = vadd.f32 %v4269, %v4180
        %v4302 = vadd.f32 %v4294, %v4198
        %v4303 = vadd.f32 %v4295, %v4200
        %v4304 = vadd.f32 %v4296, %v4202
        %v4305 = vadd.f32 %v4297, %v4204
        %v4306 = vadd.f32 %v4298, %v4206
        %v4307 = vadd.f32 %v4299, %v4208
        %v4308 = vadd.f32 %v4300, %v4210
        %v4309 = vadd.f32 %v4301, %v4212
        %4310 = vst.msk [vmem:[%s417] sm:$0xff] %vm4229, %v4302
        %4311 = vst.msk [vmem:[%s417 + $0x8] sm:$0xff] %vm4229, %v4303
        %4312 = vst.msk [vmem:[%s417 + $0x10] sm:$0xff] %vm4229, %v4304
        %4313 = vst.msk [vmem:[%s417 + $0x18] sm:$0xff] %vm4229, %v4305
        %4314 = vst.msk [vmem:[%s417 + $0x20] sm:$0xff] %vm4229, %v4306
        %4315 = vst.msk [vmem:[%s417 + $0x28] sm:$0xff] %vm4229, %v4307
        %4316 = vst.msk [vmem:[%s417 + $0x30] sm:$0xff] %vm4229, %v4308
        %4317 = vst.msk [vmem:[%s417 + $0x38] sm:$0xff] %vm4229, %v4309
        %p4318 = scmp.lt.s32.totalorder %s22, 1
        %s4319 = scalar_select %p4318, %s22, 1
        %s4320 = smul.addr %s4319, 8
        %s4321 = smul.addr %s4320, 8
        %s4322 = scalar_lea.vmem %s6, %s4321
        %p4323 = scmp.lt.s32.totalorder %s22, 1
        %s4324 = scalar_select %p4323, %s22, 1
        %s4325 = smul.addr %s4324, 8
        %s4326 = smul.addr %s4325, 8
        %s4327 = scalar_lea.vmem %s7, %s4326
        %p4328 = scmp.lt.s32.totalorder %s22, 1
        %s4329 = scalar_select %p4328, %s22, 1
        %s4330 = smul.addr %s4329, 8
        %s4331 = smul.addr %s4330, 8
        %s4332 = scalar_lea.vmem %s8, %s4331
        %p4333 = scmp.lt.s32.totalorder %s22, 1
        %s4334 = scalar_select %p4333, %s22, 1
        %s4335 = smul.addr %s4334, 8
        %s4336 = smul.addr %s4335, 8
        %s4337 = scalar_lea.vmem %s9, %s4336
        // Predicated region
        $region49: #{hwab_pallas.10} parent=43 // pred_check
          %p4338 = pneg %p181
        $region50: #{hwab_pallas.10} parent=43 // pred_check_branch
          %4340 = sbr.rel (%p4338) target = $region52
        $region51: #{hwab_pallas.10} parent=43 // pred_region
          _
        $region52: #{hwab_pallas.10} parent=43 // pred_fallthru
          _
        // Predicated region
        $region53: #{hwab_pallas.10} parent=43 // pred_check
          %p4341 = pneg %p207
        $region54: #{hwab_pallas.10} parent=43 // pred_check_branch
          %4343 = sbr.rel (%p4341) target = $region56
        $region55: #{hwab_pallas.10} parent=43 // pred_region
          _
        $region56: #{hwab_pallas.10} parent=43 // pred_fallthru
          _
        // Predicated region
        $region57: #{hwab_pallas.10} parent=43 // pred_check
          %p4344 = pneg %p233
        $region58: #{hwab_pallas.10} parent=43 // pred_check_branch
          %4346 = sbr.rel (%p4344) target = $region60
        $region59: #{hwab_pallas.10} parent=43 // pred_region
          _
        $region60: #{hwab_pallas.10} parent=43 // pred_fallthru
          _
        // Predicated region
        $region61: #{hwab_pallas.10} parent=43 // pred_check
          %p4347 = pneg %p259
        $region62: #{hwab_pallas.10} parent=43 // pred_check_branch
          %4349 = sbr.rel (%p4347) target = $region64
        $region63: #{hwab_pallas.10} parent=43 // pred_region
          _
        $region64: #{hwab_pallas.10} parent=43 // pred_fallthru
          _
      $region44: #{hwab_pallas.10} parent=5 // pred_fallthru
        _
      %p4350 = scmp.le.s32.totalorder 2, %s17
      // Predicated region
      $region65: #{hwab_pallas.10} parent=5 // pred_check
        %p4351 = pneg %p4350
      $region66: #{hwab_pallas.10} parent=5 // pred_check_branch
        %4353 = sbr.rel (%p4351) target = $region68
      $region67: #{hwab_pallas.10} parent=5 // pred_region
        %s4354 = ssub.s32 %s17, 2
        // Predicated region
        $region69: #{hwab_pallas.10} parent=67 // pred_check
          %p4355 = pneg %p187
        $region70: #{hwab_pallas.10} parent=67 // pred_check_branch
          %4357 = sbr.rel (%p4355) target = $region72
        $region71: #{hwab_pallas.10} parent=67 // pred_region
          %p4358 = scmp.lt.s32.totalorder %s23, 1
          %s4359 = scalar_select %p4358, %s23, 1
          %s4360 = smul.addr %s4359, 8
          %s4361 = smul.addr %s4360, 8
          %s4362 = scalar_lea.vmem %s6, %s4361
        $region72: #{hwab_pallas.10} parent=67 // pred_fallthru
          _
        // Predicated region
        $region73: #{hwab_pallas.10} parent=67 // pred_check
          %p4363 = pneg %p213
        $region74: #{hwab_pallas.10} parent=67 // pred_check_branch
          %4365 = sbr.rel (%p4363) target = $region76
        $region75: #{hwab_pallas.10} parent=67 // pred_region
          %p4366 = scmp.lt.s32.totalorder %s23, 1
          %s4367 = scalar_select %p4366, %s23, 1
          %s4368 = smul.addr %s4367, 8
          %s4369 = smul.addr %s4368, 8
          %s4370 = scalar_lea.vmem %s7, %s4369
        $region76: #{hwab_pallas.10} parent=67 // pred_fallthru
          _
        // Predicated region
        $region77: #{hwab_pallas.10} parent=67 // pred_check
          %p4371 = pneg %p239
        $region78: #{hwab_pallas.10} parent=67 // pred_check_branch
          %4373 = sbr.rel (%p4371) target = $region80
        $region79: #{hwab_pallas.10} parent=67 // pred_region
          %p4374 = scmp.lt.s32.totalorder %s23, 1
          %s4375 = scalar_select %p4374, %s23, 1
          %s4376 = smul.addr %s4375, 8
          %s4377 = smul.addr %s4376, 8
          %s4378 = scalar_lea.vmem %s8, %s4377
        $region80: #{hwab_pallas.10} parent=67 // pred_fallthru
          _
        // Predicated region
        $region81: #{hwab_pallas.10} parent=67 // pred_check
          %p4379 = pneg %p265
        $region82: #{hwab_pallas.10} parent=67 // pred_check_branch
          %4381 = sbr.rel (%p4379) target = $region84
        $region83: #{hwab_pallas.10} parent=67 // pred_region
          %p4382 = scmp.lt.s32.totalorder %s23, 1
          %s4383 = scalar_select %p4382, %s23, 1
          %s4384 = smul.addr %s4383, 8
          %s4385 = smul.addr %s4384, 8
          %s4386 = scalar_lea.vmem %s9, %s4385
        $region84: #{hwab_pallas.10} parent=67 // pred_fallthru
          _
      $region68: #{hwab_pallas.10} parent=5 // pred_fallthru
        _
    $region6: #{hwab_pallas.10} parent=1 // loop_footer
      %s21 = sadd.s32 1, %s17
    $region7: #{hwab_pallas.10} parent=1 // loop_footer_branch
      %16 = sbr.rel target = $region3
    $region8: #{hwab_pallas.10} parent=1 // loop_exit
      _
    %4387 = vsyncpa [#allocation4], 1
    %s4388 = scalar_lea.sflag [#allocation4], 1
    %4389 = vsyncpa %s4388, 1

</llo_original>
